<compile_context>
chip_gen: v6e
topology: v6e:2x2x1
jax: 0.10.0
libtpu: 0.0.40
codegen_flags: <defaults>
</compile_context>

<pallas_src>
import functools

import jax
import jax.numpy as jnp
from jax import lax
from jax.experimental import pallas as pl
from jax.experimental.pallas import tpu as pltpu

# Model constants (from the PyTorch module)
C_IN = 3
C_OUT = 16            # filters_number
K = 3                 # kernel_size
H = W = 32            # spatial size implied by fc: 16*16*16 after pool => 32x32 input
HP = WP = 16          # pooled spatial size
POOLED = HP * WP      # 256  (pooled positions per image -> lane dim)
N_CLASSES = 10
N_PAD_OUT = 128       # FC output padded to one full lane tile (zero-padded classes)
PATCH = C_IN * K * K  # 27
PATCH_PAD = 32        # contraction dim padded to a multiple of 8
FC_IN = C_OUT * POOLED  # 4096


def convnet4_fused_kernel(p_ref, wc_ref, shift_ref, wf_ref, fcb_ref, o_ref, act_ref):
    """Fused conv + BN + ReLU + 2x2 maxpool + FC for one batch block.

    p_ref    : (4, 32, B_blk*256) bf16  im2col patches; leading dim = 2x2 pool position,
                                        lanes ordered (image_in_block)*256 + pooled_pos
    wc_ref   : (16, 32)           bf16  conv weight (BN scale folded, zero-padded 27->32)
    shift_ref: (16, 1)            f32   per-channel (conv bias + BN) shift
    wf_ref   : (16, 256, 128)     bf16  FC weight regrouped per conv channel, classes
                                        zero-padded 10->128
    fcb_ref  : (1, 128)           f32   FC bias (zero-padded)
    o_ref    : (B_blk, 128)       f32   class scores (cols >= 10 are zero)
    act_ref  : (B_blk, 16, 256)   f32   VMEM scratch: per-image pooled activations
    """
    b_blk = o_ref.shape[0]
    wc = wc_ref[...]                                                   # (16, 32) bf16

    # Conv as matmul on each of the four 2x2 pool slabs; running max == max-pool.
    m = jnp.dot(wc, p_ref[0], preferred_element_type=jnp.float32)     # (16, B_blk*256)
    for k in range(1, 4):
        m = jnp.maximum(m, jnp.dot(wc, p_ref[k],
                                   preferred_element_type=jnp.float32))

    # BN shift (+conv bias) and ReLU, full lane width.
    act = jnp.maximum(m + shift_ref[...], 0.0)                         # (16, B_blk*256)

    # Regroup into per-image (16, 256) tiles (lane-aligned 256-wide slabs -> plain stores).
    for b in range(b_blk):
        act_ref[b] = act[:, POOLED * b:POOLED * (b + 1)]

    # Fused FC (bf16 MXU, f32 accumulation):
    #   out[b, o] = sum_c  act[b, c, :] @ wf[c, :, o]   (+ bias)
    acc = fcb_ref[...] + jnp.dot(act_ref[:, 0, :].astype(jnp.bfloat16), wf_ref[0],
                                 preferred_element_type=jnp.float32)
    for c in range(1, C_OUT):
        acc = acc + jnp.dot(act_ref[:, c, :].astype(jnp.bfloat16), wf_ref[c],
                            preferred_element_type=jnp.float32)
    o_ref[...] = acc.astype(o_ref.dtype)


def _round_up(x, m):
    return ((x + m - 1) // m) * m


@functools.partial(jax.jit, static_argnames=("block_b",))
def convnet4_forward(x, wc, bc, bn_gamma, bn_beta, bn_mean, bn_var, wf, bf,
                     *, eps=1e-5, block_b=32):
    """x: (N, 3, 32, 32) f32 NCHW (PyTorch convention). Returns (N, 10) f32."""
    n = x.shape[0]
    b_blk = min(block_b, _round_up(n, 8))      # sublane-aligned batch block
    n_pad = _round_up(n, b_blk)
    if n_pad != n:
        x = jnp.pad(x, ((0, n_pad - n), (0, 0), (0, 0), (0, 0)))

    # ---- glue: im2col into 4 pool-position slabs, lane-dense layout ----
    xp = jnp.pad(x, ((0, 0), (0, 0), (1, 1), (1, 1))).astype(jnp.bfloat16)  # (N,3,34,34)
    patches = jnp.stack(
        [xp[:, :, kh:kh + H, kw:kw + W] for kh in range(K) for kw in range(K)],
        axis=2)                                                   # (N, 3, 9, 32, 32)
    patches = patches.reshape(n_pad, C_IN, K * K, HP, 2, WP, 2)   # h=2p+dh, w=2q+dw
    # -> (dh, dw, c, kk, n, p, q): slab k = dh*2+dw, patch j = c*9+kk,
    #    lane = n*256 + p*16 + q
    patches = patches.transpose(4, 6, 1, 2, 0, 3, 5).reshape(4, PATCH, n_pad * POOLED)
    patches = jnp.pad(patches, ((0, 0), (0, PATCH_PAD - PATCH), (0, 0)))  # 27 -> 32

    # ---- fold BatchNorm (eval) + conv bias into weight scale / per-channel shift ----
    scale = bn_gamma / jnp.sqrt(bn_var + eps)                             # (16,)
    shift = ((bc - bn_mean) * scale + bn_beta).astype(jnp.float32).reshape(C_OUT, 1)
    wc_mat = wc.reshape(C_OUT, PATCH) * scale[:, None]
    wc_mat = jnp.pad(wc_mat, ((0, 0), (0, PATCH_PAD - PATCH))).astype(jnp.bfloat16)

    # FC weight regrouped per conv channel: wf3[c, g, o] = wf[o, c*256 + g];
    # class dim zero-padded 10 -> 128 for lane-dense MXU tiles / output stores.
    wf3 = wf.reshape(N_CLASSES, C_OUT, POOLED).transpose(1, 2, 0)         # (16,256,10)
    wf3 = jnp.pad(wf3, ((0, 0), (0, 0), (0, N_PAD_OUT - N_CLASSES))).astype(jnp.bfloat16)
    fcb = jnp.pad(bf.reshape(1, N_CLASSES),
                  ((0, 0), (0, N_PAD_OUT - N_CLASSES))).astype(jnp.float32)

    grid = (n_pad // b_blk,)
    flops = n_pad * (2 * 4 * PATCH_PAD * C_OUT * POOLED + 2 * FC_IN * N_PAD_OUT)
    bytes_accessed = (patches.size * 2 + wc_mat.size * 2 + wf3.size * 2
                      + shift.size * 4 + fcb.size * 4 + n_pad * N_PAD_OUT * 4)

    out = pl.pallas_call(
        convnet4_fused_kernel,
        grid=grid,
        in_specs=[
            pl.BlockSpec((4, PATCH_PAD, b_blk * POOLED), lambda nb: (0, 0, nb)),
            pl.BlockSpec((C_OUT, PATCH_PAD), lambda nb: (0, 0)),
            pl.BlockSpec((C_OUT, 1), lambda nb: (0, 0)),
            pl.BlockSpec((C_OUT, POOLED, N_PAD_OUT), lambda nb: (0, 0, 0)),
            pl.BlockSpec((1, N_PAD_OUT), lambda nb: (0, 0)),
        ],
        out_specs=pl.BlockSpec((b_blk, N_PAD_OUT), lambda nb: (nb, 0)),
        out_shape=jax.ShapeDtypeStruct((n_pad, N_PAD_OUT), jnp.float32),
        scratch_shapes=[pltpu.VMEM((b_blk, C_OUT, POOLED), jnp.float32)],
        compiler_params=pltpu.CompilerParams(dimension_semantics=("parallel",)),
        cost_estimate=pl.CostEstimate(flops=flops, transcendentals=0,
                                      bytes_accessed=bytes_accessed),
    )(patches, wc_mat, shift, wf3, fcb)
    return out[:n, :N_CLASSES]


def convnet4_reference(x, wc, bc, bn_gamma, bn_beta, bn_mean, bn_var, wf, bf, eps=1e-5):
    """Pure-JAX reference reproducing the PyTorch forward (eval-mode BatchNorm)."""
    y = lax.conv_general_dilated(
        x, wc, window_strides=(1, 1), padding=((1, 1), (1, 1)),
        dimension_numbers=("NCHW", "OIHW", "NCHW"))
    y = y + bc[None, :, None, None]
    y = ((y - bn_mean[None, :, None, None])
         * (bn_gamma[None, :, None, None]
            / jnp.sqrt(bn_var[None, :, None, None] + eps))
         + bn_beta[None, :, None, None])
    y = jnp.maximum(y, 0.0)
    y = lax.reduce_window(y, -jnp.inf, lax.max, (1, 1, 2, 2), (1, 1, 2, 2), "VALID")
    y = y.reshape(y.shape[0], -1)                 # (N, C*Hp*Wp), C-major like torch
    return y @ wf.T + bf


if __name__ == "__main__":
    key = jax.random.PRNGKey(0)
    ks = jax.random.split(key, 9)

    # Deterministic synthetic parameters (shapes from ConvNet4.__init__)
    wc = jax.random.normal(ks[0], (C_OUT, C_IN, K, K), jnp.float32) * 0.1
    bc = jax.random.normal(ks[1], (C_OUT,), jnp.float32) * 0.1
    bn_gamma = 1.0 + 0.1 * jax.random.normal(ks[2], (C_OUT,), jnp.float32)
    bn_beta = 0.1 * jax.random.normal(ks[3], (C_OUT,), jnp.float32)
    bn_mean = 0.1 * jax.random.normal(ks[4], (C_OUT,), jnp.float32)
    bn_var = 0.5 + 0.5 * jnp.abs(jax.random.normal(ks[5], (C_OUT,), jnp.float32))
    wf = jax.random.normal(ks[6], (N_CLASSES, FC_IN), jnp.float32) * 0.01
    bf = jax.random.normal(ks[7], (N_CLASSES,), jnp.float32) * 0.1

    # Small batch; block_b=8 -> grid of 2 batch blocks (exercises pipelining/megacore).
    x = jax.random.normal(ks[8], (16, C_IN, H, W), jnp.float32)

    out = jax.block_until_ready(
        convnet4_forward(x, wc, bc, bn_gamma, bn_beta, bn_mean, bn_var, wf, bf,
                         block_b=8))
    ref = jax.block_until_ready(
        convnet4_reference(x, wc, bc, bn_gamma, bn_beta, bn_mean, bn_var, wf, bf))

    assert out.shape == (16, N_CLASSES)
    assert jnp.allclose(out, ref, atol=2.5e-2, rtol=2.5e-2), (out, ref)
    print("KERNEL_OK")
</pallas_src>

<mosaic_0001>
module attributes {stable_mosaic.version = 11 : i64} {
  func.func @convnet4_fused_kernel(%arg0: i32, %arg1: memref<4x32x2048xbf16, #tpu.memory_space<vmem>>, %arg2: memref<16x32xbf16, #tpu.memory_space<vmem>>, %arg3: memref<16x1xf32, #tpu.memory_space<vmem>>, %arg4: memref<16x256x128xbf16, #tpu.memory_space<vmem>>, %arg5: memref<1x128xf32, #tpu.memory_space<vmem>>, %arg6: memref<8x128xf32, #tpu.memory_space<vmem>>, %arg7: memref<8x16x256xf32, #tpu.memory_space<vmem>>) attributes {dimension_semantics = [#tpu.dimension_semantics<parallel>], iteration_bounds = array<i64: 2>, scalar_prefetch = 0 : i64, scratch_operands = 1 : i64, tpu.core_type = #tpu.core_type<tc>, window_params = [{transform_indices = @transform_0, window_bounds = array<i64: 4, 32, 2048>}, {pipeline_mode = #tpu.pipeline_mode<synchronous>, transform_indices = @transform_1, window_bounds = array<i64: 16, 32>}, {pipeline_mode = #tpu.pipeline_mode<synchronous>, transform_indices = @transform_2, window_bounds = array<i64: 16, 1>}, {pipeline_mode = #tpu.pipeline_mode<synchronous>, transform_indices = @transform_3, window_bounds = array<i64: 16, 256, 128>}, {pipeline_mode = #tpu.pipeline_mode<synchronous>, transform_indices = @transform_4, window_bounds = array<i64: 1, 128>}, {transform_indices = @transform_5, window_bounds = array<i64: 8, 128>}]} {
    %c0 = arith.constant 0 : index
    %c0_0 = arith.constant 0 : index
    %0 = vector.load %arg2[%c0, %c0_0] : memref<16x32xbf16, #tpu.memory_space<vmem>>, vector<16x32xbf16>
    %c0_1 = arith.constant 0 : index
    %c0_2 = arith.constant 0 : index
    %c0_3 = arith.constant 0 : index
    %1 = vector.load %arg1[%c0_1, %c0_2, %c0_3] : memref<4x32x2048xbf16, #tpu.memory_space<vmem>>, vector<1x32x2048xbf16>
    %2 = vector.shape_cast %1 : vector<1x32x2048xbf16> to vector<32x2048xbf16>
    %cst = arith.constant dense<0.000000e+00> : vector<16x2048xf32>
    %3 = tpu.matmul %0, %2, %cst {dimension_numbers = #tpu.dot_dimension_numbers<[1], [0], [0], [1], [0, 0, 1, 1], [], []>} : vector<16x32xbf16>, vector<32x2048xbf16>, vector<16x2048xf32> -> vector<16x2048xf32>
    %c1 = arith.constant 1 : index
    %c0_4 = arith.constant 0 : index
    %c0_5 = arith.constant 0 : index
    %4 = vector.load %arg1[%c1, %c0_4, %c0_5] : memref<4x32x2048xbf16, #tpu.memory_space<vmem>>, vector<1x32x2048xbf16>
    %5 = vector.shape_cast %4 : vector<1x32x2048xbf16> to vector<32x2048xbf16>
    %cst_6 = arith.constant dense<0.000000e+00> : vector<16x2048xf32>
    %6 = tpu.matmul %0, %5, %cst_6 {dimension_numbers = #tpu.dot_dimension_numbers<[1], [0], [0], [1], [0, 0, 1, 1], [], []>} : vector<16x32xbf16>, vector<32x2048xbf16>, vector<16x2048xf32> -> vector<16x2048xf32>
    %7 = arith.maximumf %3, %6 : vector<16x2048xf32>
    %c2 = arith.constant 2 : index
    %c0_7 = arith.constant 0 : index
    %c0_8 = arith.constant 0 : index
    %8 = vector.load %arg1[%c2, %c0_7, %c0_8] : memref<4x32x2048xbf16, #tpu.memory_space<vmem>>, vector<1x32x2048xbf16>
    %9 = vector.shape_cast %8 : vector<1x32x2048xbf16> to vector<32x2048xbf16>
    %cst_9 = arith.constant dense<0.000000e+00> : vector<16x2048xf32>
    %10 = tpu.matmul %0, %9, %cst_9 {dimension_numbers = #tpu.dot_dimension_numbers<[1], [0], [0], [1], [0, 0, 1, 1], [], []>} : vector<16x32xbf16>, vector<32x2048xbf16>, vector<16x2048xf32> -> vector<16x2048xf32>
    %11 = arith.maximumf %7, %10 : vector<16x2048xf32>
    %c3 = arith.constant 3 : index
    %c0_10 = arith.constant 0 : index
    %c0_11 = arith.constant 0 : index
    %12 = vector.load %arg1[%c3, %c0_10, %c0_11] : memref<4x32x2048xbf16, #tpu.memory_space<vmem>>, vector<1x32x2048xbf16>
    %13 = vector.shape_cast %12 : vector<1x32x2048xbf16> to vector<32x2048xbf16>
    %cst_12 = arith.constant dense<0.000000e+00> : vector<16x2048xf32>
    %14 = tpu.matmul %0, %13, %cst_12 {dimension_numbers = #tpu.dot_dimension_numbers<[1], [0], [0], [1], [0, 0, 1, 1], [], []>} : vector<16x32xbf16>, vector<32x2048xbf16>, vector<16x2048xf32> -> vector<16x2048xf32>
    %15 = arith.maximumf %11, %14 : vector<16x2048xf32>
    %c0_13 = arith.constant 0 : index
    %c0_14 = arith.constant 0 : index
    %16 = vector.load %arg3[%c0_13, %c0_14] : memref<16x1xf32, #tpu.memory_space<vmem>>, vector<16x1xf32>
    %17 = vector.broadcast %16 : vector<16x1xf32> to vector<16x2048xf32>
    %18 = arith.addf %15, %17 : vector<16x2048xf32>
    %cst_15 = arith.constant 0.000000e+00 : f32
    %19 = vector.broadcast %cst_15 : f32 to vector<16x2048xf32>
    %20 = arith.maximumf %18, %19 : vector<16x2048xf32>
    %21 = vector.extract_strided_slice %20 {offsets = [0, 0], sizes = [16, 256], strides = [1, 1]} : vector<16x2048xf32> to vector<16x256xf32>
    %c0_16 = arith.constant 0 : index
    %c0_17 = arith.constant 0 : index
    %c0_18 = arith.constant 0 : index
    %22 = vector.load %arg7[%c0_16, %c0_17, %c0_18] : memref<8x16x256xf32, #tpu.memory_space<vmem>>, vector<1x16x256xf32>
    %23 = vector.shape_cast %22 : vector<1x16x256xf32> to vector<16x256xf32>
    %24 = vector.shape_cast %21 : vector<16x256xf32> to vector<1x16x256xf32>
    tpu.vector_store %arg7[%c0_16, %c0_17, %c0_18], %24 {strides = array<i32>} : memref<8x16x256xf32, #tpu.memory_space<vmem>>, vector<1x16x256xf32>,
    %25 = vector.extract_strided_slice %20 {offsets = [0, 256], sizes = [16, 256], strides = [1, 1]} : vector<16x2048xf32> to vector<16x256xf32>
    %c1_19 = arith.constant 1 : index
    %c0_20 = arith.constant 0 : index
    %c0_21 = arith.constant 0 : index
    %26 = vector.load %arg7[%c1_19, %c0_20, %c0_21] : memref<8x16x256xf32, #tpu.memory_space<vmem>>, vector<1x16x256xf32>
    %27 = vector.shape_cast %26 : vector<1x16x256xf32> to vector<16x256xf32>
    %28 = vector.shape_cast %25 : vector<16x256xf32> to vector<1x16x256xf32>
    tpu.vector_store %arg7[%c1_19, %c0_20, %c0_21], %28 {strides = array<i32>} : memref<8x16x256xf32, #tpu.memory_space<vmem>>, vector<1x16x256xf32>,
    %29 = vector.extract_strided_slice %20 {offsets = [0, 512], sizes = [16, 256], strides = [1, 1]} : vector<16x2048xf32> to vector<16x256xf32>
    %c2_22 = arith.constant 2 : index
    %c0_23 = arith.constant 0 : index
    %c0_24 = arith.constant 0 : index
    %30 = vector.load %arg7[%c2_22, %c0_23, %c0_24] : memref<8x16x256xf32, #tpu.memory_space<vmem>>, vector<1x16x256xf32>
    %31 = vector.shape_cast %30 : vector<1x16x256xf32> to vector<16x256xf32>
    %32 = vector.shape_cast %29 : vector<16x256xf32> to vector<1x16x256xf32>
    tpu.vector_store %arg7[%c2_22, %c0_23, %c0_24], %32 {strides = array<i32>} : memref<8x16x256xf32, #tpu.memory_space<vmem>>, vector<1x16x256xf32>,
    %33 = vector.extract_strided_slice %20 {offsets = [0, 768], sizes = [16, 256], strides = [1, 1]} : vector<16x2048xf32> to vector<16x256xf32>
    %c3_25 = arith.constant 3 : index
    %c0_26 = arith.constant 0 : index
    %c0_27 = arith.constant 0 : index
    %34 = vector.load %arg7[%c3_25, %c0_26, %c0_27] : memref<8x16x256xf32, #tpu.memory_space<vmem>>, vector<1x16x256xf32>
    %35 = vector.shape_cast %34 : vector<1x16x256xf32> to vector<16x256xf32>
    %36 = vector.shape_cast %33 : vector<16x256xf32> to vector<1x16x256xf32>
    tpu.vector_store %arg7[%c3_25, %c0_26, %c0_27], %36 {strides = array<i32>} : memref<8x16x256xf32, #tpu.memory_space<vmem>>, vector<1x16x256xf32>,
    %37 = vector.extract_strided_slice %20 {offsets = [0, 1024], sizes = [16, 256], strides = [1, 1]} : vector<16x2048xf32> to vector<16x256xf32>
    %c4 = arith.constant 4 : index
    %c0_28 = arith.constant 0 : index
    %c0_29 = arith.constant 0 : index
    %38 = vector.load %arg7[%c4, %c0_28, %c0_29] : memref<8x16x256xf32, #tpu.memory_space<vmem>>, vector<1x16x256xf32>
    %39 = vector.shape_cast %38 : vector<1x16x256xf32> to vector<16x256xf32>
    %40 = vector.shape_cast %37 : vector<16x256xf32> to vector<1x16x256xf32>
    tpu.vector_store %arg7[%c4, %c0_28, %c0_29], %40 {strides = array<i32>} : memref<8x16x256xf32, #tpu.memory_space<vmem>>, vector<1x16x256xf32>,
    %41 = vector.extract_strided_slice %20 {offsets = [0, 1280], sizes = [16, 256], strides = [1, 1]} : vector<16x2048xf32> to vector<16x256xf32>
    %c5 = arith.constant 5 : index
    %c0_30 = arith.constant 0 : index
    %c0_31 = arith.constant 0 : index
    %42 = vector.load %arg7[%c5, %c0_30, %c0_31] : memref<8x16x256xf32, #tpu.memory_space<vmem>>, vector<1x16x256xf32>
    %43 = vector.shape_cast %42 : vector<1x16x256xf32> to vector<16x256xf32>
    %44 = vector.shape_cast %41 : vector<16x256xf32> to vector<1x16x256xf32>
    tpu.vector_store %arg7[%c5, %c0_30, %c0_31], %44 {strides = array<i32>} : memref<8x16x256xf32, #tpu.memory_space<vmem>>, vector<1x16x256xf32>,
    %45 = vector.extract_strided_slice %20 {offsets = [0, 1536], sizes = [16, 256], strides = [1, 1]} : vector<16x2048xf32> to vector<16x256xf32>
    %c6 = arith.constant 6 : index
    %c0_32 = arith.constant 0 : index
    %c0_33 = arith.constant 0 : index
    %46 = vector.load %arg7[%c6, %c0_32, %c0_33] : memref<8x16x256xf32, #tpu.memory_space<vmem>>, vector<1x16x256xf32>
    %47 = vector.shape_cast %46 : vector<1x16x256xf32> to vector<16x256xf32>
    %48 = vector.shape_cast %45 : vector<16x256xf32> to vector<1x16x256xf32>
    tpu.vector_store %arg7[%c6, %c0_32, %c0_33], %48 {strides = array<i32>} : memref<8x16x256xf32, #tpu.memory_space<vmem>>, vector<1x16x256xf32>,
    %49 = vector.extract_strided_slice %20 {offsets = [0, 1792], sizes = [16, 256], strides = [1, 1]} : vector<16x2048xf32> to vector<16x256xf32>
    %c7 = arith.constant 7 : index
    %c0_34 = arith.constant 0 : index
    %c0_35 = arith.constant 0 : index
    %50 = vector.load %arg7[%c7, %c0_34, %c0_35] : memref<8x16x256xf32, #tpu.memory_space<vmem>>, vector<1x16x256xf32>
    %51 = vector.shape_cast %50 : vector<1x16x256xf32> to vector<16x256xf32>
    %52 = vector.shape_cast %49 : vector<16x256xf32> to vector<1x16x256xf32>
    tpu.vector_store %arg7[%c7, %c0_34, %c0_35], %52 {strides = array<i32>} : memref<8x16x256xf32, #tpu.memory_space<vmem>>, vector<1x16x256xf32>,
    %c0_36 = arith.constant 0 : index
    %c0_37 = arith.constant 0 : index
    %53 = vector.load %arg5[%c0_36, %c0_37] : memref<1x128xf32, #tpu.memory_space<vmem>>, vector<1x128xf32>
    %c0_38 = arith.constant 0 : index
    %c0_39 = arith.constant 0 : index
    %c0_40 = arith.constant 0 : index
    %54 = vector.load %arg7[%c0_38, %c0_39, %c0_40] : memref<8x16x256xf32, #tpu.memory_space<vmem>>, vector<8x1x256xf32>
    %55 = vector.shape_cast %54 : vector<8x1x256xf32> to vector<8x256xf32>
    %56 = arith.truncf %55 : vector<8x256xf32> to vector<8x256xbf16>
    %c0_41 = arith.constant 0 : index
    %c0_42 = arith.constant 0 : index
    %c0_43 = arith.constant 0 : index
    %57 = vector.load %arg4[%c0_41, %c0_42, %c0_43] : memref<16x256x128xbf16, #tpu.memory_space<vmem>>, vector<1x256x128xbf16>
    %58 = vector.shape_cast %57 : vector<1x256x128xbf16> to vector<256x128xbf16>
    %cst_44 = arith.constant dense<0.000000e+00> : vector<8x128xf32>
    %59 = tpu.matmul %56, %58, %cst_44 {dimension_numbers = #tpu.dot_dimension_numbers<[1], [0], [0], [1], [0, 0, 1, 1], [], []>} : vector<8x256xbf16>, vector<256x128xbf16>, vector<8x128xf32> -> vector<8x128xf32>
    %60 = vector.broadcast %53 : vector<1x128xf32> to vector<8x128xf32>
    %61 = arith.addf %60, %59 : vector<8x128xf32>
    %c0_45 = arith.constant 0 : index
    %c1_46 = arith.constant 1 : index
    %c0_47 = arith.constant 0 : index
    %62 = vector.load %arg7[%c0_45, %c1_46, %c0_47] : memref<8x16x256xf32, #tpu.memory_space<vmem>>, vector<8x1x256xf32>
    %63 = vector.shape_cast %62 : vector<8x1x256xf32> to vector<8x256xf32>
    %64 = arith.truncf %63 : vector<8x256xf32> to vector<8x256xbf16>
    %c1_48 = arith.constant 1 : index
    %c0_49 = arith.constant 0 : index
    %c0_50 = arith.constant 0 : index
    %65 = vector.load %arg4[%c1_48, %c0_49, %c0_50] : memref<16x256x128xbf16, #tpu.memory_space<vmem>>, vector<1x256x128xbf16>
    %66 = vector.shape_cast %65 : vector<1x256x128xbf16> to vector<256x128xbf16>
    %cst_51 = arith.constant dense<0.000000e+00> : vector<8x128xf32>
    %67 = tpu.matmul %64, %66, %cst_51 {dimension_numbers = #tpu.dot_dimension_numbers<[1], [0], [0], [1], [0, 0, 1, 1], [], []>} : vector<8x256xbf16>, vector<256x128xbf16>, vector<8x128xf32> -> vector<8x128xf32>
    %68 = arith.addf %61, %67 : vector<8x128xf32>
    %c0_52 = arith.constant 0 : index
    %c2_53 = arith.constant 2 : index
    %c0_54 = arith.constant 0 : index
    %69 = vector.load %arg7[%c0_52, %c2_53, %c0_54] : memref<8x16x256xf32, #tpu.memory_space<vmem>>, vector<8x1x256xf32>
    %70 = vector.shape_cast %69 : vector<8x1x256xf32> to vector<8x256xf32>
    %71 = arith.truncf %70 : vector<8x256xf32> to vector<8x256xbf16>
    %c2_55 = arith.constant 2 : index
    %c0_56 = arith.constant 0 : index
    %c0_57 = arith.constant 0 : index
    %72 = vector.load %arg4[%c2_55, %c0_56, %c0_57] : memref<16x256x128xbf16, #tpu.memory_space<vmem>>, vector<1x256x128xbf16>
    %73 = vector.shape_cast %72 : vector<1x256x128xbf16> to vector<256x128xbf16>
    %cst_58 = arith.constant dense<0.000000e+00> : vector<8x128xf32>
    %74 = tpu.matmul %71, %73, %cst_58 {dimension_numbers = #tpu.dot_dimension_numbers<[1], [0], [0], [1], [0, 0, 1, 1], [], []>} : vector<8x256xbf16>, vector<256x128xbf16>, vector<8x128xf32> -> vector<8x128xf32>
    %75 = arith.addf %68, %74 : vector<8x128xf32>
    %c0_59 = arith.constant 0 : index
    %c3_60 = arith.constant 3 : index
    %c0_61 = arith.constant 0 : index
    %76 = vector.load %arg7[%c0_59, %c3_60, %c0_61] : memref<8x16x256xf32, #tpu.memory_space<vmem>>, vector<8x1x256xf32>
    %77 = vector.shape_cast %76 : vector<8x1x256xf32> to vector<8x256xf32>
    %78 = arith.truncf %77 : vector<8x256xf32> to vector<8x256xbf16>
    %c3_62 = arith.constant 3 : index
    %c0_63 = arith.constant 0 : index
    %c0_64 = arith.constant 0 : index
    %79 = vector.load %arg4[%c3_62, %c0_63, %c0_64] : memref<16x256x128xbf16, #tpu.memory_space<vmem>>, vector<1x256x128xbf16>
    %80 = vector.shape_cast %79 : vector<1x256x128xbf16> to vector<256x128xbf16>
    %cst_65 = arith.constant dense<0.000000e+00> : vector<8x128xf32>
    %81 = tpu.matmul %78, %80, %cst_65 {dimension_numbers = #tpu.dot_dimension_numbers<[1], [0], [0], [1], [0, 0, 1, 1], [], []>} : vector<8x256xbf16>, vector<256x128xbf16>, vector<8x128xf32> -> vector<8x128xf32>
    %82 = arith.addf %75, %81 : vector<8x128xf32>
    %c0_66 = arith.constant 0 : index
    %c4_67 = arith.constant 4 : index
    %c0_68 = arith.constant 0 : index
    %83 = vector.load %arg7[%c0_66, %c4_67, %c0_68] : memref<8x16x256xf32, #tpu.memory_space<vmem>>, vector<8x1x256xf32>
    %84 = vector.shape_cast %83 : vector<8x1x256xf32> to vector<8x256xf32>
    %85 = arith.truncf %84 : vector<8x256xf32> to vector<8x256xbf16>
    %c4_69 = arith.constant 4 : index
    %c0_70 = arith.constant 0 : index
    %c0_71 = arith.constant 0 : index
    %86 = vector.load %arg4[%c4_69, %c0_70, %c0_71] : memref<16x256x128xbf16, #tpu.memory_space<vmem>>, vector<1x256x128xbf16>
    %87 = vector.shape_cast %86 : vector<1x256x128xbf16> to vector<256x128xbf16>
    %cst_72 = arith.constant dense<0.000000e+00> : vector<8x128xf32>
    %88 = tpu.matmul %85, %87, %cst_72 {dimension_numbers = #tpu.dot_dimension_numbers<[1], [0], [0], [1], [0, 0, 1, 1], [], []>} : vector<8x256xbf16>, vector<256x128xbf16>, vector<8x128xf32> -> vector<8x128xf32>
    %89 = arith.addf %82, %88 : vector<8x128xf32>
    %c0_73 = arith.constant 0 : index
    %c5_74 = arith.constant 5 : index
    %c0_75 = arith.constant 0 : index
    %90 = vector.load %arg7[%c0_73, %c5_74, %c0_75] : memref<8x16x256xf32, #tpu.memory_space<vmem>>, vector<8x1x256xf32>
    %91 = vector.shape_cast %90 : vector<8x1x256xf32> to vector<8x256xf32>
    %92 = arith.truncf %91 : vector<8x256xf32> to vector<8x256xbf16>
    %c5_76 = arith.constant 5 : index
    %c0_77 = arith.constant 0 : index
    %c0_78 = arith.constant 0 : index
    %93 = vector.load %arg4[%c5_76, %c0_77, %c0_78] : memref<16x256x128xbf16, #tpu.memory_space<vmem>>, vector<1x256x128xbf16>
    %94 = vector.shape_cast %93 : vector<1x256x128xbf16> to vector<256x128xbf16>
    %cst_79 = arith.constant dense<0.000000e+00> : vector<8x128xf32>
    %95 = tpu.matmul %92, %94, %cst_79 {dimension_numbers = #tpu.dot_dimension_numbers<[1], [0], [0], [1], [0, 0, 1, 1], [], []>} : vector<8x256xbf16>, vector<256x128xbf16>, vector<8x128xf32> -> vector<8x128xf32>
    %96 = arith.addf %89, %95 : vector<8x128xf32>
    %c0_80 = arith.constant 0 : index
    %c6_81 = arith.constant 6 : index
    %c0_82 = arith.constant 0 : index
    %97 = vector.load %arg7[%c0_80, %c6_81, %c0_82] : memref<8x16x256xf32, #tpu.memory_space<vmem>>, vector<8x1x256xf32>
    %98 = vector.shape_cast %97 : vector<8x1x256xf32> to vector<8x256xf32>
    %99 = arith.truncf %98 : vector<8x256xf32> to vector<8x256xbf16>
    %c6_83 = arith.constant 6 : index
    %c0_84 = arith.constant 0 : index
    %c0_85 = arith.constant 0 : index
    %100 = vector.load %arg4[%c6_83, %c0_84, %c0_85] : memref<16x256x128xbf16, #tpu.memory_space<vmem>>, vector<1x256x128xbf16>
    %101 = vector.shape_cast %100 : vector<1x256x128xbf16> to vector<256x128xbf16>
    %cst_86 = arith.constant dense<0.000000e+00> : vector<8x128xf32>
    %102 = tpu.matmul %99, %101, %cst_86 {dimension_numbers = #tpu.dot_dimension_numbers<[1], [0], [0], [1], [0, 0, 1, 1], [], []>} : vector<8x256xbf16>, vector<256x128xbf16>, vector<8x128xf32> -> vector<8x128xf32>
    %103 = arith.addf %96, %102 : vector<8x128xf32>
    %c0_87 = arith.constant 0 : index
    %c7_88 = arith.constant 7 : index
    %c0_89 = arith.constant 0 : index
    %104 = vector.load %arg7[%c0_87, %c7_88, %c0_89] : memref<8x16x256xf32, #tpu.memory_space<vmem>>, vector<8x1x256xf32>
    %105 = vector.shape_cast %104 : vector<8x1x256xf32> to vector<8x256xf32>
    %106 = arith.truncf %105 : vector<8x256xf32> to vector<8x256xbf16>
    %c7_90 = arith.constant 7 : index
    %c0_91 = arith.constant 0 : index
    %c0_92 = arith.constant 0 : index
    %107 = vector.load %arg4[%c7_90, %c0_91, %c0_92] : memref<16x256x128xbf16, #tpu.memory_space<vmem>>, vector<1x256x128xbf16>
    %108 = vector.shape_cast %107 : vector<1x256x128xbf16> to vector<256x128xbf16>
    %cst_93 = arith.constant dense<0.000000e+00> : vector<8x128xf32>
    %109 = tpu.matmul %106, %108, %cst_93 {dimension_numbers = #tpu.dot_dimension_numbers<[1], [0], [0], [1], [0, 0, 1, 1], [], []>} : vector<8x256xbf16>, vector<256x128xbf16>, vector<8x128xf32> -> vector<8x128xf32>
    %110 = arith.addf %103, %109 : vector<8x128xf32>
    %c0_94 = arith.constant 0 : index
    %c8 = arith.constant 8 : index
    %c0_95 = arith.constant 0 : index
    %111 = vector.load %arg7[%c0_94, %c8, %c0_95] : memref<8x16x256xf32, #tpu.memory_space<vmem>>, vector<8x1x256xf32>
    %112 = vector.shape_cast %111 : vector<8x1x256xf32> to vector<8x256xf32>
    %113 = arith.truncf %112 : vector<8x256xf32> to vector<8x256xbf16>
    %c8_96 = arith.constant 8 : index
    %c0_97 = arith.constant 0 : index
    %c0_98 = arith.constant 0 : index
    %114 = vector.load %arg4[%c8_96, %c0_97, %c0_98] : memref<16x256x128xbf16, #tpu.memory_space<vmem>>, vector<1x256x128xbf16>
    %115 = vector.shape_cast %114 : vector<1x256x128xbf16> to vector<256x128xbf16>
    %cst_99 = arith.constant dense<0.000000e+00> : vector<8x128xf32>
    %116 = tpu.matmul %113, %115, %cst_99 {dimension_numbers = #tpu.dot_dimension_numbers<[1], [0], [0], [1], [0, 0, 1, 1], [], []>} : vector<8x256xbf16>, vector<256x128xbf16>, vector<8x128xf32> -> vector<8x128xf32>
    %117 = arith.addf %110, %116 : vector<8x128xf32>
    %c0_100 = arith.constant 0 : index
    %c9 = arith.constant 9 : index
    %c0_101 = arith.constant 0 : index
    %118 = vector.load %arg7[%c0_100, %c9, %c0_101] : memref<8x16x256xf32, #tpu.memory_space<vmem>>, vector<8x1x256xf32>
    %119 = vector.shape_cast %118 : vector<8x1x256xf32> to vector<8x256xf32>
    %120 = arith.truncf %119 : vector<8x256xf32> to vector<8x256xbf16>
    %c9_102 = arith.constant 9 : index
    %c0_103 = arith.constant 0 : index
    %c0_104 = arith.constant 0 : index
    %121 = vector.load %arg4[%c9_102, %c0_103, %c0_104] : memref<16x256x128xbf16, #tpu.memory_space<vmem>>, vector<1x256x128xbf16>
    %122 = vector.shape_cast %121 : vector<1x256x128xbf16> to vector<256x128xbf16>
    %cst_105 = arith.constant dense<0.000000e+00> : vector<8x128xf32>
    %123 = tpu.matmul %120, %122, %cst_105 {dimension_numbers = #tpu.dot_dimension_numbers<[1], [0], [0], [1], [0, 0, 1, 1], [], []>} : vector<8x256xbf16>, vector<256x128xbf16>, vector<8x128xf32> -> vector<8x128xf32>
    %124 = arith.addf %117, %123 : vector<8x128xf32>
    %c0_106 = arith.constant 0 : index
    %c10 = arith.constant 10 : index
    %c0_107 = arith.constant 0 : index
    %125 = vector.load %arg7[%c0_106, %c10, %c0_107] : memref<8x16x256xf32, #tpu.memory_space<vmem>>, vector<8x1x256xf32>
    %126 = vector.shape_cast %125 : vector<8x1x256xf32> to vector<8x256xf32>
    %127 = arith.truncf %126 : vector<8x256xf32> to vector<8x256xbf16>
    %c10_108 = arith.constant 10 : index
    %c0_109 = arith.constant 0 : index
    %c0_110 = arith.constant 0 : index
    %128 = vector.load %arg4[%c10_108, %c0_109, %c0_110] : memref<16x256x128xbf16, #tpu.memory_space<vmem>>, vector<1x256x128xbf16>
    %129 = vector.shape_cast %128 : vector<1x256x128xbf16> to vector<256x128xbf16>
    %cst_111 = arith.constant dense<0.000000e+00> : vector<8x128xf32>
    %130 = tpu.matmul %127, %129, %cst_111 {dimension_numbers = #tpu.dot_dimension_numbers<[1], [0], [0], [1], [0, 0, 1, 1], [], []>} : vector<8x256xbf16>, vector<256x128xbf16>, vector<8x128xf32> -> vector<8x128xf32>
    %131 = arith.addf %124, %130 : vector<8x128xf32>
    %c0_112 = arith.constant 0 : index
    %c11 = arith.constant 11 : index
    %c0_113 = arith.constant 0 : index
    %132 = vector.load %arg7[%c0_112, %c11, %c0_113] : memref<8x16x256xf32, #tpu.memory_space<vmem>>, vector<8x1x256xf32>
    %133 = vector.shape_cast %132 : vector<8x1x256xf32> to vector<8x256xf32>
    %134 = arith.truncf %133 : vector<8x256xf32> to vector<8x256xbf16>
    %c11_114 = arith.constant 11 : index
    %c0_115 = arith.constant 0 : index
    %c0_116 = arith.constant 0 : index
    %135 = vector.load %arg4[%c11_114, %c0_115, %c0_116] : memref<16x256x128xbf16, #tpu.memory_space<vmem>>, vector<1x256x128xbf16>
    %136 = vector.shape_cast %135 : vector<1x256x128xbf16> to vector<256x128xbf16>
    %cst_117 = arith.constant dense<0.000000e+00> : vector<8x128xf32>
    %137 = tpu.matmul %134, %136, %cst_117 {dimension_numbers = #tpu.dot_dimension_numbers<[1], [0], [0], [1], [0, 0, 1, 1], [], []>} : vector<8x256xbf16>, vector<256x128xbf16>, vector<8x128xf32> -> vector<8x128xf32>
    %138 = arith.addf %131, %137 : vector<8x128xf32>
    %c0_118 = arith.constant 0 : index
    %c12 = arith.constant 12 : index
    %c0_119 = arith.constant 0 : index
    %139 = vector.load %arg7[%c0_118, %c12, %c0_119] : memref<8x16x256xf32, #tpu.memory_space<vmem>>, vector<8x1x256xf32>
    %140 = vector.shape_cast %139 : vector<8x1x256xf32> to vector<8x256xf32>
    %141 = arith.truncf %140 : vector<8x256xf32> to vector<8x256xbf16>
    %c12_120 = arith.constant 12 : index
    %c0_121 = arith.constant 0 : index
    %c0_122 = arith.constant 0 : index
    %142 = vector.load %arg4[%c12_120, %c0_121, %c0_122] : memref<16x256x128xbf16, #tpu.memory_space<vmem>>, vector<1x256x128xbf16>
    %143 = vector.shape_cast %142 : vector<1x256x128xbf16> to vector<256x128xbf16>
    %cst_123 = arith.constant dense<0.000000e+00> : vector<8x128xf32>
    %144 = tpu.matmul %141, %143, %cst_123 {dimension_numbers = #tpu.dot_dimension_numbers<[1], [0], [0], [1], [0, 0, 1, 1], [], []>} : vector<8x256xbf16>, vector<256x128xbf16>, vector<8x128xf32> -> vector<8x128xf32>
    %145 = arith.addf %138, %144 : vector<8x128xf32>
    %c0_124 = arith.constant 0 : index
    %c13 = arith.constant 13 : index
    %c0_125 = arith.constant 0 : index
    %146 = vector.load %arg7[%c0_124, %c13, %c0_125] : memref<8x16x256xf32, #tpu.memory_space<vmem>>, vector<8x1x256xf32>
    %147 = vector.shape_cast %146 : vector<8x1x256xf32> to vector<8x256xf32>
    %148 = arith.truncf %147 : vector<8x256xf32> to vector<8x256xbf16>
    %c13_126 = arith.constant 13 : index
    %c0_127 = arith.constant 0 : index
    %c0_128 = arith.constant 0 : index
    %149 = vector.load %arg4[%c13_126, %c0_127, %c0_128] : memref<16x256x128xbf16, #tpu.memory_space<vmem>>, vector<1x256x128xbf16>
    %150 = vector.shape_cast %149 : vector<1x256x128xbf16> to vector<256x128xbf16>
    %cst_129 = arith.constant dense<0.000000e+00> : vector<8x128xf32>
    %151 = tpu.matmul %148, %150, %cst_129 {dimension_numbers = #tpu.dot_dimension_numbers<[1], [0], [0], [1], [0, 0, 1, 1], [], []>} : vector<8x256xbf16>, vector<256x128xbf16>, vector<8x128xf32> -> vector<8x128xf32>
    %152 = arith.addf %145, %151 : vector<8x128xf32>
    %c0_130 = arith.constant 0 : index
    %c14 = arith.constant 14 : index
    %c0_131 = arith.constant 0 : index
    %153 = vector.load %arg7[%c0_130, %c14, %c0_131] : memref<8x16x256xf32, #tpu.memory_space<vmem>>, vector<8x1x256xf32>
    %154 = vector.shape_cast %153 : vector<8x1x256xf32> to vector<8x256xf32>
    %155 = arith.truncf %154 : vector<8x256xf32> to vector<8x256xbf16>
    %c14_132 = arith.constant 14 : index
    %c0_133 = arith.constant 0 : index
    %c0_134 = arith.constant 0 : index
    %156 = vector.load %arg4[%c14_132, %c0_133, %c0_134] : memref<16x256x128xbf16, #tpu.memory_space<vmem>>, vector<1x256x128xbf16>
    %157 = vector.shape_cast %156 : vector<1x256x128xbf16> to vector<256x128xbf16>
    %cst_135 = arith.constant dense<0.000000e+00> : vector<8x128xf32>
    %158 = tpu.matmul %155, %157, %cst_135 {dimension_numbers = #tpu.dot_dimension_numbers<[1], [0], [0], [1], [0, 0, 1, 1], [], []>} : vector<8x256xbf16>, vector<256x128xbf16>, vector<8x128xf32> -> vector<8x128xf32>
    %159 = arith.addf %152, %158 : vector<8x128xf32>
    %c0_136 = arith.constant 0 : index
    %c15 = arith.constant 15 : index
    %c0_137 = arith.constant 0 : index
    %160 = vector.load %arg7[%c0_136, %c15, %c0_137] : memref<8x16x256xf32, #tpu.memory_space<vmem>>, vector<8x1x256xf32>
    %161 = vector.shape_cast %160 : vector<8x1x256xf32> to vector<8x256xf32>
    %162 = arith.truncf %161 : vector<8x256xf32> to vector<8x256xbf16>
    %c15_138 = arith.constant 15 : index
    %c0_139 = arith.constant 0 : index
    %c0_140 = arith.constant 0 : index
    %163 = vector.load %arg4[%c15_138, %c0_139, %c0_140] : memref<16x256x128xbf16, #tpu.memory_space<vmem>>, vector<1x256x128xbf16>
    %164 = vector.shape_cast %163 : vector<1x256x128xbf16> to vector<256x128xbf16>
    %cst_141 = arith.constant dense<0.000000e+00> : vector<8x128xf32>
    %165 = tpu.matmul %162, %164, %cst_141 {dimension_numbers = #tpu.dot_dimension_numbers<[1], [0], [0], [1], [0, 0, 1, 1], [], []>} : vector<8x256xbf16>, vector<256x128xbf16>, vector<8x128xf32> -> vector<8x128xf32>
    %166 = arith.addf %159, %165 : vector<8x128xf32>
    %c0_142 = arith.constant 0 : index
    %c0_143 = arith.constant 0 : index
    %167 = vector.load %arg6[%c0_142, %c0_143] : memref<8x128xf32, #tpu.memory_space<vmem>>, vector<8x128xf32>
    tpu.vector_store %arg6[%c0_142, %c0_143], %166 {strides = array<i32>} : memref<8x128xf32, #tpu.memory_space<vmem>>, vector<8x128xf32>,
    return
  }
  func.func @transform_0(%arg0: i32) -> (i32, i32, i32) {
    %c0_i32 = arith.constant 0 : i32
    %c0_i32_0 = arith.constant 0 : i32
    %c0_i32_1 = arith.constant 0 : i32
    return %c0_i32, %c0_i32_0, %arg0 : i32, i32, i32
  }
  func.func @transform_1(%arg0: i32) -> (i32, i32) {
    %c0_i32 = arith.constant 0 : i32
    %c0_i32_0 = arith.constant 0 : i32
    %c0_i32_1 = arith.constant 0 : i32
    return %c0_i32, %c0_i32_0 : i32, i32
  }
  func.func @transform_2(%arg0: i32) -> (i32, i32) {
    %c0_i32 = arith.constant 0 : i32
    %c0_i32_0 = arith.constant 0 : i32
    %c0_i32_1 = arith.constant 0 : i32
    return %c0_i32, %c0_i32_0 : i32, i32
  }
  func.func @transform_3(%arg0: i32) -> (i32, i32, i32) {
    %c0_i32 = arith.constant 0 : i32
    %c0_i32_0 = arith.constant 0 : i32
    %c0_i32_1 = arith.constant 0 : i32
    %c0_i32_2 = arith.constant 0 : i32
    return %c0_i32, %c0_i32_0, %c0_i32_1 : i32, i32, i32
  }
  func.func @transform_4(%arg0: i32) -> (i32, i32) {
    %c0_i32 = arith.constant 0 : i32
    %c0_i32_0 = arith.constant 0 : i32
    %c0_i32_1 = arith.constant 0 : i32
    return %c0_i32, %c0_i32_0 : i32, i32
  }
  func.func @transform_5(%arg0: i32) -> (i32, i32) {
    %c0_i32 = arith.constant 0 : i32
    %c0_i32_0 = arith.constant 0 : i32
    return %arg0, %c0_i32 : i32, i32
  }
}

</mosaic_0001>

<llo_original>
// kernel: convnet4_forward.1
$region0: #{convnet4_forward.1}
  #allocation0 [shape = 'u32[]', space=smem, size = 0x4, offset = 0x4, fixed_abs, tag = 'smem constant byte address 0x4 - core index']
  #allocation1 [shape = 'u32[144,128]{1,0:T(1,128)}', space=vmem, size = 0x12000, scoped, tag = 'internal scratch']
  #allocation2 [shape = 'f32[8,16,256]{2,1,0:T(8,128)}', space=vmem, size = 0x20000, scoped, tag = 'scratch operand']
  %s0 = inlined_call_operand.vmem [shape: bf16[4,32,4096], index: 0, kind: input, shape index: {}]
  %s1 = inlined_call_operand.vmem [shape: bf16[16,32], index: 1, kind: input, shape index: {}]
  %s2 = inlined_call_operand.vmem [shape: f32[16,1], index: 2, kind: input, shape index: {}]
  %s3 = inlined_call_operand.vmem [shape: bf16[16,256,128], index: 3, kind: input, shape index: {}]
  %s4 = inlined_call_operand.vmem [shape: f32[1,128], index: 4, kind: input, shape index: {}]
  %s5 = inlined_call_operand.hbm [shape: f32[16,128], index: 5, kind: output, shape index: {}]
  %s6 = sld [smem:[#allocation0]]
  $region76: #{convnet4_forward.1} parent=0
    _
  %s8 = ssub.s32 1, %s6
  %s9 = scalar_select 0, %s8, %s6
  $region1: #{convnet4_forward.1} parent=0
    #allocation3 [shape = 'u8[1048576]{0}', space=vmem, size = 0x100000, scoped, tag = 'input window, operand 0']
    #allocation4 [shape = 'u8[8192]{0}', space=vmem, size = 0x2000, scoped, tag = 'output window, operand 0']
    #allocation5 [shape = 's32[2]{0}', space=sflag, size = 0x8, scoped, tag = 'scoped memory for convnet4_forward.1']
    %10 = vsyncpa [#allocation5], 0
    %s11 = scalar_lea.sflag [#allocation5], 1
    %12 = vsyncpa %s11, 0
    loop: start=0, step=1, limit=4
    $region2: #{convnet4_forward.1} parent=1 // loop_pre_header
      _
    $region3: #{convnet4_forward.1} parent=1 // loop_header
      %s14 = sphi 0, %s18
      %p15 = scmp.ge.s32.totalorder %s14, 4
      %s24 = sphi 0, %s26
      %s27 = sphi 0, %s24
      %s28 = sphi 0, %s27
      %s44 = sphi 0, %s28
      %s48 = sphi 0, %s48
      %s50 = sphi 0, %s48
      %s51 = sphi 0, %s50
      %s65 = sphi 0, %s51
      %s69 = sphi 0, %s69
      %s71 = sphi 0, %s69
      %s72 = sphi 0, %s71
      %s86 = sphi 0, %s72
      %s90 = sphi 0, %s90
      %s92 = sphi 0, %s90
      %s93 = sphi 0, %s92
      %s107 = sphi 0, %s93
      %s111 = sphi 0, %s111
      %s113 = sphi 0, %s111
      %s114 = sphi 0, %s113
      %s128 = sphi 0, %s114
      %s134 = sphi 0, %s136
      %s137 = sphi 0, %s134
      %s138 = sphi 0, %s137
      %s154 = sphi 0, %s138
    $region4: #{convnet4_forward.1} parent=1 // loop_header_branch
      %17 = sbr.rel (%p15) target = $region8
    $region5: #{convnet4_forward.1} parent=1 // loop_body
      %s19 = ssub.s32 %s14, 1
      %s20 = ssub.s32 %s14, 2
      %s21 = sadd.s32 %s14, 1
      %s22 = ssub.s32 %s14, %s21
      %p23 = scmp.eq.s32.totalorder %s22, 0
      %s25 = sadd.s32 %s24, 1
      %s26 = scalar_select %p23, %s24, %s25
      %p29 = pneg %p23
      %p30 = scmp.eq.s32.totalorder %s14, 1
      %p31 = por %p29, %p30
      %p32 = scmp.ne.s32.totalorder %s24, %s27
      %p33 = scmp.eq.s32.totalorder %s14, 0
      %p34 = por %p32, %p33
      %p35 = scmp.ne.s32.totalorder %s24, %s27
      %p36 = scmp.eq.s32.totalorder %s19, 1
      %p37 = por %p35, %p36
      %p38 = scmp.ne.s32.totalorder %s27, %s28
      %p39 = scmp.eq.s32.totalorder %s19, 0
      %p40 = por %p38, %p39
      %p41 = scmp.ne.s32.totalorder %s27, %s28
      %p42 = scmp.eq.s32.totalorder %s20, 1
      %p43 = por %p41, %p42
      %p45 = scmp.ne.s32.totalorder %s28, %s44
      %p46 = scmp.eq.s32.totalorder %s20, 0
      %p47 = por %p45, %p46
      %s49 = sadd.s32 %s48, 1
      %p52 = scmp.eq.s32.totalorder %s14, 1
      %p53 = scmp.ne.s32.totalorder %s48, %s50
      %p54 = scmp.eq.s32.totalorder %s14, 0
      %p55 = por %p53, %p54
      %p56 = scmp.ne.s32.totalorder %s48, %s50
      %p57 = scmp.eq.s32.totalorder %s19, 1
      %p58 = por %p56, %p57
      %p59 = scmp.ne.s32.totalorder %s50, %s51
      %p60 = scmp.eq.s32.totalorder %s19, 0
      %p61 = por %p59, %p60
      %p62 = scmp.ne.s32.totalorder %s50, %s51
      %p63 = scmp.eq.s32.totalorder %s20, 1
      %p64 = por %p62, %p63
      %p66 = scmp.ne.s32.totalorder %s51, %s65
      %p67 = scmp.eq.s32.totalorder %s20, 0
      %p68 = por %p66, %p67
      %s70 = sadd.s32 %s69, 1
      %p73 = scmp.eq.s32.totalorder %s14, 1
      %p74 = scmp.ne.s32.totalorder %s69, %s71
      %p75 = scmp.eq.s32.totalorder %s14, 0
      %p76 = por %p74, %p75
      %p77 = scmp.ne.s32.totalorder %s69, %s71
      %p78 = scmp.eq.s32.totalorder %s19, 1
      %p79 = por %p77, %p78
      %p80 = scmp.ne.s32.totalorder %s71, %s72
      %p81 = scmp.eq.s32.totalorder %s19, 0
      %p82 = por %p80, %p81
      %p83 = scmp.ne.s32.totalorder %s71, %s72
      %p84 = scmp.eq.s32.totalorder %s20, 1
      %p85 = por %p83, %p84
      %p87 = scmp.ne.s32.totalorder %s72, %s86
      %p88 = scmp.eq.s32.totalorder %s20, 0
      %p89 = por %p87, %p88
      %s91 = sadd.s32 %s90, 1
      %p94 = scmp.eq.s32.totalorder %s14, 1
      %p95 = scmp.ne.s32.totalorder %s90, %s92
      %p96 = scmp.eq.s32.totalorder %s14, 0
      %p97 = por %p95, %p96
      %p98 = scmp.ne.s32.totalorder %s90, %s92
      %p99 = scmp.eq.s32.totalorder %s19, 1
      %p100 = por %p98, %p99
      %p101 = scmp.ne.s32.totalorder %s92, %s93
      %p102 = scmp.eq.s32.totalorder %s19, 0
      %p103 = por %p101, %p102
      %p104 = scmp.ne.s32.totalorder %s92, %s93
      %p105 = scmp.eq.s32.totalorder %s20, 1
      %p106 = por %p104, %p105
      %p108 = scmp.ne.s32.totalorder %s93, %s107
      %p109 = scmp.eq.s32.totalorder %s20, 0
      %p110 = por %p108, %p109
      %s112 = sadd.s32 %s111, 1
      %p115 = scmp.eq.s32.totalorder %s14, 1
      %p116 = scmp.ne.s32.totalorder %s111, %s113
      %p117 = scmp.eq.s32.totalorder %s14, 0
      %p118 = por %p116, %p117
      %p119 = scmp.ne.s32.totalorder %s111, %s113
      %p120 = scmp.eq.s32.totalorder %s19, 1
      %p121 = por %p119, %p120
      %p122 = scmp.ne.s32.totalorder %s113, %s114
      %p123 = scmp.eq.s32.totalorder %s19, 0
      %p124 = por %p122, %p123
      %p125 = scmp.ne.s32.totalorder %s113, %s114
      %p126 = scmp.eq.s32.totalorder %s20, 1
      %p127 = por %p125, %p126
      %p129 = scmp.ne.s32.totalorder %s114, %s128
      %p130 = scmp.eq.s32.totalorder %s20, 0
      %p131 = por %p129, %p130
      %s132 = ssub.s32 %s14, %s21
      %p133 = scmp.eq.s32.totalorder %s132, 0
      %s135 = sadd.s32 %s134, 1
      %s136 = scalar_select %p133, %s134, %s135
      %p139 = pneg %p133
      %p140 = scmp.eq.s32.totalorder %s14, 1
      %p141 = por %p139, %p140
      %p142 = scmp.ne.s32.totalorder %s134, %s137
      %p143 = scmp.eq.s32.totalorder %s14, 0
      %p144 = por %p142, %p143
      %p145 = scmp.ne.s32.totalorder %s134, %s137
      %p146 = scmp.eq.s32.totalorder %s19, 1
      %p147 = por %p145, %p146
      %p148 = scmp.ne.s32.totalorder %s137, %s138
      %p149 = scmp.eq.s32.totalorder %s19, 0
      %p150 = por %p148, %p149
      %p151 = scmp.ne.s32.totalorder %s137, %s138
      %p152 = scmp.eq.s32.totalorder %s20, 1
      %p153 = por %p151, %p152
      %p155 = scmp.ne.s32.totalorder %s138, %s154
      %p156 = scmp.eq.s32.totalorder %s20, 0
      %p157 = por %p155, %p156
      %p158 = scmp.le.s32.totalorder 1, %s14
      %p159 = scmp.lt.s32.totalorder %s14, 3
      %p160 = pnand %p158, %p159
      %p161 = pneg %p160
      // Predicated region
      $region9: #{convnet4_forward.1} parent=5 // pred_check
        _
      $region10: #{convnet4_forward.1} parent=5 // pred_check_branch
        %163 = sbr.rel (%p160) target = $region12
      $region11: #{convnet4_forward.1} parent=5 // pred_region
        %s164 = ssub.s32 %s14, 1
        // Predicated region
        $region13: #{convnet4_forward.1} parent=11 // pred_check
          %p165 = pneg %p61
        $region14: #{convnet4_forward.1} parent=11 // pred_check_branch
          %167 = sbr.rel (%p165) target = $region16
        $region15: #{convnet4_forward.1} parent=11 // pred_region
          _
        $region16: #{convnet4_forward.1} parent=11 // pred_fallthru
          _
        // Predicated region
        $region17: #{convnet4_forward.1} parent=11 // pred_check
          %p168 = pneg %p82
        $region18: #{convnet4_forward.1} parent=11 // pred_check_branch
          %170 = sbr.rel (%p168) target = $region20
        $region19: #{convnet4_forward.1} parent=11 // pred_region
          _
        $region20: #{convnet4_forward.1} parent=11 // pred_fallthru
          _
        // Predicated region
        $region21: #{convnet4_forward.1} parent=11 // pred_check
          %p171 = pneg %p103
        $region22: #{convnet4_forward.1} parent=11 // pred_check_branch
          %173 = sbr.rel (%p171) target = $region24
        $region23: #{convnet4_forward.1} parent=11 // pred_region
          _
        $region24: #{convnet4_forward.1} parent=11 // pred_fallthru
          _
        // Predicated region
        $region25: #{convnet4_forward.1} parent=11 // pred_check
          %p174 = pneg %p124
        $region26: #{convnet4_forward.1} parent=11 // pred_check_branch
          %176 = sbr.rel (%p174) target = $region28
        $region27: #{convnet4_forward.1} parent=11 // pred_region
          _
        $region28: #{convnet4_forward.1} parent=11 // pred_fallthru
          _
      $region12: #{convnet4_forward.1} parent=5 // pred_fallthru
        _
      %p177 = scmp.lt.s32.totalorder %s14, 2
      // Predicated region
      $region29: #{convnet4_forward.1} parent=5 // pred_check
        %p178 = pneg %p177
      $region30: #{convnet4_forward.1} parent=5 // pred_check_branch
        %180 = sbr.rel (%p178) target = $region32
      $region31: #{convnet4_forward.1} parent=5 // pred_region
        // Predicated region
        $region33: #{convnet4_forward.1} parent=31 // pred_check
          %p181 = pneg %p34
        $region34: #{convnet4_forward.1} parent=31 // pred_check_branch
          %183 = sbr.rel (%p181) target = $region36
        $region35: #{convnet4_forward.1} parent=31 // pred_region
          %s184 = sand.u32 %s24, 1
          %s185 = sand.u32 %s24, 1
          %s186 = smul.addr %s185, 1024
          %s187 = scalar_lea.vmem [#allocation3], %s186
          %s188 = smul.u32 16, %s14
          %s189 = smul.addr %s188, 4
          %s190 = scalar_lea.vmem %s0, %s189
          // Predicated region
          $region37: #{convnet4_forward.1} parent=35 // pred_check
            _
          $region38: #{convnet4_forward.1} parent=35 // pred_check_branch
            %192 = sbr.rel (0) target = $region40
          $region39: #{convnet4_forward.1} parent=35 // pred_region
            // Predicated region
            $region41: #{convnet4_forward.1} parent=39 // pred_check
              _
            $region42: #{convnet4_forward.1} parent=39 // pred_check_branch
              %194 = sbr.rel (0) target = $region44
            $region43: #{convnet4_forward.1} parent=39 // pred_region
              loop: start=0, step=1, limit=1
              $region45: #{convnet4_forward.1} parent=43 // loop_pre_header
                _
              $region46: #{convnet4_forward.1} parent=43 // loop_header
                %s196 = sphi 0, %s200
                %p197 = scmp.ge.s32.totalorder %s196, 1
                %s201 = sphi %s190, %s190
                %s202 = sphi %s187, %s187
              $region47: #{convnet4_forward.1} parent=43 // loop_header_branch
                %199 = sbr.rel (%p197) target = $region51
              $region48: #{convnet4_forward.1} parent=43 // loop_body
                %v203 = vld [vmem:[%s201] sm:$0xff]
                %204 = vst [vmem:[%s202] sm:$0xff] %v203
                %v205 = vld [vmem:[%s201 + $0x8] sm:$0xff]
                %206 = vst [vmem:[%s202 + $0x8] sm:$0xff] %v205
                %v207 = vld [vmem:[%s201 + $0x10] sm:$0xff]
                %208 = vst [vmem:[%s202 + $0x10] sm:$0xff] %v207
                %v209 = vld [vmem:[%s201 + $0x18] sm:$0xff]
                %210 = vst [vmem:[%s202 + $0x18] sm:$0xff] %v209
                %v211 = vld [vmem:[%s201 + $0x20] sm:$0xff]
                %212 = vst [vmem:[%s202 + $0x20] sm:$0xff] %v211
                %v213 = vld [vmem:[%s201 + $0x28] sm:$0xff]
                %214 = vst [vmem:[%s202 + $0x28] sm:$0xff] %v213
                %v215 = vld [vmem:[%s201 + $0x30] sm:$0xff]
                %216 = vst [vmem:[%s202 + $0x30] sm:$0xff] %v215
                %v217 = vld [vmem:[%s201 + $0x38] sm:$0xff]
                %218 = vst [vmem:[%s202 + $0x38] sm:$0xff] %v217
                %v219 = vld [vmem:[%s201 + $0x80] sm:$0xff]
                %220 = vst [vmem:[%s202 + $0x40] sm:$0xff] %v219
                %v221 = vld [vmem:[%s201 + $0x88] sm:$0xff]
                %222 = vst [vmem:[%s202 + $0x48] sm:$0xff] %v221
                %v223 = vld [vmem:[%s201 + $0x90] sm:$0xff]
                %224 = vst [vmem:[%s202 + $0x50] sm:$0xff] %v223
                %v225 = vld [vmem:[%s201 + $0x98] sm:$0xff]
                %226 = vst [vmem:[%s202 + $0x58] sm:$0xff] %v225
                %v227 = vld [vmem:[%s201 + $0xa0] sm:$0xff]
                %228 = vst [vmem:[%s202 + $0x60] sm:$0xff] %v227
                %v229 = vld [vmem:[%s201 + $0xa8] sm:$0xff]
                %230 = vst [vmem:[%s202 + $0x68] sm:$0xff] %v229
                %v231 = vld [vmem:[%s201 + $0xb0] sm:$0xff]
                %232 = vst [vmem:[%s202 + $0x70] sm:$0xff] %v231
                %v233 = vld [vmem:[%s201 + $0xb8] sm:$0xff]
                %234 = vst [vmem:[%s202 + $0x78] sm:$0xff] %v233
                %v235 = vld [vmem:[%s201 + $0x100] sm:$0xff]
                %236 = vst [vmem:[%s202 + $0x80] sm:$0xff] %v235
                %v237 = vld [vmem:[%s201 + $0x108] sm:$0xff]
                %238 = vst [vmem:[%s202 + $0x88] sm:$0xff] %v237
                %v239 = vld [vmem:[%s201 + $0x110] sm:$0xff]
                %240 = vst [vmem:[%s202 + $0x90] sm:$0xff] %v239
                %v241 = vld [vmem:[%s201 + $0x118] sm:$0xff]
                %242 = vst [vmem:[%s202 + $0x98] sm:$0xff] %v241
                %v243 = vld [vmem:[%s201 + $0x120] sm:$0xff]
                %244 = vst [vmem:[%s202 + $0xa0] sm:$0xff] %v243
                %v245 = vld [vmem:[%s201 + $0x128] sm:$0xff]
                %246 = vst [vmem:[%s202 + $0xa8] sm:$0xff] %v245
                %v247 = vld [vmem:[%s201 + $0x130] sm:$0xff]
                %248 = vst [vmem:[%s202 + $0xb0] sm:$0xff] %v247
                %v249 = vld [vmem:[%s201 + $0x138] sm:$0xff]
                %250 = vst [vmem:[%s202 + $0xb8] sm:$0xff] %v249
                %v251 = vld [vmem:[%s201 + $0x180] sm:$0xff]
                %252 = vst [vmem:[%s202 + $0xc0] sm:$0xff] %v251
                %v253 = vld [vmem:[%s201 + $0x188] sm:$0xff]
                %254 = vst [vmem:[%s202 + $0xc8] sm:$0xff] %v253
                %v255 = vld [vmem:[%s201 + $0x190] sm:$0xff]
                %256 = vst [vmem:[%s202 + $0xd0] sm:$0xff] %v255
                %v257 = vld [vmem:[%s201 + $0x198] sm:$0xff]
                %258 = vst [vmem:[%s202 + $0xd8] sm:$0xff] %v257
                %v259 = vld [vmem:[%s201 + $0x1a0] sm:$0xff]
                %260 = vst [vmem:[%s202 + $0xe0] sm:$0xff] %v259
                %v261 = vld [vmem:[%s201 + $0x1a8] sm:$0xff]
                %262 = vst [vmem:[%s202 + $0xe8] sm:$0xff] %v261
                %v263 = vld [vmem:[%s201 + $0x1b0] sm:$0xff]
                %264 = vst [vmem:[%s202 + $0xf0] sm:$0xff] %v263
                %v265 = vld [vmem:[%s201 + $0x1b8] sm:$0xff]
                %266 = vst [vmem:[%s202 + $0xf8] sm:$0xff] %v265
                %v267 = vld [vmem:[%s201 + $0x200] sm:$0xff]
                %268 = vst [vmem:[%s202 + $0x100] sm:$0xff] %v267
                %v269 = vld [vmem:[%s201 + $0x208] sm:$0xff]
                %270 = vst [vmem:[%s202 + $0x108] sm:$0xff] %v269
                %v271 = vld [vmem:[%s201 + $0x210] sm:$0xff]
                %272 = vst [vmem:[%s202 + $0x110] sm:$0xff] %v271
                %v273 = vld [vmem:[%s201 + $0x218] sm:$0xff]
                %274 = vst [vmem:[%s202 + $0x118] sm:$0xff] %v273
                %v275 = vld [vmem:[%s201 + $0x220] sm:$0xff]
                %276 = vst [vmem:[%s202 + $0x120] sm:$0xff] %v275
                %v277 = vld [vmem:[%s201 + $0x228] sm:$0xff]
                %278 = vst [vmem:[%s202 + $0x128] sm:$0xff] %v277
                %v279 = vld [vmem:[%s201 + $0x230] sm:$0xff]
                %280 = vst [vmem:[%s202 + $0x130] sm:$0xff] %v279
                %v281 = vld [vmem:[%s201 + $0x238] sm:$0xff]
                %282 = vst [vmem:[%s202 + $0x138] sm:$0xff] %v281
                %v283 = vld [vmem:[%s201 + $0x280] sm:$0xff]
                %284 = vst [vmem:[%s202 + $0x140] sm:$0xff] %v283
                %v285 = vld [vmem:[%s201 + $0x288] sm:$0xff]
                %286 = vst [vmem:[%s202 + $0x148] sm:$0xff] %v285
                %v287 = vld [vmem:[%s201 + $0x290] sm:$0xff]
                %288 = vst [vmem:[%s202 + $0x150] sm:$0xff] %v287
                %v289 = vld [vmem:[%s201 + $0x298] sm:$0xff]
                %290 = vst [vmem:[%s202 + $0x158] sm:$0xff] %v289
                %v291 = vld [vmem:[%s201 + $0x2a0] sm:$0xff]
                %292 = vst [vmem:[%s202 + $0x160] sm:$0xff] %v291
                %v293 = vld [vmem:[%s201 + $0x2a8] sm:$0xff]
                %294 = vst [vmem:[%s202 + $0x168] sm:$0xff] %v293
                %v295 = vld [vmem:[%s201 + $0x2b0] sm:$0xff]
                %296 = vst [vmem:[%s202 + $0x170] sm:$0xff] %v295
                %v297 = vld [vmem:[%s201 + $0x2b8] sm:$0xff]
                %298 = vst [vmem:[%s202 + $0x178] sm:$0xff] %v297
                %v299 = vld [vmem:[%s201 + $0x300] sm:$0xff]
                %300 = vst [vmem:[%s202 + $0x180] sm:$0xff] %v299
                %v301 = vld [vmem:[%s201 + $0x308] sm:$0xff]
                %302 = vst [vmem:[%s202 + $0x188] sm:$0xff] %v301
                %v303 = vld [vmem:[%s201 + $0x310] sm:$0xff]
                %304 = vst [vmem:[%s202 + $0x190] sm:$0xff] %v303
                %v305 = vld [vmem:[%s201 + $0x318] sm:$0xff]
                %306 = vst [vmem:[%s202 + $0x198] sm:$0xff] %v305
                %v307 = vld [vmem:[%s201 + $0x320] sm:$0xff]
                %308 = vst [vmem:[%s202 + $0x1a0] sm:$0xff] %v307
                %v309 = vld [vmem:[%s201 + $0x328] sm:$0xff]
                %310 = vst [vmem:[%s202 + $0x1a8] sm:$0xff] %v309
                %v311 = vld [vmem:[%s201 + $0x330] sm:$0xff]
                %312 = vst [vmem:[%s202 + $0x1b0] sm:$0xff] %v311
                %v313 = vld [vmem:[%s201 + $0x338] sm:$0xff]
                %314 = vst [vmem:[%s202 + $0x1b8] sm:$0xff] %v313
                %v315 = vld [vmem:[%s201 + $0x380] sm:$0xff]
                %316 = vst [vmem:[%s202 + $0x1c0] sm:$0xff] %v315
                %v317 = vld [vmem:[%s201 + $0x388] sm:$0xff]
                %318 = vst [vmem:[%s202 + $0x1c8] sm:$0xff] %v317
                %v319 = vld [vmem:[%s201 + $0x390] sm:$0xff]
                %320 = vst [vmem:[%s202 + $0x1d0] sm:$0xff] %v319
                %v321 = vld [vmem:[%s201 + $0x398] sm:$0xff]
                %322 = vst [vmem:[%s202 + $0x1d8] sm:$0xff] %v321
                %v323 = vld [vmem:[%s201 + $0x3a0] sm:$0xff]
                %324 = vst [vmem:[%s202 + $0x1e0] sm:$0xff] %v323
                %v325 = vld [vmem:[%s201 + $0x3a8] sm:$0xff]
                %326 = vst [vmem:[%s202 + $0x1e8] sm:$0xff] %v325
                %v327 = vld [vmem:[%s201 + $0x3b0] sm:$0xff]
                %328 = vst [vmem:[%s202 + $0x1f0] sm:$0xff] %v327
                %v329 = vld [vmem:[%s201 + $0x3b8] sm:$0xff]
                %330 = vst [vmem:[%s202 + $0x1f8] sm:$0xff] %v329
                %v331 = vld [vmem:[%s201 + $0x400] sm:$0xff]
                %332 = vst [vmem:[%s202 + $0x200] sm:$0xff] %v331
                %v333 = vld [vmem:[%s201 + $0x408] sm:$0xff]
                %334 = vst [vmem:[%s202 + $0x208] sm:$0xff] %v333
                %v335 = vld [vmem:[%s201 + $0x410] sm:$0xff]
                %336 = vst [vmem:[%s202 + $0x210] sm:$0xff] %v335
                %v337 = vld [vmem:[%s201 + $0x418] sm:$0xff]
                %338 = vst [vmem:[%s202 + $0x218] sm:$0xff] %v337
                %v339 = vld [vmem:[%s201 + $0x420] sm:$0xff]
                %340 = vst [vmem:[%s202 + $0x220] sm:$0xff] %v339
                %v341 = vld [vmem:[%s201 + $0x428] sm:$0xff]
                %342 = vst [vmem:[%s202 + $0x228] sm:$0xff] %v341
                %v343 = vld [vmem:[%s201 + $0x430] sm:$0xff]
                %344 = vst [vmem:[%s202 + $0x230] sm:$0xff] %v343
                %v345 = vld [vmem:[%s201 + $0x438] sm:$0xff]
                %346 = vst [vmem:[%s202 + $0x238] sm:$0xff] %v345
                %v347 = vld [vmem:[%s201 + $0x480] sm:$0xff]
                %348 = vst [vmem:[%s202 + $0x240] sm:$0xff] %v347
                %v349 = vld [vmem:[%s201 + $0x488] sm:$0xff]
                %350 = vst [vmem:[%s202 + $0x248] sm:$0xff] %v349
                %v351 = vld [vmem:[%s201 + $0x490] sm:$0xff]
                %352 = vst [vmem:[%s202 + $0x250] sm:$0xff] %v351
                %v353 = vld [vmem:[%s201 + $0x498] sm:$0xff]
                %354 = vst [vmem:[%s202 + $0x258] sm:$0xff] %v353
                %v355 = vld [vmem:[%s201 + $0x4a0] sm:$0xff]
                %356 = vst [vmem:[%s202 + $0x260] sm:$0xff] %v355
                %v357 = vld [vmem:[%s201 + $0x4a8] sm:$0xff]
                %358 = vst [vmem:[%s202 + $0x268] sm:$0xff] %v357
                %v359 = vld [vmem:[%s201 + $0x4b0] sm:$0xff]
                %360 = vst [vmem:[%s202 + $0x270] sm:$0xff] %v359
                %v361 = vld [vmem:[%s201 + $0x4b8] sm:$0xff]
                %362 = vst [vmem:[%s202 + $0x278] sm:$0xff] %v361
                %v363 = vld [vmem:[%s201 + $0x500] sm:$0xff]
                %364 = vst [vmem:[%s202 + $0x280] sm:$0xff] %v363
                %v365 = vld [vmem:[%s201 + $0x508] sm:$0xff]
                %366 = vst [vmem:[%s202 + $0x288] sm:$0xff] %v365
                %v367 = vld [vmem:[%s201 + $0x510] sm:$0xff]
                %368 = vst [vmem:[%s202 + $0x290] sm:$0xff] %v367
                %v369 = vld [vmem:[%s201 + $0x518] sm:$0xff]
                %370 = vst [vmem:[%s202 + $0x298] sm:$0xff] %v369
                %v371 = vld [vmem:[%s201 + $0x520] sm:$0xff]
                %372 = vst [vmem:[%s202 + $0x2a0] sm:$0xff] %v371
                %v373 = vld [vmem:[%s201 + $0x528] sm:$0xff]
                %374 = vst [vmem:[%s202 + $0x2a8] sm:$0xff] %v373
                %v375 = vld [vmem:[%s201 + $0x530] sm:$0xff]
                %376 = vst [vmem:[%s202 + $0x2b0] sm:$0xff] %v375
                %v377 = vld [vmem:[%s201 + $0x538] sm:$0xff]
                %378 = vst [vmem:[%s202 + $0x2b8] sm:$0xff] %v377
                %v379 = vld [vmem:[%s201 + $0x580] sm:$0xff]
                %380 = vst [vmem:[%s202 + $0x2c0] sm:$0xff] %v379
                %v381 = vld [vmem:[%s201 + $0x588] sm:$0xff]
                %382 = vst [vmem:[%s202 + $0x2c8] sm:$0xff] %v381
                %v383 = vld [vmem:[%s201 + $0x590] sm:$0xff]
                %384 = vst [vmem:[%s202 + $0x2d0] sm:$0xff] %v383
                %v385 = vld [vmem:[%s201 + $0x598] sm:$0xff]
                %386 = vst [vmem:[%s202 + $0x2d8] sm:$0xff] %v385
                %v387 = vld [vmem:[%s201 + $0x5a0] sm:$0xff]
                %388 = vst [vmem:[%s202 + $0x2e0] sm:$0xff] %v387
                %v389 = vld [vmem:[%s201 + $0x5a8] sm:$0xff]
                %390 = vst [vmem:[%s202 + $0x2e8] sm:$0xff] %v389
                %v391 = vld [vmem:[%s201 + $0x5b0] sm:$0xff]
                %392 = vst [vmem:[%s202 + $0x2f0] sm:$0xff] %v391
                %v393 = vld [vmem:[%s201 + $0x5b8] sm:$0xff]
                %394 = vst [vmem:[%s202 + $0x2f8] sm:$0xff] %v393
                %v395 = vld [vmem:[%s201 + $0x600] sm:$0xff]
                %396 = vst [vmem:[%s202 + $0x300] sm:$0xff] %v395
                %v397 = vld [vmem:[%s201 + $0x608] sm:$0xff]
                %398 = vst [vmem:[%s202 + $0x308] sm:$0xff] %v397
                %v399 = vld [vmem:[%s201 + $0x610] sm:$0xff]
                %400 = vst [vmem:[%s202 + $0x310] sm:$0xff] %v399
                %v401 = vld [vmem:[%s201 + $0x618] sm:$0xff]
                %402 = vst [vmem:[%s202 + $0x318] sm:$0xff] %v401
                %v403 = vld [vmem:[%s201 + $0x620] sm:$0xff]
                %404 = vst [vmem:[%s202 + $0x320] sm:$0xff] %v403
                %v405 = vld [vmem:[%s201 + $0x628] sm:$0xff]
                %406 = vst [vmem:[%s202 + $0x328] sm:$0xff] %v405
                %v407 = vld [vmem:[%s201 + $0x630] sm:$0xff]
                %408 = vst [vmem:[%s202 + $0x330] sm:$0xff] %v407
                %v409 = vld [vmem:[%s201 + $0x638] sm:$0xff]
                %410 = vst [vmem:[%s202 + $0x338] sm:$0xff] %v409
                %v411 = vld [vmem:[%s201 + $0x680] sm:$0xff]
                %412 = vst [vmem:[%s202 + $0x340] sm:$0xff] %v411
                %v413 = vld [vmem:[%s201 + $0x688] sm:$0xff]
                %414 = vst [vmem:[%s202 + $0x348] sm:$0xff] %v413
                %v415 = vld [vmem:[%s201 + $0x690] sm:$0xff]
                %416 = vst [vmem:[%s202 + $0x350] sm:$0xff] %v415
                %v417 = vld [vmem:[%s201 + $0x698] sm:$0xff]
                %418 = vst [vmem:[%s202 + $0x358] sm:$0xff] %v417
                %v419 = vld [vmem:[%s201 + $0x6a0] sm:$0xff]
                %420 = vst [vmem:[%s202 + $0x360] sm:$0xff] %v419
                %v421 = vld [vmem:[%s201 + $0x6a8] sm:$0xff]
                %422 = vst [vmem:[%s202 + $0x368] sm:$0xff] %v421
                %v423 = vld [vmem:[%s201 + $0x6b0] sm:$0xff]
                %424 = vst [vmem:[%s202 + $0x370] sm:$0xff] %v423
                %v425 = vld [vmem:[%s201 + $0x6b8] sm:$0xff]
                %426 = vst [vmem:[%s202 + $0x378] sm:$0xff] %v425
                %v427 = vld [vmem:[%s201 + $0x700] sm:$0xff]
                %428 = vst [vmem:[%s202 + $0x380] sm:$0xff] %v427
                %v429 = vld [vmem:[%s201 + $0x708] sm:$0xff]
                %430 = vst [vmem:[%s202 + $0x388] sm:$0xff] %v429
                %v431 = vld [vmem:[%s201 + $0x710] sm:$0xff]
                %432 = vst [vmem:[%s202 + $0x390] sm:$0xff] %v431
                %v433 = vld [vmem:[%s201 + $0x718] sm:$0xff]
                %434 = vst [vmem:[%s202 + $0x398] sm:$0xff] %v433
                %v435 = vld [vmem:[%s201 + $0x720] sm:$0xff]
                %436 = vst [vmem:[%s202 + $0x3a0] sm:$0xff] %v435
                %v437 = vld [vmem:[%s201 + $0x728] sm:$0xff]
                %438 = vst [vmem:[%s202 + $0x3a8] sm:$0xff] %v437
                %v439 = vld [vmem:[%s201 + $0x730] sm:$0xff]
                %440 = vst [vmem:[%s202 + $0x3b0] sm:$0xff] %v439
                %v441 = vld [vmem:[%s201 + $0x738] sm:$0xff]
                %442 = vst [vmem:[%s202 + $0x3b8] sm:$0xff] %v441
                %v443 = vld [vmem:[%s201 + $0x780] sm:$0xff]
                %444 = vst [vmem:[%s202 + $0x3c0] sm:$0xff] %v443
                %v445 = vld [vmem:[%s201 + $0x788] sm:$0xff]
                %446 = vst [vmem:[%s202 + $0x3c8] sm:$0xff] %v445
                %v447 = vld [vmem:[%s201 + $0x790] sm:$0xff]
                %448 = vst [vmem:[%s202 + $0x3d0] sm:$0xff] %v447
                %v449 = vld [vmem:[%s201 + $0x798] sm:$0xff]
                %450 = vst [vmem:[%s202 + $0x3d8] sm:$0xff] %v449
                %v451 = vld [vmem:[%s201 + $0x7a0] sm:$0xff]
                %452 = vst [vmem:[%s202 + $0x3e0] sm:$0xff] %v451
                %v453 = vld [vmem:[%s201 + $0x7a8] sm:$0xff]
                %454 = vst [vmem:[%s202 + $0x3e8] sm:$0xff] %v453
                %v455 = vld [vmem:[%s201 + $0x7b0] sm:$0xff]
                %456 = vst [vmem:[%s202 + $0x3f0] sm:$0xff] %v455
                %v457 = vld [vmem:[%s201 + $0x7b8] sm:$0xff]
                %458 = vst [vmem:[%s202 + $0x3f8] sm:$0xff] %v457
              $region49: #{convnet4_forward.1} parent=43 // loop_footer
                %s200 = sadd.s32 1, %s196
              $region50: #{convnet4_forward.1} parent=43 // loop_footer_branch
                %195 = sbr.rel target = $region46
              $region51: #{convnet4_forward.1} parent=43 // loop_exit
                _
            $region44: #{convnet4_forward.1} parent=39 // pred_fallthru
              _
            // Predicated region
            $region52: #{convnet4_forward.1} parent=39 // pred_check
              _
            $region53: #{convnet4_forward.1} parent=39 // pred_check_branch
              %460 = sbr.rel target = $region55
            $region54: #{convnet4_forward.1} parent=39 // pred_region
              _
            $region55: #{convnet4_forward.1} parent=39 // pred_fallthru
              _
          $region40: #{convnet4_forward.1} parent=35 // pred_fallthru
            _
          %461 = vnop
        $region36: #{convnet4_forward.1} parent=31 // pred_fallthru
          _
      $region32: #{convnet4_forward.1} parent=5 // pred_fallthru
        _
      %p462 = scmp.le.s32.totalorder 1, %s14
      %p463 = scmp.lt.s32.totalorder %s14, 3
      %p464 = pnand %p462, %p463
      %p465 = pneg %p464
      // Predicated region
      $region56: #{convnet4_forward.1} parent=5 // pred_check
        _
      $region57: #{convnet4_forward.1} parent=5 // pred_check_branch
        %467 = sbr.rel (%p464) target = $region59
      $region58: #{convnet4_forward.1} parent=5 // pred_region
        %s468 = ssub.s32 %s14, 1
        %s469 = sand.u32 %s27, 1
        %s470 = sand.u32 %s27, 1
        %s471 = smul.addr %s470, 1024
        %s472 = scalar_lea.vmem [#allocation3], %s471
        // Predicated region
        $region60: #{convnet4_forward.1} parent=58 // pred_check
          %p473 = pneg %p40
        $region61: #{convnet4_forward.1} parent=58 // pred_check_branch
          %475 = sbr.rel (%p473) target = $region63
        $region62: #{convnet4_forward.1} parent=58 // pred_region
          _
        $region63: #{convnet4_forward.1} parent=58 // pred_fallthru
          _
        %s476 = sand.u32 %s27, 1
        %s477 = sand.u32 %s27, 1
        %s478 = smul.addr %s477, 1024
        %s479 = scalar_lea.vmem [#allocation3], %s478
        %p480 = pneg %p40
        %p481 = pneg %p37
        %p482 = pneg %p61
        %p483 = pneg %p58
        %p484 = pneg %p82
        %p485 = pneg %p79
        %p486 = pneg %p103
        %p487 = pneg %p100
        %p488 = pneg %p124
        %p489 = pneg %p121
        %p490 = pneg %p150
        %p491 = pneg %p147
        %s492 = sand.u32 %s137, 1
        %s493 = scalar_lea.sflag [#allocation5], %s492
        %s494 = sand.u32 %s137, 1
        %s495 = smul.addr %s494, 8
        %s496 = scalar_lea.vmem [#allocation4], %s495
        %s497 = smul.u32 16, %s19
        %v499 = vld [vmem:[%s1] sm:$0xf]
        %v500 = vld [vmem:[%s1 + $0x4] sm:$0xf]
        %v501 = vld [vmem:[%s472] sm:$0xff]
        %v502 = vld [vmem:[%s472 + $0x8] sm:$0xff]
        %v503 = vld [vmem:[%s472 + $0x10] sm:$0xff]
        %v504 = vld [vmem:[%s472 + $0x18] sm:$0xff]
        %v505 = vld [vmem:[%s472 + $0x20] sm:$0xff]
        %v506 = vld [vmem:[%s472 + $0x28] sm:$0xff]
        %v507 = vld [vmem:[%s472 + $0x30] sm:$0xff]
        %v508 = vld [vmem:[%s472 + $0x38] sm:$0xff]
        %v509 = vld [vmem:[%s472 + $0x40] sm:$0xff]
        %v510 = vld [vmem:[%s472 + $0x48] sm:$0xff]
        %v511 = vld [vmem:[%s472 + $0x50] sm:$0xff]
        %v512 = vld [vmem:[%s472 + $0x58] sm:$0xff]
        %v513 = vld [vmem:[%s472 + $0x60] sm:$0xff]
        %v514 = vld [vmem:[%s472 + $0x68] sm:$0xff]
        %v515 = vld [vmem:[%s472 + $0x70] sm:$0xff]
        %v516 = vld [vmem:[%s472 + $0x78] sm:$0xff]
        %v517 = vld [vmem:[%s472 + $0x80] sm:$0xff]
        %v518 = vld [vmem:[%s472 + $0x88] sm:$0xff]
        %v519 = vld [vmem:[%s472 + $0x90] sm:$0xff]
        %v520 = vld [vmem:[%s472 + $0x98] sm:$0xff]
        %v521 = vld [vmem:[%s472 + $0xa0] sm:$0xff]
        %v522 = vld [vmem:[%s472 + $0xa8] sm:$0xff]
        %v523 = vld [vmem:[%s472 + $0xb0] sm:$0xff]
        %v524 = vld [vmem:[%s472 + $0xb8] sm:$0xff]
        %v525 = vld [vmem:[%s472 + $0xc0] sm:$0xff]
        %v526 = vld [vmem:[%s472 + $0xc8] sm:$0xff]
        %v527 = vld [vmem:[%s472 + $0xd0] sm:$0xff]
        %v528 = vld [vmem:[%s472 + $0xd8] sm:$0xff]
        %v529 = vld [vmem:[%s472 + $0xe0] sm:$0xff]
        %v530 = vld [vmem:[%s472 + $0xe8] sm:$0xff]
        %v531 = vld [vmem:[%s472 + $0xf0] sm:$0xff]
        %v532 = vld [vmem:[%s472 + $0xf8] sm:$0xff]
        %v535 = vunpack.c.l.b16 %v499
        %v536 = vunpack.c.l.b16 %v500
        %v537 = vpack.c.b16 %v536, %v535
        %v570 = vunpack.c.l.b16 %v501
        %v571 = vunpack.c.h.b16 %v501
        %v572 = vunpack.c.l.b16 %v502
        %v573 = vunpack.c.h.b16 %v502
        %v574 = vunpack.c.l.b16 %v503
        %v575 = vunpack.c.h.b16 %v503
        %v576 = vunpack.c.l.b16 %v504
        %v577 = vunpack.c.h.b16 %v504
        %v578 = vunpack.c.l.b16 %v505
        %v579 = vunpack.c.h.b16 %v505
        %v580 = vunpack.c.l.b16 %v506
        %v581 = vunpack.c.h.b16 %v506
        %v582 = vunpack.c.l.b16 %v507
        %v583 = vunpack.c.h.b16 %v507
        %v584 = vunpack.c.l.b16 %v508
        %v585 = vunpack.c.h.b16 %v508
        %v586 = vunpack.c.l.b16 %v509
        %v587 = vunpack.c.h.b16 %v509
        %v588 = vunpack.c.l.b16 %v510
        %v589 = vunpack.c.h.b16 %v510
        %v590 = vunpack.c.l.b16 %v511
        %v591 = vunpack.c.h.b16 %v511
        %v592 = vunpack.c.l.b16 %v512
        %v593 = vunpack.c.h.b16 %v512
        %v594 = vunpack.c.l.b16 %v513
        %v595 = vunpack.c.h.b16 %v513
        %v596 = vunpack.c.l.b16 %v514
        %v597 = vunpack.c.h.b16 %v514
        %v598 = vunpack.c.l.b16 %v515
        %v599 = vunpack.c.h.b16 %v515
        %v600 = vunpack.c.l.b16 %v516
        %v601 = vunpack.c.h.b16 %v516
        %v602 = vunpack.c.l.b16 %v517
        %v603 = vunpack.c.h.b16 %v517
        %v604 = vunpack.c.l.b16 %v518
        %v605 = vunpack.c.h.b16 %v518
        %v606 = vunpack.c.l.b16 %v519
        %v607 = vunpack.c.h.b16 %v519
        %v608 = vunpack.c.l.b16 %v520
        %v609 = vunpack.c.h.b16 %v520
        %v610 = vunpack.c.l.b16 %v521
        %v611 = vunpack.c.h.b16 %v521
        %v612 = vunpack.c.l.b16 %v522
        %v613 = vunpack.c.h.b16 %v522
        %v614 = vunpack.c.l.b16 %v523
        %v615 = vunpack.c.h.b16 %v523
        %v616 = vunpack.c.l.b16 %v524
        %v617 = vunpack.c.h.b16 %v524
        %v618 = vunpack.c.l.b16 %v525
        %v619 = vunpack.c.h.b16 %v525
        %v620 = vunpack.c.l.b16 %v526
        %v621 = vunpack.c.h.b16 %v526
        %v622 = vunpack.c.l.b16 %v527
        %v623 = vunpack.c.h.b16 %v527
        %v624 = vunpack.c.l.b16 %v528
        %v625 = vunpack.c.h.b16 %v528
        %v626 = vunpack.c.l.b16 %v529
        %v627 = vunpack.c.h.b16 %v529
        %v628 = vunpack.c.l.b16 %v530
        %v629 = vunpack.c.h.b16 %v530
        %v630 = vunpack.c.l.b16 %v531
        %v631 = vunpack.c.h.b16 %v531
        %v632 = vunpack.c.l.b16 %v532
        %v633 = vunpack.c.h.b16 %v532
        %v634 = vpack.c.b16 %v586, %v570
        %v635 = vpack.c.b16 %v587, %v571
        %v636 = vpack.c.b16 %v588, %v572
        %v637 = vpack.c.b16 %v589, %v573
        %v638 = vpack.c.b16 %v590, %v574
        %v639 = vpack.c.b16 %v591, %v575
        %v640 = vpack.c.b16 %v592, %v576
        %v641 = vpack.c.b16 %v593, %v577
        %v642 = vpack.c.b16 %v594, %v578
        %v643 = vpack.c.b16 %v595, %v579
        %v644 = vpack.c.b16 %v596, %v580
        %v645 = vpack.c.b16 %v597, %v581
        %v646 = vpack.c.b16 %v598, %v582
        %v647 = vpack.c.b16 %v599, %v583
        %v648 = vpack.c.b16 %v600, %v584
        %v649 = vpack.c.b16 %v601, %v585
        %v650 = vpack.c.b16 %v618, %v602
        %v651 = vpack.c.b16 %v619, %v603
        %v652 = vpack.c.b16 %v620, %v604
        %v653 = vpack.c.b16 %v621, %v605
        %v654 = vpack.c.b16 %v622, %v606
        %v655 = vpack.c.b16 %v623, %v607
        %v656 = vpack.c.b16 %v624, %v608
        %v657 = vpack.c.b16 %v625, %v609
        %v658 = vpack.c.b16 %v626, %v610
        %v659 = vpack.c.b16 %v627, %v611
        %v660 = vpack.c.b16 %v628, %v612
        %v661 = vpack.c.b16 %v629, %v613
        %v662 = vpack.c.b16 %v630, %v614
        %v663 = vpack.c.b16 %v631, %v615
        %v664 = vpack.c.b16 %v632, %v616
        %v665 = vpack.c.b16 %v633, %v617
        %vm698 = vcmask 261120
        %v700 = vsel %vm698, %v537, 0
        %702 = vmatprep.subr.bf16.mxu0 0
        %703 = vmatpush1.bf16.msra.mxu0 0
        %704 = vmatprep.subr.bf16.mxu0 0
        %705 = vmatpush1.bf16.msra.mxu0 0
        %706 = vmatprep.subr.bf16.mxu0 0
        %707 = vmatpush1.bf16.msra.mxu0 0
        %708 = vmatprep.subr.bf16.mxu0 0
        %709 = vmatpush1.bf16.msra.mxu0 0
        %710 = vmatprep.subr.bf16.mxu0 0
        %711 = vmatpush1.bf16.msra.mxu0 0
        %712 = vmatprep.subr.bf16.mxu0 0
        %713 = vmatpush1.bf16.msra.mxu0 0
        %714 = vmatprep.subr.bf16.mxu0 %v651
        %715 = vmatpush1.bf16.msra.mxu0 %v650
        %716 = vmatprep.subr.bf16.mxu0 %v635
        %717 = vmatpush1.bf16.msra.mxu0 %v634
        %718 = vmatprep.subr.bf16.mxu0 0
        %719 = vmatpush2.bf16.msra.mxu0 0
        %720 = vmatprep.subr.bf16.mxu0 0
        %721 = vmatpush2.bf16.msra.mxu0 0
        %722 = vmatprep.subr.bf16.mxu0 0
        %723 = vmatpush2.bf16.msra.mxu0 0
        %724 = vmatprep.subr.bf16.mxu0 0
        %725 = vmatpush2.bf16.msra.mxu0 0
        %726 = vmatprep.subr.bf16.mxu0 0
        %727 = vmatpush2.bf16.msra.mxu0 0
        %728 = vmatprep.subr.bf16.mxu0 0
        %729 = vmatpush2.bf16.msra.mxu0 0
        %730 = vmatprep.subr.bf16.mxu0 0
        %731 = vmatpush2.bf16.msra.mxu0 0
        %732 = vmatprep.subr.bf16.mxu0 0
        %733 = vmatpush2.bf16.msra.mxu0 0
        %734 = vmatprep.mubr.bf16.mxu0 0
        %735 = vmatmul.mubr.bf16.gmra.mxu0 %v700
        %v736 = vpop.f32.mrf.mxu0
        %v737 = vadd.f32 0.0, %v736
        %v738 = vpop.f32.mrf.mxu0
        %v739 = vadd.f32 0.0, %v738
        %v740 = vpop.f32.mrf.mxu0
        %v741 = vadd.f32 0.0, %v740
        %v742 = vpop.f32.mrf.mxu0
        %v743 = vadd.f32 0.0, %v742
        %744 = vdwg.mxu0
        %745 = vmatprep.subr.bf16.mxu0 0
        %746 = vmatpush1.bf16.msra.mxu0 0
        %747 = vmatprep.subr.bf16.mxu0 0
        %748 = vmatpush1.bf16.msra.mxu0 0
        %749 = vmatprep.subr.bf16.mxu0 0
        %750 = vmatpush1.bf16.msra.mxu0 0
        %751 = vmatprep.subr.bf16.mxu0 0
        %752 = vmatpush1.bf16.msra.mxu0 0
        %753 = vmatprep.subr.bf16.mxu0 0
        %754 = vmatpush1.bf16.msra.mxu0 0
        %755 = vmatprep.subr.bf16.mxu0 0
        %756 = vmatpush1.bf16.msra.mxu0 0
        %757 = vmatprep.subr.bf16.mxu0 %v653
        %758 = vmatpush1.bf16.msra.mxu0 %v652
        %759 = vmatprep.subr.bf16.mxu0 %v637
        %760 = vmatpush1.bf16.msra.mxu0 %v636
        %761 = vmatprep.subr.bf16.mxu0 0
        %762 = vmatpush2.bf16.msra.mxu0 0
        %763 = vmatprep.subr.bf16.mxu0 0
        %764 = vmatpush2.bf16.msra.mxu0 0
        %765 = vmatprep.subr.bf16.mxu0 0
        %766 = vmatpush2.bf16.msra.mxu0 0
        %767 = vmatprep.subr.bf16.mxu0 0
        %768 = vmatpush2.bf16.msra.mxu0 0
        %769 = vmatprep.subr.bf16.mxu0 0
        %770 = vmatpush2.bf16.msra.mxu0 0
        %771 = vmatprep.subr.bf16.mxu0 0
        %772 = vmatpush2.bf16.msra.mxu0 0
        %773 = vmatprep.subr.bf16.mxu0 0
        %774 = vmatpush2.bf16.msra.mxu0 0
        %775 = vmatprep.subr.bf16.mxu0 0
        %776 = vmatpush2.bf16.msra.mxu0 0
        %777 = vmatprep.mubr.bf16.mxu0 0
        %778 = vmatmul.mubr.bf16.gmra.mxu0 %v700
        %v779 = vpop.f32.mrf.mxu0
        %v780 = vadd.f32 0.0, %v779
        %v781 = vpop.f32.mrf.mxu0
        %v782 = vadd.f32 0.0, %v781
        %v783 = vpop.f32.mrf.mxu0
        %v784 = vadd.f32 0.0, %v783
        %v785 = vpop.f32.mrf.mxu0
        %v786 = vadd.f32 0.0, %v785
        %787 = vdwg.mxu0
        %788 = vmatprep.subr.bf16.mxu0 0
        %789 = vmatpush1.bf16.msra.mxu0 0
        %790 = vmatprep.subr.bf16.mxu0 0
        %791 = vmatpush1.bf16.msra.mxu0 0
        %792 = vmatprep.subr.bf16.mxu0 0
        %793 = vmatpush1.bf16.msra.mxu0 0
        %794 = vmatprep.subr.bf16.mxu0 0
        %795 = vmatpush1.bf16.msra.mxu0 0
        %796 = vmatprep.subr.bf16.mxu0 0
        %797 = vmatpush1.bf16.msra.mxu0 0
        %798 = vmatprep.subr.bf16.mxu0 0
        %799 = vmatpush1.bf16.msra.mxu0 0
        %800 = vmatprep.subr.bf16.mxu0 %v655
        %801 = vmatpush1.bf16.msra.mxu0 %v654
        %802 = vmatprep.subr.bf16.mxu0 %v639
        %803 = vmatpush1.bf16.msra.mxu0 %v638
        %804 = vmatprep.subr.bf16.mxu0 0
        %805 = vmatpush2.bf16.msra.mxu0 0
        %806 = vmatprep.subr.bf16.mxu0 0
        %807 = vmatpush2.bf16.msra.mxu0 0
        %808 = vmatprep.subr.bf16.mxu0 0
        %809 = vmatpush2.bf16.msra.mxu0 0
        %810 = vmatprep.subr.bf16.mxu0 0
        %811 = vmatpush2.bf16.msra.mxu0 0
        %812 = vmatprep.subr.bf16.mxu0 0
        %813 = vmatpush2.bf16.msra.mxu0 0
        %814 = vmatprep.subr.bf16.mxu0 0
        %815 = vmatpush2.bf16.msra.mxu0 0
        %816 = vmatprep.subr.bf16.mxu0 0
        %817 = vmatpush2.bf16.msra.mxu0 0
        %818 = vmatprep.subr.bf16.mxu0 0
        %819 = vmatpush2.bf16.msra.mxu0 0
        %820 = vmatprep.mubr.bf16.mxu0 0
        %821 = vmatmul.mubr.bf16.gmra.mxu0 %v700
        %v822 = vpop.f32.mrf.mxu0
        %v823 = vadd.f32 0.0, %v822
        %v824 = vpop.f32.mrf.mxu0
        %v825 = vadd.f32 0.0, %v824
        %v826 = vpop.f32.mrf.mxu0
        %v827 = vadd.f32 0.0, %v826
        %v828 = vpop.f32.mrf.mxu0
        %v829 = vadd.f32 0.0, %v828
        %830 = vdwg.mxu0
        %831 = vmatprep.subr.bf16.mxu0 0
        %832 = vmatpush1.bf16.msra.mxu0 0
        %833 = vmatprep.subr.bf16.mxu0 0
        %834 = vmatpush1.bf16.msra.mxu0 0
        %835 = vmatprep.subr.bf16.mxu0 0
        %836 = vmatpush1.bf16.msra.mxu0 0
        %837 = vmatprep.subr.bf16.mxu0 0
        %838 = vmatpush1.bf16.msra.mxu0 0
        %839 = vmatprep.subr.bf16.mxu0 0
        %840 = vmatpush1.bf16.msra.mxu0 0
        %841 = vmatprep.subr.bf16.mxu0 0
        %842 = vmatpush1.bf16.msra.mxu0 0
        %843 = vmatprep.subr.bf16.mxu0 %v657
        %844 = vmatpush1.bf16.msra.mxu0 %v656
        %845 = vmatprep.subr.bf16.mxu0 %v641
        %846 = vmatpush1.bf16.msra.mxu0 %v640
        %847 = vmatprep.subr.bf16.mxu0 0
        %848 = vmatpush2.bf16.msra.mxu0 0
        %849 = vmatprep.subr.bf16.mxu0 0
        %850 = vmatpush2.bf16.msra.mxu0 0
        %851 = vmatprep.subr.bf16.mxu0 0
        %852 = vmatpush2.bf16.msra.mxu0 0
        %853 = vmatprep.subr.bf16.mxu0 0
        %854 = vmatpush2.bf16.msra.mxu0 0
        %855 = vmatprep.subr.bf16.mxu0 0
        %856 = vmatpush2.bf16.msra.mxu0 0
        %857 = vmatprep.subr.bf16.mxu0 0
        %858 = vmatpush2.bf16.msra.mxu0 0
        %859 = vmatprep.subr.bf16.mxu0 0
        %860 = vmatpush2.bf16.msra.mxu0 0
        %861 = vmatprep.subr.bf16.mxu0 0
        %862 = vmatpush2.bf16.msra.mxu0 0
        %863 = vmatprep.mubr.bf16.mxu0 0
        %864 = vmatmul.mubr.bf16.gmra.mxu0 %v700
        %v865 = vpop.f32.mrf.mxu0
        %v866 = vadd.f32 0.0, %v865
        %v867 = vpop.f32.mrf.mxu0
        %v868 = vadd.f32 0.0, %v867
        %v869 = vpop.f32.mrf.mxu0
        %v870 = vadd.f32 0.0, %v869
        %v871 = vpop.f32.mrf.mxu0
        %v872 = vadd.f32 0.0, %v871
        %873 = vdwg.mxu0
        %874 = vmatprep.subr.bf16.mxu0 0
        %875 = vmatpush1.bf16.msra.mxu0 0
        %876 = vmatprep.subr.bf16.mxu0 0
        %877 = vmatpush1.bf16.msra.mxu0 0
        %878 = vmatprep.subr.bf16.mxu0 0
        %879 = vmatpush1.bf16.msra.mxu0 0
        %880 = vmatprep.subr.bf16.mxu0 0
        %881 = vmatpush1.bf16.msra.mxu0 0
        %882 = vmatprep.subr.bf16.mxu0 0
        %883 = vmatpush1.bf16.msra.mxu0 0
        %884 = vmatprep.subr.bf16.mxu0 0
        %885 = vmatpush1.bf16.msra.mxu0 0
        %886 = vmatprep.subr.bf16.mxu0 %v659
        %887 = vmatpush1.bf16.msra.mxu0 %v658
        %888 = vmatprep.subr.bf16.mxu0 %v643
        %889 = vmatpush1.bf16.msra.mxu0 %v642
        %890 = vmatprep.subr.bf16.mxu0 0
        %891 = vmatpush2.bf16.msra.mxu0 0
        %892 = vmatprep.subr.bf16.mxu0 0
        %893 = vmatpush2.bf16.msra.mxu0 0
        %894 = vmatprep.subr.bf16.mxu0 0
        %895 = vmatpush2.bf16.msra.mxu0 0
        %896 = vmatprep.subr.bf16.mxu0 0
        %897 = vmatpush2.bf16.msra.mxu0 0
        %898 = vmatprep.subr.bf16.mxu0 0
        %899 = vmatpush2.bf16.msra.mxu0 0
        %900 = vmatprep.subr.bf16.mxu0 0
        %901 = vmatpush2.bf16.msra.mxu0 0
        %902 = vmatprep.subr.bf16.mxu0 0
        %903 = vmatpush2.bf16.msra.mxu0 0
        %904 = vmatprep.subr.bf16.mxu0 0
        %905 = vmatpush2.bf16.msra.mxu0 0
        %906 = vmatprep.mubr.bf16.mxu0 0
        %907 = vmatmul.mubr.bf16.gmra.mxu0 %v700
        %v908 = vpop.f32.mrf.mxu0
        %v909 = vadd.f32 0.0, %v908
        %v910 = vpop.f32.mrf.mxu0
        %v911 = vadd.f32 0.0, %v910
        %v912 = vpop.f32.mrf.mxu0
        %v913 = vadd.f32 0.0, %v912
        %v914 = vpop.f32.mrf.mxu0
        %v915 = vadd.f32 0.0, %v914
        %916 = vdwg.mxu0
        %917 = vmatprep.subr.bf16.mxu0 0
        %918 = vmatpush1.bf16.msra.mxu0 0
        %919 = vmatprep.subr.bf16.mxu0 0
        %920 = vmatpush1.bf16.msra.mxu0 0
        %921 = vmatprep.subr.bf16.mxu0 0
        %922 = vmatpush1.bf16.msra.mxu0 0
        %923 = vmatprep.subr.bf16.mxu0 0
        %924 = vmatpush1.bf16.msra.mxu0 0
        %925 = vmatprep.subr.bf16.mxu0 0
        %926 = vmatpush1.bf16.msra.mxu0 0
        %927 = vmatprep.subr.bf16.mxu0 0
        %928 = vmatpush1.bf16.msra.mxu0 0
        %929 = vmatprep.subr.bf16.mxu0 %v661
        %930 = vmatpush1.bf16.msra.mxu0 %v660
        %931 = vmatprep.subr.bf16.mxu0 %v645
        %932 = vmatpush1.bf16.msra.mxu0 %v644
        %933 = vmatprep.subr.bf16.mxu0 0
        %934 = vmatpush2.bf16.msra.mxu0 0
        %935 = vmatprep.subr.bf16.mxu0 0
        %936 = vmatpush2.bf16.msra.mxu0 0
        %937 = vmatprep.subr.bf16.mxu0 0
        %938 = vmatpush2.bf16.msra.mxu0 0
        %939 = vmatprep.subr.bf16.mxu0 0
        %940 = vmatpush2.bf16.msra.mxu0 0
        %941 = vmatprep.subr.bf16.mxu0 0
        %942 = vmatpush2.bf16.msra.mxu0 0
        %943 = vmatprep.subr.bf16.mxu0 0
        %944 = vmatpush2.bf16.msra.mxu0 0
        %945 = vmatprep.subr.bf16.mxu0 0
        %946 = vmatpush2.bf16.msra.mxu0 0
        %947 = vmatprep.subr.bf16.mxu0 0
        %948 = vmatpush2.bf16.msra.mxu0 0
        %949 = vmatprep.mubr.bf16.mxu0 0
        %950 = vmatmul.mubr.bf16.gmra.mxu0 %v700
        %v951 = vpop.f32.mrf.mxu0
        %v952 = vadd.f32 0.0, %v951
        %v953 = vpop.f32.mrf.mxu0
        %v954 = vadd.f32 0.0, %v953
        %v955 = vpop.f32.mrf.mxu0
        %v956 = vadd.f32 0.0, %v955
        %v957 = vpop.f32.mrf.mxu0
        %v958 = vadd.f32 0.0, %v957
        %959 = vdwg.mxu0
        %960 = vmatprep.subr.bf16.mxu0 0
        %961 = vmatpush1.bf16.msra.mxu0 0
        %962 = vmatprep.subr.bf16.mxu0 0
        %963 = vmatpush1.bf16.msra.mxu0 0
        %964 = vmatprep.subr.bf16.mxu0 0
        %965 = vmatpush1.bf16.msra.mxu0 0
        %966 = vmatprep.subr.bf16.mxu0 0
        %967 = vmatpush1.bf16.msra.mxu0 0
        %968 = vmatprep.subr.bf16.mxu0 0
        %969 = vmatpush1.bf16.msra.mxu0 0
        %970 = vmatprep.subr.bf16.mxu0 0
        %971 = vmatpush1.bf16.msra.mxu0 0
        %972 = vmatprep.subr.bf16.mxu0 %v663
        %973 = vmatpush1.bf16.msra.mxu0 %v662
        %974 = vmatprep.subr.bf16.mxu0 %v647
        %975 = vmatpush1.bf16.msra.mxu0 %v646
        %976 = vmatprep.subr.bf16.mxu0 0
        %977 = vmatpush2.bf16.msra.mxu0 0
        %978 = vmatprep.subr.bf16.mxu0 0
        %979 = vmatpush2.bf16.msra.mxu0 0
        %980 = vmatprep.subr.bf16.mxu0 0
        %981 = vmatpush2.bf16.msra.mxu0 0
        %982 = vmatprep.subr.bf16.mxu0 0
        %983 = vmatpush2.bf16.msra.mxu0 0
        %984 = vmatprep.subr.bf16.mxu0 0
        %985 = vmatpush2.bf16.msra.mxu0 0
        %986 = vmatprep.subr.bf16.mxu0 0
        %987 = vmatpush2.bf16.msra.mxu0 0
        %988 = vmatprep.subr.bf16.mxu0 0
        %989 = vmatpush2.bf16.msra.mxu0 0
        %990 = vmatprep.subr.bf16.mxu0 0
        %991 = vmatpush2.bf16.msra.mxu0 0
        %992 = vmatprep.mubr.bf16.mxu0 0
        %993 = vmatmul.mubr.bf16.gmra.mxu0 %v700
        %v994 = vpop.f32.mrf.mxu0
        %v995 = vadd.f32 0.0, %v994
        %v996 = vpop.f32.mrf.mxu0
        %v997 = vadd.f32 0.0, %v996
        %v998 = vpop.f32.mrf.mxu0
        %v999 = vadd.f32 0.0, %v998
        %v1000 = vpop.f32.mrf.mxu0
        %v1001 = vadd.f32 0.0, %v1000
        %1002 = vdwg.mxu0
        %1003 = vmatprep.subr.bf16.mxu0 0
        %1004 = vmatpush1.bf16.msra.mxu0 0
        %1005 = vmatprep.subr.bf16.mxu0 0
        %1006 = vmatpush1.bf16.msra.mxu0 0
        %1007 = vmatprep.subr.bf16.mxu0 0
        %1008 = vmatpush1.bf16.msra.mxu0 0
        %1009 = vmatprep.subr.bf16.mxu0 0
        %1010 = vmatpush1.bf16.msra.mxu0 0
        %1011 = vmatprep.subr.bf16.mxu0 0
        %1012 = vmatpush1.bf16.msra.mxu0 0
        %1013 = vmatprep.subr.bf16.mxu0 0
        %1014 = vmatpush1.bf16.msra.mxu0 0
        %1015 = vmatprep.subr.bf16.mxu0 %v665
        %1016 = vmatpush1.bf16.msra.mxu0 %v664
        %1017 = vmatprep.subr.bf16.mxu0 %v649
        %1018 = vmatpush1.bf16.msra.mxu0 %v648
        %1019 = vmatprep.subr.bf16.mxu0 0
        %1020 = vmatpush2.bf16.msra.mxu0 0
        %1021 = vmatprep.subr.bf16.mxu0 0
        %1022 = vmatpush2.bf16.msra.mxu0 0
        %1023 = vmatprep.subr.bf16.mxu0 0
        %1024 = vmatpush2.bf16.msra.mxu0 0
        %1025 = vmatprep.subr.bf16.mxu0 0
        %1026 = vmatpush2.bf16.msra.mxu0 0
        %1027 = vmatprep.subr.bf16.mxu0 0
        %1028 = vmatpush2.bf16.msra.mxu0 0
        %1029 = vmatprep.subr.bf16.mxu0 0
        %1030 = vmatpush2.bf16.msra.mxu0 0
        %1031 = vmatprep.subr.bf16.mxu0 0
        %1032 = vmatpush2.bf16.msra.mxu0 0
        %1033 = vmatprep.subr.bf16.mxu0 0
        %1034 = vmatpush2.bf16.msra.mxu0 0
        %1035 = vmatprep.mubr.bf16.mxu0 0
        %1036 = vmatmul.mubr.bf16.gmra.mxu0 %v700
        %v1037 = vpop.f32.mrf.mxu0
        %v1038 = vadd.f32 0.0, %v1037
        %v1039 = vpop.f32.mrf.mxu0
        %v1040 = vadd.f32 0.0, %v1039
        %v1041 = vpop.f32.mrf.mxu0
        %v1042 = vadd.f32 0.0, %v1041
        %v1043 = vpop.f32.mrf.mxu0
        %v1044 = vadd.f32 0.0, %v1043
        %1045 = vdwg.mxu0
        %s1046 = scalar_lea.vmem %s472, 256 [#allocation3]
        %v1047 = vld [vmem:[%s1046] sm:$0xff]
        %v1048 = vld [vmem:[%s1046 + $0x8] sm:$0xff]
        %v1049 = vld [vmem:[%s1046 + $0x10] sm:$0xff]
        %v1050 = vld [vmem:[%s1046 + $0x18] sm:$0xff]
        %v1051 = vld [vmem:[%s1046 + $0x20] sm:$0xff]
        %v1052 = vld [vmem:[%s1046 + $0x28] sm:$0xff]
        %v1053 = vld [vmem:[%s1046 + $0x30] sm:$0xff]
        %v1054 = vld [vmem:[%s1046 + $0x38] sm:$0xff]
        %v1055 = vld [vmem:[%s1046 + $0x40] sm:$0xff]
        %v1056 = vld [vmem:[%s1046 + $0x48] sm:$0xff]
        %v1057 = vld [vmem:[%s1046 + $0x50] sm:$0xff]
        %v1058 = vld [vmem:[%s1046 + $0x58] sm:$0xff]
        %v1059 = vld [vmem:[%s1046 + $0x60] sm:$0xff]
        %v1060 = vld [vmem:[%s1046 + $0x68] sm:$0xff]
        %v1061 = vld [vmem:[%s1046 + $0x70] sm:$0xff]
        %v1062 = vld [vmem:[%s1046 + $0x78] sm:$0xff]
        %v1063 = vld [vmem:[%s1046 + $0x80] sm:$0xff]
        %v1064 = vld [vmem:[%s1046 + $0x88] sm:$0xff]
        %v1065 = vld [vmem:[%s1046 + $0x90] sm:$0xff]
        %v1066 = vld [vmem:[%s1046 + $0x98] sm:$0xff]
        %v1067 = vld [vmem:[%s1046 + $0xa0] sm:$0xff]
        %v1068 = vld [vmem:[%s1046 + $0xa8] sm:$0xff]
        %v1069 = vld [vmem:[%s1046 + $0xb0] sm:$0xff]
        %v1070 = vld [vmem:[%s1046 + $0xb8] sm:$0xff]
        %v1071 = vld [vmem:[%s1046 + $0xc0] sm:$0xff]
        %v1072 = vld [vmem:[%s1046 + $0xc8] sm:$0xff]
        %v1073 = vld [vmem:[%s1046 + $0xd0] sm:$0xff]
        %v1074 = vld [vmem:[%s1046 + $0xd8] sm:$0xff]
        %v1075 = vld [vmem:[%s1046 + $0xe0] sm:$0xff]
        %v1076 = vld [vmem:[%s1046 + $0xe8] sm:$0xff]
        %v1077 = vld [vmem:[%s1046 + $0xf0] sm:$0xff]
        %v1078 = vld [vmem:[%s1046 + $0xf8] sm:$0xff]
        %v1111 = vunpack.c.l.b16 %v1047
        %v1112 = vunpack.c.h.b16 %v1047
        %v1113 = vunpack.c.l.b16 %v1048
        %v1114 = vunpack.c.h.b16 %v1048
        %v1115 = vunpack.c.l.b16 %v1049
        %v1116 = vunpack.c.h.b16 %v1049
        %v1117 = vunpack.c.l.b16 %v1050
        %v1118 = vunpack.c.h.b16 %v1050
        %v1119 = vunpack.c.l.b16 %v1051
        %v1120 = vunpack.c.h.b16 %v1051
        %v1121 = vunpack.c.l.b16 %v1052
        %v1122 = vunpack.c.h.b16 %v1052
        %v1123 = vunpack.c.l.b16 %v1053
        %v1124 = vunpack.c.h.b16 %v1053
        %v1125 = vunpack.c.l.b16 %v1054
        %v1126 = vunpack.c.h.b16 %v1054
        %v1127 = vunpack.c.l.b16 %v1055
        %v1128 = vunpack.c.h.b16 %v1055
        %v1129 = vunpack.c.l.b16 %v1056
        %v1130 = vunpack.c.h.b16 %v1056
        %v1131 = vunpack.c.l.b16 %v1057
        %v1132 = vunpack.c.h.b16 %v1057
        %v1133 = vunpack.c.l.b16 %v1058
        %v1134 = vunpack.c.h.b16 %v1058
        %v1135 = vunpack.c.l.b16 %v1059
        %v1136 = vunpack.c.h.b16 %v1059
        %v1137 = vunpack.c.l.b16 %v1060
        %v1138 = vunpack.c.h.b16 %v1060
        %v1139 = vunpack.c.l.b16 %v1061
        %v1140 = vunpack.c.h.b16 %v1061
        %v1141 = vunpack.c.l.b16 %v1062
        %v1142 = vunpack.c.h.b16 %v1062
        %v1143 = vunpack.c.l.b16 %v1063
        %v1144 = vunpack.c.h.b16 %v1063
        %v1145 = vunpack.c.l.b16 %v1064
        %v1146 = vunpack.c.h.b16 %v1064
        %v1147 = vunpack.c.l.b16 %v1065
        %v1148 = vunpack.c.h.b16 %v1065
        %v1149 = vunpack.c.l.b16 %v1066
        %v1150 = vunpack.c.h.b16 %v1066
        %v1151 = vunpack.c.l.b16 %v1067
        %v1152 = vunpack.c.h.b16 %v1067
        %v1153 = vunpack.c.l.b16 %v1068
        %v1154 = vunpack.c.h.b16 %v1068
        %v1155 = vunpack.c.l.b16 %v1069
        %v1156 = vunpack.c.h.b16 %v1069
        %v1157 = vunpack.c.l.b16 %v1070
        %v1158 = vunpack.c.h.b16 %v1070
        %v1159 = vunpack.c.l.b16 %v1071
        %v1160 = vunpack.c.h.b16 %v1071
        %v1161 = vunpack.c.l.b16 %v1072
        %v1162 = vunpack.c.h.b16 %v1072
        %v1163 = vunpack.c.l.b16 %v1073
        %v1164 = vunpack.c.h.b16 %v1073
        %v1165 = vunpack.c.l.b16 %v1074
        %v1166 = vunpack.c.h.b16 %v1074
        %v1167 = vunpack.c.l.b16 %v1075
        %v1168 = vunpack.c.h.b16 %v1075
        %v1169 = vunpack.c.l.b16 %v1076
        %v1170 = vunpack.c.h.b16 %v1076
        %v1171 = vunpack.c.l.b16 %v1077
        %v1172 = vunpack.c.h.b16 %v1077
        %v1173 = vunpack.c.l.b16 %v1078
        %v1174 = vunpack.c.h.b16 %v1078
        %v1175 = vpack.c.b16 %v1127, %v1111
        %v1176 = vpack.c.b16 %v1128, %v1112
        %v1177 = vpack.c.b16 %v1129, %v1113
        %v1178 = vpack.c.b16 %v1130, %v1114
        %v1179 = vpack.c.b16 %v1131, %v1115
        %v1180 = vpack.c.b16 %v1132, %v1116
        %v1181 = vpack.c.b16 %v1133, %v1117
        %v1182 = vpack.c.b16 %v1134, %v1118
        %v1183 = vpack.c.b16 %v1135, %v1119
        %v1184 = vpack.c.b16 %v1136, %v1120
        %v1185 = vpack.c.b16 %v1137, %v1121
        %v1186 = vpack.c.b16 %v1138, %v1122
        %v1187 = vpack.c.b16 %v1139, %v1123
        %v1188 = vpack.c.b16 %v1140, %v1124
        %v1189 = vpack.c.b16 %v1141, %v1125
        %v1190 = vpack.c.b16 %v1142, %v1126
        %v1191 = vpack.c.b16 %v1159, %v1143
        %v1192 = vpack.c.b16 %v1160, %v1144
        %v1193 = vpack.c.b16 %v1161, %v1145
        %v1194 = vpack.c.b16 %v1162, %v1146
        %v1195 = vpack.c.b16 %v1163, %v1147
        %v1196 = vpack.c.b16 %v1164, %v1148
        %v1197 = vpack.c.b16 %v1165, %v1149
        %v1198 = vpack.c.b16 %v1166, %v1150
        %v1199 = vpack.c.b16 %v1167, %v1151
        %v1200 = vpack.c.b16 %v1168, %v1152
        %v1201 = vpack.c.b16 %v1169, %v1153
        %v1202 = vpack.c.b16 %v1170, %v1154
        %v1203 = vpack.c.b16 %v1171, %v1155
        %v1204 = vpack.c.b16 %v1172, %v1156
        %v1205 = vpack.c.b16 %v1173, %v1157
        %v1206 = vpack.c.b16 %v1174, %v1158
        %1239 = vmatprep.subr.bf16.mxu0 0
        %1240 = vmatpush1.bf16.msra.mxu0 0
        %1241 = vmatprep.subr.bf16.mxu0 0
        %1242 = vmatpush1.bf16.msra.mxu0 0
        %1243 = vmatprep.subr.bf16.mxu0 0
        %1244 = vmatpush1.bf16.msra.mxu0 0
        %1245 = vmatprep.subr.bf16.mxu0 0
        %1246 = vmatpush1.bf16.msra.mxu0 0
        %1247 = vmatprep.subr.bf16.mxu0 0
        %1248 = vmatpush1.bf16.msra.mxu0 0
        %1249 = vmatprep.subr.bf16.mxu0 0
        %1250 = vmatpush1.bf16.msra.mxu0 0
        %1251 = vmatprep.subr.bf16.mxu0 %v1192
        %1252 = vmatpush1.bf16.msra.mxu0 %v1191
        %1253 = vmatprep.subr.bf16.mxu0 %v1176
        %1254 = vmatpush1.bf16.msra.mxu0 %v1175
        %1255 = vmatprep.subr.bf16.mxu0 0
        %1256 = vmatpush2.bf16.msra.mxu0 0
        %1257 = vmatprep.subr.bf16.mxu0 0
        %1258 = vmatpush2.bf16.msra.mxu0 0
        %1259 = vmatprep.subr.bf16.mxu0 0
        %1260 = vmatpush2.bf16.msra.mxu0 0
        %1261 = vmatprep.subr.bf16.mxu0 0
        %1262 = vmatpush2.bf16.msra.mxu0 0
        %1263 = vmatprep.subr.bf16.mxu0 0
        %1264 = vmatpush2.bf16.msra.mxu0 0
        %1265 = vmatprep.subr.bf16.mxu0 0
        %1266 = vmatpush2.bf16.msra.mxu0 0
        %1267 = vmatprep.subr.bf16.mxu0 0
        %1268 = vmatpush2.bf16.msra.mxu0 0
        %1269 = vmatprep.subr.bf16.mxu0 0
        %1270 = vmatpush2.bf16.msra.mxu0 0
        %1271 = vmatprep.mubr.bf16.mxu0 0
        %1272 = vmatmul.mubr.bf16.gmra.mxu0 %v700
        %v1273 = vpop.f32.mrf.mxu0
        %v1274 = vadd.f32 0.0, %v1273
        %v1275 = vpop.f32.mrf.mxu0
        %v1276 = vadd.f32 0.0, %v1275
        %v1277 = vpop.f32.mrf.mxu0
        %v1278 = vadd.f32 0.0, %v1277
        %v1279 = vpop.f32.mrf.mxu0
        %v1280 = vadd.f32 0.0, %v1279
        %1281 = vdwg.mxu0
        %1282 = vmatprep.subr.bf16.mxu0 0
        %1283 = vmatpush1.bf16.msra.mxu0 0
        %1284 = vmatprep.subr.bf16.mxu0 0
        %1285 = vmatpush1.bf16.msra.mxu0 0
        %1286 = vmatprep.subr.bf16.mxu0 0
        %1287 = vmatpush1.bf16.msra.mxu0 0
        %1288 = vmatprep.subr.bf16.mxu0 0
        %1289 = vmatpush1.bf16.msra.mxu0 0
        %1290 = vmatprep.subr.bf16.mxu0 0
        %1291 = vmatpush1.bf16.msra.mxu0 0
        %1292 = vmatprep.subr.bf16.mxu0 0
        %1293 = vmatpush1.bf16.msra.mxu0 0
        %1294 = vmatprep.subr.bf16.mxu0 %v1194
        %1295 = vmatpush1.bf16.msra.mxu0 %v1193
        %1296 = vmatprep.subr.bf16.mxu0 %v1178
        %1297 = vmatpush1.bf16.msra.mxu0 %v1177
        %1298 = vmatprep.subr.bf16.mxu0 0
        %1299 = vmatpush2.bf16.msra.mxu0 0
        %1300 = vmatprep.subr.bf16.mxu0 0
        %1301 = vmatpush2.bf16.msra.mxu0 0
        %1302 = vmatprep.subr.bf16.mxu0 0
        %1303 = vmatpush2.bf16.msra.mxu0 0
        %1304 = vmatprep.subr.bf16.mxu0 0
        %1305 = vmatpush2.bf16.msra.mxu0 0
        %1306 = vmatprep.subr.bf16.mxu0 0
        %1307 = vmatpush2.bf16.msra.mxu0 0
        %1308 = vmatprep.subr.bf16.mxu0 0
        %1309 = vmatpush2.bf16.msra.mxu0 0
        %1310 = vmatprep.subr.bf16.mxu0 0
        %1311 = vmatpush2.bf16.msra.mxu0 0
        %1312 = vmatprep.subr.bf16.mxu0 0
        %1313 = vmatpush2.bf16.msra.mxu0 0
        %1314 = vmatprep.mubr.bf16.mxu0 0
        %1315 = vmatmul.mubr.bf16.gmra.mxu0 %v700
        %v1316 = vpop.f32.mrf.mxu0
        %v1317 = vadd.f32 0.0, %v1316
        %v1318 = vpop.f32.mrf.mxu0
        %v1319 = vadd.f32 0.0, %v1318
        %v1320 = vpop.f32.mrf.mxu0
        %v1321 = vadd.f32 0.0, %v1320
        %v1322 = vpop.f32.mrf.mxu0
        %v1323 = vadd.f32 0.0, %v1322
        %1324 = vdwg.mxu0
        %1325 = vmatprep.subr.bf16.mxu0 0
        %1326 = vmatpush1.bf16.msra.mxu0 0
        %1327 = vmatprep.subr.bf16.mxu0 0
        %1328 = vmatpush1.bf16.msra.mxu0 0
        %1329 = vmatprep.subr.bf16.mxu0 0
        %1330 = vmatpush1.bf16.msra.mxu0 0
        %1331 = vmatprep.subr.bf16.mxu0 0
        %1332 = vmatpush1.bf16.msra.mxu0 0
        %1333 = vmatprep.subr.bf16.mxu0 0
        %1334 = vmatpush1.bf16.msra.mxu0 0
        %1335 = vmatprep.subr.bf16.mxu0 0
        %1336 = vmatpush1.bf16.msra.mxu0 0
        %1337 = vmatprep.subr.bf16.mxu0 %v1196
        %1338 = vmatpush1.bf16.msra.mxu0 %v1195
        %1339 = vmatprep.subr.bf16.mxu0 %v1180
        %1340 = vmatpush1.bf16.msra.mxu0 %v1179
        %1341 = vmatprep.subr.bf16.mxu0 0
        %1342 = vmatpush2.bf16.msra.mxu0 0
        %1343 = vmatprep.subr.bf16.mxu0 0
        %1344 = vmatpush2.bf16.msra.mxu0 0
        %1345 = vmatprep.subr.bf16.mxu0 0
        %1346 = vmatpush2.bf16.msra.mxu0 0
        %1347 = vmatprep.subr.bf16.mxu0 0
        %1348 = vmatpush2.bf16.msra.mxu0 0
        %1349 = vmatprep.subr.bf16.mxu0 0
        %1350 = vmatpush2.bf16.msra.mxu0 0
        %1351 = vmatprep.subr.bf16.mxu0 0
        %1352 = vmatpush2.bf16.msra.mxu0 0
        %1353 = vmatprep.subr.bf16.mxu0 0
        %1354 = vmatpush2.bf16.msra.mxu0 0
        %1355 = vmatprep.subr.bf16.mxu0 0
        %1356 = vmatpush2.bf16.msra.mxu0 0
        %1357 = vmatprep.mubr.bf16.mxu0 0
        %1358 = vmatmul.mubr.bf16.gmra.mxu0 %v700
        %v1359 = vpop.f32.mrf.mxu0
        %v1360 = vadd.f32 0.0, %v1359
        %v1361 = vpop.f32.mrf.mxu0
        %v1362 = vadd.f32 0.0, %v1361
        %v1363 = vpop.f32.mrf.mxu0
        %v1364 = vadd.f32 0.0, %v1363
        %v1365 = vpop.f32.mrf.mxu0
        %v1366 = vadd.f32 0.0, %v1365
        %1367 = vdwg.mxu0
        %1368 = vmatprep.subr.bf16.mxu0 0
        %1369 = vmatpush1.bf16.msra.mxu0 0
        %1370 = vmatprep.subr.bf16.mxu0 0
        %1371 = vmatpush1.bf16.msra.mxu0 0
        %1372 = vmatprep.subr.bf16.mxu0 0
        %1373 = vmatpush1.bf16.msra.mxu0 0
        %1374 = vmatprep.subr.bf16.mxu0 0
        %1375 = vmatpush1.bf16.msra.mxu0 0
        %1376 = vmatprep.subr.bf16.mxu0 0
        %1377 = vmatpush1.bf16.msra.mxu0 0
        %1378 = vmatprep.subr.bf16.mxu0 0
        %1379 = vmatpush1.bf16.msra.mxu0 0
        %1380 = vmatprep.subr.bf16.mxu0 %v1198
        %1381 = vmatpush1.bf16.msra.mxu0 %v1197
        %1382 = vmatprep.subr.bf16.mxu0 %v1182
        %1383 = vmatpush1.bf16.msra.mxu0 %v1181
        %1384 = vmatprep.subr.bf16.mxu0 0
        %1385 = vmatpush2.bf16.msra.mxu0 0
        %1386 = vmatprep.subr.bf16.mxu0 0
        %1387 = vmatpush2.bf16.msra.mxu0 0
        %1388 = vmatprep.subr.bf16.mxu0 0
        %1389 = vmatpush2.bf16.msra.mxu0 0
        %1390 = vmatprep.subr.bf16.mxu0 0
        %1391 = vmatpush2.bf16.msra.mxu0 0
        %1392 = vmatprep.subr.bf16.mxu0 0
        %1393 = vmatpush2.bf16.msra.mxu0 0
        %1394 = vmatprep.subr.bf16.mxu0 0
        %1395 = vmatpush2.bf16.msra.mxu0 0
        %1396 = vmatprep.subr.bf16.mxu0 0
        %1397 = vmatpush2.bf16.msra.mxu0 0
        %1398 = vmatprep.subr.bf16.mxu0 0
        %1399 = vmatpush2.bf16.msra.mxu0 0
        %1400 = vmatprep.mubr.bf16.mxu0 0
        %1401 = vmatmul.mubr.bf16.gmra.mxu0 %v700
        %v1402 = vpop.f32.mrf.mxu0
        %v1403 = vadd.f32 0.0, %v1402
        %v1404 = vpop.f32.mrf.mxu0
        %v1405 = vadd.f32 0.0, %v1404
        %v1406 = vpop.f32.mrf.mxu0
        %v1407 = vadd.f32 0.0, %v1406
        %v1408 = vpop.f32.mrf.mxu0
        %v1409 = vadd.f32 0.0, %v1408
        %1410 = vdwg.mxu0
        %1411 = vmatprep.subr.bf16.mxu0 0
        %1412 = vmatpush1.bf16.msra.mxu0 0
        %1413 = vmatprep.subr.bf16.mxu0 0
        %1414 = vmatpush1.bf16.msra.mxu0 0
        %1415 = vmatprep.subr.bf16.mxu0 0
        %1416 = vmatpush1.bf16.msra.mxu0 0
        %1417 = vmatprep.subr.bf16.mxu0 0
        %1418 = vmatpush1.bf16.msra.mxu0 0
        %1419 = vmatprep.subr.bf16.mxu0 0
        %1420 = vmatpush1.bf16.msra.mxu0 0
        %1421 = vmatprep.subr.bf16.mxu0 0
        %1422 = vmatpush1.bf16.msra.mxu0 0
        %1423 = vmatprep.subr.bf16.mxu0 %v1200
        %1424 = vmatpush1.bf16.msra.mxu0 %v1199
        %1425 = vmatprep.subr.bf16.mxu0 %v1184
        %1426 = vmatpush1.bf16.msra.mxu0 %v1183
        %1427 = vmatprep.subr.bf16.mxu0 0
        %1428 = vmatpush2.bf16.msra.mxu0 0
        %1429 = vmatprep.subr.bf16.mxu0 0
        %1430 = vmatpush2.bf16.msra.mxu0 0
        %1431 = vmatprep.subr.bf16.mxu0 0
        %1432 = vmatpush2.bf16.msra.mxu0 0
        %1433 = vmatprep.subr.bf16.mxu0 0
        %1434 = vmatpush2.bf16.msra.mxu0 0
        %1435 = vmatprep.subr.bf16.mxu0 0
        %1436 = vmatpush2.bf16.msra.mxu0 0
        %1437 = vmatprep.subr.bf16.mxu0 0
        %1438 = vmatpush2.bf16.msra.mxu0 0
        %1439 = vmatprep.subr.bf16.mxu0 0
        %1440 = vmatpush2.bf16.msra.mxu0 0
        %1441 = vmatprep.subr.bf16.mxu0 0
        %1442 = vmatpush2.bf16.msra.mxu0 0
        %1443 = vmatprep.mubr.bf16.mxu0 0
        %1444 = vmatmul.mubr.bf16.gmra.mxu0 %v700
        %v1445 = vpop.f32.mrf.mxu0
        %v1446 = vadd.f32 0.0, %v1445
        %v1447 = vpop.f32.mrf.mxu0
        %v1448 = vadd.f32 0.0, %v1447
        %v1449 = vpop.f32.mrf.mxu0
        %v1450 = vadd.f32 0.0, %v1449
        %v1451 = vpop.f32.mrf.mxu0
        %v1452 = vadd.f32 0.0, %v1451
        %1453 = vdwg.mxu0
        %1454 = vmatprep.subr.bf16.mxu0 0
        %1455 = vmatpush1.bf16.msra.mxu0 0
        %1456 = vmatprep.subr.bf16.mxu0 0
        %1457 = vmatpush1.bf16.msra.mxu0 0
        %1458 = vmatprep.subr.bf16.mxu0 0
        %1459 = vmatpush1.bf16.msra.mxu0 0
        %1460 = vmatprep.subr.bf16.mxu0 0
        %1461 = vmatpush1.bf16.msra.mxu0 0
        %1462 = vmatprep.subr.bf16.mxu0 0
        %1463 = vmatpush1.bf16.msra.mxu0 0
        %1464 = vmatprep.subr.bf16.mxu0 0
        %1465 = vmatpush1.bf16.msra.mxu0 0
        %1466 = vmatprep.subr.bf16.mxu0 %v1202
        %1467 = vmatpush1.bf16.msra.mxu0 %v1201
        %1468 = vmatprep.subr.bf16.mxu0 %v1186
        %1469 = vmatpush1.bf16.msra.mxu0 %v1185
        %1470 = vmatprep.subr.bf16.mxu0 0
        %1471 = vmatpush2.bf16.msra.mxu0 0
        %1472 = vmatprep.subr.bf16.mxu0 0
        %1473 = vmatpush2.bf16.msra.mxu0 0
        %1474 = vmatprep.subr.bf16.mxu0 0
        %1475 = vmatpush2.bf16.msra.mxu0 0
        %1476 = vmatprep.subr.bf16.mxu0 0
        %1477 = vmatpush2.bf16.msra.mxu0 0
        %1478 = vmatprep.subr.bf16.mxu0 0
        %1479 = vmatpush2.bf16.msra.mxu0 0
        %1480 = vmatprep.subr.bf16.mxu0 0
        %1481 = vmatpush2.bf16.msra.mxu0 0
        %1482 = vmatprep.subr.bf16.mxu0 0
        %1483 = vmatpush2.bf16.msra.mxu0 0
        %1484 = vmatprep.subr.bf16.mxu0 0
        %1485 = vmatpush2.bf16.msra.mxu0 0
        %1486 = vmatprep.mubr.bf16.mxu0 0
        %1487 = vmatmul.mubr.bf16.gmra.mxu0 %v700
        %v1488 = vpop.f32.mrf.mxu0
        %v1489 = vadd.f32 0.0, %v1488
        %v1490 = vpop.f32.mrf.mxu0
        %v1491 = vadd.f32 0.0, %v1490
        %v1492 = vpop.f32.mrf.mxu0
        %v1493 = vadd.f32 0.0, %v1492
        %v1494 = vpop.f32.mrf.mxu0
        %v1495 = vadd.f32 0.0, %v1494
        %1496 = vdwg.mxu0
        %1497 = vmatprep.subr.bf16.mxu0 0
        %1498 = vmatpush1.bf16.msra.mxu0 0
        %1499 = vmatprep.subr.bf16.mxu0 0
        %1500 = vmatpush1.bf16.msra.mxu0 0
        %1501 = vmatprep.subr.bf16.mxu0 0
        %1502 = vmatpush1.bf16.msra.mxu0 0
        %1503 = vmatprep.subr.bf16.mxu0 0
        %1504 = vmatpush1.bf16.msra.mxu0 0
        %1505 = vmatprep.subr.bf16.mxu0 0
        %1506 = vmatpush1.bf16.msra.mxu0 0
        %1507 = vmatprep.subr.bf16.mxu0 0
        %1508 = vmatpush1.bf16.msra.mxu0 0
        %1509 = vmatprep.subr.bf16.mxu0 %v1204
        %1510 = vmatpush1.bf16.msra.mxu0 %v1203
        %1511 = vmatprep.subr.bf16.mxu0 %v1188
        %1512 = vmatpush1.bf16.msra.mxu0 %v1187
        %1513 = vmatprep.subr.bf16.mxu0 0
        %1514 = vmatpush2.bf16.msra.mxu0 0
        %1515 = vmatprep.subr.bf16.mxu0 0
        %1516 = vmatpush2.bf16.msra.mxu0 0
        %1517 = vmatprep.subr.bf16.mxu0 0
        %1518 = vmatpush2.bf16.msra.mxu0 0
        %1519 = vmatprep.subr.bf16.mxu0 0
        %1520 = vmatpush2.bf16.msra.mxu0 0
        %1521 = vmatprep.subr.bf16.mxu0 0
        %1522 = vmatpush2.bf16.msra.mxu0 0
        %1523 = vmatprep.subr.bf16.mxu0 0
        %1524 = vmatpush2.bf16.msra.mxu0 0
        %1525 = vmatprep.subr.bf16.mxu0 0
        %1526 = vmatpush2.bf16.msra.mxu0 0
        %1527 = vmatprep.subr.bf16.mxu0 0
        %1528 = vmatpush2.bf16.msra.mxu0 0
        %1529 = vmatprep.mubr.bf16.mxu0 0
        %1530 = vmatmul.mubr.bf16.gmra.mxu0 %v700
        %v1531 = vpop.f32.mrf.mxu0
        %v1532 = vadd.f32 0.0, %v1531
        %v1533 = vpop.f32.mrf.mxu0
        %v1534 = vadd.f32 0.0, %v1533
        %v1535 = vpop.f32.mrf.mxu0
        %v1536 = vadd.f32 0.0, %v1535
        %v1537 = vpop.f32.mrf.mxu0
        %v1538 = vadd.f32 0.0, %v1537
        %1539 = vdwg.mxu0
        %1540 = vmatprep.subr.bf16.mxu0 0
        %1541 = vmatpush1.bf16.msra.mxu0 0
        %1542 = vmatprep.subr.bf16.mxu0 0
        %1543 = vmatpush1.bf16.msra.mxu0 0
        %1544 = vmatprep.subr.bf16.mxu0 0
        %1545 = vmatpush1.bf16.msra.mxu0 0
        %1546 = vmatprep.subr.bf16.mxu0 0
        %1547 = vmatpush1.bf16.msra.mxu0 0
        %1548 = vmatprep.subr.bf16.mxu0 0
        %1549 = vmatpush1.bf16.msra.mxu0 0
        %1550 = vmatprep.subr.bf16.mxu0 0
        %1551 = vmatpush1.bf16.msra.mxu0 0
        %1552 = vmatprep.subr.bf16.mxu0 %v1206
        %1553 = vmatpush1.bf16.msra.mxu0 %v1205
        %1554 = vmatprep.subr.bf16.mxu0 %v1190
        %1555 = vmatpush1.bf16.msra.mxu0 %v1189
        %1556 = vmatprep.subr.bf16.mxu0 0
        %1557 = vmatpush2.bf16.msra.mxu0 0
        %1558 = vmatprep.subr.bf16.mxu0 0
        %1559 = vmatpush2.bf16.msra.mxu0 0
        %1560 = vmatprep.subr.bf16.mxu0 0
        %1561 = vmatpush2.bf16.msra.mxu0 0
        %1562 = vmatprep.subr.bf16.mxu0 0
        %1563 = vmatpush2.bf16.msra.mxu0 0
        %1564 = vmatprep.subr.bf16.mxu0 0
        %1565 = vmatpush2.bf16.msra.mxu0 0
        %1566 = vmatprep.subr.bf16.mxu0 0
        %1567 = vmatpush2.bf16.msra.mxu0 0
        %1568 = vmatprep.subr.bf16.mxu0 0
        %1569 = vmatpush2.bf16.msra.mxu0 0
        %1570 = vmatprep.subr.bf16.mxu0 0
        %1571 = vmatpush2.bf16.msra.mxu0 0
        %1572 = vmatprep.mubr.bf16.mxu0 0
        %1573 = vmatmul.mubr.bf16.gmra.mxu0 %v700
        %v1574 = vpop.f32.mrf.mxu0
        %v1575 = vadd.f32 0.0, %v1574
        %v1576 = vpop.f32.mrf.mxu0
        %v1577 = vadd.f32 0.0, %v1576
        %v1578 = vpop.f32.mrf.mxu0
        %v1579 = vadd.f32 0.0, %v1578
        %v1580 = vpop.f32.mrf.mxu0
        %v1581 = vadd.f32 0.0, %v1580
        %1582 = vdwg.mxu0
        %v1583 = vmax.f32 %v737, %v1274
        %v1584 = vmax.f32 %v739, %v1276
        %v1585 = vmax.f32 %v780, %v1317
        %v1586 = vmax.f32 %v782, %v1319
        %v1587 = vmax.f32 %v823, %v1360
        %v1588 = vmax.f32 %v825, %v1362
        %v1589 = vmax.f32 %v866, %v1403
        %v1590 = vmax.f32 %v868, %v1405
        %v1591 = vmax.f32 %v909, %v1446
        %v1592 = vmax.f32 %v911, %v1448
        %v1593 = vmax.f32 %v952, %v1489
        %v1594 = vmax.f32 %v954, %v1491
        %v1595 = vmax.f32 %v995, %v1532
        %v1596 = vmax.f32 %v997, %v1534
        %v1597 = vmax.f32 %v1038, %v1575
        %v1598 = vmax.f32 %v1040, %v1577
        %v1599 = vmax.f32 %v741, %v1278
        %v1600 = vmax.f32 %v743, %v1280
        %v1601 = vmax.f32 %v784, %v1321
        %v1602 = vmax.f32 %v786, %v1323
        %v1603 = vmax.f32 %v827, %v1364
        %v1604 = vmax.f32 %v829, %v1366
        %v1605 = vmax.f32 %v870, %v1407
        %v1606 = vmax.f32 %v872, %v1409
        %v1607 = vmax.f32 %v913, %v1450
        %v1608 = vmax.f32 %v915, %v1452
        %v1609 = vmax.f32 %v956, %v1493
        %v1610 = vmax.f32 %v958, %v1495
        %v1611 = vmax.f32 %v999, %v1536
        %v1612 = vmax.f32 %v1001, %v1538
        %v1613 = vmax.f32 %v1042, %v1579
        %v1614 = vmax.f32 %v1044, %v1581
        %s1615 = scalar_lea.vmem %s472, 512 [#allocation3]
        %v1616 = vld [vmem:[%s1615] sm:$0xff]
        %v1617 = vld [vmem:[%s1615 + $0x8] sm:$0xff]
        %v1618 = vld [vmem:[%s1615 + $0x10] sm:$0xff]
        %v1619 = vld [vmem:[%s1615 + $0x18] sm:$0xff]
        %v1620 = vld [vmem:[%s1615 + $0x20] sm:$0xff]
        %v1621 = vld [vmem:[%s1615 + $0x28] sm:$0xff]
        %v1622 = vld [vmem:[%s1615 + $0x30] sm:$0xff]
        %v1623 = vld [vmem:[%s1615 + $0x38] sm:$0xff]
        %v1624 = vld [vmem:[%s1615 + $0x40] sm:$0xff]
        %v1625 = vld [vmem:[%s1615 + $0x48] sm:$0xff]
        %v1626 = vld [vmem:[%s1615 + $0x50] sm:$0xff]
        %v1627 = vld [vmem:[%s1615 + $0x58] sm:$0xff]
        %v1628 = vld [vmem:[%s1615 + $0x60] sm:$0xff]
        %v1629 = vld [vmem:[%s1615 + $0x68] sm:$0xff]
        %v1630 = vld [vmem:[%s1615 + $0x70] sm:$0xff]
        %v1631 = vld [vmem:[%s1615 + $0x78] sm:$0xff]
        %v1632 = vld [vmem:[%s1615 + $0x80] sm:$0xff]
        %v1633 = vld [vmem:[%s1615 + $0x88] sm:$0xff]
        %v1634 = vld [vmem:[%s1615 + $0x90] sm:$0xff]
        %v1635 = vld [vmem:[%s1615 + $0x98] sm:$0xff]
        %v1636 = vld [vmem:[%s1615 + $0xa0] sm:$0xff]
        %v1637 = vld [vmem:[%s1615 + $0xa8] sm:$0xff]
        %v1638 = vld [vmem:[%s1615 + $0xb0] sm:$0xff]
        %v1639 = vld [vmem:[%s1615 + $0xb8] sm:$0xff]
        %v1640 = vld [vmem:[%s1615 + $0xc0] sm:$0xff]
        %v1641 = vld [vmem:[%s1615 + $0xc8] sm:$0xff]
        %v1642 = vld [vmem:[%s1615 + $0xd0] sm:$0xff]
        %v1643 = vld [vmem:[%s1615 + $0xd8] sm:$0xff]
        %v1644 = vld [vmem:[%s1615 + $0xe0] sm:$0xff]
        %v1645 = vld [vmem:[%s1615 + $0xe8] sm:$0xff]
        %v1646 = vld [vmem:[%s1615 + $0xf0] sm:$0xff]
        %v1647 = vld [vmem:[%s1615 + $0xf8] sm:$0xff]
        %v1680 = vunpack.c.l.b16 %v1616
        %v1681 = vunpack.c.h.b16 %v1616
        %v1682 = vunpack.c.l.b16 %v1617
        %v1683 = vunpack.c.h.b16 %v1617
        %v1684 = vunpack.c.l.b16 %v1618
        %v1685 = vunpack.c.h.b16 %v1618
        %v1686 = vunpack.c.l.b16 %v1619
        %v1687 = vunpack.c.h.b16 %v1619
        %v1688 = vunpack.c.l.b16 %v1620
        %v1689 = vunpack.c.h.b16 %v1620
        %v1690 = vunpack.c.l.b16 %v1621
        %v1691 = vunpack.c.h.b16 %v1621
        %v1692 = vunpack.c.l.b16 %v1622
        %v1693 = vunpack.c.h.b16 %v1622
        %v1694 = vunpack.c.l.b16 %v1623
        %v1695 = vunpack.c.h.b16 %v1623
        %v1696 = vunpack.c.l.b16 %v1624
        %v1697 = vunpack.c.h.b16 %v1624
        %v1698 = vunpack.c.l.b16 %v1625
        %v1699 = vunpack.c.h.b16 %v1625
        %v1700 = vunpack.c.l.b16 %v1626
        %v1701 = vunpack.c.h.b16 %v1626
        %v1702 = vunpack.c.l.b16 %v1627
        %v1703 = vunpack.c.h.b16 %v1627
        %v1704 = vunpack.c.l.b16 %v1628
        %v1705 = vunpack.c.h.b16 %v1628
        %v1706 = vunpack.c.l.b16 %v1629
        %v1707 = vunpack.c.h.b16 %v1629
        %v1708 = vunpack.c.l.b16 %v1630
        %v1709 = vunpack.c.h.b16 %v1630
        %v1710 = vunpack.c.l.b16 %v1631
        %v1711 = vunpack.c.h.b16 %v1631
        %v1712 = vunpack.c.l.b16 %v1632
        %v1713 = vunpack.c.h.b16 %v1632
        %v1714 = vunpack.c.l.b16 %v1633
        %v1715 = vunpack.c.h.b16 %v1633
        %v1716 = vunpack.c.l.b16 %v1634
        %v1717 = vunpack.c.h.b16 %v1634
        %v1718 = vunpack.c.l.b16 %v1635
        %v1719 = vunpack.c.h.b16 %v1635
        %v1720 = vunpack.c.l.b16 %v1636
        %v1721 = vunpack.c.h.b16 %v1636
        %v1722 = vunpack.c.l.b16 %v1637
        %v1723 = vunpack.c.h.b16 %v1637
        %v1724 = vunpack.c.l.b16 %v1638
        %v1725 = vunpack.c.h.b16 %v1638
        %v1726 = vunpack.c.l.b16 %v1639
        %v1727 = vunpack.c.h.b16 %v1639
        %v1728 = vunpack.c.l.b16 %v1640
        %v1729 = vunpack.c.h.b16 %v1640
        %v1730 = vunpack.c.l.b16 %v1641
        %v1731 = vunpack.c.h.b16 %v1641
        %v1732 = vunpack.c.l.b16 %v1642
        %v1733 = vunpack.c.h.b16 %v1642
        %v1734 = vunpack.c.l.b16 %v1643
        %v1735 = vunpack.c.h.b16 %v1643
        %v1736 = vunpack.c.l.b16 %v1644
        %v1737 = vunpack.c.h.b16 %v1644
        %v1738 = vunpack.c.l.b16 %v1645
        %v1739 = vunpack.c.h.b16 %v1645
        %v1740 = vunpack.c.l.b16 %v1646
        %v1741 = vunpack.c.h.b16 %v1646
        %v1742 = vunpack.c.l.b16 %v1647
        %v1743 = vunpack.c.h.b16 %v1647
        %v1744 = vpack.c.b16 %v1696, %v1680
        %v1745 = vpack.c.b16 %v1697, %v1681
        %v1746 = vpack.c.b16 %v1698, %v1682
        %v1747 = vpack.c.b16 %v1699, %v1683
        %v1748 = vpack.c.b16 %v1700, %v1684
        %v1749 = vpack.c.b16 %v1701, %v1685
        %v1750 = vpack.c.b16 %v1702, %v1686
        %v1751 = vpack.c.b16 %v1703, %v1687
        %v1752 = vpack.c.b16 %v1704, %v1688
        %v1753 = vpack.c.b16 %v1705, %v1689
        %v1754 = vpack.c.b16 %v1706, %v1690
        %v1755 = vpack.c.b16 %v1707, %v1691
        %v1756 = vpack.c.b16 %v1708, %v1692
        %v1757 = vpack.c.b16 %v1709, %v1693
        %v1758 = vpack.c.b16 %v1710, %v1694
        %v1759 = vpack.c.b16 %v1711, %v1695
        %v1760 = vpack.c.b16 %v1728, %v1712
        %v1761 = vpack.c.b16 %v1729, %v1713
        %v1762 = vpack.c.b16 %v1730, %v1714
        %v1763 = vpack.c.b16 %v1731, %v1715
        %v1764 = vpack.c.b16 %v1732, %v1716
        %v1765 = vpack.c.b16 %v1733, %v1717
        %v1766 = vpack.c.b16 %v1734, %v1718
        %v1767 = vpack.c.b16 %v1735, %v1719
        %v1768 = vpack.c.b16 %v1736, %v1720
        %v1769 = vpack.c.b16 %v1737, %v1721
        %v1770 = vpack.c.b16 %v1738, %v1722
        %v1771 = vpack.c.b16 %v1739, %v1723
        %v1772 = vpack.c.b16 %v1740, %v1724
        %v1773 = vpack.c.b16 %v1741, %v1725
        %v1774 = vpack.c.b16 %v1742, %v1726
        %v1775 = vpack.c.b16 %v1743, %v1727
        %1808 = vmatprep.subr.bf16.mxu0 0
        %1809 = vmatpush1.bf16.msra.mxu0 0
        %1810 = vmatprep.subr.bf16.mxu0 0
        %1811 = vmatpush1.bf16.msra.mxu0 0
        %1812 = vmatprep.subr.bf16.mxu0 0
        %1813 = vmatpush1.bf16.msra.mxu0 0
        %1814 = vmatprep.subr.bf16.mxu0 0
        %1815 = vmatpush1.bf16.msra.mxu0 0
        %1816 = vmatprep.subr.bf16.mxu0 0
        %1817 = vmatpush1.bf16.msra.mxu0 0
        %1818 = vmatprep.subr.bf16.mxu0 0
        %1819 = vmatpush1.bf16.msra.mxu0 0
        %1820 = vmatprep.subr.bf16.mxu0 %v1761
        %1821 = vmatpush1.bf16.msra.mxu0 %v1760
        %1822 = vmatprep.subr.bf16.mxu0 %v1745
        %1823 = vmatpush1.bf16.msra.mxu0 %v1744
        %1824 = vmatprep.subr.bf16.mxu0 0
        %1825 = vmatpush2.bf16.msra.mxu0 0
        %1826 = vmatprep.subr.bf16.mxu0 0
        %1827 = vmatpush2.bf16.msra.mxu0 0
        %1828 = vmatprep.subr.bf16.mxu0 0
        %1829 = vmatpush2.bf16.msra.mxu0 0
        %1830 = vmatprep.subr.bf16.mxu0 0
        %1831 = vmatpush2.bf16.msra.mxu0 0
        %1832 = vmatprep.subr.bf16.mxu0 0
        %1833 = vmatpush2.bf16.msra.mxu0 0
        %1834 = vmatprep.subr.bf16.mxu0 0
        %1835 = vmatpush2.bf16.msra.mxu0 0
        %1836 = vmatprep.subr.bf16.mxu0 0
        %1837 = vmatpush2.bf16.msra.mxu0 0
        %1838 = vmatprep.subr.bf16.mxu0 0
        %1839 = vmatpush2.bf16.msra.mxu0 0
        %1840 = vmatprep.mubr.bf16.mxu0 0
        %1841 = vmatmul.mubr.bf16.gmra.mxu0 %v700
        %v1842 = vpop.f32.mrf.mxu0
        %v1843 = vadd.f32 0.0, %v1842
        %v1844 = vpop.f32.mrf.mxu0
        %v1845 = vadd.f32 0.0, %v1844
        %v1846 = vpop.f32.mrf.mxu0
        %v1847 = vadd.f32 0.0, %v1846
        %v1848 = vpop.f32.mrf.mxu0
        %v1849 = vadd.f32 0.0, %v1848
        %1850 = vdwg.mxu0
        %1851 = vmatprep.subr.bf16.mxu0 0
        %1852 = vmatpush1.bf16.msra.mxu0 0
        %1853 = vmatprep.subr.bf16.mxu0 0
        %1854 = vmatpush1.bf16.msra.mxu0 0
        %1855 = vmatprep.subr.bf16.mxu0 0
        %1856 = vmatpush1.bf16.msra.mxu0 0
        %1857 = vmatprep.subr.bf16.mxu0 0
        %1858 = vmatpush1.bf16.msra.mxu0 0
        %1859 = vmatprep.subr.bf16.mxu0 0
        %1860 = vmatpush1.bf16.msra.mxu0 0
        %1861 = vmatprep.subr.bf16.mxu0 0
        %1862 = vmatpush1.bf16.msra.mxu0 0
        %1863 = vmatprep.subr.bf16.mxu0 %v1763
        %1864 = vmatpush1.bf16.msra.mxu0 %v1762
        %1865 = vmatprep.subr.bf16.mxu0 %v1747
        %1866 = vmatpush1.bf16.msra.mxu0 %v1746
        %1867 = vmatprep.subr.bf16.mxu0 0
        %1868 = vmatpush2.bf16.msra.mxu0 0
        %1869 = vmatprep.subr.bf16.mxu0 0
        %1870 = vmatpush2.bf16.msra.mxu0 0
        %1871 = vmatprep.subr.bf16.mxu0 0
        %1872 = vmatpush2.bf16.msra.mxu0 0
        %1873 = vmatprep.subr.bf16.mxu0 0
        %1874 = vmatpush2.bf16.msra.mxu0 0
        %1875 = vmatprep.subr.bf16.mxu0 0
        %1876 = vmatpush2.bf16.msra.mxu0 0
        %1877 = vmatprep.subr.bf16.mxu0 0
        %1878 = vmatpush2.bf16.msra.mxu0 0
        %1879 = vmatprep.subr.bf16.mxu0 0
        %1880 = vmatpush2.bf16.msra.mxu0 0
        %1881 = vmatprep.subr.bf16.mxu0 0
        %1882 = vmatpush2.bf16.msra.mxu0 0
        %1883 = vmatprep.mubr.bf16.mxu0 0
        %1884 = vmatmul.mubr.bf16.gmra.mxu0 %v700
        %v1885 = vpop.f32.mrf.mxu0
        %v1886 = vadd.f32 0.0, %v1885
        %v1887 = vpop.f32.mrf.mxu0
        %v1888 = vadd.f32 0.0, %v1887
        %v1889 = vpop.f32.mrf.mxu0
        %v1890 = vadd.f32 0.0, %v1889
        %v1891 = vpop.f32.mrf.mxu0
        %v1892 = vadd.f32 0.0, %v1891
        %1893 = vdwg.mxu0
        %1894 = vmatprep.subr.bf16.mxu0 0
        %1895 = vmatpush1.bf16.msra.mxu0 0
        %1896 = vmatprep.subr.bf16.mxu0 0
        %1897 = vmatpush1.bf16.msra.mxu0 0
        %1898 = vmatprep.subr.bf16.mxu0 0
        %1899 = vmatpush1.bf16.msra.mxu0 0
        %1900 = vmatprep.subr.bf16.mxu0 0
        %1901 = vmatpush1.bf16.msra.mxu0 0
        %1902 = vmatprep.subr.bf16.mxu0 0
        %1903 = vmatpush1.bf16.msra.mxu0 0
        %1904 = vmatprep.subr.bf16.mxu0 0
        %1905 = vmatpush1.bf16.msra.mxu0 0
        %1906 = vmatprep.subr.bf16.mxu0 %v1765
        %1907 = vmatpush1.bf16.msra.mxu0 %v1764
        %1908 = vmatprep.subr.bf16.mxu0 %v1749
        %1909 = vmatpush1.bf16.msra.mxu0 %v1748
        %1910 = vmatprep.subr.bf16.mxu0 0
        %1911 = vmatpush2.bf16.msra.mxu0 0
        %1912 = vmatprep.subr.bf16.mxu0 0
        %1913 = vmatpush2.bf16.msra.mxu0 0
        %1914 = vmatprep.subr.bf16.mxu0 0
        %1915 = vmatpush2.bf16.msra.mxu0 0
        %1916 = vmatprep.subr.bf16.mxu0 0
        %1917 = vmatpush2.bf16.msra.mxu0 0
        %1918 = vmatprep.subr.bf16.mxu0 0
        %1919 = vmatpush2.bf16.msra.mxu0 0
        %1920 = vmatprep.subr.bf16.mxu0 0
        %1921 = vmatpush2.bf16.msra.mxu0 0
        %1922 = vmatprep.subr.bf16.mxu0 0
        %1923 = vmatpush2.bf16.msra.mxu0 0
        %1924 = vmatprep.subr.bf16.mxu0 0
        %1925 = vmatpush2.bf16.msra.mxu0 0
        %1926 = vmatprep.mubr.bf16.mxu0 0
        %1927 = vmatmul.mubr.bf16.gmra.mxu0 %v700
        %v1928 = vpop.f32.mrf.mxu0
        %v1929 = vadd.f32 0.0, %v1928
        %v1930 = vpop.f32.mrf.mxu0
        %v1931 = vadd.f32 0.0, %v1930
        %v1932 = vpop.f32.mrf.mxu0
        %v1933 = vadd.f32 0.0, %v1932
        %v1934 = vpop.f32.mrf.mxu0
        %v1935 = vadd.f32 0.0, %v1934
        %1936 = vdwg.mxu0
        %1937 = vmatprep.subr.bf16.mxu0 0
        %1938 = vmatpush1.bf16.msra.mxu0 0
        %1939 = vmatprep.subr.bf16.mxu0 0
        %1940 = vmatpush1.bf16.msra.mxu0 0
        %1941 = vmatprep.subr.bf16.mxu0 0
        %1942 = vmatpush1.bf16.msra.mxu0 0
        %1943 = vmatprep.subr.bf16.mxu0 0
        %1944 = vmatpush1.bf16.msra.mxu0 0
        %1945 = vmatprep.subr.bf16.mxu0 0
        %1946 = vmatpush1.bf16.msra.mxu0 0
        %1947 = vmatprep.subr.bf16.mxu0 0
        %1948 = vmatpush1.bf16.msra.mxu0 0
        %1949 = vmatprep.subr.bf16.mxu0 %v1767
        %1950 = vmatpush1.bf16.msra.mxu0 %v1766
        %1951 = vmatprep.subr.bf16.mxu0 %v1751
        %1952 = vmatpush1.bf16.msra.mxu0 %v1750
        %1953 = vmatprep.subr.bf16.mxu0 0
        %1954 = vmatpush2.bf16.msra.mxu0 0
        %1955 = vmatprep.subr.bf16.mxu0 0
        %1956 = vmatpush2.bf16.msra.mxu0 0
        %1957 = vmatprep.subr.bf16.mxu0 0
        %1958 = vmatpush2.bf16.msra.mxu0 0
        %1959 = vmatprep.subr.bf16.mxu0 0
        %1960 = vmatpush2.bf16.msra.mxu0 0
        %1961 = vmatprep.subr.bf16.mxu0 0
        %1962 = vmatpush2.bf16.msra.mxu0 0
        %1963 = vmatprep.subr.bf16.mxu0 0
        %1964 = vmatpush2.bf16.msra.mxu0 0
        %1965 = vmatprep.subr.bf16.mxu0 0
        %1966 = vmatpush2.bf16.msra.mxu0 0
        %1967 = vmatprep.subr.bf16.mxu0 0
        %1968 = vmatpush2.bf16.msra.mxu0 0
        %1969 = vmatprep.mubr.bf16.mxu0 0
        %1970 = vmatmul.mubr.bf16.gmra.mxu0 %v700
        %v1971 = vpop.f32.mrf.mxu0
        %v1972 = vadd.f32 0.0, %v1971
        %v1973 = vpop.f32.mrf.mxu0
        %v1974 = vadd.f32 0.0, %v1973
        %v1975 = vpop.f32.mrf.mxu0
        %v1976 = vadd.f32 0.0, %v1975
        %v1977 = vpop.f32.mrf.mxu0
        %v1978 = vadd.f32 0.0, %v1977
        %1979 = vdwg.mxu0
        %1980 = vmatprep.subr.bf16.mxu0 0
        %1981 = vmatpush1.bf16.msra.mxu0 0
        %1982 = vmatprep.subr.bf16.mxu0 0
        %1983 = vmatpush1.bf16.msra.mxu0 0
        %1984 = vmatprep.subr.bf16.mxu0 0
        %1985 = vmatpush1.bf16.msra.mxu0 0
        %1986 = vmatprep.subr.bf16.mxu0 0
        %1987 = vmatpush1.bf16.msra.mxu0 0
        %1988 = vmatprep.subr.bf16.mxu0 0
        %1989 = vmatpush1.bf16.msra.mxu0 0
        %1990 = vmatprep.subr.bf16.mxu0 0
        %1991 = vmatpush1.bf16.msra.mxu0 0
        %1992 = vmatprep.subr.bf16.mxu0 %v1769
        %1993 = vmatpush1.bf16.msra.mxu0 %v1768
        %1994 = vmatprep.subr.bf16.mxu0 %v1753
        %1995 = vmatpush1.bf16.msra.mxu0 %v1752
        %1996 = vmatprep.subr.bf16.mxu0 0
        %1997 = vmatpush2.bf16.msra.mxu0 0
        %1998 = vmatprep.subr.bf16.mxu0 0
        %1999 = vmatpush2.bf16.msra.mxu0 0
        %2000 = vmatprep.subr.bf16.mxu0 0
        %2001 = vmatpush2.bf16.msra.mxu0 0
        %2002 = vmatprep.subr.bf16.mxu0 0
        %2003 = vmatpush2.bf16.msra.mxu0 0
        %2004 = vmatprep.subr.bf16.mxu0 0
        %2005 = vmatpush2.bf16.msra.mxu0 0
        %2006 = vmatprep.subr.bf16.mxu0 0
        %2007 = vmatpush2.bf16.msra.mxu0 0
        %2008 = vmatprep.subr.bf16.mxu0 0
        %2009 = vmatpush2.bf16.msra.mxu0 0
        %2010 = vmatprep.subr.bf16.mxu0 0
        %2011 = vmatpush2.bf16.msra.mxu0 0
        %2012 = vmatprep.mubr.bf16.mxu0 0
        %2013 = vmatmul.mubr.bf16.gmra.mxu0 %v700
        %v2014 = vpop.f32.mrf.mxu0
        %v2015 = vadd.f32 0.0, %v2014
        %v2016 = vpop.f32.mrf.mxu0
        %v2017 = vadd.f32 0.0, %v2016
        %v2018 = vpop.f32.mrf.mxu0
        %v2019 = vadd.f32 0.0, %v2018
        %v2020 = vpop.f32.mrf.mxu0
        %v2021 = vadd.f32 0.0, %v2020
        %2022 = vdwg.mxu0
        %2023 = vmatprep.subr.bf16.mxu0 0
        %2024 = vmatpush1.bf16.msra.mxu0 0
        %2025 = vmatprep.subr.bf16.mxu0 0
        %2026 = vmatpush1.bf16.msra.mxu0 0
        %2027 = vmatprep.subr.bf16.mxu0 0
        %2028 = vmatpush1.bf16.msra.mxu0 0
        %2029 = vmatprep.subr.bf16.mxu0 0
        %2030 = vmatpush1.bf16.msra.mxu0 0
        %2031 = vmatprep.subr.bf16.mxu0 0
        %2032 = vmatpush1.bf16.msra.mxu0 0
        %2033 = vmatprep.subr.bf16.mxu0 0
        %2034 = vmatpush1.bf16.msra.mxu0 0
        %2035 = vmatprep.subr.bf16.mxu0 %v1771
        %2036 = vmatpush1.bf16.msra.mxu0 %v1770
        %2037 = vmatprep.subr.bf16.mxu0 %v1755
        %2038 = vmatpush1.bf16.msra.mxu0 %v1754
        %2039 = vmatprep.subr.bf16.mxu0 0
        %2040 = vmatpush2.bf16.msra.mxu0 0
        %2041 = vmatprep.subr.bf16.mxu0 0
        %2042 = vmatpush2.bf16.msra.mxu0 0
        %2043 = vmatprep.subr.bf16.mxu0 0
        %2044 = vmatpush2.bf16.msra.mxu0 0
        %2045 = vmatprep.subr.bf16.mxu0 0
        %2046 = vmatpush2.bf16.msra.mxu0 0
        %2047 = vmatprep.subr.bf16.mxu0 0
        %2048 = vmatpush2.bf16.msra.mxu0 0
        %2049 = vmatprep.subr.bf16.mxu0 0
        %2050 = vmatpush2.bf16.msra.mxu0 0
        %2051 = vmatprep.subr.bf16.mxu0 0
        %2052 = vmatpush2.bf16.msra.mxu0 0
        %2053 = vmatprep.subr.bf16.mxu0 0
        %2054 = vmatpush2.bf16.msra.mxu0 0
        %2055 = vmatprep.mubr.bf16.mxu0 0
        %2056 = vmatmul.mubr.bf16.gmra.mxu0 %v700
        %v2057 = vpop.f32.mrf.mxu0
        %v2058 = vadd.f32 0.0, %v2057
        %v2059 = vpop.f32.mrf.mxu0
        %v2060 = vadd.f32 0.0, %v2059
        %v2061 = vpop.f32.mrf.mxu0
        %v2062 = vadd.f32 0.0, %v2061
        %v2063 = vpop.f32.mrf.mxu0
        %v2064 = vadd.f32 0.0, %v2063
        %2065 = vdwg.mxu0
        %2066 = vmatprep.subr.bf16.mxu0 0
        %2067 = vmatpush1.bf16.msra.mxu0 0
        %2068 = vmatprep.subr.bf16.mxu0 0
        %2069 = vmatpush1.bf16.msra.mxu0 0
        %2070 = vmatprep.subr.bf16.mxu0 0
        %2071 = vmatpush1.bf16.msra.mxu0 0
        %2072 = vmatprep.subr.bf16.mxu0 0
        %2073 = vmatpush1.bf16.msra.mxu0 0
        %2074 = vmatprep.subr.bf16.mxu0 0
        %2075 = vmatpush1.bf16.msra.mxu0 0
        %2076 = vmatprep.subr.bf16.mxu0 0
        %2077 = vmatpush1.bf16.msra.mxu0 0
        %2078 = vmatprep.subr.bf16.mxu0 %v1773
        %2079 = vmatpush1.bf16.msra.mxu0 %v1772
        %2080 = vmatprep.subr.bf16.mxu0 %v1757
        %2081 = vmatpush1.bf16.msra.mxu0 %v1756
        %2082 = vmatprep.subr.bf16.mxu0 0
        %2083 = vmatpush2.bf16.msra.mxu0 0
        %2084 = vmatprep.subr.bf16.mxu0 0
        %2085 = vmatpush2.bf16.msra.mxu0 0
        %2086 = vmatprep.subr.bf16.mxu0 0
        %2087 = vmatpush2.bf16.msra.mxu0 0
        %2088 = vmatprep.subr.bf16.mxu0 0
        %2089 = vmatpush2.bf16.msra.mxu0 0
        %2090 = vmatprep.subr.bf16.mxu0 0
        %2091 = vmatpush2.bf16.msra.mxu0 0
        %2092 = vmatprep.subr.bf16.mxu0 0
        %2093 = vmatpush2.bf16.msra.mxu0 0
        %2094 = vmatprep.subr.bf16.mxu0 0
        %2095 = vmatpush2.bf16.msra.mxu0 0
        %2096 = vmatprep.subr.bf16.mxu0 0
        %2097 = vmatpush2.bf16.msra.mxu0 0
        %2098 = vmatprep.mubr.bf16.mxu0 0
        %2099 = vmatmul.mubr.bf16.gmra.mxu0 %v700
        %v2100 = vpop.f32.mrf.mxu0
        %v2101 = vadd.f32 0.0, %v2100
        %v2102 = vpop.f32.mrf.mxu0
        %v2103 = vadd.f32 0.0, %v2102
        %v2104 = vpop.f32.mrf.mxu0
        %v2105 = vadd.f32 0.0, %v2104
        %v2106 = vpop.f32.mrf.mxu0
        %v2107 = vadd.f32 0.0, %v2106
        %2108 = vdwg.mxu0
        %2109 = vmatprep.subr.bf16.mxu0 0
        %2110 = vmatpush1.bf16.msra.mxu0 0
        %2111 = vmatprep.subr.bf16.mxu0 0
        %2112 = vmatpush1.bf16.msra.mxu0 0
        %2113 = vmatprep.subr.bf16.mxu0 0
        %2114 = vmatpush1.bf16.msra.mxu0 0
        %2115 = vmatprep.subr.bf16.mxu0 0
        %2116 = vmatpush1.bf16.msra.mxu0 0
        %2117 = vmatprep.subr.bf16.mxu0 0
        %2118 = vmatpush1.bf16.msra.mxu0 0
        %2119 = vmatprep.subr.bf16.mxu0 0
        %2120 = vmatpush1.bf16.msra.mxu0 0
        %2121 = vmatprep.subr.bf16.mxu0 %v1775
        %2122 = vmatpush1.bf16.msra.mxu0 %v1774
        %2123 = vmatprep.subr.bf16.mxu0 %v1759
        %2124 = vmatpush1.bf16.msra.mxu0 %v1758
        %2125 = vmatprep.subr.bf16.mxu0 0
        %2126 = vmatpush2.bf16.msra.mxu0 0
        %2127 = vmatprep.subr.bf16.mxu0 0
        %2128 = vmatpush2.bf16.msra.mxu0 0
        %2129 = vmatprep.subr.bf16.mxu0 0
        %2130 = vmatpush2.bf16.msra.mxu0 0
        %2131 = vmatprep.subr.bf16.mxu0 0
        %2132 = vmatpush2.bf16.msra.mxu0 0
        %2133 = vmatprep.subr.bf16.mxu0 0
        %2134 = vmatpush2.bf16.msra.mxu0 0
        %2135 = vmatprep.subr.bf16.mxu0 0
        %2136 = vmatpush2.bf16.msra.mxu0 0
        %2137 = vmatprep.subr.bf16.mxu0 0
        %2138 = vmatpush2.bf16.msra.mxu0 0
        %2139 = vmatprep.subr.bf16.mxu0 0
        %2140 = vmatpush2.bf16.msra.mxu0 0
        %2141 = vmatprep.mubr.bf16.mxu0 0
        %2142 = vmatmul.mubr.bf16.gmra.mxu0 %v700
        %v2143 = vpop.f32.mrf.mxu0
        %v2144 = vadd.f32 0.0, %v2143
        %v2145 = vpop.f32.mrf.mxu0
        %v2146 = vadd.f32 0.0, %v2145
        %v2147 = vpop.f32.mrf.mxu0
        %v2148 = vadd.f32 0.0, %v2147
        %v2149 = vpop.f32.mrf.mxu0
        %v2150 = vadd.f32 0.0, %v2149
        %2151 = vdwg.mxu0
        %v2152 = vmax.f32 %v1583, %v1843
        %v2153 = vmax.f32 %v1584, %v1845
        %v2154 = vmax.f32 %v1585, %v1886
        %v2155 = vmax.f32 %v1586, %v1888
        %v2156 = vmax.f32 %v1587, %v1929
        %v2157 = vmax.f32 %v1588, %v1931
        %v2158 = vmax.f32 %v1589, %v1972
        %v2159 = vmax.f32 %v1590, %v1974
        %v2160 = vmax.f32 %v1591, %v2015
        %v2161 = vmax.f32 %v1592, %v2017
        %v2162 = vmax.f32 %v1593, %v2058
        %v2163 = vmax.f32 %v1594, %v2060
        %v2164 = vmax.f32 %v1595, %v2101
        %v2165 = vmax.f32 %v1596, %v2103
        %v2166 = vmax.f32 %v1597, %v2144
        %v2167 = vmax.f32 %v1598, %v2146
        %v2168 = vmax.f32 %v1599, %v1847
        %v2169 = vmax.f32 %v1600, %v1849
        %v2170 = vmax.f32 %v1601, %v1890
        %v2171 = vmax.f32 %v1602, %v1892
        %v2172 = vmax.f32 %v1603, %v1933
        %v2173 = vmax.f32 %v1604, %v1935
        %v2174 = vmax.f32 %v1605, %v1976
        %v2175 = vmax.f32 %v1606, %v1978
        %v2176 = vmax.f32 %v1607, %v2019
        %v2177 = vmax.f32 %v1608, %v2021
        %v2178 = vmax.f32 %v1609, %v2062
        %v2179 = vmax.f32 %v1610, %v2064
        %v2180 = vmax.f32 %v1611, %v2105
        %v2181 = vmax.f32 %v1612, %v2107
        %v2182 = vmax.f32 %v1613, %v2148
        %v2183 = vmax.f32 %v1614, %v2150
        %s2184 = scalar_lea.vmem %s472, 768 [#allocation3]
        %v2185 = vld [vmem:[%s2184] sm:$0xff]
        %v2186 = vld [vmem:[%s2184 + $0x8] sm:$0xff]
        %v2187 = vld [vmem:[%s2184 + $0x10] sm:$0xff]
        %v2188 = vld [vmem:[%s2184 + $0x18] sm:$0xff]
        %v2189 = vld [vmem:[%s2184 + $0x20] sm:$0xff]
        %v2190 = vld [vmem:[%s2184 + $0x28] sm:$0xff]
        %v2191 = vld [vmem:[%s2184 + $0x30] sm:$0xff]
        %v2192 = vld [vmem:[%s2184 + $0x38] sm:$0xff]
        %v2193 = vld [vmem:[%s2184 + $0x40] sm:$0xff]
        %v2194 = vld [vmem:[%s2184 + $0x48] sm:$0xff]
        %v2195 = vld [vmem:[%s2184 + $0x50] sm:$0xff]
        %v2196 = vld [vmem:[%s2184 + $0x58] sm:$0xff]
        %v2197 = vld [vmem:[%s2184 + $0x60] sm:$0xff]
        %v2198 = vld [vmem:[%s2184 + $0x68] sm:$0xff]
        %v2199 = vld [vmem:[%s2184 + $0x70] sm:$0xff]
        %v2200 = vld [vmem:[%s2184 + $0x78] sm:$0xff]
        %v2201 = vld [vmem:[%s2184 + $0x80] sm:$0xff]
        %v2202 = vld [vmem:[%s2184 + $0x88] sm:$0xff]
        %v2203 = vld [vmem:[%s2184 + $0x90] sm:$0xff]
        %v2204 = vld [vmem:[%s2184 + $0x98] sm:$0xff]
        %v2205 = vld [vmem:[%s2184 + $0xa0] sm:$0xff]
        %v2206 = vld [vmem:[%s2184 + $0xa8] sm:$0xff]
        %v2207 = vld [vmem:[%s2184 + $0xb0] sm:$0xff]
        %v2208 = vld [vmem:[%s2184 + $0xb8] sm:$0xff]
        %v2209 = vld [vmem:[%s2184 + $0xc0] sm:$0xff]
        %v2210 = vld [vmem:[%s2184 + $0xc8] sm:$0xff]
        %v2211 = vld [vmem:[%s2184 + $0xd0] sm:$0xff]
        %v2212 = vld [vmem:[%s2184 + $0xd8] sm:$0xff]
        %v2213 = vld [vmem:[%s2184 + $0xe0] sm:$0xff]
        %v2214 = vld [vmem:[%s2184 + $0xe8] sm:$0xff]
        %v2215 = vld [vmem:[%s2184 + $0xf0] sm:$0xff]
        %v2216 = vld [vmem:[%s2184 + $0xf8] sm:$0xff]
        %v2249 = vunpack.c.l.b16 %v2185
        %v2250 = vunpack.c.h.b16 %v2185
        %v2251 = vunpack.c.l.b16 %v2186
        %v2252 = vunpack.c.h.b16 %v2186
        %v2253 = vunpack.c.l.b16 %v2187
        %v2254 = vunpack.c.h.b16 %v2187
        %v2255 = vunpack.c.l.b16 %v2188
        %v2256 = vunpack.c.h.b16 %v2188
        %v2257 = vunpack.c.l.b16 %v2189
        %v2258 = vunpack.c.h.b16 %v2189
        %v2259 = vunpack.c.l.b16 %v2190
        %v2260 = vunpack.c.h.b16 %v2190
        %v2261 = vunpack.c.l.b16 %v2191
        %v2262 = vunpack.c.h.b16 %v2191
        %v2263 = vunpack.c.l.b16 %v2192
        %v2264 = vunpack.c.h.b16 %v2192
        %v2265 = vunpack.c.l.b16 %v2193
        %v2266 = vunpack.c.h.b16 %v2193
        %v2267 = vunpack.c.l.b16 %v2194
        %v2268 = vunpack.c.h.b16 %v2194
        %v2269 = vunpack.c.l.b16 %v2195
        %v2270 = vunpack.c.h.b16 %v2195
        %v2271 = vunpack.c.l.b16 %v2196
        %v2272 = vunpack.c.h.b16 %v2196
        %v2273 = vunpack.c.l.b16 %v2197
        %v2274 = vunpack.c.h.b16 %v2197
        %v2275 = vunpack.c.l.b16 %v2198
        %v2276 = vunpack.c.h.b16 %v2198
        %v2277 = vunpack.c.l.b16 %v2199
        %v2278 = vunpack.c.h.b16 %v2199
        %v2279 = vunpack.c.l.b16 %v2200
        %v2280 = vunpack.c.h.b16 %v2200
        %v2281 = vunpack.c.l.b16 %v2201
        %v2282 = vunpack.c.h.b16 %v2201
        %v2283 = vunpack.c.l.b16 %v2202
        %v2284 = vunpack.c.h.b16 %v2202
        %v2285 = vunpack.c.l.b16 %v2203
        %v2286 = vunpack.c.h.b16 %v2203
        %v2287 = vunpack.c.l.b16 %v2204
        %v2288 = vunpack.c.h.b16 %v2204
        %v2289 = vunpack.c.l.b16 %v2205
        %v2290 = vunpack.c.h.b16 %v2205
        %v2291 = vunpack.c.l.b16 %v2206
        %v2292 = vunpack.c.h.b16 %v2206
        %v2293 = vunpack.c.l.b16 %v2207
        %v2294 = vunpack.c.h.b16 %v2207
        %v2295 = vunpack.c.l.b16 %v2208
        %v2296 = vunpack.c.h.b16 %v2208
        %v2297 = vunpack.c.l.b16 %v2209
        %v2298 = vunpack.c.h.b16 %v2209
        %v2299 = vunpack.c.l.b16 %v2210
        %v2300 = vunpack.c.h.b16 %v2210
        %v2301 = vunpack.c.l.b16 %v2211
        %v2302 = vunpack.c.h.b16 %v2211
        %v2303 = vunpack.c.l.b16 %v2212
        %v2304 = vunpack.c.h.b16 %v2212
        %v2305 = vunpack.c.l.b16 %v2213
        %v2306 = vunpack.c.h.b16 %v2213
        %v2307 = vunpack.c.l.b16 %v2214
        %v2308 = vunpack.c.h.b16 %v2214
        %v2309 = vunpack.c.l.b16 %v2215
        %v2310 = vunpack.c.h.b16 %v2215
        %v2311 = vunpack.c.l.b16 %v2216
        %v2312 = vunpack.c.h.b16 %v2216
        %v2313 = vpack.c.b16 %v2265, %v2249
        %v2314 = vpack.c.b16 %v2266, %v2250
        %v2315 = vpack.c.b16 %v2267, %v2251
        %v2316 = vpack.c.b16 %v2268, %v2252
        %v2317 = vpack.c.b16 %v2269, %v2253
        %v2318 = vpack.c.b16 %v2270, %v2254
        %v2319 = vpack.c.b16 %v2271, %v2255
        %v2320 = vpack.c.b16 %v2272, %v2256
        %v2321 = vpack.c.b16 %v2273, %v2257
        %v2322 = vpack.c.b16 %v2274, %v2258
        %v2323 = vpack.c.b16 %v2275, %v2259
        %v2324 = vpack.c.b16 %v2276, %v2260
        %v2325 = vpack.c.b16 %v2277, %v2261
        %v2326 = vpack.c.b16 %v2278, %v2262
        %v2327 = vpack.c.b16 %v2279, %v2263
        %v2328 = vpack.c.b16 %v2280, %v2264
        %v2329 = vpack.c.b16 %v2297, %v2281
        %v2330 = vpack.c.b16 %v2298, %v2282
        %v2331 = vpack.c.b16 %v2299, %v2283
        %v2332 = vpack.c.b16 %v2300, %v2284
        %v2333 = vpack.c.b16 %v2301, %v2285
        %v2334 = vpack.c.b16 %v2302, %v2286
        %v2335 = vpack.c.b16 %v2303, %v2287
        %v2336 = vpack.c.b16 %v2304, %v2288
        %v2337 = vpack.c.b16 %v2305, %v2289
        %v2338 = vpack.c.b16 %v2306, %v2290
        %v2339 = vpack.c.b16 %v2307, %v2291
        %v2340 = vpack.c.b16 %v2308, %v2292
        %v2341 = vpack.c.b16 %v2309, %v2293
        %v2342 = vpack.c.b16 %v2310, %v2294
        %v2343 = vpack.c.b16 %v2311, %v2295
        %v2344 = vpack.c.b16 %v2312, %v2296
        %2377 = vmatprep.subr.bf16.mxu0 0
        %2378 = vmatpush1.bf16.msra.mxu0 0
        %2379 = vmatprep.subr.bf16.mxu0 0
        %2380 = vmatpush1.bf16.msra.mxu0 0
        %2381 = vmatprep.subr.bf16.mxu0 0
        %2382 = vmatpush1.bf16.msra.mxu0 0
        %2383 = vmatprep.subr.bf16.mxu0 0
        %2384 = vmatpush1.bf16.msra.mxu0 0
        %2385 = vmatprep.subr.bf16.mxu0 0
        %2386 = vmatpush1.bf16.msra.mxu0 0
        %2387 = vmatprep.subr.bf16.mxu0 0
        %2388 = vmatpush1.bf16.msra.mxu0 0
        %2389 = vmatprep.subr.bf16.mxu0 %v2330
        %2390 = vmatpush1.bf16.msra.mxu0 %v2329
        %2391 = vmatprep.subr.bf16.mxu0 %v2314
        %2392 = vmatpush1.bf16.msra.mxu0 %v2313
        %2393 = vmatprep.subr.bf16.mxu0 0
        %2394 = vmatpush2.bf16.msra.mxu0 0
        %2395 = vmatprep.subr.bf16.mxu0 0
        %2396 = vmatpush2.bf16.msra.mxu0 0
        %2397 = vmatprep.subr.bf16.mxu0 0
        %2398 = vmatpush2.bf16.msra.mxu0 0
        %2399 = vmatprep.subr.bf16.mxu0 0
        %2400 = vmatpush2.bf16.msra.mxu0 0
        %2401 = vmatprep.subr.bf16.mxu0 0
        %2402 = vmatpush2.bf16.msra.mxu0 0
        %2403 = vmatprep.subr.bf16.mxu0 0
        %2404 = vmatpush2.bf16.msra.mxu0 0
        %2405 = vmatprep.subr.bf16.mxu0 0
        %2406 = vmatpush2.bf16.msra.mxu0 0
        %2407 = vmatprep.subr.bf16.mxu0 0
        %2408 = vmatpush2.bf16.msra.mxu0 0
        %2409 = vmatprep.mubr.bf16.mxu0 0
        %2410 = vmatmul.mubr.bf16.gmra.mxu0 %v700
        %v2411 = vpop.f32.mrf.mxu0
        %v2412 = vadd.f32 0.0, %v2411
        %v2413 = vpop.f32.mrf.mxu0
        %v2414 = vadd.f32 0.0, %v2413
        %v2415 = vpop.f32.mrf.mxu0
        %v2416 = vadd.f32 0.0, %v2415
        %v2417 = vpop.f32.mrf.mxu0
        %v2418 = vadd.f32 0.0, %v2417
        %2419 = vdwg.mxu0
        %2420 = vmatprep.subr.bf16.mxu0 0
        %2421 = vmatpush1.bf16.msra.mxu0 0
        %2422 = vmatprep.subr.bf16.mxu0 0
        %2423 = vmatpush1.bf16.msra.mxu0 0
        %2424 = vmatprep.subr.bf16.mxu0 0
        %2425 = vmatpush1.bf16.msra.mxu0 0
        %2426 = vmatprep.subr.bf16.mxu0 0
        %2427 = vmatpush1.bf16.msra.mxu0 0
        %2428 = vmatprep.subr.bf16.mxu0 0
        %2429 = vmatpush1.bf16.msra.mxu0 0
        %2430 = vmatprep.subr.bf16.mxu0 0
        %2431 = vmatpush1.bf16.msra.mxu0 0
        %2432 = vmatprep.subr.bf16.mxu0 %v2332
        %2433 = vmatpush1.bf16.msra.mxu0 %v2331
        %2434 = vmatprep.subr.bf16.mxu0 %v2316
        %2435 = vmatpush1.bf16.msra.mxu0 %v2315
        %2436 = vmatprep.subr.bf16.mxu0 0
        %2437 = vmatpush2.bf16.msra.mxu0 0
        %2438 = vmatprep.subr.bf16.mxu0 0
        %2439 = vmatpush2.bf16.msra.mxu0 0
        %2440 = vmatprep.subr.bf16.mxu0 0
        %2441 = vmatpush2.bf16.msra.mxu0 0
        %2442 = vmatprep.subr.bf16.mxu0 0
        %2443 = vmatpush2.bf16.msra.mxu0 0
        %2444 = vmatprep.subr.bf16.mxu0 0
        %2445 = vmatpush2.bf16.msra.mxu0 0
        %2446 = vmatprep.subr.bf16.mxu0 0
        %2447 = vmatpush2.bf16.msra.mxu0 0
        %2448 = vmatprep.subr.bf16.mxu0 0
        %2449 = vmatpush2.bf16.msra.mxu0 0
        %2450 = vmatprep.subr.bf16.mxu0 0
        %2451 = vmatpush2.bf16.msra.mxu0 0
        %2452 = vmatprep.mubr.bf16.mxu0 0
        %2453 = vmatmul.mubr.bf16.gmra.mxu0 %v700
        %v2454 = vpop.f32.mrf.mxu0
        %v2455 = vadd.f32 0.0, %v2454
        %v2456 = vpop.f32.mrf.mxu0
        %v2457 = vadd.f32 0.0, %v2456
        %v2458 = vpop.f32.mrf.mxu0
        %v2459 = vadd.f32 0.0, %v2458
        %v2460 = vpop.f32.mrf.mxu0
        %v2461 = vadd.f32 0.0, %v2460
        %2462 = vdwg.mxu0
        %2463 = vmatprep.subr.bf16.mxu0 0
        %2464 = vmatpush1.bf16.msra.mxu0 0
        %2465 = vmatprep.subr.bf16.mxu0 0
        %2466 = vmatpush1.bf16.msra.mxu0 0
        %2467 = vmatprep.subr.bf16.mxu0 0
        %2468 = vmatpush1.bf16.msra.mxu0 0
        %2469 = vmatprep.subr.bf16.mxu0 0
        %2470 = vmatpush1.bf16.msra.mxu0 0
        %2471 = vmatprep.subr.bf16.mxu0 0
        %2472 = vmatpush1.bf16.msra.mxu0 0
        %2473 = vmatprep.subr.bf16.mxu0 0
        %2474 = vmatpush1.bf16.msra.mxu0 0
        %2475 = vmatprep.subr.bf16.mxu0 %v2334
        %2476 = vmatpush1.bf16.msra.mxu0 %v2333
        %2477 = vmatprep.subr.bf16.mxu0 %v2318
        %2478 = vmatpush1.bf16.msra.mxu0 %v2317
        %2479 = vmatprep.subr.bf16.mxu0 0
        %2480 = vmatpush2.bf16.msra.mxu0 0
        %2481 = vmatprep.subr.bf16.mxu0 0
        %2482 = vmatpush2.bf16.msra.mxu0 0
        %2483 = vmatprep.subr.bf16.mxu0 0
        %2484 = vmatpush2.bf16.msra.mxu0 0
        %2485 = vmatprep.subr.bf16.mxu0 0
        %2486 = vmatpush2.bf16.msra.mxu0 0
        %2487 = vmatprep.subr.bf16.mxu0 0
        %2488 = vmatpush2.bf16.msra.mxu0 0
        %2489 = vmatprep.subr.bf16.mxu0 0
        %2490 = vmatpush2.bf16.msra.mxu0 0
        %2491 = vmatprep.subr.bf16.mxu0 0
        %2492 = vmatpush2.bf16.msra.mxu0 0
        %2493 = vmatprep.subr.bf16.mxu0 0
        %2494 = vmatpush2.bf16.msra.mxu0 0
        %2495 = vmatprep.mubr.bf16.mxu0 0
        %2496 = vmatmul.mubr.bf16.gmra.mxu0 %v700
        %v2497 = vpop.f32.mrf.mxu0
        %v2498 = vadd.f32 0.0, %v2497
        %v2499 = vpop.f32.mrf.mxu0
        %v2500 = vadd.f32 0.0, %v2499
        %v2501 = vpop.f32.mrf.mxu0
        %v2502 = vadd.f32 0.0, %v2501
        %v2503 = vpop.f32.mrf.mxu0
        %v2504 = vadd.f32 0.0, %v2503
        %2505 = vdwg.mxu0
        %2506 = vmatprep.subr.bf16.mxu0 0
        %2507 = vmatpush1.bf16.msra.mxu0 0
        %2508 = vmatprep.subr.bf16.mxu0 0
        %2509 = vmatpush1.bf16.msra.mxu0 0
        %2510 = vmatprep.subr.bf16.mxu0 0
        %2511 = vmatpush1.bf16.msra.mxu0 0
        %2512 = vmatprep.subr.bf16.mxu0 0
        %2513 = vmatpush1.bf16.msra.mxu0 0
        %2514 = vmatprep.subr.bf16.mxu0 0
        %2515 = vmatpush1.bf16.msra.mxu0 0
        %2516 = vmatprep.subr.bf16.mxu0 0
        %2517 = vmatpush1.bf16.msra.mxu0 0
        %2518 = vmatprep.subr.bf16.mxu0 %v2336
        %2519 = vmatpush1.bf16.msra.mxu0 %v2335
        %2520 = vmatprep.subr.bf16.mxu0 %v2320
        %2521 = vmatpush1.bf16.msra.mxu0 %v2319
        %2522 = vmatprep.subr.bf16.mxu0 0
        %2523 = vmatpush2.bf16.msra.mxu0 0
        %2524 = vmatprep.subr.bf16.mxu0 0
        %2525 = vmatpush2.bf16.msra.mxu0 0
        %2526 = vmatprep.subr.bf16.mxu0 0
        %2527 = vmatpush2.bf16.msra.mxu0 0
        %2528 = vmatprep.subr.bf16.mxu0 0
        %2529 = vmatpush2.bf16.msra.mxu0 0
        %2530 = vmatprep.subr.bf16.mxu0 0
        %2531 = vmatpush2.bf16.msra.mxu0 0
        %2532 = vmatprep.subr.bf16.mxu0 0
        %2533 = vmatpush2.bf16.msra.mxu0 0
        %2534 = vmatprep.subr.bf16.mxu0 0
        %2535 = vmatpush2.bf16.msra.mxu0 0
        %2536 = vmatprep.subr.bf16.mxu0 0
        %2537 = vmatpush2.bf16.msra.mxu0 0
        %2538 = vmatprep.mubr.bf16.mxu0 0
        %2539 = vmatmul.mubr.bf16.gmra.mxu0 %v700
        %v2540 = vpop.f32.mrf.mxu0
        %v2541 = vadd.f32 0.0, %v2540
        %v2542 = vpop.f32.mrf.mxu0
        %v2543 = vadd.f32 0.0, %v2542
        %v2544 = vpop.f32.mrf.mxu0
        %v2545 = vadd.f32 0.0, %v2544
        %v2546 = vpop.f32.mrf.mxu0
        %v2547 = vadd.f32 0.0, %v2546
        %2548 = vdwg.mxu0
        %2549 = vmatprep.subr.bf16.mxu0 0
        %2550 = vmatpush1.bf16.msra.mxu0 0
        %2551 = vmatprep.subr.bf16.mxu0 0
        %2552 = vmatpush1.bf16.msra.mxu0 0
        %2553 = vmatprep.subr.bf16.mxu0 0
        %2554 = vmatpush1.bf16.msra.mxu0 0
        %2555 = vmatprep.subr.bf16.mxu0 0
        %2556 = vmatpush1.bf16.msra.mxu0 0
        %2557 = vmatprep.subr.bf16.mxu0 0
        %2558 = vmatpush1.bf16.msra.mxu0 0
        %2559 = vmatprep.subr.bf16.mxu0 0
        %2560 = vmatpush1.bf16.msra.mxu0 0
        %2561 = vmatprep.subr.bf16.mxu0 %v2338
        %2562 = vmatpush1.bf16.msra.mxu0 %v2337
        %2563 = vmatprep.subr.bf16.mxu0 %v2322
        %2564 = vmatpush1.bf16.msra.mxu0 %v2321
        %2565 = vmatprep.subr.bf16.mxu0 0
        %2566 = vmatpush2.bf16.msra.mxu0 0
        %2567 = vmatprep.subr.bf16.mxu0 0
        %2568 = vmatpush2.bf16.msra.mxu0 0
        %2569 = vmatprep.subr.bf16.mxu0 0
        %2570 = vmatpush2.bf16.msra.mxu0 0
        %2571 = vmatprep.subr.bf16.mxu0 0
        %2572 = vmatpush2.bf16.msra.mxu0 0
        %2573 = vmatprep.subr.bf16.mxu0 0
        %2574 = vmatpush2.bf16.msra.mxu0 0
        %2575 = vmatprep.subr.bf16.mxu0 0
        %2576 = vmatpush2.bf16.msra.mxu0 0
        %2577 = vmatprep.subr.bf16.mxu0 0
        %2578 = vmatpush2.bf16.msra.mxu0 0
        %2579 = vmatprep.subr.bf16.mxu0 0
        %2580 = vmatpush2.bf16.msra.mxu0 0
        %2581 = vmatprep.mubr.bf16.mxu0 0
        %2582 = vmatmul.mubr.bf16.gmra.mxu0 %v700
        %v2583 = vpop.f32.mrf.mxu0
        %v2584 = vadd.f32 0.0, %v2583
        %v2585 = vpop.f32.mrf.mxu0
        %v2586 = vadd.f32 0.0, %v2585
        %v2587 = vpop.f32.mrf.mxu0
        %v2588 = vadd.f32 0.0, %v2587
        %v2589 = vpop.f32.mrf.mxu0
        %v2590 = vadd.f32 0.0, %v2589
        %2591 = vdwg.mxu0
        %2592 = vmatprep.subr.bf16.mxu0 0
        %2593 = vmatpush1.bf16.msra.mxu0 0
        %2594 = vmatprep.subr.bf16.mxu0 0
        %2595 = vmatpush1.bf16.msra.mxu0 0
        %2596 = vmatprep.subr.bf16.mxu0 0
        %2597 = vmatpush1.bf16.msra.mxu0 0
        %2598 = vmatprep.subr.bf16.mxu0 0
        %2599 = vmatpush1.bf16.msra.mxu0 0
        %2600 = vmatprep.subr.bf16.mxu0 0
        %2601 = vmatpush1.bf16.msra.mxu0 0
        %2602 = vmatprep.subr.bf16.mxu0 0
        %2603 = vmatpush1.bf16.msra.mxu0 0
        %2604 = vmatprep.subr.bf16.mxu0 %v2340
        %2605 = vmatpush1.bf16.msra.mxu0 %v2339
        %2606 = vmatprep.subr.bf16.mxu0 %v2324
        %2607 = vmatpush1.bf16.msra.mxu0 %v2323
        %2608 = vmatprep.subr.bf16.mxu0 0
        %2609 = vmatpush2.bf16.msra.mxu0 0
        %2610 = vmatprep.subr.bf16.mxu0 0
        %2611 = vmatpush2.bf16.msra.mxu0 0
        %2612 = vmatprep.subr.bf16.mxu0 0
        %2613 = vmatpush2.bf16.msra.mxu0 0
        %2614 = vmatprep.subr.bf16.mxu0 0
        %2615 = vmatpush2.bf16.msra.mxu0 0
        %2616 = vmatprep.subr.bf16.mxu0 0
        %2617 = vmatpush2.bf16.msra.mxu0 0
        %2618 = vmatprep.subr.bf16.mxu0 0
        %2619 = vmatpush2.bf16.msra.mxu0 0
        %2620 = vmatprep.subr.bf16.mxu0 0
        %2621 = vmatpush2.bf16.msra.mxu0 0
        %2622 = vmatprep.subr.bf16.mxu0 0
        %2623 = vmatpush2.bf16.msra.mxu0 0
        %2624 = vmatprep.mubr.bf16.mxu0 0
        %2625 = vmatmul.mubr.bf16.gmra.mxu0 %v700
        %v2626 = vpop.f32.mrf.mxu0
        %v2627 = vadd.f32 0.0, %v2626
        %v2628 = vpop.f32.mrf.mxu0
        %v2629 = vadd.f32 0.0, %v2628
        %v2630 = vpop.f32.mrf.mxu0
        %v2631 = vadd.f32 0.0, %v2630
        %v2632 = vpop.f32.mrf.mxu0
        %v2633 = vadd.f32 0.0, %v2632
        %2634 = vdwg.mxu0
        %2635 = vmatprep.subr.bf16.mxu0 0
        %2636 = vmatpush1.bf16.msra.mxu0 0
        %2637 = vmatprep.subr.bf16.mxu0 0
        %2638 = vmatpush1.bf16.msra.mxu0 0
        %2639 = vmatprep.subr.bf16.mxu0 0
        %2640 = vmatpush1.bf16.msra.mxu0 0
        %2641 = vmatprep.subr.bf16.mxu0 0
        %2642 = vmatpush1.bf16.msra.mxu0 0
        %2643 = vmatprep.subr.bf16.mxu0 0
        %2644 = vmatpush1.bf16.msra.mxu0 0
        %2645 = vmatprep.subr.bf16.mxu0 0
        %2646 = vmatpush1.bf16.msra.mxu0 0
        %2647 = vmatprep.subr.bf16.mxu0 %v2342
        %2648 = vmatpush1.bf16.msra.mxu0 %v2341
        %2649 = vmatprep.subr.bf16.mxu0 %v2326
        %2650 = vmatpush1.bf16.msra.mxu0 %v2325
        %2651 = vmatprep.subr.bf16.mxu0 0
        %2652 = vmatpush2.bf16.msra.mxu0 0
        %2653 = vmatprep.subr.bf16.mxu0 0
        %2654 = vmatpush2.bf16.msra.mxu0 0
        %2655 = vmatprep.subr.bf16.mxu0 0
        %2656 = vmatpush2.bf16.msra.mxu0 0
        %2657 = vmatprep.subr.bf16.mxu0 0
        %2658 = vmatpush2.bf16.msra.mxu0 0
        %2659 = vmatprep.subr.bf16.mxu0 0
        %2660 = vmatpush2.bf16.msra.mxu0 0
        %2661 = vmatprep.subr.bf16.mxu0 0
        %2662 = vmatpush2.bf16.msra.mxu0 0
        %2663 = vmatprep.subr.bf16.mxu0 0
        %2664 = vmatpush2.bf16.msra.mxu0 0
        %2665 = vmatprep.subr.bf16.mxu0 0
        %2666 = vmatpush2.bf16.msra.mxu0 0
        %2667 = vmatprep.mubr.bf16.mxu0 0
        %2668 = vmatmul.mubr.bf16.gmra.mxu0 %v700
        %v2669 = vpop.f32.mrf.mxu0
        %v2670 = vadd.f32 0.0, %v2669
        %v2671 = vpop.f32.mrf.mxu0
        %v2672 = vadd.f32 0.0, %v2671
        %v2673 = vpop.f32.mrf.mxu0
        %v2674 = vadd.f32 0.0, %v2673
        %v2675 = vpop.f32.mrf.mxu0
        %v2676 = vadd.f32 0.0, %v2675
        %2677 = vdwg.mxu0
        %2678 = vmatprep.subr.bf16.mxu0 0
        %2679 = vmatpush1.bf16.msra.mxu0 0
        %2680 = vmatprep.subr.bf16.mxu0 0
        %2681 = vmatpush1.bf16.msra.mxu0 0
        %2682 = vmatprep.subr.bf16.mxu0 0
        %2683 = vmatpush1.bf16.msra.mxu0 0
        %2684 = vmatprep.subr.bf16.mxu0 0
        %2685 = vmatpush1.bf16.msra.mxu0 0
        %2686 = vmatprep.subr.bf16.mxu0 0
        %2687 = vmatpush1.bf16.msra.mxu0 0
        %2688 = vmatprep.subr.bf16.mxu0 0
        %2689 = vmatpush1.bf16.msra.mxu0 0
        %2690 = vmatprep.subr.bf16.mxu0 %v2344
        %2691 = vmatpush1.bf16.msra.mxu0 %v2343
        %2692 = vmatprep.subr.bf16.mxu0 %v2328
        %2693 = vmatpush1.bf16.msra.mxu0 %v2327
        %2694 = vmatprep.subr.bf16.mxu0 0
        %2695 = vmatpush2.bf16.msra.mxu0 0
        %2696 = vmatprep.subr.bf16.mxu0 0
        %2697 = vmatpush2.bf16.msra.mxu0 0
        %2698 = vmatprep.subr.bf16.mxu0 0
        %2699 = vmatpush2.bf16.msra.mxu0 0
        %2700 = vmatprep.subr.bf16.mxu0 0
        %2701 = vmatpush2.bf16.msra.mxu0 0
        %2702 = vmatprep.subr.bf16.mxu0 0
        %2703 = vmatpush2.bf16.msra.mxu0 0
        %2704 = vmatprep.subr.bf16.mxu0 0
        %2705 = vmatpush2.bf16.msra.mxu0 0
        %2706 = vmatprep.subr.bf16.mxu0 0
        %2707 = vmatpush2.bf16.msra.mxu0 0
        %2708 = vmatprep.subr.bf16.mxu0 0
        %2709 = vmatpush2.bf16.msra.mxu0 0
        %2710 = vmatprep.mubr.bf16.mxu0 0
        %2711 = vmatmul.mubr.bf16.gmra.mxu0 %v700
        %v2712 = vpop.f32.mrf.mxu0
        %v2713 = vadd.f32 0.0, %v2712
        %v2714 = vpop.f32.mrf.mxu0
        %v2715 = vadd.f32 0.0, %v2714
        %v2716 = vpop.f32.mrf.mxu0
        %v2717 = vadd.f32 0.0, %v2716
        %v2718 = vpop.f32.mrf.mxu0
        %v2719 = vadd.f32 0.0, %v2718
        %2720 = vdwg.mxu0
        %v2721 = vmax.f32 %v2152, %v2412
        %v2722 = vmax.f32 %v2153, %v2414
        %v2723 = vmax.f32 %v2154, %v2455
        %v2724 = vmax.f32 %v2155, %v2457
        %v2725 = vmax.f32 %v2156, %v2498
        %v2726 = vmax.f32 %v2157, %v2500
        %v2727 = vmax.f32 %v2158, %v2541
        %v2728 = vmax.f32 %v2159, %v2543
        %v2729 = vmax.f32 %v2160, %v2584
        %v2730 = vmax.f32 %v2161, %v2586
        %v2731 = vmax.f32 %v2162, %v2627
        %v2732 = vmax.f32 %v2163, %v2629
        %v2733 = vmax.f32 %v2164, %v2670
        %v2734 = vmax.f32 %v2165, %v2672
        %v2735 = vmax.f32 %v2166, %v2713
        %v2736 = vmax.f32 %v2167, %v2715
        %v2737 = vmax.f32 %v2168, %v2416
        %v2738 = vmax.f32 %v2169, %v2418
        %v2739 = vmax.f32 %v2170, %v2459
        %v2740 = vmax.f32 %v2171, %v2461
        %v2741 = vmax.f32 %v2172, %v2502
        %v2742 = vmax.f32 %v2173, %v2504
        %v2743 = vmax.f32 %v2174, %v2545
        %v2744 = vmax.f32 %v2175, %v2547
        %v2745 = vmax.f32 %v2176, %v2588
        %v2746 = vmax.f32 %v2177, %v2590
        %v2747 = vmax.f32 %v2178, %v2631
        %v2748 = vmax.f32 %v2179, %v2633
        %v2749 = vmax.f32 %v2180, %v2674
        %v2750 = vmax.f32 %v2181, %v2676
        %v2751 = vmax.f32 %v2182, %v2717
        %v2752 = vmax.f32 %v2183, %v2719
        %v2753 = vld [vmem:[%s2] sm:$0xff]
        %v2754 = vld [vmem:[%s2 + $0x8] sm:$0xff]
        %2756 = vset.pattern.permute.xlu0 0
        %2757 = vperm.xlu0 %2756, %v2753
        %v2758 = vpop.permute.xlu0 %2757
        %2761 = vset.pattern.permute.xlu0 0
        %2762 = vperm.xlu0 %2761, %v2754
        %v2763 = vpop.permute.xlu0 %2762
        %v2765 = vadd.f32 %v2721, %v2758
        %v2766 = vadd.f32 %v2722, %v2758
        %v2767 = vadd.f32 %v2723, %v2758
        %v2768 = vadd.f32 %v2724, %v2758
        %v2769 = vadd.f32 %v2725, %v2758
        %v2770 = vadd.f32 %v2726, %v2758
        %v2771 = vadd.f32 %v2727, %v2758
        %v2772 = vadd.f32 %v2728, %v2758
        %v2773 = vadd.f32 %v2729, %v2758
        %v2774 = vadd.f32 %v2730, %v2758
        %v2775 = vadd.f32 %v2731, %v2758
        %v2776 = vadd.f32 %v2732, %v2758
        %v2777 = vadd.f32 %v2733, %v2758
        %v2778 = vadd.f32 %v2734, %v2758
        %v2779 = vadd.f32 %v2735, %v2758
        %v2780 = vadd.f32 %v2736, %v2758
        %v2781 = vadd.f32 %v2737, %v2763
        %v2782 = vadd.f32 %v2738, %v2763
        %v2783 = vadd.f32 %v2739, %v2763
        %v2784 = vadd.f32 %v2740, %v2763
        %v2785 = vadd.f32 %v2741, %v2763
        %v2786 = vadd.f32 %v2742, %v2763
        %v2787 = vadd.f32 %v2743, %v2763
        %v2788 = vadd.f32 %v2744, %v2763
        %v2789 = vadd.f32 %v2745, %v2763
        %v2790 = vadd.f32 %v2746, %v2763
        %v2791 = vadd.f32 %v2747, %v2763
        %v2792 = vadd.f32 %v2748, %v2763
        %v2793 = vadd.f32 %v2749, %v2763
        %v2794 = vadd.f32 %v2750, %v2763
        %v2795 = vadd.f32 %v2751, %v2763
        %v2796 = vadd.f32 %v2752, %v2763
        %v2797 = vmax.f32 %v2765, 0.0
        %v2798 = vmax.f32 %v2766, 0.0
        %v2799 = vmax.f32 %v2767, 0.0
        %v2800 = vmax.f32 %v2768, 0.0
        %v2801 = vmax.f32 %v2769, 0.0
        %v2802 = vmax.f32 %v2770, 0.0
        %v2803 = vmax.f32 %v2771, 0.0
        %v2804 = vmax.f32 %v2772, 0.0
        %v2805 = vmax.f32 %v2773, 0.0
        %v2806 = vmax.f32 %v2774, 0.0
        %v2807 = vmax.f32 %v2775, 0.0
        %v2808 = vmax.f32 %v2776, 0.0
        %v2809 = vmax.f32 %v2777, 0.0
        %v2810 = vmax.f32 %v2778, 0.0
        %v2811 = vmax.f32 %v2779, 0.0
        %v2812 = vmax.f32 %v2780, 0.0
        %v2813 = vmax.f32 %v2781, 0.0
        %v2814 = vmax.f32 %v2782, 0.0
        %v2815 = vmax.f32 %v2783, 0.0
        %v2816 = vmax.f32 %v2784, 0.0
        %v2817 = vmax.f32 %v2785, 0.0
        %v2818 = vmax.f32 %v2786, 0.0
        %v2819 = vmax.f32 %v2787, 0.0
        %v2820 = vmax.f32 %v2788, 0.0
        %v2821 = vmax.f32 %v2789, 0.0
        %v2822 = vmax.f32 %v2790, 0.0
        %v2823 = vmax.f32 %v2791, 0.0
        %v2824 = vmax.f32 %v2792, 0.0
        %v2825 = vmax.f32 %v2793, 0.0
        %v2826 = vmax.f32 %v2794, 0.0
        %v2827 = vmax.f32 %v2795, 0.0
        %v2828 = vmax.f32 %v2796, 0.0
        %2829 = vst [vmem:[#allocation2] sm:$0xff] %v2797
        %2830 = vst [vmem:[#allocation2 + $0x8] sm:$0xff] %v2798
        %2831 = vst [vmem:[#allocation2 + $0x10] sm:$0xff] %v2813
        %2832 = vst [vmem:[#allocation2 + $0x18] sm:$0xff] %v2814
        %s2833 = scalar_lea.vmem [#allocation2], 32
        %2834 = vst [vmem:[%s2833] sm:$0xff] %v2799
        %2835 = vst [vmem:[%s2833 + $0x8] sm:$0xff] %v2800
        %2836 = vst [vmem:[%s2833 + $0x10] sm:$0xff] %v2815
        %2837 = vst [vmem:[%s2833 + $0x18] sm:$0xff] %v2816
        %s2838 = scalar_lea.vmem [#allocation2], 64
        %2839 = vst [vmem:[%s2838] sm:$0xff] %v2801
        %2840 = vst [vmem:[%s2838 + $0x8] sm:$0xff] %v2802
        %2841 = vst [vmem:[%s2838 + $0x10] sm:$0xff] %v2817
        %2842 = vst [vmem:[%s2838 + $0x18] sm:$0xff] %v2818
        %s2843 = scalar_lea.vmem [#allocation2], 96
        %2844 = vst [vmem:[%s2843] sm:$0xff] %v2803
        %2845 = vst [vmem:[%s2843 + $0x8] sm:$0xff] %v2804
        %2846 = vst [vmem:[%s2843 + $0x10] sm:$0xff] %v2819
        %2847 = vst [vmem:[%s2843 + $0x18] sm:$0xff] %v2820
        %s2848 = scalar_lea.vmem [#allocation2], 128
        %2849 = vst [vmem:[%s2848] sm:$0xff] %v2805
        %2850 = vst [vmem:[%s2848 + $0x8] sm:$0xff] %v2806
        %2851 = vst [vmem:[%s2848 + $0x10] sm:$0xff] %v2821
        %2852 = vst [vmem:[%s2848 + $0x18] sm:$0xff] %v2822
        %s2853 = scalar_lea.vmem [#allocation2], 160
        %2854 = vst [vmem:[%s2853] sm:$0xff] %v2807
        %2855 = vst [vmem:[%s2853 + $0x8] sm:$0xff] %v2808
        %2856 = vst [vmem:[%s2853 + $0x10] sm:$0xff] %v2823
        %2857 = vst [vmem:[%s2853 + $0x18] sm:$0xff] %v2824
        %s2858 = scalar_lea.vmem [#allocation2], 192
        %2859 = vst [vmem:[%s2858] sm:$0xff] %v2809
        %2860 = vst [vmem:[%s2858 + $0x8] sm:$0xff] %v2810
        %2861 = vst [vmem:[%s2858 + $0x10] sm:$0xff] %v2825
        %2862 = vst [vmem:[%s2858 + $0x18] sm:$0xff] %v2826
        %s2863 = scalar_lea.vmem [#allocation2], 224
        %2864 = vst [vmem:[%s2863] sm:$0xff] %v2811
        %2865 = vst [vmem:[%s2863 + $0x8] sm:$0xff] %v2812
        %2866 = vst [vmem:[%s2863 + $0x10] sm:$0xff] %v2827
        %2867 = vst [vmem:[%s2863 + $0x18] sm:$0xff] %v2828
        %v2868 = vld [vmem:[%s4] sm:$0x1]
        %v2869 = vld [vmem:[#allocation2] ss:$8 sm:$0x3]
        %s2870 = scalar_lea.vmem [#allocation2], 32
        %v2871 = vld [vmem:[%s2870] ss:$8 sm:$0x3]
        %s2872 = scalar_lea.vmem [#allocation2], 64
        %v2873 = vld [vmem:[%s2872] ss:$8 sm:$0x3]
        %s2874 = scalar_lea.vmem [#allocation2], 96
        %v2875 = vld [vmem:[%s2874] ss:$8 sm:$0x3]
        %s2876 = scalar_lea.vmem [#allocation2], 128
        %v2877 = vld [vmem:[%s2876] ss:$8 sm:$0x3]
        %s2878 = scalar_lea.vmem [#allocation2], 160
        %v2879 = vld [vmem:[%s2878] ss:$8 sm:$0x3]
        %s2880 = scalar_lea.vmem [#allocation2], 192
        %v2881 = vld [vmem:[%s2880] ss:$8 sm:$0x3]
        %s2882 = scalar_lea.vmem [#allocation2], 224
        %v2883 = vld [vmem:[%s2882] ss:$8 sm:$0x3]
        %v2892 = vlaneseq
        %v2893 = vshrl.u32 %v2892, 7
        %v2894 = vsub.s32 0, %v2893
        %v2895 = vrot.slane %v2869, %v2894
        %v2896 = vlaneseq
        %v2897 = vshrl.u32 %v2896, 7
        %v2898 = vsub.s32 1, %v2897
        %v2899 = vrot.slane %v2869, %v2898
        %v2900 = vlaneseq
        %v2901 = vshrl.u32 %v2900, 7
        %v2902 = vsub.s32 0, %v2901
        %v2903 = vrot.slane %v2871, %v2902
        %v2904 = vlaneseq
        %v2905 = vshrl.u32 %v2904, 7
        %v2906 = vsub.s32 1, %v2905
        %v2907 = vrot.slane %v2871, %v2906
        %v2908 = vlaneseq
        %v2909 = vshrl.u32 %v2908, 7
        %v2910 = vsub.s32 0, %v2909
        %v2911 = vrot.slane %v2873, %v2910
        %v2912 = vlaneseq
        %v2913 = vshrl.u32 %v2912, 7
        %v2914 = vsub.s32 1, %v2913
        %v2915 = vrot.slane %v2873, %v2914
        %v2916 = vlaneseq
        %v2917 = vshrl.u32 %v2916, 7
        %v2918 = vsub.s32 0, %v2917
        %v2919 = vrot.slane %v2875, %v2918
        %v2920 = vlaneseq
        %v2921 = vshrl.u32 %v2920, 7
        %v2922 = vsub.s32 1, %v2921
        %v2923 = vrot.slane %v2875, %v2922
        %v2924 = vlaneseq
        %v2925 = vshrl.u32 %v2924, 7
        %v2926 = vsub.s32 0, %v2925
        %v2927 = vrot.slane %v2877, %v2926
        %v2928 = vlaneseq
        %v2929 = vshrl.u32 %v2928, 7
        %v2930 = vsub.s32 1, %v2929
        %v2931 = vrot.slane %v2877, %v2930
        %v2932 = vlaneseq
        %v2933 = vshrl.u32 %v2932, 7
        %v2934 = vsub.s32 0, %v2933
        %v2935 = vrot.slane %v2879, %v2934
        %v2936 = vlaneseq
        %v2937 = vshrl.u32 %v2936, 7
        %v2938 = vsub.s32 1, %v2937
        %v2939 = vrot.slane %v2879, %v2938
        %v2940 = vlaneseq
        %v2941 = vshrl.u32 %v2940, 7
        %v2942 = vsub.s32 0, %v2941
        %v2943 = vrot.slane %v2881, %v2942
        %v2944 = vlaneseq
        %v2945 = vshrl.u32 %v2944, 7
        %v2946 = vsub.s32 1, %v2945
        %v2947 = vrot.slane %v2881, %v2946
        %v2948 = vlaneseq
        %v2949 = vshrl.u32 %v2948, 7
        %v2950 = vsub.s32 0, %v2949
        %v2951 = vrot.slane %v2883, %v2950
        %v2952 = vlaneseq
        %v2953 = vshrl.u32 %v2952, 7
        %v2954 = vsub.s32 1, %v2953
        %v2955 = vrot.slane %v2883, %v2954
        %v2972 = vpack.c.bf16 %v2895, %v2895
        %v2973 = vpack.c.bf16 %v2899, %v2899
        %v2974 = vpack.c.bf16 %v2903, %v2903
        %v2975 = vpack.c.bf16 %v2907, %v2907
        %v2976 = vpack.c.bf16 %v2911, %v2911
        %v2977 = vpack.c.bf16 %v2915, %v2915
        %v2978 = vpack.c.bf16 %v2919, %v2919
        %v2979 = vpack.c.bf16 %v2923, %v2923
        %v2980 = vpack.c.bf16 %v2927, %v2927
        %v2981 = vpack.c.bf16 %v2931, %v2931
        %v2982 = vpack.c.bf16 %v2935, %v2935
        %v2983 = vpack.c.bf16 %v2939, %v2939
        %v2984 = vpack.c.bf16 %v2943, %v2943
        %v2985 = vpack.c.bf16 %v2947, %v2947
        %v2986 = vpack.c.bf16 %v2951, %v2951
        %v2987 = vpack.c.bf16 %v2955, %v2955
        %v2988 = vld [vmem:[%s3] sm:$0xf]
        %v2989 = vld [vmem:[%s3 + $0x4] sm:$0xf]
        %v2990 = vld [vmem:[%s3 + $0x8] sm:$0xf]
        %v2991 = vld [vmem:[%s3 + $0xc] sm:$0xf]
        %v2992 = vld [vmem:[%s3 + $0x10] sm:$0xf]
        %v2993 = vld [vmem:[%s3 + $0x14] sm:$0xf]
        %v2994 = vld [vmem:[%s3 + $0x18] sm:$0xf]
        %v2995 = vld [vmem:[%s3 + $0x1c] sm:$0xf]
        %v2996 = vld [vmem:[%s3 + $0x20] sm:$0xf]
        %v2997 = vld [vmem:[%s3 + $0x24] sm:$0xf]
        %v2998 = vld [vmem:[%s3 + $0x28] sm:$0xf]
        %v2999 = vld [vmem:[%s3 + $0x2c] sm:$0xf]
        %v3000 = vld [vmem:[%s3 + $0x30] sm:$0xf]
        %v3001 = vld [vmem:[%s3 + $0x34] sm:$0xf]
        %v3002 = vld [vmem:[%s3 + $0x38] sm:$0xf]
        %v3003 = vld [vmem:[%s3 + $0x3c] sm:$0xf]
        %v3004 = vld [vmem:[%s3 + $0x40] sm:$0xf]
        %v3005 = vld [vmem:[%s3 + $0x44] sm:$0xf]
        %v3006 = vld [vmem:[%s3 + $0x48] sm:$0xf]
        %v3007 = vld [vmem:[%s3 + $0x4c] sm:$0xf]
        %v3008 = vld [vmem:[%s3 + $0x50] sm:$0xf]
        %v3009 = vld [vmem:[%s3 + $0x54] sm:$0xf]
        %v3010 = vld [vmem:[%s3 + $0x58] sm:$0xf]
        %v3011 = vld [vmem:[%s3 + $0x5c] sm:$0xf]
        %v3012 = vld [vmem:[%s3 + $0x60] sm:$0xf]
        %v3013 = vld [vmem:[%s3 + $0x64] sm:$0xf]
        %v3014 = vld [vmem:[%s3 + $0x68] sm:$0xf]
        %v3015 = vld [vmem:[%s3 + $0x6c] sm:$0xf]
        %v3016 = vld [vmem:[%s3 + $0x70] sm:$0xf]
        %v3017 = vld [vmem:[%s3 + $0x74] sm:$0xf]
        %v3018 = vld [vmem:[%s3 + $0x78] sm:$0xf]
        %v3019 = vld [vmem:[%s3 + $0x7c] sm:$0xf]
        %v3036 = vunpack.c.l.b16 %v2972
        %v3037 = vunpack.c.l.b16 %v2973
        %v3038 = vunpack.c.l.b16 %v2974
        %v3039 = vunpack.c.l.b16 %v2975
        %v3040 = vunpack.c.l.b16 %v2976
        %v3041 = vunpack.c.l.b16 %v2977
        %v3042 = vunpack.c.l.b16 %v2978
        %v3043 = vunpack.c.l.b16 %v2979
        %v3044 = vunpack.c.l.b16 %v2980
        %v3045 = vunpack.c.l.b16 %v2981
        %v3046 = vunpack.c.l.b16 %v2982
        %v3047 = vunpack.c.l.b16 %v2983
        %v3048 = vunpack.c.l.b16 %v2984
        %v3049 = vunpack.c.l.b16 %v2985
        %v3050 = vunpack.c.l.b16 %v2986
        %v3051 = vunpack.c.l.b16 %v2987
        %v3052 = vrot.slane %v3038, 7
        %vm3053 = vcmask 1041409
        %v3054 = vsel %vm3053, %v3052, %v3036
        %v3055 = vrot.slane %v3040, 6
        %vm3056 = vcmask 1042434
        %v3057 = vsel %vm3056, %v3055, %v3054
        %v3058 = vrot.slane %v3042, 5
        %vm3059 = vcmask 1043459
        %v3060 = vsel %vm3059, %v3058, %v3057
        %v3061 = vrot.slane %v3044, 4
        %vm3062 = vcmask 1044484
        %v3063 = vsel %vm3062, %v3061, %v3060
        %v3064 = vrot.slane %v3046, 3
        %vm3065 = vcmask 1045509
        %v3066 = vsel %vm3065, %v3064, %v3063
        %v3067 = vrot.slane %v3048, 2
        %vm3068 = vcmask 1046534
        %v3069 = vsel %vm3068, %v3067, %v3066
        %v3070 = vrot.slane %v3050, 1
        %vm3071 = vcmask 1047559
        %v3072 = vsel %vm3071, %v3070, %v3069
        %v3073 = vrot.slane %v3039, 7
        %v3074 = vsel %vm3053, %v3073, %v3037
        %v3075 = vrot.slane %v3041, 6
        %v3076 = vsel %vm3056, %v3075, %v3074
        %v3077 = vrot.slane %v3043, 5
        %v3078 = vsel %vm3059, %v3077, %v3076
        %v3079 = vrot.slane %v3045, 4
        %v3080 = vsel %vm3062, %v3079, %v3078
        %v3081 = vrot.slane %v3047, 3
        %v3082 = vsel %vm3065, %v3081, %v3080
        %v3083 = vrot.slane %v3049, 2
        %v3084 = vsel %vm3068, %v3083, %v3082
        %v3085 = vrot.slane %v3051, 1
        %v3086 = vsel %vm3071, %v3085, %v3084
        %v3087 = vpack.c.b16 %v3072, %v3072
        %v3088 = vpack.c.b16 %v3086, %v3086
        %v3123 = vunpack.c.l.b16 %v2988
        %v3124 = vunpack.c.l.b16 %v2989
        %v3125 = vunpack.c.l.b16 %v2990
        %v3126 = vunpack.c.l.b16 %v2991
        %v3127 = vunpack.c.l.b16 %v2992
        %v3128 = vunpack.c.l.b16 %v2993
        %v3129 = vunpack.c.l.b16 %v2994
        %v3130 = vunpack.c.l.b16 %v2995
        %v3131 = vunpack.c.l.b16 %v2996
        %v3132 = vunpack.c.l.b16 %v2997
        %v3133 = vunpack.c.l.b16 %v2998
        %v3134 = vunpack.c.l.b16 %v2999
        %v3135 = vunpack.c.l.b16 %v3000
        %v3136 = vunpack.c.l.b16 %v3001
        %v3137 = vunpack.c.l.b16 %v3002
        %v3138 = vunpack.c.l.b16 %v3003
        %v3139 = vunpack.c.l.b16 %v3004
        %v3140 = vunpack.c.l.b16 %v3005
        %v3141 = vunpack.c.l.b16 %v3006
        %v3142 = vunpack.c.l.b16 %v3007
        %v3143 = vunpack.c.l.b16 %v3008
        %v3144 = vunpack.c.l.b16 %v3009
        %v3145 = vunpack.c.l.b16 %v3010
        %v3146 = vunpack.c.l.b16 %v3011
        %v3147 = vunpack.c.l.b16 %v3012
        %v3148 = vunpack.c.l.b16 %v3013
        %v3149 = vunpack.c.l.b16 %v3014
        %v3150 = vunpack.c.l.b16 %v3015
        %v3151 = vunpack.c.l.b16 %v3016
        %v3152 = vunpack.c.l.b16 %v3017
        %v3153 = vunpack.c.l.b16 %v3018
        %v3154 = vunpack.c.l.b16 %v3019
        %v3155 = vpack.c.b16 %v3124, %v3123
        %v3156 = vpack.c.b16 %v3126, %v3125
        %v3157 = vpack.c.b16 %v3128, %v3127
        %v3158 = vpack.c.b16 %v3130, %v3129
        %v3159 = vpack.c.b16 %v3132, %v3131
        %v3160 = vpack.c.b16 %v3134, %v3133
        %v3161 = vpack.c.b16 %v3136, %v3135
        %v3162 = vpack.c.b16 %v3138, %v3137
        %v3163 = vpack.c.b16 %v3140, %v3139
        %v3164 = vpack.c.b16 %v3142, %v3141
        %v3165 = vpack.c.b16 %v3144, %v3143
        %v3166 = vpack.c.b16 %v3146, %v3145
        %v3167 = vpack.c.b16 %v3148, %v3147
        %v3168 = vpack.c.b16 %v3150, %v3149
        %v3169 = vpack.c.b16 %v3152, %v3151
        %v3170 = vpack.c.b16 %v3154, %v3153
        %3187 = vmatprep.subr.bf16.mxu0 0
        %3188 = vmatpush1.bf16.msra.mxu0 %v3162
        %3189 = vmatprep.subr.bf16.mxu0 0
        %3190 = vmatpush1.bf16.msra.mxu0 %v3161
        %3191 = vmatprep.subr.bf16.mxu0 0
        %3192 = vmatpush1.bf16.msra.mxu0 %v3160
        %3193 = vmatprep.subr.bf16.mxu0 0
        %3194 = vmatpush1.bf16.msra.mxu0 %v3159
        %3195 = vmatprep.subr.bf16.mxu0 0
        %3196 = vmatpush1.bf16.msra.mxu0 %v3158
        %3197 = vmatprep.subr.bf16.mxu0 0
        %3198 = vmatpush1.bf16.msra.mxu0 %v3157
        %3199 = vmatprep.subr.bf16.mxu0 0
        %3200 = vmatpush1.bf16.msra.mxu0 %v3156
        %3201 = vmatprep.subr.bf16.mxu0 0
        %3202 = vmatpush1.bf16.msra.mxu0 %v3155
        %3203 = vmatprep.subr.bf16.mxu0 0
        %3204 = vmatpush2.bf16.msra.mxu0 %v3170
        %3205 = vmatprep.subr.bf16.mxu0 0
        %3206 = vmatpush2.bf16.msra.mxu0 %v3169
        %3207 = vmatprep.subr.bf16.mxu0 0
        %3208 = vmatpush2.bf16.msra.mxu0 %v3168
        %3209 = vmatprep.subr.bf16.mxu0 0
        %3210 = vmatpush2.bf16.msra.mxu0 %v3167
        %3211 = vmatprep.subr.bf16.mxu0 0
        %3212 = vmatpush2.bf16.msra.mxu0 %v3166
        %3213 = vmatprep.subr.bf16.mxu0 0
        %3214 = vmatpush2.bf16.msra.mxu0 %v3165
        %3215 = vmatprep.subr.bf16.mxu0 0
        %3216 = vmatpush2.bf16.msra.mxu0 %v3164
        %3217 = vmatprep.subr.bf16.mxu0 0
        %3218 = vmatpush2.bf16.msra.mxu0 %v3163
        %3219 = vmatprep.mubr.bf16.mxu0 %v3088
        %3220 = vmatmul.mubr.bf16.gmra.mxu0 %v3087
        %v3221 = vpop.f32.mrf.mxu0
        %v3222 = vadd.f32 0.0, %v3221
        %v3223 = vpop.f32.mrf.mxu0
        %v3224 = vpop.f32.mrf.mxu0
        %v3225 = vpop.f32.mrf.mxu0
        %3226 = vdwg.mxu0
        %v3228 = vlaneseq
        %v3229 = vshrl.u32 %v3228, 7
        %v3230 = vsub.s32 0, %v3229
        %v3231 = vrot.slane %v2868, %v3230
        %v3233 = vadd.f32 %v3231, %v3222
        %s3234 = scalar_lea.vmem [#allocation2], 1
        %v3235 = vld [vmem:[%s3234] ss:$8 sm:$0x3]
        %s3236 = scalar_lea.vmem [#allocation2], 33
        %v3237 = vld [vmem:[%s3236] ss:$8 sm:$0x3]
        %s3238 = scalar_lea.vmem [#allocation2], 65
        %v3239 = vld [vmem:[%s3238] ss:$8 sm:$0x3]
        %s3240 = scalar_lea.vmem [#allocation2], 97
        %v3241 = vld [vmem:[%s3240] ss:$8 sm:$0x3]
        %s3242 = scalar_lea.vmem [#allocation2], 129
        %v3243 = vld [vmem:[%s3242] ss:$8 sm:$0x3]
        %s3244 = scalar_lea.vmem [#allocation2], 161
        %v3245 = vld [vmem:[%s3244] ss:$8 sm:$0x3]
        %s3246 = scalar_lea.vmem [#allocation2], 193
        %v3247 = vld [vmem:[%s3246] ss:$8 sm:$0x3]
        %s3248 = scalar_lea.vmem [#allocation2], 225
        %v3249 = vld [vmem:[%s3248] ss:$8 sm:$0x3]
        %v3258 = vlaneseq
        %v3259 = vshrl.u32 %v3258, 7
        %v3260 = vsub.s32 0, %v3259
        %v3261 = vrot.slane %v3235, %v3260
        %v3262 = vlaneseq
        %v3263 = vshrl.u32 %v3262, 7
        %v3264 = vsub.s32 1, %v3263
        %v3265 = vrot.slane %v3235, %v3264
        %v3266 = vlaneseq
        %v3267 = vshrl.u32 %v3266, 7
        %v3268 = vsub.s32 0, %v3267
        %v3269 = vrot.slane %v3237, %v3268
        %v3270 = vlaneseq
        %v3271 = vshrl.u32 %v3270, 7
        %v3272 = vsub.s32 1, %v3271
        %v3273 = vrot.slane %v3237, %v3272
        %v3274 = vlaneseq
        %v3275 = vshrl.u32 %v3274, 7
        %v3276 = vsub.s32 0, %v3275
        %v3277 = vrot.slane %v3239, %v3276
        %v3278 = vlaneseq
        %v3279 = vshrl.u32 %v3278, 7
        %v3280 = vsub.s32 1, %v3279
        %v3281 = vrot.slane %v3239, %v3280
        %v3282 = vlaneseq
        %v3283 = vshrl.u32 %v3282, 7
        %v3284 = vsub.s32 0, %v3283
        %v3285 = vrot.slane %v3241, %v3284
        %v3286 = vlaneseq
        %v3287 = vshrl.u32 %v3286, 7
        %v3288 = vsub.s32 1, %v3287
        %v3289 = vrot.slane %v3241, %v3288
        %v3290 = vlaneseq
        %v3291 = vshrl.u32 %v3290, 7
        %v3292 = vsub.s32 0, %v3291
        %v3293 = vrot.slane %v3243, %v3292
        %v3294 = vlaneseq
        %v3295 = vshrl.u32 %v3294, 7
        %v3296 = vsub.s32 1, %v3295
        %v3297 = vrot.slane %v3243, %v3296
        %v3298 = vlaneseq
        %v3299 = vshrl.u32 %v3298, 7
        %v3300 = vsub.s32 0, %v3299
        %v3301 = vrot.slane %v3245, %v3300
        %v3302 = vlaneseq
        %v3303 = vshrl.u32 %v3302, 7
        %v3304 = vsub.s32 1, %v3303
        %v3305 = vrot.slane %v3245, %v3304
        %v3306 = vlaneseq
        %v3307 = vshrl.u32 %v3306, 7
        %v3308 = vsub.s32 0, %v3307
        %v3309 = vrot.slane %v3247, %v3308
        %v3310 = vlaneseq
        %v3311 = vshrl.u32 %v3310, 7
        %v3312 = vsub.s32 1, %v3311
        %v3313 = vrot.slane %v3247, %v3312
        %v3314 = vlaneseq
        %v3315 = vshrl.u32 %v3314, 7
        %v3316 = vsub.s32 0, %v3315
        %v3317 = vrot.slane %v3249, %v3316
        %v3318 = vlaneseq
        %v3319 = vshrl.u32 %v3318, 7
        %v3320 = vsub.s32 1, %v3319
        %v3321 = vrot.slane %v3249, %v3320
        %v3338 = vpack.c.bf16 %v3261, %v3261
        %v3339 = vpack.c.bf16 %v3265, %v3265
        %v3340 = vpack.c.bf16 %v3269, %v3269
        %v3341 = vpack.c.bf16 %v3273, %v3273
        %v3342 = vpack.c.bf16 %v3277, %v3277
        %v3343 = vpack.c.bf16 %v3281, %v3281
        %v3344 = vpack.c.bf16 %v3285, %v3285
        %v3345 = vpack.c.bf16 %v3289, %v3289
        %v3346 = vpack.c.bf16 %v3293, %v3293
        %v3347 = vpack.c.bf16 %v3297, %v3297
        %v3348 = vpack.c.bf16 %v3301, %v3301
        %v3349 = vpack.c.bf16 %v3305, %v3305
        %v3350 = vpack.c.bf16 %v3309, %v3309
        %v3351 = vpack.c.bf16 %v3313, %v3313
        %v3352 = vpack.c.bf16 %v3317, %v3317
        %v3353 = vpack.c.bf16 %v3321, %v3321
        %s3354 = scalar_lea.vmem %s3, 128
        %v3355 = vld [vmem:[%s3354] sm:$0xf]
        %v3356 = vld [vmem:[%s3354 + $0x4] sm:$0xf]
        %v3357 = vld [vmem:[%s3354 + $0x8] sm:$0xf]
        %v3358 = vld [vmem:[%s3354 + $0xc] sm:$0xf]
        %v3359 = vld [vmem:[%s3354 + $0x10] sm:$0xf]
        %v3360 = vld [vmem:[%s3354 + $0x14] sm:$0xf]
        %v3361 = vld [vmem:[%s3354 + $0x18] sm:$0xf]
        %v3362 = vld [vmem:[%s3354 + $0x1c] sm:$0xf]
        %v3363 = vld [vmem:[%s3354 + $0x20] sm:$0xf]
        %v3364 = vld [vmem:[%s3354 + $0x24] sm:$0xf]
        %v3365 = vld [vmem:[%s3354 + $0x28] sm:$0xf]
        %v3366 = vld [vmem:[%s3354 + $0x2c] sm:$0xf]
        %v3367 = vld [vmem:[%s3354 + $0x30] sm:$0xf]
        %v3368 = vld [vmem:[%s3354 + $0x34] sm:$0xf]
        %v3369 = vld [vmem:[%s3354 + $0x38] sm:$0xf]
        %v3370 = vld [vmem:[%s3354 + $0x3c] sm:$0xf]
        %v3371 = vld [vmem:[%s3354 + $0x40] sm:$0xf]
        %v3372 = vld [vmem:[%s3354 + $0x44] sm:$0xf]
        %v3373 = vld [vmem:[%s3354 + $0x48] sm:$0xf]
        %v3374 = vld [vmem:[%s3354 + $0x4c] sm:$0xf]
        %v3375 = vld [vmem:[%s3354 + $0x50] sm:$0xf]
        %v3376 = vld [vmem:[%s3354 + $0x54] sm:$0xf]
        %v3377 = vld [vmem:[%s3354 + $0x58] sm:$0xf]
        %v3378 = vld [vmem:[%s3354 + $0x5c] sm:$0xf]
        %v3379 = vld [vmem:[%s3354 + $0x60] sm:$0xf]
        %v3380 = vld [vmem:[%s3354 + $0x64] sm:$0xf]
        %v3381 = vld [vmem:[%s3354 + $0x68] sm:$0xf]
        %v3382 = vld [vmem:[%s3354 + $0x6c] sm:$0xf]
        %v3383 = vld [vmem:[%s3354 + $0x70] sm:$0xf]
        %v3384 = vld [vmem:[%s3354 + $0x74] sm:$0xf]
        %v3385 = vld [vmem:[%s3354 + $0x78] sm:$0xf]
        %v3386 = vld [vmem:[%s3354 + $0x7c] sm:$0xf]
        %v3403 = vunpack.c.l.b16 %v3338
        %v3404 = vunpack.c.l.b16 %v3339
        %v3405 = vunpack.c.l.b16 %v3340
        %v3406 = vunpack.c.l.b16 %v3341
        %v3407 = vunpack.c.l.b16 %v3342
        %v3408 = vunpack.c.l.b16 %v3343
        %v3409 = vunpack.c.l.b16 %v3344
        %v3410 = vunpack.c.l.b16 %v3345
        %v3411 = vunpack.c.l.b16 %v3346
        %v3412 = vunpack.c.l.b16 %v3347
        %v3413 = vunpack.c.l.b16 %v3348
        %v3414 = vunpack.c.l.b16 %v3349
        %v3415 = vunpack.c.l.b16 %v3350
        %v3416 = vunpack.c.l.b16 %v3351
        %v3417 = vunpack.c.l.b16 %v3352
        %v3418 = vunpack.c.l.b16 %v3353
        %v3419 = vrot.slane %v3405, 7
        %v3420 = vsel %vm3053, %v3419, %v3403
        %v3421 = vrot.slane %v3407, 6
        %v3422 = vsel %vm3056, %v3421, %v3420
        %v3423 = vrot.slane %v3409, 5
        %v3424 = vsel %vm3059, %v3423, %v3422
        %v3425 = vrot.slane %v3411, 4
        %v3426 = vsel %vm3062, %v3425, %v3424
        %v3427 = vrot.slane %v3413, 3
        %v3428 = vsel %vm3065, %v3427, %v3426
        %v3429 = vrot.slane %v3415, 2
        %v3430 = vsel %vm3068, %v3429, %v3428
        %v3431 = vrot.slane %v3417, 1
        %v3432 = vsel %vm3071, %v3431, %v3430
        %v3433 = vrot.slane %v3406, 7
        %v3434 = vsel %vm3053, %v3433, %v3404
        %v3435 = vrot.slane %v3408, 6
        %v3436 = vsel %vm3056, %v3435, %v3434
        %v3437 = vrot.slane %v3410, 5
        %v3438 = vsel %vm3059, %v3437, %v3436
        %v3439 = vrot.slane %v3412, 4
        %v3440 = vsel %vm3062, %v3439, %v3438
        %v3441 = vrot.slane %v3414, 3
        %v3442 = vsel %vm3065, %v3441, %v3440
        %v3443 = vrot.slane %v3416, 2
        %v3444 = vsel %vm3068, %v3443, %v3442
        %v3445 = vrot.slane %v3418, 1
        %v3446 = vsel %vm3071, %v3445, %v3444
        %v3447 = vpack.c.b16 %v3432, %v3432
        %v3448 = vpack.c.b16 %v3446, %v3446
        %v3483 = vunpack.c.l.b16 %v3355
        %v3484 = vunpack.c.l.b16 %v3356
        %v3485 = vunpack.c.l.b16 %v3357
        %v3486 = vunpack.c.l.b16 %v3358
        %v3487 = vunpack.c.l.b16 %v3359
        %v3488 = vunpack.c.l.b16 %v3360
        %v3489 = vunpack.c.l.b16 %v3361
        %v3490 = vunpack.c.l.b16 %v3362
        %v3491 = vunpack.c.l.b16 %v3363
        %v3492 = vunpack.c.l.b16 %v3364
        %v3493 = vunpack.c.l.b16 %v3365
        %v3494 = vunpack.c.l.b16 %v3366
        %v3495 = vunpack.c.l.b16 %v3367
        %v3496 = vunpack.c.l.b16 %v3368
        %v3497 = vunpack.c.l.b16 %v3369
        %v3498 = vunpack.c.l.b16 %v3370
        %v3499 = vunpack.c.l.b16 %v3371
        %v3500 = vunpack.c.l.b16 %v3372
        %v3501 = vunpack.c.l.b16 %v3373
        %v3502 = vunpack.c.l.b16 %v3374
        %v3503 = vunpack.c.l.b16 %v3375
        %v3504 = vunpack.c.l.b16 %v3376
        %v3505 = vunpack.c.l.b16 %v3377
        %v3506 = vunpack.c.l.b16 %v3378
        %v3507 = vunpack.c.l.b16 %v3379
        %v3508 = vunpack.c.l.b16 %v3380
        %v3509 = vunpack.c.l.b16 %v3381
        %v3510 = vunpack.c.l.b16 %v3382
        %v3511 = vunpack.c.l.b16 %v3383
        %v3512 = vunpack.c.l.b16 %v3384
        %v3513 = vunpack.c.l.b16 %v3385
        %v3514 = vunpack.c.l.b16 %v3386
        %v3515 = vpack.c.b16 %v3484, %v3483
        %v3516 = vpack.c.b16 %v3486, %v3485
        %v3517 = vpack.c.b16 %v3488, %v3487
        %v3518 = vpack.c.b16 %v3490, %v3489
        %v3519 = vpack.c.b16 %v3492, %v3491
        %v3520 = vpack.c.b16 %v3494, %v3493
        %v3521 = vpack.c.b16 %v3496, %v3495
        %v3522 = vpack.c.b16 %v3498, %v3497
        %v3523 = vpack.c.b16 %v3500, %v3499
        %v3524 = vpack.c.b16 %v3502, %v3501
        %v3525 = vpack.c.b16 %v3504, %v3503
        %v3526 = vpack.c.b16 %v3506, %v3505
        %v3527 = vpack.c.b16 %v3508, %v3507
        %v3528 = vpack.c.b16 %v3510, %v3509
        %v3529 = vpack.c.b16 %v3512, %v3511
        %v3530 = vpack.c.b16 %v3514, %v3513
        %3547 = vmatprep.subr.bf16.mxu0 0
        %3548 = vmatpush1.bf16.msra.mxu0 %v3522
        %3549 = vmatprep.subr.bf16.mxu0 0
        %3550 = vmatpush1.bf16.msra.mxu0 %v3521
        %3551 = vmatprep.subr.bf16.mxu0 0
        %3552 = vmatpush1.bf16.msra.mxu0 %v3520
        %3553 = vmatprep.subr.bf16.mxu0 0
        %3554 = vmatpush1.bf16.msra.mxu0 %v3519
        %3555 = vmatprep.subr.bf16.mxu0 0
        %3556 = vmatpush1.bf16.msra.mxu0 %v3518
        %3557 = vmatprep.subr.bf16.mxu0 0
        %3558 = vmatpush1.bf16.msra.mxu0 %v3517
        %3559 = vmatprep.subr.bf16.mxu0 0
        %3560 = vmatpush1.bf16.msra.mxu0 %v3516
        %3561 = vmatprep.subr.bf16.mxu0 0
        %3562 = vmatpush1.bf16.msra.mxu0 %v3515
        %3563 = vmatprep.subr.bf16.mxu0 0
        %3564 = vmatpush2.bf16.msra.mxu0 %v3530
        %3565 = vmatprep.subr.bf16.mxu0 0
        %3566 = vmatpush2.bf16.msra.mxu0 %v3529
        %3567 = vmatprep.subr.bf16.mxu0 0
        %3568 = vmatpush2.bf16.msra.mxu0 %v3528
        %3569 = vmatprep.subr.bf16.mxu0 0
        %3570 = vmatpush2.bf16.msra.mxu0 %v3527
        %3571 = vmatprep.subr.bf16.mxu0 0
        %3572 = vmatpush2.bf16.msra.mxu0 %v3526
        %3573 = vmatprep.subr.bf16.mxu0 0
        %3574 = vmatpush2.bf16.msra.mxu0 %v3525
        %3575 = vmatprep.subr.bf16.mxu0 0
        %3576 = vmatpush2.bf16.msra.mxu0 %v3524
        %3577 = vmatprep.subr.bf16.mxu0 0
        %3578 = vmatpush2.bf16.msra.mxu0 %v3523
        %3579 = vmatprep.mubr.bf16.mxu0 %v3448
        %3580 = vmatmul.mubr.bf16.gmra.mxu0 %v3447
        %v3581 = vpop.f32.mrf.mxu0
        %v3582 = vadd.f32 0.0, %v3581
        %v3583 = vpop.f32.mrf.mxu0
        %v3584 = vpop.f32.mrf.mxu0
        %v3585 = vpop.f32.mrf.mxu0
        %3586 = vdwg.mxu0
        %v3587 = vadd.f32 %v3233, %v3582
        %s3588 = scalar_lea.vmem [#allocation2], 2
        %v3589 = vld [vmem:[%s3588] ss:$8 sm:$0x3]
        %s3590 = scalar_lea.vmem [#allocation2], 34
        %v3591 = vld [vmem:[%s3590] ss:$8 sm:$0x3]
        %s3592 = scalar_lea.vmem [#allocation2], 66
        %v3593 = vld [vmem:[%s3592] ss:$8 sm:$0x3]
        %s3594 = scalar_lea.vmem [#allocation2], 98
        %v3595 = vld [vmem:[%s3594] ss:$8 sm:$0x3]
        %s3596 = scalar_lea.vmem [#allocation2], 130
        %v3597 = vld [vmem:[%s3596] ss:$8 sm:$0x3]
        %s3598 = scalar_lea.vmem [#allocation2], 162
        %v3599 = vld [vmem:[%s3598] ss:$8 sm:$0x3]
        %s3600 = scalar_lea.vmem [#allocation2], 194
        %v3601 = vld [vmem:[%s3600] ss:$8 sm:$0x3]
        %s3602 = scalar_lea.vmem [#allocation2], 226
        %v3603 = vld [vmem:[%s3602] ss:$8 sm:$0x3]
        %v3612 = vlaneseq
        %v3613 = vshrl.u32 %v3612, 7
        %v3614 = vsub.s32 0, %v3613
        %v3615 = vrot.slane %v3589, %v3614
        %v3616 = vlaneseq
        %v3617 = vshrl.u32 %v3616, 7
        %v3618 = vsub.s32 1, %v3617
        %v3619 = vrot.slane %v3589, %v3618
        %v3620 = vlaneseq
        %v3621 = vshrl.u32 %v3620, 7
        %v3622 = vsub.s32 0, %v3621
        %v3623 = vrot.slane %v3591, %v3622
        %v3624 = vlaneseq
        %v3625 = vshrl.u32 %v3624, 7
        %v3626 = vsub.s32 1, %v3625
        %v3627 = vrot.slane %v3591, %v3626
        %v3628 = vlaneseq
        %v3629 = vshrl.u32 %v3628, 7
        %v3630 = vsub.s32 0, %v3629
        %v3631 = vrot.slane %v3593, %v3630
        %v3632 = vlaneseq
        %v3633 = vshrl.u32 %v3632, 7
        %v3634 = vsub.s32 1, %v3633
        %v3635 = vrot.slane %v3593, %v3634
        %v3636 = vlaneseq
        %v3637 = vshrl.u32 %v3636, 7
        %v3638 = vsub.s32 0, %v3637
        %v3639 = vrot.slane %v3595, %v3638
        %v3640 = vlaneseq
        %v3641 = vshrl.u32 %v3640, 7
        %v3642 = vsub.s32 1, %v3641
        %v3643 = vrot.slane %v3595, %v3642
        %v3644 = vlaneseq
        %v3645 = vshrl.u32 %v3644, 7
        %v3646 = vsub.s32 0, %v3645
        %v3647 = vrot.slane %v3597, %v3646
        %v3648 = vlaneseq
        %v3649 = vshrl.u32 %v3648, 7
        %v3650 = vsub.s32 1, %v3649
        %v3651 = vrot.slane %v3597, %v3650
        %v3652 = vlaneseq
        %v3653 = vshrl.u32 %v3652, 7
        %v3654 = vsub.s32 0, %v3653
        %v3655 = vrot.slane %v3599, %v3654
        %v3656 = vlaneseq
        %v3657 = vshrl.u32 %v3656, 7
        %v3658 = vsub.s32 1, %v3657
        %v3659 = vrot.slane %v3599, %v3658
        %v3660 = vlaneseq
        %v3661 = vshrl.u32 %v3660, 7
        %v3662 = vsub.s32 0, %v3661
        %v3663 = vrot.slane %v3601, %v3662
        %v3664 = vlaneseq
        %v3665 = vshrl.u32 %v3664, 7
        %v3666 = vsub.s32 1, %v3665
        %v3667 = vrot.slane %v3601, %v3666
        %v3668 = vlaneseq
        %v3669 = vshrl.u32 %v3668, 7
        %v3670 = vsub.s32 0, %v3669
        %v3671 = vrot.slane %v3603, %v3670
        %v3672 = vlaneseq
        %v3673 = vshrl.u32 %v3672, 7
        %v3674 = vsub.s32 1, %v3673
        %v3675 = vrot.slane %v3603, %v3674
        %v3692 = vpack.c.bf16 %v3615, %v3615
        %v3693 = vpack.c.bf16 %v3619, %v3619
        %v3694 = vpack.c.bf16 %v3623, %v3623
        %v3695 = vpack.c.bf16 %v3627, %v3627
        %v3696 = vpack.c.bf16 %v3631, %v3631
        %v3697 = vpack.c.bf16 %v3635, %v3635
        %v3698 = vpack.c.bf16 %v3639, %v3639
        %v3699 = vpack.c.bf16 %v3643, %v3643
        %v3700 = vpack.c.bf16 %v3647, %v3647
        %v3701 = vpack.c.bf16 %v3651, %v3651
        %v3702 = vpack.c.bf16 %v3655, %v3655
        %v3703 = vpack.c.bf16 %v3659, %v3659
        %v3704 = vpack.c.bf16 %v3663, %v3663
        %v3705 = vpack.c.bf16 %v3667, %v3667
        %v3706 = vpack.c.bf16 %v3671, %v3671
        %v3707 = vpack.c.bf16 %v3675, %v3675
        %s3708 = scalar_lea.vmem %s3, 256
        %v3709 = vld [vmem:[%s3708] sm:$0xf]
        %v3710 = vld [vmem:[%s3708 + $0x4] sm:$0xf]
        %v3711 = vld [vmem:[%s3708 + $0x8] sm:$0xf]
        %v3712 = vld [vmem:[%s3708 + $0xc] sm:$0xf]
        %v3713 = vld [vmem:[%s3708 + $0x10] sm:$0xf]
        %v3714 = vld [vmem:[%s3708 + $0x14] sm:$0xf]
        %v3715 = vld [vmem:[%s3708 + $0x18] sm:$0xf]
        %v3716 = vld [vmem:[%s3708 + $0x1c] sm:$0xf]
        %v3717 = vld [vmem:[%s3708 + $0x20] sm:$0xf]
        %v3718 = vld [vmem:[%s3708 + $0x24] sm:$0xf]
        %v3719 = vld [vmem:[%s3708 + $0x28] sm:$0xf]
        %v3720 = vld [vmem:[%s3708 + $0x2c] sm:$0xf]
        %v3721 = vld [vmem:[%s3708 + $0x30] sm:$0xf]
        %v3722 = vld [vmem:[%s3708 + $0x34] sm:$0xf]
        %v3723 = vld [vmem:[%s3708 + $0x38] sm:$0xf]
        %v3724 = vld [vmem:[%s3708 + $0x3c] sm:$0xf]
        %v3725 = vld [vmem:[%s3708 + $0x40] sm:$0xf]
        %v3726 = vld [vmem:[%s3708 + $0x44] sm:$0xf]
        %v3727 = vld [vmem:[%s3708 + $0x48] sm:$0xf]
        %v3728 = vld [vmem:[%s3708 + $0x4c] sm:$0xf]
        %v3729 = vld [vmem:[%s3708 + $0x50] sm:$0xf]
        %v3730 = vld [vmem:[%s3708 + $0x54] sm:$0xf]
        %v3731 = vld [vmem:[%s3708 + $0x58] sm:$0xf]
        %v3732 = vld [vmem:[%s3708 + $0x5c] sm:$0xf]
        %v3733 = vld [vmem:[%s3708 + $0x60] sm:$0xf]
        %v3734 = vld [vmem:[%s3708 + $0x64] sm:$0xf]
        %v3735 = vld [vmem:[%s3708 + $0x68] sm:$0xf]
        %v3736 = vld [vmem:[%s3708 + $0x6c] sm:$0xf]
        %v3737 = vld [vmem:[%s3708 + $0x70] sm:$0xf]
        %v3738 = vld [vmem:[%s3708 + $0x74] sm:$0xf]
        %v3739 = vld [vmem:[%s3708 + $0x78] sm:$0xf]
        %v3740 = vld [vmem:[%s3708 + $0x7c] sm:$0xf]
        %v3757 = vunpack.c.l.b16 %v3692
        %v3758 = vunpack.c.l.b16 %v3693
        %v3759 = vunpack.c.l.b16 %v3694
        %v3760 = vunpack.c.l.b16 %v3695
        %v3761 = vunpack.c.l.b16 %v3696
        %v3762 = vunpack.c.l.b16 %v3697
        %v3763 = vunpack.c.l.b16 %v3698
        %v3764 = vunpack.c.l.b16 %v3699
        %v3765 = vunpack.c.l.b16 %v3700
        %v3766 = vunpack.c.l.b16 %v3701
        %v3767 = vunpack.c.l.b16 %v3702
        %v3768 = vunpack.c.l.b16 %v3703
        %v3769 = vunpack.c.l.b16 %v3704
        %v3770 = vunpack.c.l.b16 %v3705
        %v3771 = vunpack.c.l.b16 %v3706
        %v3772 = vunpack.c.l.b16 %v3707
        %v3773 = vrot.slane %v3759, 7
        %v3774 = vsel %vm3053, %v3773, %v3757
        %v3775 = vrot.slane %v3761, 6
        %v3776 = vsel %vm3056, %v3775, %v3774
        %v3777 = vrot.slane %v3763, 5
        %v3778 = vsel %vm3059, %v3777, %v3776
        %v3779 = vrot.slane %v3765, 4
        %v3780 = vsel %vm3062, %v3779, %v3778
        %v3781 = vrot.slane %v3767, 3
        %v3782 = vsel %vm3065, %v3781, %v3780
        %v3783 = vrot.slane %v3769, 2
        %v3784 = vsel %vm3068, %v3783, %v3782
        %v3785 = vrot.slane %v3771, 1
        %v3786 = vsel %vm3071, %v3785, %v3784
        %v3787 = vrot.slane %v3760, 7
        %v3788 = vsel %vm3053, %v3787, %v3758
        %v3789 = vrot.slane %v3762, 6
        %v3790 = vsel %vm3056, %v3789, %v3788
        %v3791 = vrot.slane %v3764, 5
        %v3792 = vsel %vm3059, %v3791, %v3790
        %v3793 = vrot.slane %v3766, 4
        %v3794 = vsel %vm3062, %v3793, %v3792
        %v3795 = vrot.slane %v3768, 3
        %v3796 = vsel %vm3065, %v3795, %v3794
        %v3797 = vrot.slane %v3770, 2
        %v3798 = vsel %vm3068, %v3797, %v3796
        %v3799 = vrot.slane %v3772, 1
        %v3800 = vsel %vm3071, %v3799, %v3798
        %v3801 = vpack.c.b16 %v3786, %v3786
        %v3802 = vpack.c.b16 %v3800, %v3800
        %v3837 = vunpack.c.l.b16 %v3709
        %v3838 = vunpack.c.l.b16 %v3710
        %v3839 = vunpack.c.l.b16 %v3711
        %v3840 = vunpack.c.l.b16 %v3712
        %v3841 = vunpack.c.l.b16 %v3713
        %v3842 = vunpack.c.l.b16 %v3714
        %v3843 = vunpack.c.l.b16 %v3715
        %v3844 = vunpack.c.l.b16 %v3716
        %v3845 = vunpack.c.l.b16 %v3717
        %v3846 = vunpack.c.l.b16 %v3718
        %v3847 = vunpack.c.l.b16 %v3719
        %v3848 = vunpack.c.l.b16 %v3720
        %v3849 = vunpack.c.l.b16 %v3721
        %v3850 = vunpack.c.l.b16 %v3722
        %v3851 = vunpack.c.l.b16 %v3723
        %v3852 = vunpack.c.l.b16 %v3724
        %v3853 = vunpack.c.l.b16 %v3725
        %v3854 = vunpack.c.l.b16 %v3726
        %v3855 = vunpack.c.l.b16 %v3727
        %v3856 = vunpack.c.l.b16 %v3728
        %v3857 = vunpack.c.l.b16 %v3729
        %v3858 = vunpack.c.l.b16 %v3730
        %v3859 = vunpack.c.l.b16 %v3731
        %v3860 = vunpack.c.l.b16 %v3732
        %v3861 = vunpack.c.l.b16 %v3733
        %v3862 = vunpack.c.l.b16 %v3734
        %v3863 = vunpack.c.l.b16 %v3735
        %v3864 = vunpack.c.l.b16 %v3736
        %v3865 = vunpack.c.l.b16 %v3737
        %v3866 = vunpack.c.l.b16 %v3738
        %v3867 = vunpack.c.l.b16 %v3739
        %v3868 = vunpack.c.l.b16 %v3740
        %v3869 = vpack.c.b16 %v3838, %v3837
        %v3870 = vpack.c.b16 %v3840, %v3839
        %v3871 = vpack.c.b16 %v3842, %v3841
        %v3872 = vpack.c.b16 %v3844, %v3843
        %v3873 = vpack.c.b16 %v3846, %v3845
        %v3874 = vpack.c.b16 %v3848, %v3847
        %v3875 = vpack.c.b16 %v3850, %v3849
        %v3876 = vpack.c.b16 %v3852, %v3851
        %v3877 = vpack.c.b16 %v3854, %v3853
        %v3878 = vpack.c.b16 %v3856, %v3855
        %v3879 = vpack.c.b16 %v3858, %v3857
        %v3880 = vpack.c.b16 %v3860, %v3859
        %v3881 = vpack.c.b16 %v3862, %v3861
        %v3882 = vpack.c.b16 %v3864, %v3863
        %v3883 = vpack.c.b16 %v3866, %v3865
        %v3884 = vpack.c.b16 %v3868, %v3867
        %3901 = vmatprep.subr.bf16.mxu0 0
        %3902 = vmatpush1.bf16.msra.mxu0 %v3876
        %3903 = vmatprep.subr.bf16.mxu0 0
        %3904 = vmatpush1.bf16.msra.mxu0 %v3875
        %3905 = vmatprep.subr.bf16.mxu0 0
        %3906 = vmatpush1.bf16.msra.mxu0 %v3874
        %3907 = vmatprep.subr.bf16.mxu0 0
        %3908 = vmatpush1.bf16.msra.mxu0 %v3873
        %3909 = vmatprep.subr.bf16.mxu0 0
        %3910 = vmatpush1.bf16.msra.mxu0 %v3872
        %3911 = vmatprep.subr.bf16.mxu0 0
        %3912 = vmatpush1.bf16.msra.mxu0 %v3871
        %3913 = vmatprep.subr.bf16.mxu0 0
        %3914 = vmatpush1.bf16.msra.mxu0 %v3870
        %3915 = vmatprep.subr.bf16.mxu0 0
        %3916 = vmatpush1.bf16.msra.mxu0 %v3869
        %3917 = vmatprep.subr.bf16.mxu0 0
        %3918 = vmatpush2.bf16.msra.mxu0 %v3884
        %3919 = vmatprep.subr.bf16.mxu0 0
        %3920 = vmatpush2.bf16.msra.mxu0 %v3883
        %3921 = vmatprep.subr.bf16.mxu0 0
        %3922 = vmatpush2.bf16.msra.mxu0 %v3882
        %3923 = vmatprep.subr.bf16.mxu0 0
        %3924 = vmatpush2.bf16.msra.mxu0 %v3881
        %3925 = vmatprep.subr.bf16.mxu0 0
        %3926 = vmatpush2.bf16.msra.mxu0 %v3880
        %3927 = vmatprep.subr.bf16.mxu0 0
        %3928 = vmatpush2.bf16.msra.mxu0 %v3879
        %3929 = vmatprep.subr.bf16.mxu0 0
        %3930 = vmatpush2.bf16.msra.mxu0 %v3878
        %3931 = vmatprep.subr.bf16.mxu0 0
        %3932 = vmatpush2.bf16.msra.mxu0 %v3877
        %3933 = vmatprep.mubr.bf16.mxu0 %v3802
        %3934 = vmatmul.mubr.bf16.gmra.mxu0 %v3801
        %v3935 = vpop.f32.mrf.mxu0
        %v3936 = vadd.f32 0.0, %v3935
        %v3937 = vpop.f32.mrf.mxu0
        %v3938 = vpop.f32.mrf.mxu0
        %v3939 = vpop.f32.mrf.mxu0
        %3940 = vdwg.mxu0
        %v3941 = vadd.f32 %v3587, %v3936
        %s3942 = scalar_lea.vmem [#allocation2], 3
        %v3943 = vld [vmem:[%s3942] ss:$8 sm:$0x3]
        %s3944 = scalar_lea.vmem [#allocation2], 35
        %v3945 = vld [vmem:[%s3944] ss:$8 sm:$0x3]
        %s3946 = scalar_lea.vmem [#allocation2], 67
        %v3947 = vld [vmem:[%s3946] ss:$8 sm:$0x3]
        %s3948 = scalar_lea.vmem [#allocation2], 99
        %v3949 = vld [vmem:[%s3948] ss:$8 sm:$0x3]
        %s3950 = scalar_lea.vmem [#allocation2], 131
        %v3951 = vld [vmem:[%s3950] ss:$8 sm:$0x3]
        %s3952 = scalar_lea.vmem [#allocation2], 163
        %v3953 = vld [vmem:[%s3952] ss:$8 sm:$0x3]
        %s3954 = scalar_lea.vmem [#allocation2], 195
        %v3955 = vld [vmem:[%s3954] ss:$8 sm:$0x3]
        %s3956 = scalar_lea.vmem [#allocation2], 227
        %v3957 = vld [vmem:[%s3956] ss:$8 sm:$0x3]
        %v3966 = vlaneseq
        %v3967 = vshrl.u32 %v3966, 7
        %v3968 = vsub.s32 0, %v3967
        %v3969 = vrot.slane %v3943, %v3968
        %v3970 = vlaneseq
        %v3971 = vshrl.u32 %v3970, 7
        %v3972 = vsub.s32 1, %v3971
        %v3973 = vrot.slane %v3943, %v3972
        %v3974 = vlaneseq
        %v3975 = vshrl.u32 %v3974, 7
        %v3976 = vsub.s32 0, %v3975
        %v3977 = vrot.slane %v3945, %v3976
        %v3978 = vlaneseq
        %v3979 = vshrl.u32 %v3978, 7
        %v3980 = vsub.s32 1, %v3979
        %v3981 = vrot.slane %v3945, %v3980
        %v3982 = vlaneseq
        %v3983 = vshrl.u32 %v3982, 7
        %v3984 = vsub.s32 0, %v3983
        %v3985 = vrot.slane %v3947, %v3984
        %v3986 = vlaneseq
        %v3987 = vshrl.u32 %v3986, 7
        %v3988 = vsub.s32 1, %v3987
        %v3989 = vrot.slane %v3947, %v3988
        %v3990 = vlaneseq
        %v3991 = vshrl.u32 %v3990, 7
        %v3992 = vsub.s32 0, %v3991
        %v3993 = vrot.slane %v3949, %v3992
        %v3994 = vlaneseq
        %v3995 = vshrl.u32 %v3994, 7
        %v3996 = vsub.s32 1, %v3995
        %v3997 = vrot.slane %v3949, %v3996
        %v3998 = vlaneseq
        %v3999 = vshrl.u32 %v3998, 7
        %v4000 = vsub.s32 0, %v3999
        %v4001 = vrot.slane %v3951, %v4000
        %v4002 = vlaneseq
        %v4003 = vshrl.u32 %v4002, 7
        %v4004 = vsub.s32 1, %v4003
        %v4005 = vrot.slane %v3951, %v4004
        %v4006 = vlaneseq
        %v4007 = vshrl.u32 %v4006, 7
        %v4008 = vsub.s32 0, %v4007
        %v4009 = vrot.slane %v3953, %v4008
        %v4010 = vlaneseq
        %v4011 = vshrl.u32 %v4010, 7
        %v4012 = vsub.s32 1, %v4011
        %v4013 = vrot.slane %v3953, %v4012
        %v4014 = vlaneseq
        %v4015 = vshrl.u32 %v4014, 7
        %v4016 = vsub.s32 0, %v4015
        %v4017 = vrot.slane %v3955, %v4016
        %v4018 = vlaneseq
        %v4019 = vshrl.u32 %v4018, 7
        %v4020 = vsub.s32 1, %v4019
        %v4021 = vrot.slane %v3955, %v4020
        %v4022 = vlaneseq
        %v4023 = vshrl.u32 %v4022, 7
        %v4024 = vsub.s32 0, %v4023
        %v4025 = vrot.slane %v3957, %v4024
        %v4026 = vlaneseq
        %v4027 = vshrl.u32 %v4026, 7
        %v4028 = vsub.s32 1, %v4027
        %v4029 = vrot.slane %v3957, %v4028
        %v4046 = vpack.c.bf16 %v3969, %v3969
        %v4047 = vpack.c.bf16 %v3973, %v3973
        %v4048 = vpack.c.bf16 %v3977, %v3977
        %v4049 = vpack.c.bf16 %v3981, %v3981
        %v4050 = vpack.c.bf16 %v3985, %v3985
        %v4051 = vpack.c.bf16 %v3989, %v3989
        %v4052 = vpack.c.bf16 %v3993, %v3993
        %v4053 = vpack.c.bf16 %v3997, %v3997
        %v4054 = vpack.c.bf16 %v4001, %v4001
        %v4055 = vpack.c.bf16 %v4005, %v4005
        %v4056 = vpack.c.bf16 %v4009, %v4009
        %v4057 = vpack.c.bf16 %v4013, %v4013
        %v4058 = vpack.c.bf16 %v4017, %v4017
        %v4059 = vpack.c.bf16 %v4021, %v4021
        %v4060 = vpack.c.bf16 %v4025, %v4025
        %v4061 = vpack.c.bf16 %v4029, %v4029
        %s4062 = scalar_lea.vmem %s3, 384
        %v4063 = vld [vmem:[%s4062] sm:$0xf]
        %v4064 = vld [vmem:[%s4062 + $0x4] sm:$0xf]
        %v4065 = vld [vmem:[%s4062 + $0x8] sm:$0xf]
        %v4066 = vld [vmem:[%s4062 + $0xc] sm:$0xf]
        %v4067 = vld [vmem:[%s4062 + $0x10] sm:$0xf]
        %v4068 = vld [vmem:[%s4062 + $0x14] sm:$0xf]
        %v4069 = vld [vmem:[%s4062 + $0x18] sm:$0xf]
        %v4070 = vld [vmem:[%s4062 + $0x1c] sm:$0xf]
        %v4071 = vld [vmem:[%s4062 + $0x20] sm:$0xf]
        %v4072 = vld [vmem:[%s4062 + $0x24] sm:$0xf]
        %v4073 = vld [vmem:[%s4062 + $0x28] sm:$0xf]
        %v4074 = vld [vmem:[%s4062 + $0x2c] sm:$0xf]
        %v4075 = vld [vmem:[%s4062 + $0x30] sm:$0xf]
        %v4076 = vld [vmem:[%s4062 + $0x34] sm:$0xf]
        %v4077 = vld [vmem:[%s4062 + $0x38] sm:$0xf]
        %v4078 = vld [vmem:[%s4062 + $0x3c] sm:$0xf]
        %v4079 = vld [vmem:[%s4062 + $0x40] sm:$0xf]
        %v4080 = vld [vmem:[%s4062 + $0x44] sm:$0xf]
        %v4081 = vld [vmem:[%s4062 + $0x48] sm:$0xf]
        %v4082 = vld [vmem:[%s4062 + $0x4c] sm:$0xf]
        %v4083 = vld [vmem:[%s4062 + $0x50] sm:$0xf]
        %v4084 = vld [vmem:[%s4062 + $0x54] sm:$0xf]
        %v4085 = vld [vmem:[%s4062 + $0x58] sm:$0xf]
        %v4086 = vld [vmem:[%s4062 + $0x5c] sm:$0xf]
        %v4087 = vld [vmem:[%s4062 + $0x60] sm:$0xf]
        %v4088 = vld [vmem:[%s4062 + $0x64] sm:$0xf]
        %v4089 = vld [vmem:[%s4062 + $0x68] sm:$0xf]
        %v4090 = vld [vmem:[%s4062 + $0x6c] sm:$0xf]
        %v4091 = vld [vmem:[%s4062 + $0x70] sm:$0xf]
        %v4092 = vld [vmem:[%s4062 + $0x74] sm:$0xf]
        %v4093 = vld [vmem:[%s4062 + $0x78] sm:$0xf]
        %v4094 = vld [vmem:[%s4062 + $0x7c] sm:$0xf]
        %v4111 = vunpack.c.l.b16 %v4046
        %v4112 = vunpack.c.l.b16 %v4047
        %v4113 = vunpack.c.l.b16 %v4048
        %v4114 = vunpack.c.l.b16 %v4049
        %v4115 = vunpack.c.l.b16 %v4050
        %v4116 = vunpack.c.l.b16 %v4051
        %v4117 = vunpack.c.l.b16 %v4052
        %v4118 = vunpack.c.l.b16 %v4053
        %v4119 = vunpack.c.l.b16 %v4054
        %v4120 = vunpack.c.l.b16 %v4055
        %v4121 = vunpack.c.l.b16 %v4056
        %v4122 = vunpack.c.l.b16 %v4057
        %v4123 = vunpack.c.l.b16 %v4058
        %v4124 = vunpack.c.l.b16 %v4059
        %v4125 = vunpack.c.l.b16 %v4060
        %v4126 = vunpack.c.l.b16 %v4061
        %v4127 = vrot.slane %v4113, 7
        %v4128 = vsel %vm3053, %v4127, %v4111
        %v4129 = vrot.slane %v4115, 6
        %v4130 = vsel %vm3056, %v4129, %v4128
        %v4131 = vrot.slane %v4117, 5
        %v4132 = vsel %vm3059, %v4131, %v4130
        %v4133 = vrot.slane %v4119, 4
        %v4134 = vsel %vm3062, %v4133, %v4132
        %v4135 = vrot.slane %v4121, 3
        %v4136 = vsel %vm3065, %v4135, %v4134
        %v4137 = vrot.slane %v4123, 2
        %v4138 = vsel %vm3068, %v4137, %v4136
        %v4139 = vrot.slane %v4125, 1
        %v4140 = vsel %vm3071, %v4139, %v4138
        %v4141 = vrot.slane %v4114, 7
        %v4142 = vsel %vm3053, %v4141, %v4112
        %v4143 = vrot.slane %v4116, 6
        %v4144 = vsel %vm3056, %v4143, %v4142
        %v4145 = vrot.slane %v4118, 5
        %v4146 = vsel %vm3059, %v4145, %v4144
        %v4147 = vrot.slane %v4120, 4
        %v4148 = vsel %vm3062, %v4147, %v4146
        %v4149 = vrot.slane %v4122, 3
        %v4150 = vsel %vm3065, %v4149, %v4148
        %v4151 = vrot.slane %v4124, 2
        %v4152 = vsel %vm3068, %v4151, %v4150
        %v4153 = vrot.slane %v4126, 1
        %v4154 = vsel %vm3071, %v4153, %v4152
        %v4155 = vpack.c.b16 %v4140, %v4140
        %v4156 = vpack.c.b16 %v4154, %v4154
        %v4191 = vunpack.c.l.b16 %v4063
        %v4192 = vunpack.c.l.b16 %v4064
        %v4193 = vunpack.c.l.b16 %v4065
        %v4194 = vunpack.c.l.b16 %v4066
        %v4195 = vunpack.c.l.b16 %v4067
        %v4196 = vunpack.c.l.b16 %v4068
        %v4197 = vunpack.c.l.b16 %v4069
        %v4198 = vunpack.c.l.b16 %v4070
        %v4199 = vunpack.c.l.b16 %v4071
        %v4200 = vunpack.c.l.b16 %v4072
        %v4201 = vunpack.c.l.b16 %v4073
        %v4202 = vunpack.c.l.b16 %v4074
        %v4203 = vunpack.c.l.b16 %v4075
        %v4204 = vunpack.c.l.b16 %v4076
        %v4205 = vunpack.c.l.b16 %v4077
        %v4206 = vunpack.c.l.b16 %v4078
        %v4207 = vunpack.c.l.b16 %v4079
        %v4208 = vunpack.c.l.b16 %v4080
        %v4209 = vunpack.c.l.b16 %v4081
        %v4210 = vunpack.c.l.b16 %v4082
        %v4211 = vunpack.c.l.b16 %v4083
        %v4212 = vunpack.c.l.b16 %v4084
        %v4213 = vunpack.c.l.b16 %v4085
        %v4214 = vunpack.c.l.b16 %v4086
        %v4215 = vunpack.c.l.b16 %v4087
        %v4216 = vunpack.c.l.b16 %v4088
        %v4217 = vunpack.c.l.b16 %v4089
        %v4218 = vunpack.c.l.b16 %v4090
        %v4219 = vunpack.c.l.b16 %v4091
        %v4220 = vunpack.c.l.b16 %v4092
        %v4221 = vunpack.c.l.b16 %v4093
        %v4222 = vunpack.c.l.b16 %v4094
        %v4223 = vpack.c.b16 %v4192, %v4191
        %v4224 = vpack.c.b16 %v4194, %v4193
        %v4225 = vpack.c.b16 %v4196, %v4195
        %v4226 = vpack.c.b16 %v4198, %v4197
        %v4227 = vpack.c.b16 %v4200, %v4199
        %v4228 = vpack.c.b16 %v4202, %v4201
        %v4229 = vpack.c.b16 %v4204, %v4203
        %v4230 = vpack.c.b16 %v4206, %v4205
        %v4231 = vpack.c.b16 %v4208, %v4207
        %v4232 = vpack.c.b16 %v4210, %v4209
        %v4233 = vpack.c.b16 %v4212, %v4211
        %v4234 = vpack.c.b16 %v4214, %v4213
        %v4235 = vpack.c.b16 %v4216, %v4215
        %v4236 = vpack.c.b16 %v4218, %v4217
        %v4237 = vpack.c.b16 %v4220, %v4219
        %v4238 = vpack.c.b16 %v4222, %v4221
        %4255 = vmatprep.subr.bf16.mxu0 0
        %4256 = vmatpush1.bf16.msra.mxu0 %v4230
        %4257 = vmatprep.subr.bf16.mxu0 0
        %4258 = vmatpush1.bf16.msra.mxu0 %v4229
        %4259 = vmatprep.subr.bf16.mxu0 0
        %4260 = vmatpush1.bf16.msra.mxu0 %v4228
        %4261 = vmatprep.subr.bf16.mxu0 0
        %4262 = vmatpush1.bf16.msra.mxu0 %v4227
        %4263 = vmatprep.subr.bf16.mxu0 0
        %4264 = vmatpush1.bf16.msra.mxu0 %v4226
        %4265 = vmatprep.subr.bf16.mxu0 0
        %4266 = vmatpush1.bf16.msra.mxu0 %v4225
        %4267 = vmatprep.subr.bf16.mxu0 0
        %4268 = vmatpush1.bf16.msra.mxu0 %v4224
        %4269 = vmatprep.subr.bf16.mxu0 0
        %4270 = vmatpush1.bf16.msra.mxu0 %v4223
        %4271 = vmatprep.subr.bf16.mxu0 0
        %4272 = vmatpush2.bf16.msra.mxu0 %v4238
        %4273 = vmatprep.subr.bf16.mxu0 0
        %4274 = vmatpush2.bf16.msra.mxu0 %v4237
        %4275 = vmatprep.subr.bf16.mxu0 0
        %4276 = vmatpush2.bf16.msra.mxu0 %v4236
        %4277 = vmatprep.subr.bf16.mxu0 0
        %4278 = vmatpush2.bf16.msra.mxu0 %v4235
        %4279 = vmatprep.subr.bf16.mxu0 0
        %4280 = vmatpush2.bf16.msra.mxu0 %v4234
        %4281 = vmatprep.subr.bf16.mxu0 0
        %4282 = vmatpush2.bf16.msra.mxu0 %v4233
        %4283 = vmatprep.subr.bf16.mxu0 0
        %4284 = vmatpush2.bf16.msra.mxu0 %v4232
        %4285 = vmatprep.subr.bf16.mxu0 0
        %4286 = vmatpush2.bf16.msra.mxu0 %v4231
        %4287 = vmatprep.mubr.bf16.mxu0 %v4156
        %4288 = vmatmul.mubr.bf16.gmra.mxu0 %v4155
        %v4289 = vpop.f32.mrf.mxu0
        %v4290 = vadd.f32 0.0, %v4289
        %v4291 = vpop.f32.mrf.mxu0
        %v4292 = vpop.f32.mrf.mxu0
        %v4293 = vpop.f32.mrf.mxu0
        %4294 = vdwg.mxu0
        %v4295 = vadd.f32 %v3941, %v4290
        %s4296 = scalar_lea.vmem [#allocation2], 4
        %v4297 = vld [vmem:[%s4296] ss:$8 sm:$0x3]
        %s4298 = scalar_lea.vmem [#allocation2], 36
        %v4299 = vld [vmem:[%s4298] ss:$8 sm:$0x3]
        %s4300 = scalar_lea.vmem [#allocation2], 68
        %v4301 = vld [vmem:[%s4300] ss:$8 sm:$0x3]
        %s4302 = scalar_lea.vmem [#allocation2], 100
        %v4303 = vld [vmem:[%s4302] ss:$8 sm:$0x3]
        %s4304 = scalar_lea.vmem [#allocation2], 132
        %v4305 = vld [vmem:[%s4304] ss:$8 sm:$0x3]
        %s4306 = scalar_lea.vmem [#allocation2], 164
        %v4307 = vld [vmem:[%s4306] ss:$8 sm:$0x3]
        %s4308 = scalar_lea.vmem [#allocation2], 196
        %v4309 = vld [vmem:[%s4308] ss:$8 sm:$0x3]
        %s4310 = scalar_lea.vmem [#allocation2], 228
        %v4311 = vld [vmem:[%s4310] ss:$8 sm:$0x3]
        %v4320 = vlaneseq
        %v4321 = vshrl.u32 %v4320, 7
        %v4322 = vsub.s32 0, %v4321
        %v4323 = vrot.slane %v4297, %v4322
        %v4324 = vlaneseq
        %v4325 = vshrl.u32 %v4324, 7
        %v4326 = vsub.s32 1, %v4325
        %v4327 = vrot.slane %v4297, %v4326
        %v4328 = vlaneseq
        %v4329 = vshrl.u32 %v4328, 7
        %v4330 = vsub.s32 0, %v4329
        %v4331 = vrot.slane %v4299, %v4330
        %v4332 = vlaneseq
        %v4333 = vshrl.u32 %v4332, 7
        %v4334 = vsub.s32 1, %v4333
        %v4335 = vrot.slane %v4299, %v4334
        %v4336 = vlaneseq
        %v4337 = vshrl.u32 %v4336, 7
        %v4338 = vsub.s32 0, %v4337
        %v4339 = vrot.slane %v4301, %v4338
        %v4340 = vlaneseq
        %v4341 = vshrl.u32 %v4340, 7
        %v4342 = vsub.s32 1, %v4341
        %v4343 = vrot.slane %v4301, %v4342
        %v4344 = vlaneseq
        %v4345 = vshrl.u32 %v4344, 7
        %v4346 = vsub.s32 0, %v4345
        %v4347 = vrot.slane %v4303, %v4346
        %v4348 = vlaneseq
        %v4349 = vshrl.u32 %v4348, 7
        %v4350 = vsub.s32 1, %v4349
        %v4351 = vrot.slane %v4303, %v4350
        %v4352 = vlaneseq
        %v4353 = vshrl.u32 %v4352, 7
        %v4354 = vsub.s32 0, %v4353
        %v4355 = vrot.slane %v4305, %v4354
        %v4356 = vlaneseq
        %v4357 = vshrl.u32 %v4356, 7
        %v4358 = vsub.s32 1, %v4357
        %v4359 = vrot.slane %v4305, %v4358
        %v4360 = vlaneseq
        %v4361 = vshrl.u32 %v4360, 7
        %v4362 = vsub.s32 0, %v4361
        %v4363 = vrot.slane %v4307, %v4362
        %v4364 = vlaneseq
        %v4365 = vshrl.u32 %v4364, 7
        %v4366 = vsub.s32 1, %v4365
        %v4367 = vrot.slane %v4307, %v4366
        %v4368 = vlaneseq
        %v4369 = vshrl.u32 %v4368, 7
        %v4370 = vsub.s32 0, %v4369
        %v4371 = vrot.slane %v4309, %v4370
        %v4372 = vlaneseq
        %v4373 = vshrl.u32 %v4372, 7
        %v4374 = vsub.s32 1, %v4373
        %v4375 = vrot.slane %v4309, %v4374
        %v4376 = vlaneseq
        %v4377 = vshrl.u32 %v4376, 7
        %v4378 = vsub.s32 0, %v4377
        %v4379 = vrot.slane %v4311, %v4378
        %v4380 = vlaneseq
        %v4381 = vshrl.u32 %v4380, 7
        %v4382 = vsub.s32 1, %v4381
        %v4383 = vrot.slane %v4311, %v4382
        %v4400 = vpack.c.bf16 %v4323, %v4323
        %v4401 = vpack.c.bf16 %v4327, %v4327
        %v4402 = vpack.c.bf16 %v4331, %v4331
        %v4403 = vpack.c.bf16 %v4335, %v4335
        %v4404 = vpack.c.bf16 %v4339, %v4339
        %v4405 = vpack.c.bf16 %v4343, %v4343
        %v4406 = vpack.c.bf16 %v4347, %v4347
        %v4407 = vpack.c.bf16 %v4351, %v4351
        %v4408 = vpack.c.bf16 %v4355, %v4355
        %v4409 = vpack.c.bf16 %v4359, %v4359
        %v4410 = vpack.c.bf16 %v4363, %v4363
        %v4411 = vpack.c.bf16 %v4367, %v4367
        %v4412 = vpack.c.bf16 %v4371, %v4371
        %v4413 = vpack.c.bf16 %v4375, %v4375
        %v4414 = vpack.c.bf16 %v4379, %v4379
        %v4415 = vpack.c.bf16 %v4383, %v4383
        %s4416 = scalar_lea.vmem %s3, 512
        %v4417 = vld [vmem:[%s4416] sm:$0xf]
        %v4418 = vld [vmem:[%s4416 + $0x4] sm:$0xf]
        %v4419 = vld [vmem:[%s4416 + $0x8] sm:$0xf]
        %v4420 = vld [vmem:[%s4416 + $0xc] sm:$0xf]
        %v4421 = vld [vmem:[%s4416 + $0x10] sm:$0xf]
        %v4422 = vld [vmem:[%s4416 + $0x14] sm:$0xf]
        %v4423 = vld [vmem:[%s4416 + $0x18] sm:$0xf]
        %v4424 = vld [vmem:[%s4416 + $0x1c] sm:$0xf]
        %v4425 = vld [vmem:[%s4416 + $0x20] sm:$0xf]
        %v4426 = vld [vmem:[%s4416 + $0x24] sm:$0xf]
        %v4427 = vld [vmem:[%s4416 + $0x28] sm:$0xf]
        %v4428 = vld [vmem:[%s4416 + $0x2c] sm:$0xf]
        %v4429 = vld [vmem:[%s4416 + $0x30] sm:$0xf]
        %v4430 = vld [vmem:[%s4416 + $0x34] sm:$0xf]
        %v4431 = vld [vmem:[%s4416 + $0x38] sm:$0xf]
        %v4432 = vld [vmem:[%s4416 + $0x3c] sm:$0xf]
        %v4433 = vld [vmem:[%s4416 + $0x40] sm:$0xf]
        %v4434 = vld [vmem:[%s4416 + $0x44] sm:$0xf]
        %v4435 = vld [vmem:[%s4416 + $0x48] sm:$0xf]
        %v4436 = vld [vmem:[%s4416 + $0x4c] sm:$0xf]
        %v4437 = vld [vmem:[%s4416 + $0x50] sm:$0xf]
        %v4438 = vld [vmem:[%s4416 + $0x54] sm:$0xf]
        %v4439 = vld [vmem:[%s4416 + $0x58] sm:$0xf]
        %v4440 = vld [vmem:[%s4416 + $0x5c] sm:$0xf]
        %v4441 = vld [vmem:[%s4416 + $0x60] sm:$0xf]
        %v4442 = vld [vmem:[%s4416 + $0x64] sm:$0xf]
        %v4443 = vld [vmem:[%s4416 + $0x68] sm:$0xf]
        %v4444 = vld [vmem:[%s4416 + $0x6c] sm:$0xf]
        %v4445 = vld [vmem:[%s4416 + $0x70] sm:$0xf]
        %v4446 = vld [vmem:[%s4416 + $0x74] sm:$0xf]
        %v4447 = vld [vmem:[%s4416 + $0x78] sm:$0xf]
        %v4448 = vld [vmem:[%s4416 + $0x7c] sm:$0xf]
        %v4465 = vunpack.c.l.b16 %v4400
        %v4466 = vunpack.c.l.b16 %v4401
        %v4467 = vunpack.c.l.b16 %v4402
        %v4468 = vunpack.c.l.b16 %v4403
        %v4469 = vunpack.c.l.b16 %v4404
        %v4470 = vunpack.c.l.b16 %v4405
        %v4471 = vunpack.c.l.b16 %v4406
        %v4472 = vunpack.c.l.b16 %v4407
        %v4473 = vunpack.c.l.b16 %v4408
        %v4474 = vunpack.c.l.b16 %v4409
        %v4475 = vunpack.c.l.b16 %v4410
        %v4476 = vunpack.c.l.b16 %v4411
        %v4477 = vunpack.c.l.b16 %v4412
        %v4478 = vunpack.c.l.b16 %v4413
        %v4479 = vunpack.c.l.b16 %v4414
        %v4480 = vunpack.c.l.b16 %v4415
        %v4481 = vrot.slane %v4467, 7
        %v4482 = vsel %vm3053, %v4481, %v4465
        %v4483 = vrot.slane %v4469, 6
        %v4484 = vsel %vm3056, %v4483, %v4482
        %v4485 = vrot.slane %v4471, 5
        %v4486 = vsel %vm3059, %v4485, %v4484
        %v4487 = vrot.slane %v4473, 4
        %v4488 = vsel %vm3062, %v4487, %v4486
        %v4489 = vrot.slane %v4475, 3
        %v4490 = vsel %vm3065, %v4489, %v4488
        %v4491 = vrot.slane %v4477, 2
        %v4492 = vsel %vm3068, %v4491, %v4490
        %v4493 = vrot.slane %v4479, 1
        %v4494 = vsel %vm3071, %v4493, %v4492
        %v4495 = vrot.slane %v4468, 7
        %v4496 = vsel %vm3053, %v4495, %v4466
        %v4497 = vrot.slane %v4470, 6
        %v4498 = vsel %vm3056, %v4497, %v4496
        %v4499 = vrot.slane %v4472, 5
        %v4500 = vsel %vm3059, %v4499, %v4498
        %v4501 = vrot.slane %v4474, 4
        %v4502 = vsel %vm3062, %v4501, %v4500
        %v4503 = vrot.slane %v4476, 3
        %v4504 = vsel %vm3065, %v4503, %v4502
        %v4505 = vrot.slane %v4478, 2
        %v4506 = vsel %vm3068, %v4505, %v4504
        %v4507 = vrot.slane %v4480, 1
        %v4508 = vsel %vm3071, %v4507, %v4506
        %v4509 = vpack.c.b16 %v4494, %v4494
        %v4510 = vpack.c.b16 %v4508, %v4508
        %v4545 = vunpack.c.l.b16 %v4417
        %v4546 = vunpack.c.l.b16 %v4418
        %v4547 = vunpack.c.l.b16 %v4419
        %v4548 = vunpack.c.l.b16 %v4420
        %v4549 = vunpack.c.l.b16 %v4421
        %v4550 = vunpack.c.l.b16 %v4422
        %v4551 = vunpack.c.l.b16 %v4423
        %v4552 = vunpack.c.l.b16 %v4424
        %v4553 = vunpack.c.l.b16 %v4425
        %v4554 = vunpack.c.l.b16 %v4426
        %v4555 = vunpack.c.l.b16 %v4427
        %v4556 = vunpack.c.l.b16 %v4428
        %v4557 = vunpack.c.l.b16 %v4429
        %v4558 = vunpack.c.l.b16 %v4430
        %v4559 = vunpack.c.l.b16 %v4431
        %v4560 = vunpack.c.l.b16 %v4432
        %v4561 = vunpack.c.l.b16 %v4433
        %v4562 = vunpack.c.l.b16 %v4434
        %v4563 = vunpack.c.l.b16 %v4435
        %v4564 = vunpack.c.l.b16 %v4436
        %v4565 = vunpack.c.l.b16 %v4437
        %v4566 = vunpack.c.l.b16 %v4438
        %v4567 = vunpack.c.l.b16 %v4439
        %v4568 = vunpack.c.l.b16 %v4440
        %v4569 = vunpack.c.l.b16 %v4441
        %v4570 = vunpack.c.l.b16 %v4442
        %v4571 = vunpack.c.l.b16 %v4443
        %v4572 = vunpack.c.l.b16 %v4444
        %v4573 = vunpack.c.l.b16 %v4445
        %v4574 = vunpack.c.l.b16 %v4446
        %v4575 = vunpack.c.l.b16 %v4447
        %v4576 = vunpack.c.l.b16 %v4448
        %v4577 = vpack.c.b16 %v4546, %v4545
        %v4578 = vpack.c.b16 %v4548, %v4547
        %v4579 = vpack.c.b16 %v4550, %v4549
        %v4580 = vpack.c.b16 %v4552, %v4551
        %v4581 = vpack.c.b16 %v4554, %v4553
        %v4582 = vpack.c.b16 %v4556, %v4555
        %v4583 = vpack.c.b16 %v4558, %v4557
        %v4584 = vpack.c.b16 %v4560, %v4559
        %v4585 = vpack.c.b16 %v4562, %v4561
        %v4586 = vpack.c.b16 %v4564, %v4563
        %v4587 = vpack.c.b16 %v4566, %v4565
        %v4588 = vpack.c.b16 %v4568, %v4567
        %v4589 = vpack.c.b16 %v4570, %v4569
        %v4590 = vpack.c.b16 %v4572, %v4571
        %v4591 = vpack.c.b16 %v4574, %v4573
        %v4592 = vpack.c.b16 %v4576, %v4575
        %4609 = vmatprep.subr.bf16.mxu0 0
        %4610 = vmatpush1.bf16.msra.mxu0 %v4584
        %4611 = vmatprep.subr.bf16.mxu0 0
        %4612 = vmatpush1.bf16.msra.mxu0 %v4583
        %4613 = vmatprep.subr.bf16.mxu0 0
        %4614 = vmatpush1.bf16.msra.mxu0 %v4582
        %4615 = vmatprep.subr.bf16.mxu0 0
        %4616 = vmatpush1.bf16.msra.mxu0 %v4581
        %4617 = vmatprep.subr.bf16.mxu0 0
        %4618 = vmatpush1.bf16.msra.mxu0 %v4580
        %4619 = vmatprep.subr.bf16.mxu0 0
        %4620 = vmatpush1.bf16.msra.mxu0 %v4579
        %4621 = vmatprep.subr.bf16.mxu0 0
        %4622 = vmatpush1.bf16.msra.mxu0 %v4578
        %4623 = vmatprep.subr.bf16.mxu0 0
        %4624 = vmatpush1.bf16.msra.mxu0 %v4577
        %4625 = vmatprep.subr.bf16.mxu0 0
        %4626 = vmatpush2.bf16.msra.mxu0 %v4592
        %4627 = vmatprep.subr.bf16.mxu0 0
        %4628 = vmatpush2.bf16.msra.mxu0 %v4591
        %4629 = vmatprep.subr.bf16.mxu0 0
        %4630 = vmatpush2.bf16.msra.mxu0 %v4590
        %4631 = vmatprep.subr.bf16.mxu0 0
        %4632 = vmatpush2.bf16.msra.mxu0 %v4589
        %4633 = vmatprep.subr.bf16.mxu0 0
        %4634 = vmatpush2.bf16.msra.mxu0 %v4588
        %4635 = vmatprep.subr.bf16.mxu0 0
        %4636 = vmatpush2.bf16.msra.mxu0 %v4587
        %4637 = vmatprep.subr.bf16.mxu0 0
        %4638 = vmatpush2.bf16.msra.mxu0 %v4586
        %4639 = vmatprep.subr.bf16.mxu0 0
        %4640 = vmatpush2.bf16.msra.mxu0 %v4585
        %4641 = vmatprep.mubr.bf16.mxu0 %v4510
        %4642 = vmatmul.mubr.bf16.gmra.mxu0 %v4509
        %v4643 = vpop.f32.mrf.mxu0
        %v4644 = vadd.f32 0.0, %v4643
        %v4645 = vpop.f32.mrf.mxu0
        %v4646 = vpop.f32.mrf.mxu0
        %v4647 = vpop.f32.mrf.mxu0
        %4648 = vdwg.mxu0
        %v4649 = vadd.f32 %v4295, %v4644
        %s4650 = scalar_lea.vmem [#allocation2], 5
        %v4651 = vld [vmem:[%s4650] ss:$8 sm:$0x3]
        %s4652 = scalar_lea.vmem [#allocation2], 37
        %v4653 = vld [vmem:[%s4652] ss:$8 sm:$0x3]
        %s4654 = scalar_lea.vmem [#allocation2], 69
        %v4655 = vld [vmem:[%s4654] ss:$8 sm:$0x3]
        %s4656 = scalar_lea.vmem [#allocation2], 101
        %v4657 = vld [vmem:[%s4656] ss:$8 sm:$0x3]
        %s4658 = scalar_lea.vmem [#allocation2], 133
        %v4659 = vld [vmem:[%s4658] ss:$8 sm:$0x3]
        %s4660 = scalar_lea.vmem [#allocation2], 165
        %v4661 = vld [vmem:[%s4660] ss:$8 sm:$0x3]
        %s4662 = scalar_lea.vmem [#allocation2], 197
        %v4663 = vld [vmem:[%s4662] ss:$8 sm:$0x3]
        %s4664 = scalar_lea.vmem [#allocation2], 229
        %v4665 = vld [vmem:[%s4664] ss:$8 sm:$0x3]
        %v4674 = vlaneseq
        %v4675 = vshrl.u32 %v4674, 7
        %v4676 = vsub.s32 0, %v4675
        %v4677 = vrot.slane %v4651, %v4676
        %v4678 = vlaneseq
        %v4679 = vshrl.u32 %v4678, 7
        %v4680 = vsub.s32 1, %v4679
        %v4681 = vrot.slane %v4651, %v4680
        %v4682 = vlaneseq
        %v4683 = vshrl.u32 %v4682, 7
        %v4684 = vsub.s32 0, %v4683
        %v4685 = vrot.slane %v4653, %v4684
        %v4686 = vlaneseq
        %v4687 = vshrl.u32 %v4686, 7
        %v4688 = vsub.s32 1, %v4687
        %v4689 = vrot.slane %v4653, %v4688
        %v4690 = vlaneseq
        %v4691 = vshrl.u32 %v4690, 7
        %v4692 = vsub.s32 0, %v4691
        %v4693 = vrot.slane %v4655, %v4692
        %v4694 = vlaneseq
        %v4695 = vshrl.u32 %v4694, 7
        %v4696 = vsub.s32 1, %v4695
        %v4697 = vrot.slane %v4655, %v4696
        %v4698 = vlaneseq
        %v4699 = vshrl.u32 %v4698, 7
        %v4700 = vsub.s32 0, %v4699
        %v4701 = vrot.slane %v4657, %v4700
        %v4702 = vlaneseq
        %v4703 = vshrl.u32 %v4702, 7
        %v4704 = vsub.s32 1, %v4703
        %v4705 = vrot.slane %v4657, %v4704
        %v4706 = vlaneseq
        %v4707 = vshrl.u32 %v4706, 7
        %v4708 = vsub.s32 0, %v4707
        %v4709 = vrot.slane %v4659, %v4708
        %v4710 = vlaneseq
        %v4711 = vshrl.u32 %v4710, 7
        %v4712 = vsub.s32 1, %v4711
        %v4713 = vrot.slane %v4659, %v4712
        %v4714 = vlaneseq
        %v4715 = vshrl.u32 %v4714, 7
        %v4716 = vsub.s32 0, %v4715
        %v4717 = vrot.slane %v4661, %v4716
        %v4718 = vlaneseq
        %v4719 = vshrl.u32 %v4718, 7
        %v4720 = vsub.s32 1, %v4719
        %v4721 = vrot.slane %v4661, %v4720
        %v4722 = vlaneseq
        %v4723 = vshrl.u32 %v4722, 7
        %v4724 = vsub.s32 0, %v4723
        %v4725 = vrot.slane %v4663, %v4724
        %v4726 = vlaneseq
        %v4727 = vshrl.u32 %v4726, 7
        %v4728 = vsub.s32 1, %v4727
        %v4729 = vrot.slane %v4663, %v4728
        %v4730 = vlaneseq
        %v4731 = vshrl.u32 %v4730, 7
        %v4732 = vsub.s32 0, %v4731
        %v4733 = vrot.slane %v4665, %v4732
        %v4734 = vlaneseq
        %v4735 = vshrl.u32 %v4734, 7
        %v4736 = vsub.s32 1, %v4735
        %v4737 = vrot.slane %v4665, %v4736
        %v4754 = vpack.c.bf16 %v4677, %v4677
        %v4755 = vpack.c.bf16 %v4681, %v4681
        %v4756 = vpack.c.bf16 %v4685, %v4685
        %v4757 = vpack.c.bf16 %v4689, %v4689
        %v4758 = vpack.c.bf16 %v4693, %v4693
        %v4759 = vpack.c.bf16 %v4697, %v4697
        %v4760 = vpack.c.bf16 %v4701, %v4701
        %v4761 = vpack.c.bf16 %v4705, %v4705
        %v4762 = vpack.c.bf16 %v4709, %v4709
        %v4763 = vpack.c.bf16 %v4713, %v4713
        %v4764 = vpack.c.bf16 %v4717, %v4717
        %v4765 = vpack.c.bf16 %v4721, %v4721
        %v4766 = vpack.c.bf16 %v4725, %v4725
        %v4767 = vpack.c.bf16 %v4729, %v4729
        %v4768 = vpack.c.bf16 %v4733, %v4733
        %v4769 = vpack.c.bf16 %v4737, %v4737
        %s4770 = scalar_lea.vmem %s3, 640
        %v4771 = vld [vmem:[%s4770] sm:$0xf]
        %v4772 = vld [vmem:[%s4770 + $0x4] sm:$0xf]
        %v4773 = vld [vmem:[%s4770 + $0x8] sm:$0xf]
        %v4774 = vld [vmem:[%s4770 + $0xc] sm:$0xf]
        %v4775 = vld [vmem:[%s4770 + $0x10] sm:$0xf]
        %v4776 = vld [vmem:[%s4770 + $0x14] sm:$0xf]
        %v4777 = vld [vmem:[%s4770 + $0x18] sm:$0xf]
        %v4778 = vld [vmem:[%s4770 + $0x1c] sm:$0xf]
        %v4779 = vld [vmem:[%s4770 + $0x20] sm:$0xf]
        %v4780 = vld [vmem:[%s4770 + $0x24] sm:$0xf]
        %v4781 = vld [vmem:[%s4770 + $0x28] sm:$0xf]
        %v4782 = vld [vmem:[%s4770 + $0x2c] sm:$0xf]
        %v4783 = vld [vmem:[%s4770 + $0x30] sm:$0xf]
        %v4784 = vld [vmem:[%s4770 + $0x34] sm:$0xf]
        %v4785 = vld [vmem:[%s4770 + $0x38] sm:$0xf]
        %v4786 = vld [vmem:[%s4770 + $0x3c] sm:$0xf]
        %v4787 = vld [vmem:[%s4770 + $0x40] sm:$0xf]
        %v4788 = vld [vmem:[%s4770 + $0x44] sm:$0xf]
        %v4789 = vld [vmem:[%s4770 + $0x48] sm:$0xf]
        %v4790 = vld [vmem:[%s4770 + $0x4c] sm:$0xf]
        %v4791 = vld [vmem:[%s4770 + $0x50] sm:$0xf]
        %v4792 = vld [vmem:[%s4770 + $0x54] sm:$0xf]
        %v4793 = vld [vmem:[%s4770 + $0x58] sm:$0xf]
        %v4794 = vld [vmem:[%s4770 + $0x5c] sm:$0xf]
        %v4795 = vld [vmem:[%s4770 + $0x60] sm:$0xf]
        %v4796 = vld [vmem:[%s4770 + $0x64] sm:$0xf]
        %v4797 = vld [vmem:[%s4770 + $0x68] sm:$0xf]
        %v4798 = vld [vmem:[%s4770 + $0x6c] sm:$0xf]
        %v4799 = vld [vmem:[%s4770 + $0x70] sm:$0xf]
        %v4800 = vld [vmem:[%s4770 + $0x74] sm:$0xf]
        %v4801 = vld [vmem:[%s4770 + $0x78] sm:$0xf]
        %v4802 = vld [vmem:[%s4770 + $0x7c] sm:$0xf]
        %v4819 = vunpack.c.l.b16 %v4754
        %v4820 = vunpack.c.l.b16 %v4755
        %v4821 = vunpack.c.l.b16 %v4756
        %v4822 = vunpack.c.l.b16 %v4757
        %v4823 = vunpack.c.l.b16 %v4758
        %v4824 = vunpack.c.l.b16 %v4759
        %v4825 = vunpack.c.l.b16 %v4760
        %v4826 = vunpack.c.l.b16 %v4761
        %v4827 = vunpack.c.l.b16 %v4762
        %v4828 = vunpack.c.l.b16 %v4763
        %v4829 = vunpack.c.l.b16 %v4764
        %v4830 = vunpack.c.l.b16 %v4765
        %v4831 = vunpack.c.l.b16 %v4766
        %v4832 = vunpack.c.l.b16 %v4767
        %v4833 = vunpack.c.l.b16 %v4768
        %v4834 = vunpack.c.l.b16 %v4769
        %v4835 = vrot.slane %v4821, 7
        %v4836 = vsel %vm3053, %v4835, %v4819
        %v4837 = vrot.slane %v4823, 6
        %v4838 = vsel %vm3056, %v4837, %v4836
        %v4839 = vrot.slane %v4825, 5
        %v4840 = vsel %vm3059, %v4839, %v4838
        %v4841 = vrot.slane %v4827, 4
        %v4842 = vsel %vm3062, %v4841, %v4840
        %v4843 = vrot.slane %v4829, 3
        %v4844 = vsel %vm3065, %v4843, %v4842
        %v4845 = vrot.slane %v4831, 2
        %v4846 = vsel %vm3068, %v4845, %v4844
        %v4847 = vrot.slane %v4833, 1
        %v4848 = vsel %vm3071, %v4847, %v4846
        %v4849 = vrot.slane %v4822, 7
        %v4850 = vsel %vm3053, %v4849, %v4820
        %v4851 = vrot.slane %v4824, 6
        %v4852 = vsel %vm3056, %v4851, %v4850
        %v4853 = vrot.slane %v4826, 5
        %v4854 = vsel %vm3059, %v4853, %v4852
        %v4855 = vrot.slane %v4828, 4
        %v4856 = vsel %vm3062, %v4855, %v4854
        %v4857 = vrot.slane %v4830, 3
        %v4858 = vsel %vm3065, %v4857, %v4856
        %v4859 = vrot.slane %v4832, 2
        %v4860 = vsel %vm3068, %v4859, %v4858
        %v4861 = vrot.slane %v4834, 1
        %v4862 = vsel %vm3071, %v4861, %v4860
        %v4863 = vpack.c.b16 %v4848, %v4848
        %v4864 = vpack.c.b16 %v4862, %v4862
        %v4899 = vunpack.c.l.b16 %v4771
        %v4900 = vunpack.c.l.b16 %v4772
        %v4901 = vunpack.c.l.b16 %v4773
        %v4902 = vunpack.c.l.b16 %v4774
        %v4903 = vunpack.c.l.b16 %v4775
        %v4904 = vunpack.c.l.b16 %v4776
        %v4905 = vunpack.c.l.b16 %v4777
        %v4906 = vunpack.c.l.b16 %v4778
        %v4907 = vunpack.c.l.b16 %v4779
        %v4908 = vunpack.c.l.b16 %v4780
        %v4909 = vunpack.c.l.b16 %v4781
        %v4910 = vunpack.c.l.b16 %v4782
        %v4911 = vunpack.c.l.b16 %v4783
        %v4912 = vunpack.c.l.b16 %v4784
        %v4913 = vunpack.c.l.b16 %v4785
        %v4914 = vunpack.c.l.b16 %v4786
        %v4915 = vunpack.c.l.b16 %v4787
        %v4916 = vunpack.c.l.b16 %v4788
        %v4917 = vunpack.c.l.b16 %v4789
        %v4918 = vunpack.c.l.b16 %v4790
        %v4919 = vunpack.c.l.b16 %v4791
        %v4920 = vunpack.c.l.b16 %v4792
        %v4921 = vunpack.c.l.b16 %v4793
        %v4922 = vunpack.c.l.b16 %v4794
        %v4923 = vunpack.c.l.b16 %v4795
        %v4924 = vunpack.c.l.b16 %v4796
        %v4925 = vunpack.c.l.b16 %v4797
        %v4926 = vunpack.c.l.b16 %v4798
        %v4927 = vunpack.c.l.b16 %v4799
        %v4928 = vunpack.c.l.b16 %v4800
        %v4929 = vunpack.c.l.b16 %v4801
        %v4930 = vunpack.c.l.b16 %v4802
        %v4931 = vpack.c.b16 %v4900, %v4899
        %v4932 = vpack.c.b16 %v4902, %v4901
        %v4933 = vpack.c.b16 %v4904, %v4903
        %v4934 = vpack.c.b16 %v4906, %v4905
        %v4935 = vpack.c.b16 %v4908, %v4907
        %v4936 = vpack.c.b16 %v4910, %v4909
        %v4937 = vpack.c.b16 %v4912, %v4911
        %v4938 = vpack.c.b16 %v4914, %v4913
        %v4939 = vpack.c.b16 %v4916, %v4915
        %v4940 = vpack.c.b16 %v4918, %v4917
        %v4941 = vpack.c.b16 %v4920, %v4919
        %v4942 = vpack.c.b16 %v4922, %v4921
        %v4943 = vpack.c.b16 %v4924, %v4923
        %v4944 = vpack.c.b16 %v4926, %v4925
        %v4945 = vpack.c.b16 %v4928, %v4927
        %v4946 = vpack.c.b16 %v4930, %v4929
        %4963 = vmatprep.subr.bf16.mxu0 0
        %4964 = vmatpush1.bf16.msra.mxu0 %v4938
        %4965 = vmatprep.subr.bf16.mxu0 0
        %4966 = vmatpush1.bf16.msra.mxu0 %v4937
        %4967 = vmatprep.subr.bf16.mxu0 0
        %4968 = vmatpush1.bf16.msra.mxu0 %v4936
        %4969 = vmatprep.subr.bf16.mxu0 0
        %4970 = vmatpush1.bf16.msra.mxu0 %v4935
        %4971 = vmatprep.subr.bf16.mxu0 0
        %4972 = vmatpush1.bf16.msra.mxu0 %v4934
        %4973 = vmatprep.subr.bf16.mxu0 0
        %4974 = vmatpush1.bf16.msra.mxu0 %v4933
        %4975 = vmatprep.subr.bf16.mxu0 0
        %4976 = vmatpush1.bf16.msra.mxu0 %v4932
        %4977 = vmatprep.subr.bf16.mxu0 0
        %4978 = vmatpush1.bf16.msra.mxu0 %v4931
        %4979 = vmatprep.subr.bf16.mxu0 0
        %4980 = vmatpush2.bf16.msra.mxu0 %v4946
        %4981 = vmatprep.subr.bf16.mxu0 0
        %4982 = vmatpush2.bf16.msra.mxu0 %v4945
        %4983 = vmatprep.subr.bf16.mxu0 0
        %4984 = vmatpush2.bf16.msra.mxu0 %v4944
        %4985 = vmatprep.subr.bf16.mxu0 0
        %4986 = vmatpush2.bf16.msra.mxu0 %v4943
        %4987 = vmatprep.subr.bf16.mxu0 0
        %4988 = vmatpush2.bf16.msra.mxu0 %v4942
        %4989 = vmatprep.subr.bf16.mxu0 0
        %4990 = vmatpush2.bf16.msra.mxu0 %v4941
        %4991 = vmatprep.subr.bf16.mxu0 0
        %4992 = vmatpush2.bf16.msra.mxu0 %v4940
        %4993 = vmatprep.subr.bf16.mxu0 0
        %4994 = vmatpush2.bf16.msra.mxu0 %v4939
        %4995 = vmatprep.mubr.bf16.mxu0 %v4864
        %4996 = vmatmul.mubr.bf16.gmra.mxu0 %v4863
        %v4997 = vpop.f32.mrf.mxu0
        %v4998 = vadd.f32 0.0, %v4997
        %v4999 = vpop.f32.mrf.mxu0
        %v5000 = vpop.f32.mrf.mxu0
        %v5001 = vpop.f32.mrf.mxu0
        %5002 = vdwg.mxu0
        %v5003 = vadd.f32 %v4649, %v4998
        %s5004 = scalar_lea.vmem [#allocation2], 6
        %v5005 = vld [vmem:[%s5004] ss:$8 sm:$0x3]
        %s5006 = scalar_lea.vmem [#allocation2], 38
        %v5007 = vld [vmem:[%s5006] ss:$8 sm:$0x3]
        %s5008 = scalar_lea.vmem [#allocation2], 70
        %v5009 = vld [vmem:[%s5008] ss:$8 sm:$0x3]
        %s5010 = scalar_lea.vmem [#allocation2], 102
        %v5011 = vld [vmem:[%s5010] ss:$8 sm:$0x3]
        %s5012 = scalar_lea.vmem [#allocation2], 134
        %v5013 = vld [vmem:[%s5012] ss:$8 sm:$0x3]
        %s5014 = scalar_lea.vmem [#allocation2], 166
        %v5015 = vld [vmem:[%s5014] ss:$8 sm:$0x3]
        %s5016 = scalar_lea.vmem [#allocation2], 198
        %v5017 = vld [vmem:[%s5016] ss:$8 sm:$0x3]
        %s5018 = scalar_lea.vmem [#allocation2], 230
        %v5019 = vld [vmem:[%s5018] ss:$8 sm:$0x3]
        %v5028 = vlaneseq
        %v5029 = vshrl.u32 %v5028, 7
        %v5030 = vsub.s32 0, %v5029
        %v5031 = vrot.slane %v5005, %v5030
        %v5032 = vlaneseq
        %v5033 = vshrl.u32 %v5032, 7
        %v5034 = vsub.s32 1, %v5033
        %v5035 = vrot.slane %v5005, %v5034
        %v5036 = vlaneseq
        %v5037 = vshrl.u32 %v5036, 7
        %v5038 = vsub.s32 0, %v5037
        %v5039 = vrot.slane %v5007, %v5038
        %v5040 = vlaneseq
        %v5041 = vshrl.u32 %v5040, 7
        %v5042 = vsub.s32 1, %v5041
        %v5043 = vrot.slane %v5007, %v5042
        %v5044 = vlaneseq
        %v5045 = vshrl.u32 %v5044, 7
        %v5046 = vsub.s32 0, %v5045
        %v5047 = vrot.slane %v5009, %v5046
        %v5048 = vlaneseq
        %v5049 = vshrl.u32 %v5048, 7
        %v5050 = vsub.s32 1, %v5049
        %v5051 = vrot.slane %v5009, %v5050
        %v5052 = vlaneseq
        %v5053 = vshrl.u32 %v5052, 7
        %v5054 = vsub.s32 0, %v5053
        %v5055 = vrot.slane %v5011, %v5054
        %v5056 = vlaneseq
        %v5057 = vshrl.u32 %v5056, 7
        %v5058 = vsub.s32 1, %v5057
        %v5059 = vrot.slane %v5011, %v5058
        %v5060 = vlaneseq
        %v5061 = vshrl.u32 %v5060, 7
        %v5062 = vsub.s32 0, %v5061
        %v5063 = vrot.slane %v5013, %v5062
        %v5064 = vlaneseq
        %v5065 = vshrl.u32 %v5064, 7
        %v5066 = vsub.s32 1, %v5065
        %v5067 = vrot.slane %v5013, %v5066
        %v5068 = vlaneseq
        %v5069 = vshrl.u32 %v5068, 7
        %v5070 = vsub.s32 0, %v5069
        %v5071 = vrot.slane %v5015, %v5070
        %v5072 = vlaneseq
        %v5073 = vshrl.u32 %v5072, 7
        %v5074 = vsub.s32 1, %v5073
        %v5075 = vrot.slane %v5015, %v5074
        %v5076 = vlaneseq
        %v5077 = vshrl.u32 %v5076, 7
        %v5078 = vsub.s32 0, %v5077
        %v5079 = vrot.slane %v5017, %v5078
        %v5080 = vlaneseq
        %v5081 = vshrl.u32 %v5080, 7
        %v5082 = vsub.s32 1, %v5081
        %v5083 = vrot.slane %v5017, %v5082
        %v5084 = vlaneseq
        %v5085 = vshrl.u32 %v5084, 7
        %v5086 = vsub.s32 0, %v5085
        %v5087 = vrot.slane %v5019, %v5086
        %v5088 = vlaneseq
        %v5089 = vshrl.u32 %v5088, 7
        %v5090 = vsub.s32 1, %v5089
        %v5091 = vrot.slane %v5019, %v5090
        %v5108 = vpack.c.bf16 %v5031, %v5031
        %v5109 = vpack.c.bf16 %v5035, %v5035
        %v5110 = vpack.c.bf16 %v5039, %v5039
        %v5111 = vpack.c.bf16 %v5043, %v5043
        %v5112 = vpack.c.bf16 %v5047, %v5047
        %v5113 = vpack.c.bf16 %v5051, %v5051
        %v5114 = vpack.c.bf16 %v5055, %v5055
        %v5115 = vpack.c.bf16 %v5059, %v5059
        %v5116 = vpack.c.bf16 %v5063, %v5063
        %v5117 = vpack.c.bf16 %v5067, %v5067
        %v5118 = vpack.c.bf16 %v5071, %v5071
        %v5119 = vpack.c.bf16 %v5075, %v5075
        %v5120 = vpack.c.bf16 %v5079, %v5079
        %v5121 = vpack.c.bf16 %v5083, %v5083
        %v5122 = vpack.c.bf16 %v5087, %v5087
        %v5123 = vpack.c.bf16 %v5091, %v5091
        %s5124 = scalar_lea.vmem %s3, 768
        %v5125 = vld [vmem:[%s5124] sm:$0xf]
        %v5126 = vld [vmem:[%s5124 + $0x4] sm:$0xf]
        %v5127 = vld [vmem:[%s5124 + $0x8] sm:$0xf]
        %v5128 = vld [vmem:[%s5124 + $0xc] sm:$0xf]
        %v5129 = vld [vmem:[%s5124 + $0x10] sm:$0xf]
        %v5130 = vld [vmem:[%s5124 + $0x14] sm:$0xf]
        %v5131 = vld [vmem:[%s5124 + $0x18] sm:$0xf]
        %v5132 = vld [vmem:[%s5124 + $0x1c] sm:$0xf]
        %v5133 = vld [vmem:[%s5124 + $0x20] sm:$0xf]
        %v5134 = vld [vmem:[%s5124 + $0x24] sm:$0xf]
        %v5135 = vld [vmem:[%s5124 + $0x28] sm:$0xf]
        %v5136 = vld [vmem:[%s5124 + $0x2c] sm:$0xf]
        %v5137 = vld [vmem:[%s5124 + $0x30] sm:$0xf]
        %v5138 = vld [vmem:[%s5124 + $0x34] sm:$0xf]
        %v5139 = vld [vmem:[%s5124 + $0x38] sm:$0xf]
        %v5140 = vld [vmem:[%s5124 + $0x3c] sm:$0xf]
        %v5141 = vld [vmem:[%s5124 + $0x40] sm:$0xf]
        %v5142 = vld [vmem:[%s5124 + $0x44] sm:$0xf]
        %v5143 = vld [vmem:[%s5124 + $0x48] sm:$0xf]
        %v5144 = vld [vmem:[%s5124 + $0x4c] sm:$0xf]
        %v5145 = vld [vmem:[%s5124 + $0x50] sm:$0xf]
        %v5146 = vld [vmem:[%s5124 + $0x54] sm:$0xf]
        %v5147 = vld [vmem:[%s5124 + $0x58] sm:$0xf]
        %v5148 = vld [vmem:[%s5124 + $0x5c] sm:$0xf]
        %v5149 = vld [vmem:[%s5124 + $0x60] sm:$0xf]
        %v5150 = vld [vmem:[%s5124 + $0x64] sm:$0xf]
        %v5151 = vld [vmem:[%s5124 + $0x68] sm:$0xf]
        %v5152 = vld [vmem:[%s5124 + $0x6c] sm:$0xf]
        %v5153 = vld [vmem:[%s5124 + $0x70] sm:$0xf]
        %v5154 = vld [vmem:[%s5124 + $0x74] sm:$0xf]
        %v5155 = vld [vmem:[%s5124 + $0x78] sm:$0xf]
        %v5156 = vld [vmem:[%s5124 + $0x7c] sm:$0xf]
        %v5173 = vunpack.c.l.b16 %v5108
        %v5174 = vunpack.c.l.b16 %v5109
        %v5175 = vunpack.c.l.b16 %v5110
        %v5176 = vunpack.c.l.b16 %v5111
        %v5177 = vunpack.c.l.b16 %v5112
        %v5178 = vunpack.c.l.b16 %v5113
        %v5179 = vunpack.c.l.b16 %v5114
        %v5180 = vunpack.c.l.b16 %v5115
        %v5181 = vunpack.c.l.b16 %v5116
        %v5182 = vunpack.c.l.b16 %v5117
        %v5183 = vunpack.c.l.b16 %v5118
        %v5184 = vunpack.c.l.b16 %v5119
        %v5185 = vunpack.c.l.b16 %v5120
        %v5186 = vunpack.c.l.b16 %v5121
        %v5187 = vunpack.c.l.b16 %v5122
        %v5188 = vunpack.c.l.b16 %v5123
        %v5189 = vrot.slane %v5175, 7
        %v5190 = vsel %vm3053, %v5189, %v5173
        %v5191 = vrot.slane %v5177, 6
        %v5192 = vsel %vm3056, %v5191, %v5190
        %v5193 = vrot.slane %v5179, 5
        %v5194 = vsel %vm3059, %v5193, %v5192
        %v5195 = vrot.slane %v5181, 4
        %v5196 = vsel %vm3062, %v5195, %v5194
        %v5197 = vrot.slane %v5183, 3
        %v5198 = vsel %vm3065, %v5197, %v5196
        %v5199 = vrot.slane %v5185, 2
        %v5200 = vsel %vm3068, %v5199, %v5198
        %v5201 = vrot.slane %v5187, 1
        %v5202 = vsel %vm3071, %v5201, %v5200
        %v5203 = vrot.slane %v5176, 7
        %v5204 = vsel %vm3053, %v5203, %v5174
        %v5205 = vrot.slane %v5178, 6
        %v5206 = vsel %vm3056, %v5205, %v5204
        %v5207 = vrot.slane %v5180, 5
        %v5208 = vsel %vm3059, %v5207, %v5206
        %v5209 = vrot.slane %v5182, 4
        %v5210 = vsel %vm3062, %v5209, %v5208
        %v5211 = vrot.slane %v5184, 3
        %v5212 = vsel %vm3065, %v5211, %v5210
        %v5213 = vrot.slane %v5186, 2
        %v5214 = vsel %vm3068, %v5213, %v5212
        %v5215 = vrot.slane %v5188, 1
        %v5216 = vsel %vm3071, %v5215, %v5214
        %v5217 = vpack.c.b16 %v5202, %v5202
        %v5218 = vpack.c.b16 %v5216, %v5216
        %v5253 = vunpack.c.l.b16 %v5125
        %v5254 = vunpack.c.l.b16 %v5126
        %v5255 = vunpack.c.l.b16 %v5127
        %v5256 = vunpack.c.l.b16 %v5128
        %v5257 = vunpack.c.l.b16 %v5129
        %v5258 = vunpack.c.l.b16 %v5130
        %v5259 = vunpack.c.l.b16 %v5131
        %v5260 = vunpack.c.l.b16 %v5132
        %v5261 = vunpack.c.l.b16 %v5133
        %v5262 = vunpack.c.l.b16 %v5134
        %v5263 = vunpack.c.l.b16 %v5135
        %v5264 = vunpack.c.l.b16 %v5136
        %v5265 = vunpack.c.l.b16 %v5137
        %v5266 = vunpack.c.l.b16 %v5138
        %v5267 = vunpack.c.l.b16 %v5139
        %v5268 = vunpack.c.l.b16 %v5140
        %v5269 = vunpack.c.l.b16 %v5141
        %v5270 = vunpack.c.l.b16 %v5142
        %v5271 = vunpack.c.l.b16 %v5143
        %v5272 = vunpack.c.l.b16 %v5144
        %v5273 = vunpack.c.l.b16 %v5145
        %v5274 = vunpack.c.l.b16 %v5146
        %v5275 = vunpack.c.l.b16 %v5147
        %v5276 = vunpack.c.l.b16 %v5148
        %v5277 = vunpack.c.l.b16 %v5149
        %v5278 = vunpack.c.l.b16 %v5150
        %v5279 = vunpack.c.l.b16 %v5151
        %v5280 = vunpack.c.l.b16 %v5152
        %v5281 = vunpack.c.l.b16 %v5153
        %v5282 = vunpack.c.l.b16 %v5154
        %v5283 = vunpack.c.l.b16 %v5155
        %v5284 = vunpack.c.l.b16 %v5156
        %v5285 = vpack.c.b16 %v5254, %v5253
        %v5286 = vpack.c.b16 %v5256, %v5255
        %v5287 = vpack.c.b16 %v5258, %v5257
        %v5288 = vpack.c.b16 %v5260, %v5259
        %v5289 = vpack.c.b16 %v5262, %v5261
        %v5290 = vpack.c.b16 %v5264, %v5263
        %v5291 = vpack.c.b16 %v5266, %v5265
        %v5292 = vpack.c.b16 %v5268, %v5267
        %v5293 = vpack.c.b16 %v5270, %v5269
        %v5294 = vpack.c.b16 %v5272, %v5271
        %v5295 = vpack.c.b16 %v5274, %v5273
        %v5296 = vpack.c.b16 %v5276, %v5275
        %v5297 = vpack.c.b16 %v5278, %v5277
        %v5298 = vpack.c.b16 %v5280, %v5279
        %v5299 = vpack.c.b16 %v5282, %v5281
        %v5300 = vpack.c.b16 %v5284, %v5283
        %5317 = vmatprep.subr.bf16.mxu0 0
        %5318 = vmatpush1.bf16.msra.mxu0 %v5292
        %5319 = vmatprep.subr.bf16.mxu0 0
        %5320 = vmatpush1.bf16.msra.mxu0 %v5291
        %5321 = vmatprep.subr.bf16.mxu0 0
        %5322 = vmatpush1.bf16.msra.mxu0 %v5290
        %5323 = vmatprep.subr.bf16.mxu0 0
        %5324 = vmatpush1.bf16.msra.mxu0 %v5289
        %5325 = vmatprep.subr.bf16.mxu0 0
        %5326 = vmatpush1.bf16.msra.mxu0 %v5288
        %5327 = vmatprep.subr.bf16.mxu0 0
        %5328 = vmatpush1.bf16.msra.mxu0 %v5287
        %5329 = vmatprep.subr.bf16.mxu0 0
        %5330 = vmatpush1.bf16.msra.mxu0 %v5286
        %5331 = vmatprep.subr.bf16.mxu0 0
        %5332 = vmatpush1.bf16.msra.mxu0 %v5285
        %5333 = vmatprep.subr.bf16.mxu0 0
        %5334 = vmatpush2.bf16.msra.mxu0 %v5300
        %5335 = vmatprep.subr.bf16.mxu0 0
        %5336 = vmatpush2.bf16.msra.mxu0 %v5299
        %5337 = vmatprep.subr.bf16.mxu0 0
        %5338 = vmatpush2.bf16.msra.mxu0 %v5298
        %5339 = vmatprep.subr.bf16.mxu0 0
        %5340 = vmatpush2.bf16.msra.mxu0 %v5297
        %5341 = vmatprep.subr.bf16.mxu0 0
        %5342 = vmatpush2.bf16.msra.mxu0 %v5296
        %5343 = vmatprep.subr.bf16.mxu0 0
        %5344 = vmatpush2.bf16.msra.mxu0 %v5295
        %5345 = vmatprep.subr.bf16.mxu0 0
        %5346 = vmatpush2.bf16.msra.mxu0 %v5294
        %5347 = vmatprep.subr.bf16.mxu0 0
        %5348 = vmatpush2.bf16.msra.mxu0 %v5293
        %5349 = vmatprep.mubr.bf16.mxu0 %v5218
        %5350 = vmatmul.mubr.bf16.gmra.mxu0 %v5217
        %v5351 = vpop.f32.mrf.mxu0
        %v5352 = vadd.f32 0.0, %v5351
        %v5353 = vpop.f32.mrf.mxu0
        %v5354 = vpop.f32.mrf.mxu0
        %v5355 = vpop.f32.mrf.mxu0
        %5356 = vdwg.mxu0
        %v5357 = vadd.f32 %v5003, %v5352
        %s5358 = scalar_lea.vmem [#allocation2], 7
        %v5359 = vld [vmem:[%s5358] ss:$8 sm:$0x3]
        %s5360 = scalar_lea.vmem [#allocation2], 39
        %v5361 = vld [vmem:[%s5360] ss:$8 sm:$0x3]
        %s5362 = scalar_lea.vmem [#allocation2], 71
        %v5363 = vld [vmem:[%s5362] ss:$8 sm:$0x3]
        %s5364 = scalar_lea.vmem [#allocation2], 103
        %v5365 = vld [vmem:[%s5364] ss:$8 sm:$0x3]
        %s5366 = scalar_lea.vmem [#allocation2], 135
        %v5367 = vld [vmem:[%s5366] ss:$8 sm:$0x3]
        %s5368 = scalar_lea.vmem [#allocation2], 167
        %v5369 = vld [vmem:[%s5368] ss:$8 sm:$0x3]
        %s5370 = scalar_lea.vmem [#allocation2], 199
        %v5371 = vld [vmem:[%s5370] ss:$8 sm:$0x3]
        %s5372 = scalar_lea.vmem [#allocation2], 231
        %v5373 = vld [vmem:[%s5372] ss:$8 sm:$0x3]
        %v5382 = vlaneseq
        %v5383 = vshrl.u32 %v5382, 7
        %v5384 = vsub.s32 0, %v5383
        %v5385 = vrot.slane %v5359, %v5384
        %v5386 = vlaneseq
        %v5387 = vshrl.u32 %v5386, 7
        %v5388 = vsub.s32 1, %v5387
        %v5389 = vrot.slane %v5359, %v5388
        %v5390 = vlaneseq
        %v5391 = vshrl.u32 %v5390, 7
        %v5392 = vsub.s32 0, %v5391
        %v5393 = vrot.slane %v5361, %v5392
        %v5394 = vlaneseq
        %v5395 = vshrl.u32 %v5394, 7
        %v5396 = vsub.s32 1, %v5395
        %v5397 = vrot.slane %v5361, %v5396
        %v5398 = vlaneseq
        %v5399 = vshrl.u32 %v5398, 7
        %v5400 = vsub.s32 0, %v5399
        %v5401 = vrot.slane %v5363, %v5400
        %v5402 = vlaneseq
        %v5403 = vshrl.u32 %v5402, 7
        %v5404 = vsub.s32 1, %v5403
        %v5405 = vrot.slane %v5363, %v5404
        %v5406 = vlaneseq
        %v5407 = vshrl.u32 %v5406, 7
        %v5408 = vsub.s32 0, %v5407
        %v5409 = vrot.slane %v5365, %v5408
        %v5410 = vlaneseq
        %v5411 = vshrl.u32 %v5410, 7
        %v5412 = vsub.s32 1, %v5411
        %v5413 = vrot.slane %v5365, %v5412
        %v5414 = vlaneseq
        %v5415 = vshrl.u32 %v5414, 7
        %v5416 = vsub.s32 0, %v5415
        %v5417 = vrot.slane %v5367, %v5416
        %v5418 = vlaneseq
        %v5419 = vshrl.u32 %v5418, 7
        %v5420 = vsub.s32 1, %v5419
        %v5421 = vrot.slane %v5367, %v5420
        %v5422 = vlaneseq
        %v5423 = vshrl.u32 %v5422, 7
        %v5424 = vsub.s32 0, %v5423
        %v5425 = vrot.slane %v5369, %v5424
        %v5426 = vlaneseq
        %v5427 = vshrl.u32 %v5426, 7
        %v5428 = vsub.s32 1, %v5427
        %v5429 = vrot.slane %v5369, %v5428
        %v5430 = vlaneseq
        %v5431 = vshrl.u32 %v5430, 7
        %v5432 = vsub.s32 0, %v5431
        %v5433 = vrot.slane %v5371, %v5432
        %v5434 = vlaneseq
        %v5435 = vshrl.u32 %v5434, 7
        %v5436 = vsub.s32 1, %v5435
        %v5437 = vrot.slane %v5371, %v5436
        %v5438 = vlaneseq
        %v5439 = vshrl.u32 %v5438, 7
        %v5440 = vsub.s32 0, %v5439
        %v5441 = vrot.slane %v5373, %v5440
        %v5442 = vlaneseq
        %v5443 = vshrl.u32 %v5442, 7
        %v5444 = vsub.s32 1, %v5443
        %v5445 = vrot.slane %v5373, %v5444
        %v5462 = vpack.c.bf16 %v5385, %v5385
        %v5463 = vpack.c.bf16 %v5389, %v5389
        %v5464 = vpack.c.bf16 %v5393, %v5393
        %v5465 = vpack.c.bf16 %v5397, %v5397
        %v5466 = vpack.c.bf16 %v5401, %v5401
        %v5467 = vpack.c.bf16 %v5405, %v5405
        %v5468 = vpack.c.bf16 %v5409, %v5409
        %v5469 = vpack.c.bf16 %v5413, %v5413
        %v5470 = vpack.c.bf16 %v5417, %v5417
        %v5471 = vpack.c.bf16 %v5421, %v5421
        %v5472 = vpack.c.bf16 %v5425, %v5425
        %v5473 = vpack.c.bf16 %v5429, %v5429
        %v5474 = vpack.c.bf16 %v5433, %v5433
        %v5475 = vpack.c.bf16 %v5437, %v5437
        %v5476 = vpack.c.bf16 %v5441, %v5441
        %v5477 = vpack.c.bf16 %v5445, %v5445
        %s5478 = scalar_lea.vmem %s3, 896
        %v5479 = vld [vmem:[%s5478] sm:$0xf]
        %v5480 = vld [vmem:[%s5478 + $0x4] sm:$0xf]
        %v5481 = vld [vmem:[%s5478 + $0x8] sm:$0xf]
        %v5482 = vld [vmem:[%s5478 + $0xc] sm:$0xf]
        %v5483 = vld [vmem:[%s5478 + $0x10] sm:$0xf]
        %v5484 = vld [vmem:[%s5478 + $0x14] sm:$0xf]
        %v5485 = vld [vmem:[%s5478 + $0x18] sm:$0xf]
        %v5486 = vld [vmem:[%s5478 + $0x1c] sm:$0xf]
        %v5487 = vld [vmem:[%s5478 + $0x20] sm:$0xf]
        %v5488 = vld [vmem:[%s5478 + $0x24] sm:$0xf]
        %v5489 = vld [vmem:[%s5478 + $0x28] sm:$0xf]
        %v5490 = vld [vmem:[%s5478 + $0x2c] sm:$0xf]
        %v5491 = vld [vmem:[%s5478 + $0x30] sm:$0xf]
        %v5492 = vld [vmem:[%s5478 + $0x34] sm:$0xf]
        %v5493 = vld [vmem:[%s5478 + $0x38] sm:$0xf]
        %v5494 = vld [vmem:[%s5478 + $0x3c] sm:$0xf]
        %v5495 = vld [vmem:[%s5478 + $0x40] sm:$0xf]
        %v5496 = vld [vmem:[%s5478 + $0x44] sm:$0xf]
        %v5497 = vld [vmem:[%s5478 + $0x48] sm:$0xf]
        %v5498 = vld [vmem:[%s5478 + $0x4c] sm:$0xf]
        %v5499 = vld [vmem:[%s5478 + $0x50] sm:$0xf]
        %v5500 = vld [vmem:[%s5478 + $0x54] sm:$0xf]
        %v5501 = vld [vmem:[%s5478 + $0x58] sm:$0xf]
        %v5502 = vld [vmem:[%s5478 + $0x5c] sm:$0xf]
        %v5503 = vld [vmem:[%s5478 + $0x60] sm:$0xf]
        %v5504 = vld [vmem:[%s5478 + $0x64] sm:$0xf]
        %v5505 = vld [vmem:[%s5478 + $0x68] sm:$0xf]
        %v5506 = vld [vmem:[%s5478 + $0x6c] sm:$0xf]
        %v5507 = vld [vmem:[%s5478 + $0x70] sm:$0xf]
        %v5508 = vld [vmem:[%s5478 + $0x74] sm:$0xf]
        %v5509 = vld [vmem:[%s5478 + $0x78] sm:$0xf]
        %v5510 = vld [vmem:[%s5478 + $0x7c] sm:$0xf]
        %v5527 = vunpack.c.l.b16 %v5462
        %v5528 = vunpack.c.l.b16 %v5463
        %v5529 = vunpack.c.l.b16 %v5464
        %v5530 = vunpack.c.l.b16 %v5465
        %v5531 = vunpack.c.l.b16 %v5466
        %v5532 = vunpack.c.l.b16 %v5467
        %v5533 = vunpack.c.l.b16 %v5468
        %v5534 = vunpack.c.l.b16 %v5469
        %v5535 = vunpack.c.l.b16 %v5470
        %v5536 = vunpack.c.l.b16 %v5471
        %v5537 = vunpack.c.l.b16 %v5472
        %v5538 = vunpack.c.l.b16 %v5473
        %v5539 = vunpack.c.l.b16 %v5474
        %v5540 = vunpack.c.l.b16 %v5475
        %v5541 = vunpack.c.l.b16 %v5476
        %v5542 = vunpack.c.l.b16 %v5477
        %v5543 = vrot.slane %v5529, 7
        %v5544 = vsel %vm3053, %v5543, %v5527
        %v5545 = vrot.slane %v5531, 6
        %v5546 = vsel %vm3056, %v5545, %v5544
        %v5547 = vrot.slane %v5533, 5
        %v5548 = vsel %vm3059, %v5547, %v5546
        %v5549 = vrot.slane %v5535, 4
        %v5550 = vsel %vm3062, %v5549, %v5548
        %v5551 = vrot.slane %v5537, 3
        %v5552 = vsel %vm3065, %v5551, %v5550
        %v5553 = vrot.slane %v5539, 2
        %v5554 = vsel %vm3068, %v5553, %v5552
        %v5555 = vrot.slane %v5541, 1
        %v5556 = vsel %vm3071, %v5555, %v5554
        %v5557 = vrot.slane %v5530, 7
        %v5558 = vsel %vm3053, %v5557, %v5528
        %v5559 = vrot.slane %v5532, 6
        %v5560 = vsel %vm3056, %v5559, %v5558
        %v5561 = vrot.slane %v5534, 5
        %v5562 = vsel %vm3059, %v5561, %v5560
        %v5563 = vrot.slane %v5536, 4
        %v5564 = vsel %vm3062, %v5563, %v5562
        %v5565 = vrot.slane %v5538, 3
        %v5566 = vsel %vm3065, %v5565, %v5564
        %v5567 = vrot.slane %v5540, 2
        %v5568 = vsel %vm3068, %v5567, %v5566
        %v5569 = vrot.slane %v5542, 1
        %v5570 = vsel %vm3071, %v5569, %v5568
        %v5571 = vpack.c.b16 %v5556, %v5556
        %v5572 = vpack.c.b16 %v5570, %v5570
        %v5607 = vunpack.c.l.b16 %v5479
        %v5608 = vunpack.c.l.b16 %v5480
        %v5609 = vunpack.c.l.b16 %v5481
        %v5610 = vunpack.c.l.b16 %v5482
        %v5611 = vunpack.c.l.b16 %v5483
        %v5612 = vunpack.c.l.b16 %v5484
        %v5613 = vunpack.c.l.b16 %v5485
        %v5614 = vunpack.c.l.b16 %v5486
        %v5615 = vunpack.c.l.b16 %v5487
        %v5616 = vunpack.c.l.b16 %v5488
        %v5617 = vunpack.c.l.b16 %v5489
        %v5618 = vunpack.c.l.b16 %v5490
        %v5619 = vunpack.c.l.b16 %v5491
        %v5620 = vunpack.c.l.b16 %v5492
        %v5621 = vunpack.c.l.b16 %v5493
        %v5622 = vunpack.c.l.b16 %v5494
        %v5623 = vunpack.c.l.b16 %v5495
        %v5624 = vunpack.c.l.b16 %v5496
        %v5625 = vunpack.c.l.b16 %v5497
        %v5626 = vunpack.c.l.b16 %v5498
        %v5627 = vunpack.c.l.b16 %v5499
        %v5628 = vunpack.c.l.b16 %v5500
        %v5629 = vunpack.c.l.b16 %v5501
        %v5630 = vunpack.c.l.b16 %v5502
        %v5631 = vunpack.c.l.b16 %v5503
        %v5632 = vunpack.c.l.b16 %v5504
        %v5633 = vunpack.c.l.b16 %v5505
        %v5634 = vunpack.c.l.b16 %v5506
        %v5635 = vunpack.c.l.b16 %v5507
        %v5636 = vunpack.c.l.b16 %v5508
        %v5637 = vunpack.c.l.b16 %v5509
        %v5638 = vunpack.c.l.b16 %v5510
        %v5639 = vpack.c.b16 %v5608, %v5607
        %v5640 = vpack.c.b16 %v5610, %v5609
        %v5641 = vpack.c.b16 %v5612, %v5611
        %v5642 = vpack.c.b16 %v5614, %v5613
        %v5643 = vpack.c.b16 %v5616, %v5615
        %v5644 = vpack.c.b16 %v5618, %v5617
        %v5645 = vpack.c.b16 %v5620, %v5619
        %v5646 = vpack.c.b16 %v5622, %v5621
        %v5647 = vpack.c.b16 %v5624, %v5623
        %v5648 = vpack.c.b16 %v5626, %v5625
        %v5649 = vpack.c.b16 %v5628, %v5627
        %v5650 = vpack.c.b16 %v5630, %v5629
        %v5651 = vpack.c.b16 %v5632, %v5631
        %v5652 = vpack.c.b16 %v5634, %v5633
        %v5653 = vpack.c.b16 %v5636, %v5635
        %v5654 = vpack.c.b16 %v5638, %v5637
        %5671 = vmatprep.subr.bf16.mxu0 0
        %5672 = vmatpush1.bf16.msra.mxu0 %v5646
        %5673 = vmatprep.subr.bf16.mxu0 0
        %5674 = vmatpush1.bf16.msra.mxu0 %v5645
        %5675 = vmatprep.subr.bf16.mxu0 0
        %5676 = vmatpush1.bf16.msra.mxu0 %v5644
        %5677 = vmatprep.subr.bf16.mxu0 0
        %5678 = vmatpush1.bf16.msra.mxu0 %v5643
        %5679 = vmatprep.subr.bf16.mxu0 0
        %5680 = vmatpush1.bf16.msra.mxu0 %v5642
        %5681 = vmatprep.subr.bf16.mxu0 0
        %5682 = vmatpush1.bf16.msra.mxu0 %v5641
        %5683 = vmatprep.subr.bf16.mxu0 0
        %5684 = vmatpush1.bf16.msra.mxu0 %v5640
        %5685 = vmatprep.subr.bf16.mxu0 0
        %5686 = vmatpush1.bf16.msra.mxu0 %v5639
        %5687 = vmatprep.subr.bf16.mxu0 0
        %5688 = vmatpush2.bf16.msra.mxu0 %v5654
        %5689 = vmatprep.subr.bf16.mxu0 0
        %5690 = vmatpush2.bf16.msra.mxu0 %v5653
        %5691 = vmatprep.subr.bf16.mxu0 0
        %5692 = vmatpush2.bf16.msra.mxu0 %v5652
        %5693 = vmatprep.subr.bf16.mxu0 0
        %5694 = vmatpush2.bf16.msra.mxu0 %v5651
        %5695 = vmatprep.subr.bf16.mxu0 0
        %5696 = vmatpush2.bf16.msra.mxu0 %v5650
        %5697 = vmatprep.subr.bf16.mxu0 0
        %5698 = vmatpush2.bf16.msra.mxu0 %v5649
        %5699 = vmatprep.subr.bf16.mxu0 0
        %5700 = vmatpush2.bf16.msra.mxu0 %v5648
        %5701 = vmatprep.subr.bf16.mxu0 0
        %5702 = vmatpush2.bf16.msra.mxu0 %v5647
        %5703 = vmatprep.mubr.bf16.mxu0 %v5572
        %5704 = vmatmul.mubr.bf16.gmra.mxu0 %v5571
        %v5705 = vpop.f32.mrf.mxu0
        %v5706 = vadd.f32 0.0, %v5705
        %v5707 = vpop.f32.mrf.mxu0
        %v5708 = vpop.f32.mrf.mxu0
        %v5709 = vpop.f32.mrf.mxu0
        %5710 = vdwg.mxu0
        %v5711 = vadd.f32 %v5357, %v5706
        %s5712 = scalar_lea.vmem [#allocation2], 16
        %v5713 = vld [vmem:[%s5712] ss:$8 sm:$0x3]
        %s5714 = scalar_lea.vmem [#allocation2], 48
        %v5715 = vld [vmem:[%s5714] ss:$8 sm:$0x3]
        %s5716 = scalar_lea.vmem [#allocation2], 80
        %v5717 = vld [vmem:[%s5716] ss:$8 sm:$0x3]
        %s5718 = scalar_lea.vmem [#allocation2], 112
        %v5719 = vld [vmem:[%s5718] ss:$8 sm:$0x3]
        %s5720 = scalar_lea.vmem [#allocation2], 144
        %v5721 = vld [vmem:[%s5720] ss:$8 sm:$0x3]
        %s5722 = scalar_lea.vmem [#allocation2], 176
        %v5723 = vld [vmem:[%s5722] ss:$8 sm:$0x3]
        %s5724 = scalar_lea.vmem [#allocation2], 208
        %v5725 = vld [vmem:[%s5724] ss:$8 sm:$0x3]
        %s5726 = scalar_lea.vmem [#allocation2], 240
        %v5727 = vld [vmem:[%s5726] ss:$8 sm:$0x3]
        %v5736 = vlaneseq
        %v5737 = vshrl.u32 %v5736, 7
        %v5738 = vsub.s32 0, %v5737
        %v5739 = vrot.slane %v5713, %v5738
        %v5740 = vlaneseq
        %v5741 = vshrl.u32 %v5740, 7
        %v5742 = vsub.s32 1, %v5741
        %v5743 = vrot.slane %v5713, %v5742
        %v5744 = vlaneseq
        %v5745 = vshrl.u32 %v5744, 7
        %v5746 = vsub.s32 0, %v5745
        %v5747 = vrot.slane %v5715, %v5746
        %v5748 = vlaneseq
        %v5749 = vshrl.u32 %v5748, 7
        %v5750 = vsub.s32 1, %v5749
        %v5751 = vrot.slane %v5715, %v5750
        %v5752 = vlaneseq
        %v5753 = vshrl.u32 %v5752, 7
        %v5754 = vsub.s32 0, %v5753
        %v5755 = vrot.slane %v5717, %v5754
        %v5756 = vlaneseq
        %v5757 = vshrl.u32 %v5756, 7
        %v5758 = vsub.s32 1, %v5757
        %v5759 = vrot.slane %v5717, %v5758
        %v5760 = vlaneseq
        %v5761 = vshrl.u32 %v5760, 7
        %v5762 = vsub.s32 0, %v5761
        %v5763 = vrot.slane %v5719, %v5762
        %v5764 = vlaneseq
        %v5765 = vshrl.u32 %v5764, 7
        %v5766 = vsub.s32 1, %v5765
        %v5767 = vrot.slane %v5719, %v5766
        %v5768 = vlaneseq
        %v5769 = vshrl.u32 %v5768, 7
        %v5770 = vsub.s32 0, %v5769
        %v5771 = vrot.slane %v5721, %v5770
        %v5772 = vlaneseq
        %v5773 = vshrl.u32 %v5772, 7
        %v5774 = vsub.s32 1, %v5773
        %v5775 = vrot.slane %v5721, %v5774
        %v5776 = vlaneseq
        %v5777 = vshrl.u32 %v5776, 7
        %v5778 = vsub.s32 0, %v5777
        %v5779 = vrot.slane %v5723, %v5778
        %v5780 = vlaneseq
        %v5781 = vshrl.u32 %v5780, 7
        %v5782 = vsub.s32 1, %v5781
        %v5783 = vrot.slane %v5723, %v5782
        %v5784 = vlaneseq
        %v5785 = vshrl.u32 %v5784, 7
        %v5786 = vsub.s32 0, %v5785
        %v5787 = vrot.slane %v5725, %v5786
        %v5788 = vlaneseq
        %v5789 = vshrl.u32 %v5788, 7
        %v5790 = vsub.s32 1, %v5789
        %v5791 = vrot.slane %v5725, %v5790
        %v5792 = vlaneseq
        %v5793 = vshrl.u32 %v5792, 7
        %v5794 = vsub.s32 0, %v5793
        %v5795 = vrot.slane %v5727, %v5794
        %v5796 = vlaneseq
        %v5797 = vshrl.u32 %v5796, 7
        %v5798 = vsub.s32 1, %v5797
        %v5799 = vrot.slane %v5727, %v5798
        %v5816 = vpack.c.bf16 %v5739, %v5739
        %v5817 = vpack.c.bf16 %v5743, %v5743
        %v5818 = vpack.c.bf16 %v5747, %v5747
        %v5819 = vpack.c.bf16 %v5751, %v5751
        %v5820 = vpack.c.bf16 %v5755, %v5755
        %v5821 = vpack.c.bf16 %v5759, %v5759
        %v5822 = vpack.c.bf16 %v5763, %v5763
        %v5823 = vpack.c.bf16 %v5767, %v5767
        %v5824 = vpack.c.bf16 %v5771, %v5771
        %v5825 = vpack.c.bf16 %v5775, %v5775
        %v5826 = vpack.c.bf16 %v5779, %v5779
        %v5827 = vpack.c.bf16 %v5783, %v5783
        %v5828 = vpack.c.bf16 %v5787, %v5787
        %v5829 = vpack.c.bf16 %v5791, %v5791
        %v5830 = vpack.c.bf16 %v5795, %v5795
        %v5831 = vpack.c.bf16 %v5799, %v5799
        %s5832 = scalar_lea.vmem %s3, 1024
        %v5833 = vld [vmem:[%s5832] sm:$0xf]
        %v5834 = vld [vmem:[%s5832 + $0x4] sm:$0xf]
        %v5835 = vld [vmem:[%s5832 + $0x8] sm:$0xf]
        %v5836 = vld [vmem:[%s5832 + $0xc] sm:$0xf]
        %v5837 = vld [vmem:[%s5832 + $0x10] sm:$0xf]
        %v5838 = vld [vmem:[%s5832 + $0x14] sm:$0xf]
        %v5839 = vld [vmem:[%s5832 + $0x18] sm:$0xf]
        %v5840 = vld [vmem:[%s5832 + $0x1c] sm:$0xf]
        %v5841 = vld [vmem:[%s5832 + $0x20] sm:$0xf]
        %v5842 = vld [vmem:[%s5832 + $0x24] sm:$0xf]
        %v5843 = vld [vmem:[%s5832 + $0x28] sm:$0xf]
        %v5844 = vld [vmem:[%s5832 + $0x2c] sm:$0xf]
        %v5845 = vld [vmem:[%s5832 + $0x30] sm:$0xf]
        %v5846 = vld [vmem:[%s5832 + $0x34] sm:$0xf]
        %v5847 = vld [vmem:[%s5832 + $0x38] sm:$0xf]
        %v5848 = vld [vmem:[%s5832 + $0x3c] sm:$0xf]
        %v5849 = vld [vmem:[%s5832 + $0x40] sm:$0xf]
        %v5850 = vld [vmem:[%s5832 + $0x44] sm:$0xf]
        %v5851 = vld [vmem:[%s5832 + $0x48] sm:$0xf]
        %v5852 = vld [vmem:[%s5832 + $0x4c] sm:$0xf]
        %v5853 = vld [vmem:[%s5832 + $0x50] sm:$0xf]
        %v5854 = vld [vmem:[%s5832 + $0x54] sm:$0xf]
        %v5855 = vld [vmem:[%s5832 + $0x58] sm:$0xf]
        %v5856 = vld [vmem:[%s5832 + $0x5c] sm:$0xf]
        %v5857 = vld [vmem:[%s5832 + $0x60] sm:$0xf]
        %v5858 = vld [vmem:[%s5832 + $0x64] sm:$0xf]
        %v5859 = vld [vmem:[%s5832 + $0x68] sm:$0xf]
        %v5860 = vld [vmem:[%s5832 + $0x6c] sm:$0xf]
        %v5861 = vld [vmem:[%s5832 + $0x70] sm:$0xf]
        %v5862 = vld [vmem:[%s5832 + $0x74] sm:$0xf]
        %v5863 = vld [vmem:[%s5832 + $0x78] sm:$0xf]
        %v5864 = vld [vmem:[%s5832 + $0x7c] sm:$0xf]
        %v5881 = vunpack.c.l.b16 %v5816
        %v5882 = vunpack.c.l.b16 %v5817
        %v5883 = vunpack.c.l.b16 %v5818
        %v5884 = vunpack.c.l.b16 %v5819
        %v5885 = vunpack.c.l.b16 %v5820
        %v5886 = vunpack.c.l.b16 %v5821
        %v5887 = vunpack.c.l.b16 %v5822
        %v5888 = vunpack.c.l.b16 %v5823
        %v5889 = vunpack.c.l.b16 %v5824
        %v5890 = vunpack.c.l.b16 %v5825
        %v5891 = vunpack.c.l.b16 %v5826
        %v5892 = vunpack.c.l.b16 %v5827
        %v5893 = vunpack.c.l.b16 %v5828
        %v5894 = vunpack.c.l.b16 %v5829
        %v5895 = vunpack.c.l.b16 %v5830
        %v5896 = vunpack.c.l.b16 %v5831
        %v5897 = vrot.slane %v5883, 7
        %v5898 = vsel %vm3053, %v5897, %v5881
        %v5899 = vrot.slane %v5885, 6
        %v5900 = vsel %vm3056, %v5899, %v5898
        %v5901 = vrot.slane %v5887, 5
        %v5902 = vsel %vm3059, %v5901, %v5900
        %v5903 = vrot.slane %v5889, 4
        %v5904 = vsel %vm3062, %v5903, %v5902
        %v5905 = vrot.slane %v5891, 3
        %v5906 = vsel %vm3065, %v5905, %v5904
        %v5907 = vrot.slane %v5893, 2
        %v5908 = vsel %vm3068, %v5907, %v5906
        %v5909 = vrot.slane %v5895, 1
        %v5910 = vsel %vm3071, %v5909, %v5908
        %v5911 = vrot.slane %v5884, 7
        %v5912 = vsel %vm3053, %v5911, %v5882
        %v5913 = vrot.slane %v5886, 6
        %v5914 = vsel %vm3056, %v5913, %v5912
        %v5915 = vrot.slane %v5888, 5
        %v5916 = vsel %vm3059, %v5915, %v5914
        %v5917 = vrot.slane %v5890, 4
        %v5918 = vsel %vm3062, %v5917, %v5916
        %v5919 = vrot.slane %v5892, 3
        %v5920 = vsel %vm3065, %v5919, %v5918
        %v5921 = vrot.slane %v5894, 2
        %v5922 = vsel %vm3068, %v5921, %v5920
        %v5923 = vrot.slane %v5896, 1
        %v5924 = vsel %vm3071, %v5923, %v5922
        %v5925 = vpack.c.b16 %v5910, %v5910
        %v5926 = vpack.c.b16 %v5924, %v5924
        %v5961 = vunpack.c.l.b16 %v5833
        %v5962 = vunpack.c.l.b16 %v5834
        %v5963 = vunpack.c.l.b16 %v5835
        %v5964 = vunpack.c.l.b16 %v5836
        %v5965 = vunpack.c.l.b16 %v5837
        %v5966 = vunpack.c.l.b16 %v5838
        %v5967 = vunpack.c.l.b16 %v5839
        %v5968 = vunpack.c.l.b16 %v5840
        %v5969 = vunpack.c.l.b16 %v5841
        %v5970 = vunpack.c.l.b16 %v5842
        %v5971 = vunpack.c.l.b16 %v5843
        %v5972 = vunpack.c.l.b16 %v5844
        %v5973 = vunpack.c.l.b16 %v5845
        %v5974 = vunpack.c.l.b16 %v5846
        %v5975 = vunpack.c.l.b16 %v5847
        %v5976 = vunpack.c.l.b16 %v5848
        %v5977 = vunpack.c.l.b16 %v5849
        %v5978 = vunpack.c.l.b16 %v5850
        %v5979 = vunpack.c.l.b16 %v5851
        %v5980 = vunpack.c.l.b16 %v5852
        %v5981 = vunpack.c.l.b16 %v5853
        %v5982 = vunpack.c.l.b16 %v5854
        %v5983 = vunpack.c.l.b16 %v5855
        %v5984 = vunpack.c.l.b16 %v5856
        %v5985 = vunpack.c.l.b16 %v5857
        %v5986 = vunpack.c.l.b16 %v5858
        %v5987 = vunpack.c.l.b16 %v5859
        %v5988 = vunpack.c.l.b16 %v5860
        %v5989 = vunpack.c.l.b16 %v5861
        %v5990 = vunpack.c.l.b16 %v5862
        %v5991 = vunpack.c.l.b16 %v5863
        %v5992 = vunpack.c.l.b16 %v5864
        %v5993 = vpack.c.b16 %v5962, %v5961
        %v5994 = vpack.c.b16 %v5964, %v5963
        %v5995 = vpack.c.b16 %v5966, %v5965
        %v5996 = vpack.c.b16 %v5968, %v5967
        %v5997 = vpack.c.b16 %v5970, %v5969
        %v5998 = vpack.c.b16 %v5972, %v5971
        %v5999 = vpack.c.b16 %v5974, %v5973
        %v6000 = vpack.c.b16 %v5976, %v5975
        %v6001 = vpack.c.b16 %v5978, %v5977
        %v6002 = vpack.c.b16 %v5980, %v5979
        %v6003 = vpack.c.b16 %v5982, %v5981
        %v6004 = vpack.c.b16 %v5984, %v5983
        %v6005 = vpack.c.b16 %v5986, %v5985
        %v6006 = vpack.c.b16 %v5988, %v5987
        %v6007 = vpack.c.b16 %v5990, %v5989
        %v6008 = vpack.c.b16 %v5992, %v5991
        %6025 = vmatprep.subr.bf16.mxu0 0
        %6026 = vmatpush1.bf16.msra.mxu0 %v6000
        %6027 = vmatprep.subr.bf16.mxu0 0
        %6028 = vmatpush1.bf16.msra.mxu0 %v5999
        %6029 = vmatprep.subr.bf16.mxu0 0
        %6030 = vmatpush1.bf16.msra.mxu0 %v5998
        %6031 = vmatprep.subr.bf16.mxu0 0
        %6032 = vmatpush1.bf16.msra.mxu0 %v5997
        %6033 = vmatprep.subr.bf16.mxu0 0
        %6034 = vmatpush1.bf16.msra.mxu0 %v5996
        %6035 = vmatprep.subr.bf16.mxu0 0
        %6036 = vmatpush1.bf16.msra.mxu0 %v5995
        %6037 = vmatprep.subr.bf16.mxu0 0
        %6038 = vmatpush1.bf16.msra.mxu0 %v5994
        %6039 = vmatprep.subr.bf16.mxu0 0
        %6040 = vmatpush1.bf16.msra.mxu0 %v5993
        %6041 = vmatprep.subr.bf16.mxu0 0
        %6042 = vmatpush2.bf16.msra.mxu0 %v6008
        %6043 = vmatprep.subr.bf16.mxu0 0
        %6044 = vmatpush2.bf16.msra.mxu0 %v6007
        %6045 = vmatprep.subr.bf16.mxu0 0
        %6046 = vmatpush2.bf16.msra.mxu0 %v6006
        %6047 = vmatprep.subr.bf16.mxu0 0
        %6048 = vmatpush2.bf16.msra.mxu0 %v6005
        %6049 = vmatprep.subr.bf16.mxu0 0
        %6050 = vmatpush2.bf16.msra.mxu0 %v6004
        %6051 = vmatprep.subr.bf16.mxu0 0
        %6052 = vmatpush2.bf16.msra.mxu0 %v6003
        %6053 = vmatprep.subr.bf16.mxu0 0
        %6054 = vmatpush2.bf16.msra.mxu0 %v6002
        %6055 = vmatprep.subr.bf16.mxu0 0
        %6056 = vmatpush2.bf16.msra.mxu0 %v6001
        %6057 = vmatprep.mubr.bf16.mxu0 %v5926
        %6058 = vmatmul.mubr.bf16.gmra.mxu0 %v5925
        %v6059 = vpop.f32.mrf.mxu0
        %v6060 = vadd.f32 0.0, %v6059
        %v6061 = vpop.f32.mrf.mxu0
        %v6062 = vpop.f32.mrf.mxu0
        %v6063 = vpop.f32.mrf.mxu0
        %6064 = vdwg.mxu0
        %v6065 = vadd.f32 %v5711, %v6060
        %s6066 = scalar_lea.vmem [#allocation2], 17
        %v6067 = vld [vmem:[%s6066] ss:$8 sm:$0x3]
        %s6068 = scalar_lea.vmem [#allocation2], 49
        %v6069 = vld [vmem:[%s6068] ss:$8 sm:$0x3]
        %s6070 = scalar_lea.vmem [#allocation2], 81
        %v6071 = vld [vmem:[%s6070] ss:$8 sm:$0x3]
        %s6072 = scalar_lea.vmem [#allocation2], 113
        %v6073 = vld [vmem:[%s6072] ss:$8 sm:$0x3]
        %s6074 = scalar_lea.vmem [#allocation2], 145
        %v6075 = vld [vmem:[%s6074] ss:$8 sm:$0x3]
        %s6076 = scalar_lea.vmem [#allocation2], 177
        %v6077 = vld [vmem:[%s6076] ss:$8 sm:$0x3]
        %s6078 = scalar_lea.vmem [#allocation2], 209
        %v6079 = vld [vmem:[%s6078] ss:$8 sm:$0x3]
        %s6080 = scalar_lea.vmem [#allocation2], 241
        %v6081 = vld [vmem:[%s6080] ss:$8 sm:$0x3]
        %v6090 = vlaneseq
        %v6091 = vshrl.u32 %v6090, 7
        %v6092 = vsub.s32 0, %v6091
        %v6093 = vrot.slane %v6067, %v6092
        %v6094 = vlaneseq
        %v6095 = vshrl.u32 %v6094, 7
        %v6096 = vsub.s32 1, %v6095
        %v6097 = vrot.slane %v6067, %v6096
        %v6098 = vlaneseq
        %v6099 = vshrl.u32 %v6098, 7
        %v6100 = vsub.s32 0, %v6099
        %v6101 = vrot.slane %v6069, %v6100
        %v6102 = vlaneseq
        %v6103 = vshrl.u32 %v6102, 7
        %v6104 = vsub.s32 1, %v6103
        %v6105 = vrot.slane %v6069, %v6104
        %v6106 = vlaneseq
        %v6107 = vshrl.u32 %v6106, 7
        %v6108 = vsub.s32 0, %v6107
        %v6109 = vrot.slane %v6071, %v6108
        %v6110 = vlaneseq
        %v6111 = vshrl.u32 %v6110, 7
        %v6112 = vsub.s32 1, %v6111
        %v6113 = vrot.slane %v6071, %v6112
        %v6114 = vlaneseq
        %v6115 = vshrl.u32 %v6114, 7
        %v6116 = vsub.s32 0, %v6115
        %v6117 = vrot.slane %v6073, %v6116
        %v6118 = vlaneseq
        %v6119 = vshrl.u32 %v6118, 7
        %v6120 = vsub.s32 1, %v6119
        %v6121 = vrot.slane %v6073, %v6120
        %v6122 = vlaneseq
        %v6123 = vshrl.u32 %v6122, 7
        %v6124 = vsub.s32 0, %v6123
        %v6125 = vrot.slane %v6075, %v6124
        %v6126 = vlaneseq
        %v6127 = vshrl.u32 %v6126, 7
        %v6128 = vsub.s32 1, %v6127
        %v6129 = vrot.slane %v6075, %v6128
        %v6130 = vlaneseq
        %v6131 = vshrl.u32 %v6130, 7
        %v6132 = vsub.s32 0, %v6131
        %v6133 = vrot.slane %v6077, %v6132
        %v6134 = vlaneseq
        %v6135 = vshrl.u32 %v6134, 7
        %v6136 = vsub.s32 1, %v6135
        %v6137 = vrot.slane %v6077, %v6136
        %v6138 = vlaneseq
        %v6139 = vshrl.u32 %v6138, 7
        %v6140 = vsub.s32 0, %v6139
        %v6141 = vrot.slane %v6079, %v6140
        %v6142 = vlaneseq
        %v6143 = vshrl.u32 %v6142, 7
        %v6144 = vsub.s32 1, %v6143
        %v6145 = vrot.slane %v6079, %v6144
        %v6146 = vlaneseq
        %v6147 = vshrl.u32 %v6146, 7
        %v6148 = vsub.s32 0, %v6147
        %v6149 = vrot.slane %v6081, %v6148
        %v6150 = vlaneseq
        %v6151 = vshrl.u32 %v6150, 7
        %v6152 = vsub.s32 1, %v6151
        %v6153 = vrot.slane %v6081, %v6152
        %v6170 = vpack.c.bf16 %v6093, %v6093
        %v6171 = vpack.c.bf16 %v6097, %v6097
        %v6172 = vpack.c.bf16 %v6101, %v6101
        %v6173 = vpack.c.bf16 %v6105, %v6105
        %v6174 = vpack.c.bf16 %v6109, %v6109
        %v6175 = vpack.c.bf16 %v6113, %v6113
        %v6176 = vpack.c.bf16 %v6117, %v6117
        %v6177 = vpack.c.bf16 %v6121, %v6121
        %v6178 = vpack.c.bf16 %v6125, %v6125
        %v6179 = vpack.c.bf16 %v6129, %v6129
        %v6180 = vpack.c.bf16 %v6133, %v6133
        %v6181 = vpack.c.bf16 %v6137, %v6137
        %v6182 = vpack.c.bf16 %v6141, %v6141
        %v6183 = vpack.c.bf16 %v6145, %v6145
        %v6184 = vpack.c.bf16 %v6149, %v6149
        %v6185 = vpack.c.bf16 %v6153, %v6153
        %s6186 = scalar_lea.vmem %s3, 1152
        %v6187 = vld [vmem:[%s6186] sm:$0xf]
        %v6188 = vld [vmem:[%s6186 + $0x4] sm:$0xf]
        %v6189 = vld [vmem:[%s6186 + $0x8] sm:$0xf]
        %v6190 = vld [vmem:[%s6186 + $0xc] sm:$0xf]
        %v6191 = vld [vmem:[%s6186 + $0x10] sm:$0xf]
        %v6192 = vld [vmem:[%s6186 + $0x14] sm:$0xf]
        %v6193 = vld [vmem:[%s6186 + $0x18] sm:$0xf]
        %v6194 = vld [vmem:[%s6186 + $0x1c] sm:$0xf]
        %v6195 = vld [vmem:[%s6186 + $0x20] sm:$0xf]
        %v6196 = vld [vmem:[%s6186 + $0x24] sm:$0xf]
        %v6197 = vld [vmem:[%s6186 + $0x28] sm:$0xf]
        %v6198 = vld [vmem:[%s6186 + $0x2c] sm:$0xf]
        %v6199 = vld [vmem:[%s6186 + $0x30] sm:$0xf]
        %v6200 = vld [vmem:[%s6186 + $0x34] sm:$0xf]
        %v6201 = vld [vmem:[%s6186 + $0x38] sm:$0xf]
        %v6202 = vld [vmem:[%s6186 + $0x3c] sm:$0xf]
        %v6203 = vld [vmem:[%s6186 + $0x40] sm:$0xf]
        %v6204 = vld [vmem:[%s6186 + $0x44] sm:$0xf]
        %v6205 = vld [vmem:[%s6186 + $0x48] sm:$0xf]
        %v6206 = vld [vmem:[%s6186 + $0x4c] sm:$0xf]
        %v6207 = vld [vmem:[%s6186 + $0x50] sm:$0xf]
        %v6208 = vld [vmem:[%s6186 + $0x54] sm:$0xf]
        %v6209 = vld [vmem:[%s6186 + $0x58] sm:$0xf]
        %v6210 = vld [vmem:[%s6186 + $0x5c] sm:$0xf]
        %v6211 = vld [vmem:[%s6186 + $0x60] sm:$0xf]
        %v6212 = vld [vmem:[%s6186 + $0x64] sm:$0xf]
        %v6213 = vld [vmem:[%s6186 + $0x68] sm:$0xf]
        %v6214 = vld [vmem:[%s6186 + $0x6c] sm:$0xf]
        %v6215 = vld [vmem:[%s6186 + $0x70] sm:$0xf]
        %v6216 = vld [vmem:[%s6186 + $0x74] sm:$0xf]
        %v6217 = vld [vmem:[%s6186 + $0x78] sm:$0xf]
        %v6218 = vld [vmem:[%s6186 + $0x7c] sm:$0xf]
        %v6235 = vunpack.c.l.b16 %v6170
        %v6236 = vunpack.c.l.b16 %v6171
        %v6237 = vunpack.c.l.b16 %v6172
        %v6238 = vunpack.c.l.b16 %v6173
        %v6239 = vunpack.c.l.b16 %v6174
        %v6240 = vunpack.c.l.b16 %v6175
        %v6241 = vunpack.c.l.b16 %v6176
        %v6242 = vunpack.c.l.b16 %v6177
        %v6243 = vunpack.c.l.b16 %v6178
        %v6244 = vunpack.c.l.b16 %v6179
        %v6245 = vunpack.c.l.b16 %v6180
        %v6246 = vunpack.c.l.b16 %v6181
        %v6247 = vunpack.c.l.b16 %v6182
        %v6248 = vunpack.c.l.b16 %v6183
        %v6249 = vunpack.c.l.b16 %v6184
        %v6250 = vunpack.c.l.b16 %v6185
        %v6251 = vrot.slane %v6237, 7
        %v6252 = vsel %vm3053, %v6251, %v6235
        %v6253 = vrot.slane %v6239, 6
        %v6254 = vsel %vm3056, %v6253, %v6252
        %v6255 = vrot.slane %v6241, 5
        %v6256 = vsel %vm3059, %v6255, %v6254
        %v6257 = vrot.slane %v6243, 4
        %v6258 = vsel %vm3062, %v6257, %v6256
        %v6259 = vrot.slane %v6245, 3
        %v6260 = vsel %vm3065, %v6259, %v6258
        %v6261 = vrot.slane %v6247, 2
        %v6262 = vsel %vm3068, %v6261, %v6260
        %v6263 = vrot.slane %v6249, 1
        %v6264 = vsel %vm3071, %v6263, %v6262
        %v6265 = vrot.slane %v6238, 7
        %v6266 = vsel %vm3053, %v6265, %v6236
        %v6267 = vrot.slane %v6240, 6
        %v6268 = vsel %vm3056, %v6267, %v6266
        %v6269 = vrot.slane %v6242, 5
        %v6270 = vsel %vm3059, %v6269, %v6268
        %v6271 = vrot.slane %v6244, 4
        %v6272 = vsel %vm3062, %v6271, %v6270
        %v6273 = vrot.slane %v6246, 3
        %v6274 = vsel %vm3065, %v6273, %v6272
        %v6275 = vrot.slane %v6248, 2
        %v6276 = vsel %vm3068, %v6275, %v6274
        %v6277 = vrot.slane %v6250, 1
        %v6278 = vsel %vm3071, %v6277, %v6276
        %v6279 = vpack.c.b16 %v6264, %v6264
        %v6280 = vpack.c.b16 %v6278, %v6278
        %v6315 = vunpack.c.l.b16 %v6187
        %v6316 = vunpack.c.l.b16 %v6188
        %v6317 = vunpack.c.l.b16 %v6189
        %v6318 = vunpack.c.l.b16 %v6190
        %v6319 = vunpack.c.l.b16 %v6191
        %v6320 = vunpack.c.l.b16 %v6192
        %v6321 = vunpack.c.l.b16 %v6193
        %v6322 = vunpack.c.l.b16 %v6194
        %v6323 = vunpack.c.l.b16 %v6195
        %v6324 = vunpack.c.l.b16 %v6196
        %v6325 = vunpack.c.l.b16 %v6197
        %v6326 = vunpack.c.l.b16 %v6198
        %v6327 = vunpack.c.l.b16 %v6199
        %v6328 = vunpack.c.l.b16 %v6200
        %v6329 = vunpack.c.l.b16 %v6201
        %v6330 = vunpack.c.l.b16 %v6202
        %v6331 = vunpack.c.l.b16 %v6203
        %v6332 = vunpack.c.l.b16 %v6204
        %v6333 = vunpack.c.l.b16 %v6205
        %v6334 = vunpack.c.l.b16 %v6206
        %v6335 = vunpack.c.l.b16 %v6207
        %v6336 = vunpack.c.l.b16 %v6208
        %v6337 = vunpack.c.l.b16 %v6209
        %v6338 = vunpack.c.l.b16 %v6210
        %v6339 = vunpack.c.l.b16 %v6211
        %v6340 = vunpack.c.l.b16 %v6212
        %v6341 = vunpack.c.l.b16 %v6213
        %v6342 = vunpack.c.l.b16 %v6214
        %v6343 = vunpack.c.l.b16 %v6215
        %v6344 = vunpack.c.l.b16 %v6216
        %v6345 = vunpack.c.l.b16 %v6217
        %v6346 = vunpack.c.l.b16 %v6218
        %v6347 = vpack.c.b16 %v6316, %v6315
        %v6348 = vpack.c.b16 %v6318, %v6317
        %v6349 = vpack.c.b16 %v6320, %v6319
        %v6350 = vpack.c.b16 %v6322, %v6321
        %v6351 = vpack.c.b16 %v6324, %v6323
        %v6352 = vpack.c.b16 %v6326, %v6325
        %v6353 = vpack.c.b16 %v6328, %v6327
        %v6354 = vpack.c.b16 %v6330, %v6329
        %v6355 = vpack.c.b16 %v6332, %v6331
        %v6356 = vpack.c.b16 %v6334, %v6333
        %v6357 = vpack.c.b16 %v6336, %v6335
        %v6358 = vpack.c.b16 %v6338, %v6337
        %v6359 = vpack.c.b16 %v6340, %v6339
        %v6360 = vpack.c.b16 %v6342, %v6341
        %v6361 = vpack.c.b16 %v6344, %v6343
        %v6362 = vpack.c.b16 %v6346, %v6345
        %6379 = vmatprep.subr.bf16.mxu0 0
        %6380 = vmatpush1.bf16.msra.mxu0 %v6354
        %6381 = vmatprep.subr.bf16.mxu0 0
        %6382 = vmatpush1.bf16.msra.mxu0 %v6353
        %6383 = vmatprep.subr.bf16.mxu0 0
        %6384 = vmatpush1.bf16.msra.mxu0 %v6352
        %6385 = vmatprep.subr.bf16.mxu0 0
        %6386 = vmatpush1.bf16.msra.mxu0 %v6351
        %6387 = vmatprep.subr.bf16.mxu0 0
        %6388 = vmatpush1.bf16.msra.mxu0 %v6350
        %6389 = vmatprep.subr.bf16.mxu0 0
        %6390 = vmatpush1.bf16.msra.mxu0 %v6349
        %6391 = vmatprep.subr.bf16.mxu0 0
        %6392 = vmatpush1.bf16.msra.mxu0 %v6348
        %6393 = vmatprep.subr.bf16.mxu0 0
        %6394 = vmatpush1.bf16.msra.mxu0 %v6347
        %6395 = vmatprep.subr.bf16.mxu0 0
        %6396 = vmatpush2.bf16.msra.mxu0 %v6362
        %6397 = vmatprep.subr.bf16.mxu0 0
        %6398 = vmatpush2.bf16.msra.mxu0 %v6361
        %6399 = vmatprep.subr.bf16.mxu0 0
        %6400 = vmatpush2.bf16.msra.mxu0 %v6360
        %6401 = vmatprep.subr.bf16.mxu0 0
        %6402 = vmatpush2.bf16.msra.mxu0 %v6359
        %6403 = vmatprep.subr.bf16.mxu0 0
        %6404 = vmatpush2.bf16.msra.mxu0 %v6358
        %6405 = vmatprep.subr.bf16.mxu0 0
        %6406 = vmatpush2.bf16.msra.mxu0 %v6357
        %6407 = vmatprep.subr.bf16.mxu0 0
        %6408 = vmatpush2.bf16.msra.mxu0 %v6356
        %6409 = vmatprep.subr.bf16.mxu0 0
        %6410 = vmatpush2.bf16.msra.mxu0 %v6355
        %6411 = vmatprep.mubr.bf16.mxu0 %v6280
        %6412 = vmatmul.mubr.bf16.gmra.mxu0 %v6279
        %v6413 = vpop.f32.mrf.mxu0
        %v6414 = vadd.f32 0.0, %v6413
        %v6415 = vpop.f32.mrf.mxu0
        %v6416 = vpop.f32.mrf.mxu0
        %v6417 = vpop.f32.mrf.mxu0
        %6418 = vdwg.mxu0
        %v6419 = vadd.f32 %v6065, %v6414
        %s6420 = scalar_lea.vmem [#allocation2], 18
        %v6421 = vld [vmem:[%s6420] ss:$8 sm:$0x3]
        %s6422 = scalar_lea.vmem [#allocation2], 50
        %v6423 = vld [vmem:[%s6422] ss:$8 sm:$0x3]
        %s6424 = scalar_lea.vmem [#allocation2], 82
        %v6425 = vld [vmem:[%s6424] ss:$8 sm:$0x3]
        %s6426 = scalar_lea.vmem [#allocation2], 114
        %v6427 = vld [vmem:[%s6426] ss:$8 sm:$0x3]
        %s6428 = scalar_lea.vmem [#allocation2], 146
        %v6429 = vld [vmem:[%s6428] ss:$8 sm:$0x3]
        %s6430 = scalar_lea.vmem [#allocation2], 178
        %v6431 = vld [vmem:[%s6430] ss:$8 sm:$0x3]
        %s6432 = scalar_lea.vmem [#allocation2], 210
        %v6433 = vld [vmem:[%s6432] ss:$8 sm:$0x3]
        %s6434 = scalar_lea.vmem [#allocation2], 242
        %v6435 = vld [vmem:[%s6434] ss:$8 sm:$0x3]
        %v6444 = vlaneseq
        %v6445 = vshrl.u32 %v6444, 7
        %v6446 = vsub.s32 0, %v6445
        %v6447 = vrot.slane %v6421, %v6446
        %v6448 = vlaneseq
        %v6449 = vshrl.u32 %v6448, 7
        %v6450 = vsub.s32 1, %v6449
        %v6451 = vrot.slane %v6421, %v6450
        %v6452 = vlaneseq
        %v6453 = vshrl.u32 %v6452, 7
        %v6454 = vsub.s32 0, %v6453
        %v6455 = vrot.slane %v6423, %v6454
        %v6456 = vlaneseq
        %v6457 = vshrl.u32 %v6456, 7
        %v6458 = vsub.s32 1, %v6457
        %v6459 = vrot.slane %v6423, %v6458
        %v6460 = vlaneseq
        %v6461 = vshrl.u32 %v6460, 7
        %v6462 = vsub.s32 0, %v6461
        %v6463 = vrot.slane %v6425, %v6462
        %v6464 = vlaneseq
        %v6465 = vshrl.u32 %v6464, 7
        %v6466 = vsub.s32 1, %v6465
        %v6467 = vrot.slane %v6425, %v6466
        %v6468 = vlaneseq
        %v6469 = vshrl.u32 %v6468, 7
        %v6470 = vsub.s32 0, %v6469
        %v6471 = vrot.slane %v6427, %v6470
        %v6472 = vlaneseq
        %v6473 = vshrl.u32 %v6472, 7
        %v6474 = vsub.s32 1, %v6473
        %v6475 = vrot.slane %v6427, %v6474
        %v6476 = vlaneseq
        %v6477 = vshrl.u32 %v6476, 7
        %v6478 = vsub.s32 0, %v6477
        %v6479 = vrot.slane %v6429, %v6478
        %v6480 = vlaneseq
        %v6481 = vshrl.u32 %v6480, 7
        %v6482 = vsub.s32 1, %v6481
        %v6483 = vrot.slane %v6429, %v6482
        %v6484 = vlaneseq
        %v6485 = vshrl.u32 %v6484, 7
        %v6486 = vsub.s32 0, %v6485
        %v6487 = vrot.slane %v6431, %v6486
        %v6488 = vlaneseq
        %v6489 = vshrl.u32 %v6488, 7
        %v6490 = vsub.s32 1, %v6489
        %v6491 = vrot.slane %v6431, %v6490
        %v6492 = vlaneseq
        %v6493 = vshrl.u32 %v6492, 7
        %v6494 = vsub.s32 0, %v6493
        %v6495 = vrot.slane %v6433, %v6494
        %v6496 = vlaneseq
        %v6497 = vshrl.u32 %v6496, 7
        %v6498 = vsub.s32 1, %v6497
        %v6499 = vrot.slane %v6433, %v6498
        %v6500 = vlaneseq
        %v6501 = vshrl.u32 %v6500, 7
        %v6502 = vsub.s32 0, %v6501
        %v6503 = vrot.slane %v6435, %v6502
        %v6504 = vlaneseq
        %v6505 = vshrl.u32 %v6504, 7
        %v6506 = vsub.s32 1, %v6505
        %v6507 = vrot.slane %v6435, %v6506
        %v6524 = vpack.c.bf16 %v6447, %v6447
        %v6525 = vpack.c.bf16 %v6451, %v6451
        %v6526 = vpack.c.bf16 %v6455, %v6455
        %v6527 = vpack.c.bf16 %v6459, %v6459
        %v6528 = vpack.c.bf16 %v6463, %v6463
        %v6529 = vpack.c.bf16 %v6467, %v6467
        %v6530 = vpack.c.bf16 %v6471, %v6471
        %v6531 = vpack.c.bf16 %v6475, %v6475
        %v6532 = vpack.c.bf16 %v6479, %v6479
        %v6533 = vpack.c.bf16 %v6483, %v6483
        %v6534 = vpack.c.bf16 %v6487, %v6487
        %v6535 = vpack.c.bf16 %v6491, %v6491
        %v6536 = vpack.c.bf16 %v6495, %v6495
        %v6537 = vpack.c.bf16 %v6499, %v6499
        %v6538 = vpack.c.bf16 %v6503, %v6503
        %v6539 = vpack.c.bf16 %v6507, %v6507
        %s6540 = scalar_lea.vmem %s3, 1280
        %v6541 = vld [vmem:[%s6540] sm:$0xf]
        %v6542 = vld [vmem:[%s6540 + $0x4] sm:$0xf]
        %v6543 = vld [vmem:[%s6540 + $0x8] sm:$0xf]
        %v6544 = vld [vmem:[%s6540 + $0xc] sm:$0xf]
        %v6545 = vld [vmem:[%s6540 + $0x10] sm:$0xf]
        %v6546 = vld [vmem:[%s6540 + $0x14] sm:$0xf]
        %v6547 = vld [vmem:[%s6540 + $0x18] sm:$0xf]
        %v6548 = vld [vmem:[%s6540 + $0x1c] sm:$0xf]
        %v6549 = vld [vmem:[%s6540 + $0x20] sm:$0xf]
        %v6550 = vld [vmem:[%s6540 + $0x24] sm:$0xf]
        %v6551 = vld [vmem:[%s6540 + $0x28] sm:$0xf]
        %v6552 = vld [vmem:[%s6540 + $0x2c] sm:$0xf]
        %v6553 = vld [vmem:[%s6540 + $0x30] sm:$0xf]
        %v6554 = vld [vmem:[%s6540 + $0x34] sm:$0xf]
        %v6555 = vld [vmem:[%s6540 + $0x38] sm:$0xf]
        %v6556 = vld [vmem:[%s6540 + $0x3c] sm:$0xf]
        %v6557 = vld [vmem:[%s6540 + $0x40] sm:$0xf]
        %v6558 = vld [vmem:[%s6540 + $0x44] sm:$0xf]
        %v6559 = vld [vmem:[%s6540 + $0x48] sm:$0xf]
        %v6560 = vld [vmem:[%s6540 + $0x4c] sm:$0xf]
        %v6561 = vld [vmem:[%s6540 + $0x50] sm:$0xf]
        %v6562 = vld [vmem:[%s6540 + $0x54] sm:$0xf]
        %v6563 = vld [vmem:[%s6540 + $0x58] sm:$0xf]
        %v6564 = vld [vmem:[%s6540 + $0x5c] sm:$0xf]
        %v6565 = vld [vmem:[%s6540 + $0x60] sm:$0xf]
        %v6566 = vld [vmem:[%s6540 + $0x64] sm:$0xf]
        %v6567 = vld [vmem:[%s6540 + $0x68] sm:$0xf]
        %v6568 = vld [vmem:[%s6540 + $0x6c] sm:$0xf]
        %v6569 = vld [vmem:[%s6540 + $0x70] sm:$0xf]
        %v6570 = vld [vmem:[%s6540 + $0x74] sm:$0xf]
        %v6571 = vld [vmem:[%s6540 + $0x78] sm:$0xf]
        %v6572 = vld [vmem:[%s6540 + $0x7c] sm:$0xf]
        %v6589 = vunpack.c.l.b16 %v6524
        %v6590 = vunpack.c.l.b16 %v6525
        %v6591 = vunpack.c.l.b16 %v6526
        %v6592 = vunpack.c.l.b16 %v6527
        %v6593 = vunpack.c.l.b16 %v6528
        %v6594 = vunpack.c.l.b16 %v6529
        %v6595 = vunpack.c.l.b16 %v6530
        %v6596 = vunpack.c.l.b16 %v6531
        %v6597 = vunpack.c.l.b16 %v6532
        %v6598 = vunpack.c.l.b16 %v6533
        %v6599 = vunpack.c.l.b16 %v6534
        %v6600 = vunpack.c.l.b16 %v6535
        %v6601 = vunpack.c.l.b16 %v6536
        %v6602 = vunpack.c.l.b16 %v6537
        %v6603 = vunpack.c.l.b16 %v6538
        %v6604 = vunpack.c.l.b16 %v6539
        %v6605 = vrot.slane %v6591, 7
        %v6606 = vsel %vm3053, %v6605, %v6589
        %v6607 = vrot.slane %v6593, 6
        %v6608 = vsel %vm3056, %v6607, %v6606
        %v6609 = vrot.slane %v6595, 5
        %v6610 = vsel %vm3059, %v6609, %v6608
        %v6611 = vrot.slane %v6597, 4
        %v6612 = vsel %vm3062, %v6611, %v6610
        %v6613 = vrot.slane %v6599, 3
        %v6614 = vsel %vm3065, %v6613, %v6612
        %v6615 = vrot.slane %v6601, 2
        %v6616 = vsel %vm3068, %v6615, %v6614
        %v6617 = vrot.slane %v6603, 1
        %v6618 = vsel %vm3071, %v6617, %v6616
        %v6619 = vrot.slane %v6592, 7
        %v6620 = vsel %vm3053, %v6619, %v6590
        %v6621 = vrot.slane %v6594, 6
        %v6622 = vsel %vm3056, %v6621, %v6620
        %v6623 = vrot.slane %v6596, 5
        %v6624 = vsel %vm3059, %v6623, %v6622
        %v6625 = vrot.slane %v6598, 4
        %v6626 = vsel %vm3062, %v6625, %v6624
        %v6627 = vrot.slane %v6600, 3
        %v6628 = vsel %vm3065, %v6627, %v6626
        %v6629 = vrot.slane %v6602, 2
        %v6630 = vsel %vm3068, %v6629, %v6628
        %v6631 = vrot.slane %v6604, 1
        %v6632 = vsel %vm3071, %v6631, %v6630
        %v6633 = vpack.c.b16 %v6618, %v6618
        %v6634 = vpack.c.b16 %v6632, %v6632
        %v6669 = vunpack.c.l.b16 %v6541
        %v6670 = vunpack.c.l.b16 %v6542
        %v6671 = vunpack.c.l.b16 %v6543
        %v6672 = vunpack.c.l.b16 %v6544
        %v6673 = vunpack.c.l.b16 %v6545
        %v6674 = vunpack.c.l.b16 %v6546
        %v6675 = vunpack.c.l.b16 %v6547
        %v6676 = vunpack.c.l.b16 %v6548
        %v6677 = vunpack.c.l.b16 %v6549
        %v6678 = vunpack.c.l.b16 %v6550
        %v6679 = vunpack.c.l.b16 %v6551
        %v6680 = vunpack.c.l.b16 %v6552
        %v6681 = vunpack.c.l.b16 %v6553
        %v6682 = vunpack.c.l.b16 %v6554
        %v6683 = vunpack.c.l.b16 %v6555
        %v6684 = vunpack.c.l.b16 %v6556
        %v6685 = vunpack.c.l.b16 %v6557
        %v6686 = vunpack.c.l.b16 %v6558
        %v6687 = vunpack.c.l.b16 %v6559
        %v6688 = vunpack.c.l.b16 %v6560
        %v6689 = vunpack.c.l.b16 %v6561
        %v6690 = vunpack.c.l.b16 %v6562
        %v6691 = vunpack.c.l.b16 %v6563
        %v6692 = vunpack.c.l.b16 %v6564
        %v6693 = vunpack.c.l.b16 %v6565
        %v6694 = vunpack.c.l.b16 %v6566
        %v6695 = vunpack.c.l.b16 %v6567
        %v6696 = vunpack.c.l.b16 %v6568
        %v6697 = vunpack.c.l.b16 %v6569
        %v6698 = vunpack.c.l.b16 %v6570
        %v6699 = vunpack.c.l.b16 %v6571
        %v6700 = vunpack.c.l.b16 %v6572
        %v6701 = vpack.c.b16 %v6670, %v6669
        %v6702 = vpack.c.b16 %v6672, %v6671
        %v6703 = vpack.c.b16 %v6674, %v6673
        %v6704 = vpack.c.b16 %v6676, %v6675
        %v6705 = vpack.c.b16 %v6678, %v6677
        %v6706 = vpack.c.b16 %v6680, %v6679
        %v6707 = vpack.c.b16 %v6682, %v6681
        %v6708 = vpack.c.b16 %v6684, %v6683
        %v6709 = vpack.c.b16 %v6686, %v6685
        %v6710 = vpack.c.b16 %v6688, %v6687
        %v6711 = vpack.c.b16 %v6690, %v6689
        %v6712 = vpack.c.b16 %v6692, %v6691
        %v6713 = vpack.c.b16 %v6694, %v6693
        %v6714 = vpack.c.b16 %v6696, %v6695
        %v6715 = vpack.c.b16 %v6698, %v6697
        %v6716 = vpack.c.b16 %v6700, %v6699
        %6733 = vmatprep.subr.bf16.mxu0 0
        %6734 = vmatpush1.bf16.msra.mxu0 %v6708
        %6735 = vmatprep.subr.bf16.mxu0 0
        %6736 = vmatpush1.bf16.msra.mxu0 %v6707
        %6737 = vmatprep.subr.bf16.mxu0 0
        %6738 = vmatpush1.bf16.msra.mxu0 %v6706
        %6739 = vmatprep.subr.bf16.mxu0 0
        %6740 = vmatpush1.bf16.msra.mxu0 %v6705
        %6741 = vmatprep.subr.bf16.mxu0 0
        %6742 = vmatpush1.bf16.msra.mxu0 %v6704
        %6743 = vmatprep.subr.bf16.mxu0 0
        %6744 = vmatpush1.bf16.msra.mxu0 %v6703
        %6745 = vmatprep.subr.bf16.mxu0 0
        %6746 = vmatpush1.bf16.msra.mxu0 %v6702
        %6747 = vmatprep.subr.bf16.mxu0 0
        %6748 = vmatpush1.bf16.msra.mxu0 %v6701
        %6749 = vmatprep.subr.bf16.mxu0 0
        %6750 = vmatpush2.bf16.msra.mxu0 %v6716
        %6751 = vmatprep.subr.bf16.mxu0 0
        %6752 = vmatpush2.bf16.msra.mxu0 %v6715
        %6753 = vmatprep.subr.bf16.mxu0 0
        %6754 = vmatpush2.bf16.msra.mxu0 %v6714
        %6755 = vmatprep.subr.bf16.mxu0 0
        %6756 = vmatpush2.bf16.msra.mxu0 %v6713
        %6757 = vmatprep.subr.bf16.mxu0 0
        %6758 = vmatpush2.bf16.msra.mxu0 %v6712
        %6759 = vmatprep.subr.bf16.mxu0 0
        %6760 = vmatpush2.bf16.msra.mxu0 %v6711
        %6761 = vmatprep.subr.bf16.mxu0 0
        %6762 = vmatpush2.bf16.msra.mxu0 %v6710
        %6763 = vmatprep.subr.bf16.mxu0 0
        %6764 = vmatpush2.bf16.msra.mxu0 %v6709
        %6765 = vmatprep.mubr.bf16.mxu0 %v6634
        %6766 = vmatmul.mubr.bf16.gmra.mxu0 %v6633
        %v6767 = vpop.f32.mrf.mxu0
        %v6768 = vadd.f32 0.0, %v6767
        %v6769 = vpop.f32.mrf.mxu0
        %v6770 = vpop.f32.mrf.mxu0
        %v6771 = vpop.f32.mrf.mxu0
        %6772 = vdwg.mxu0
        %v6773 = vadd.f32 %v6419, %v6768
        %s6774 = scalar_lea.vmem [#allocation2], 19
        %v6775 = vld [vmem:[%s6774] ss:$8 sm:$0x3]
        %s6776 = scalar_lea.vmem [#allocation2], 51
        %v6777 = vld [vmem:[%s6776] ss:$8 sm:$0x3]
        %s6778 = scalar_lea.vmem [#allocation2], 83
        %v6779 = vld [vmem:[%s6778] ss:$8 sm:$0x3]
        %s6780 = scalar_lea.vmem [#allocation2], 115
        %v6781 = vld [vmem:[%s6780] ss:$8 sm:$0x3]
        %s6782 = scalar_lea.vmem [#allocation2], 147
        %v6783 = vld [vmem:[%s6782] ss:$8 sm:$0x3]
        %s6784 = scalar_lea.vmem [#allocation2], 179
        %v6785 = vld [vmem:[%s6784] ss:$8 sm:$0x3]
        %s6786 = scalar_lea.vmem [#allocation2], 211
        %v6787 = vld [vmem:[%s6786] ss:$8 sm:$0x3]
        %s6788 = scalar_lea.vmem [#allocation2], 243
        %v6789 = vld [vmem:[%s6788] ss:$8 sm:$0x3]
        %v6798 = vlaneseq
        %v6799 = vshrl.u32 %v6798, 7
        %v6800 = vsub.s32 0, %v6799
        %v6801 = vrot.slane %v6775, %v6800
        %v6802 = vlaneseq
        %v6803 = vshrl.u32 %v6802, 7
        %v6804 = vsub.s32 1, %v6803
        %v6805 = vrot.slane %v6775, %v6804
        %v6806 = vlaneseq
        %v6807 = vshrl.u32 %v6806, 7
        %v6808 = vsub.s32 0, %v6807
        %v6809 = vrot.slane %v6777, %v6808
        %v6810 = vlaneseq
        %v6811 = vshrl.u32 %v6810, 7
        %v6812 = vsub.s32 1, %v6811
        %v6813 = vrot.slane %v6777, %v6812
        %v6814 = vlaneseq
        %v6815 = vshrl.u32 %v6814, 7
        %v6816 = vsub.s32 0, %v6815
        %v6817 = vrot.slane %v6779, %v6816
        %v6818 = vlaneseq
        %v6819 = vshrl.u32 %v6818, 7
        %v6820 = vsub.s32 1, %v6819
        %v6821 = vrot.slane %v6779, %v6820
        %v6822 = vlaneseq
        %v6823 = vshrl.u32 %v6822, 7
        %v6824 = vsub.s32 0, %v6823
        %v6825 = vrot.slane %v6781, %v6824
        %v6826 = vlaneseq
        %v6827 = vshrl.u32 %v6826, 7
        %v6828 = vsub.s32 1, %v6827
        %v6829 = vrot.slane %v6781, %v6828
        %v6830 = vlaneseq
        %v6831 = vshrl.u32 %v6830, 7
        %v6832 = vsub.s32 0, %v6831
        %v6833 = vrot.slane %v6783, %v6832
        %v6834 = vlaneseq
        %v6835 = vshrl.u32 %v6834, 7
        %v6836 = vsub.s32 1, %v6835
        %v6837 = vrot.slane %v6783, %v6836
        %v6838 = vlaneseq
        %v6839 = vshrl.u32 %v6838, 7
        %v6840 = vsub.s32 0, %v6839
        %v6841 = vrot.slane %v6785, %v6840
        %v6842 = vlaneseq
        %v6843 = vshrl.u32 %v6842, 7
        %v6844 = vsub.s32 1, %v6843
        %v6845 = vrot.slane %v6785, %v6844
        %v6846 = vlaneseq
        %v6847 = vshrl.u32 %v6846, 7
        %v6848 = vsub.s32 0, %v6847
        %v6849 = vrot.slane %v6787, %v6848
        %v6850 = vlaneseq
        %v6851 = vshrl.u32 %v6850, 7
        %v6852 = vsub.s32 1, %v6851
        %v6853 = vrot.slane %v6787, %v6852
        %v6854 = vlaneseq
        %v6855 = vshrl.u32 %v6854, 7
        %v6856 = vsub.s32 0, %v6855
        %v6857 = vrot.slane %v6789, %v6856
        %v6858 = vlaneseq
        %v6859 = vshrl.u32 %v6858, 7
        %v6860 = vsub.s32 1, %v6859
        %v6861 = vrot.slane %v6789, %v6860
        %v6878 = vpack.c.bf16 %v6801, %v6801
        %v6879 = vpack.c.bf16 %v6805, %v6805
        %v6880 = vpack.c.bf16 %v6809, %v6809
        %v6881 = vpack.c.bf16 %v6813, %v6813
        %v6882 = vpack.c.bf16 %v6817, %v6817
        %v6883 = vpack.c.bf16 %v6821, %v6821
        %v6884 = vpack.c.bf16 %v6825, %v6825
        %v6885 = vpack.c.bf16 %v6829, %v6829
        %v6886 = vpack.c.bf16 %v6833, %v6833
        %v6887 = vpack.c.bf16 %v6837, %v6837
        %v6888 = vpack.c.bf16 %v6841, %v6841
        %v6889 = vpack.c.bf16 %v6845, %v6845
        %v6890 = vpack.c.bf16 %v6849, %v6849
        %v6891 = vpack.c.bf16 %v6853, %v6853
        %v6892 = vpack.c.bf16 %v6857, %v6857
        %v6893 = vpack.c.bf16 %v6861, %v6861
        %s6894 = scalar_lea.vmem %s3, 1408
        %v6895 = vld [vmem:[%s6894] sm:$0xf]
        %v6896 = vld [vmem:[%s6894 + $0x4] sm:$0xf]
        %v6897 = vld [vmem:[%s6894 + $0x8] sm:$0xf]
        %v6898 = vld [vmem:[%s6894 + $0xc] sm:$0xf]
        %v6899 = vld [vmem:[%s6894 + $0x10] sm:$0xf]
        %v6900 = vld [vmem:[%s6894 + $0x14] sm:$0xf]
        %v6901 = vld [vmem:[%s6894 + $0x18] sm:$0xf]
        %v6902 = vld [vmem:[%s6894 + $0x1c] sm:$0xf]
        %v6903 = vld [vmem:[%s6894 + $0x20] sm:$0xf]
        %v6904 = vld [vmem:[%s6894 + $0x24] sm:$0xf]
        %v6905 = vld [vmem:[%s6894 + $0x28] sm:$0xf]
        %v6906 = vld [vmem:[%s6894 + $0x2c] sm:$0xf]
        %v6907 = vld [vmem:[%s6894 + $0x30] sm:$0xf]
        %v6908 = vld [vmem:[%s6894 + $0x34] sm:$0xf]
        %v6909 = vld [vmem:[%s6894 + $0x38] sm:$0xf]
        %v6910 = vld [vmem:[%s6894 + $0x3c] sm:$0xf]
        %v6911 = vld [vmem:[%s6894 + $0x40] sm:$0xf]
        %v6912 = vld [vmem:[%s6894 + $0x44] sm:$0xf]
        %v6913 = vld [vmem:[%s6894 + $0x48] sm:$0xf]
        %v6914 = vld [vmem:[%s6894 + $0x4c] sm:$0xf]
        %v6915 = vld [vmem:[%s6894 + $0x50] sm:$0xf]
        %v6916 = vld [vmem:[%s6894 + $0x54] sm:$0xf]
        %v6917 = vld [vmem:[%s6894 + $0x58] sm:$0xf]
        %v6918 = vld [vmem:[%s6894 + $0x5c] sm:$0xf]
        %v6919 = vld [vmem:[%s6894 + $0x60] sm:$0xf]
        %v6920 = vld [vmem:[%s6894 + $0x64] sm:$0xf]
        %v6921 = vld [vmem:[%s6894 + $0x68] sm:$0xf]
        %v6922 = vld [vmem:[%s6894 + $0x6c] sm:$0xf]
        %v6923 = vld [vmem:[%s6894 + $0x70] sm:$0xf]
        %v6924 = vld [vmem:[%s6894 + $0x74] sm:$0xf]
        %v6925 = vld [vmem:[%s6894 + $0x78] sm:$0xf]
        %v6926 = vld [vmem:[%s6894 + $0x7c] sm:$0xf]
        %v6943 = vunpack.c.l.b16 %v6878
        %v6944 = vunpack.c.l.b16 %v6879
        %v6945 = vunpack.c.l.b16 %v6880
        %v6946 = vunpack.c.l.b16 %v6881
        %v6947 = vunpack.c.l.b16 %v6882
        %v6948 = vunpack.c.l.b16 %v6883
        %v6949 = vunpack.c.l.b16 %v6884
        %v6950 = vunpack.c.l.b16 %v6885
        %v6951 = vunpack.c.l.b16 %v6886
        %v6952 = vunpack.c.l.b16 %v6887
        %v6953 = vunpack.c.l.b16 %v6888
        %v6954 = vunpack.c.l.b16 %v6889
        %v6955 = vunpack.c.l.b16 %v6890
        %v6956 = vunpack.c.l.b16 %v6891
        %v6957 = vunpack.c.l.b16 %v6892
        %v6958 = vunpack.c.l.b16 %v6893
        %v6959 = vrot.slane %v6945, 7
        %v6960 = vsel %vm3053, %v6959, %v6943
        %v6961 = vrot.slane %v6947, 6
        %v6962 = vsel %vm3056, %v6961, %v6960
        %v6963 = vrot.slane %v6949, 5
        %v6964 = vsel %vm3059, %v6963, %v6962
        %v6965 = vrot.slane %v6951, 4
        %v6966 = vsel %vm3062, %v6965, %v6964
        %v6967 = vrot.slane %v6953, 3
        %v6968 = vsel %vm3065, %v6967, %v6966
        %v6969 = vrot.slane %v6955, 2
        %v6970 = vsel %vm3068, %v6969, %v6968
        %v6971 = vrot.slane %v6957, 1
        %v6972 = vsel %vm3071, %v6971, %v6970
        %v6973 = vrot.slane %v6946, 7
        %v6974 = vsel %vm3053, %v6973, %v6944
        %v6975 = vrot.slane %v6948, 6
        %v6976 = vsel %vm3056, %v6975, %v6974
        %v6977 = vrot.slane %v6950, 5
        %v6978 = vsel %vm3059, %v6977, %v6976
        %v6979 = vrot.slane %v6952, 4
        %v6980 = vsel %vm3062, %v6979, %v6978
        %v6981 = vrot.slane %v6954, 3
        %v6982 = vsel %vm3065, %v6981, %v6980
        %v6983 = vrot.slane %v6956, 2
        %v6984 = vsel %vm3068, %v6983, %v6982
        %v6985 = vrot.slane %v6958, 1
        %v6986 = vsel %vm3071, %v6985, %v6984
        %v6987 = vpack.c.b16 %v6972, %v6972
        %v6988 = vpack.c.b16 %v6986, %v6986
        %v7023 = vunpack.c.l.b16 %v6895
        %v7024 = vunpack.c.l.b16 %v6896
        %v7025 = vunpack.c.l.b16 %v6897
        %v7026 = vunpack.c.l.b16 %v6898
        %v7027 = vunpack.c.l.b16 %v6899
        %v7028 = vunpack.c.l.b16 %v6900
        %v7029 = vunpack.c.l.b16 %v6901
        %v7030 = vunpack.c.l.b16 %v6902
        %v7031 = vunpack.c.l.b16 %v6903
        %v7032 = vunpack.c.l.b16 %v6904
        %v7033 = vunpack.c.l.b16 %v6905
        %v7034 = vunpack.c.l.b16 %v6906
        %v7035 = vunpack.c.l.b16 %v6907
        %v7036 = vunpack.c.l.b16 %v6908
        %v7037 = vunpack.c.l.b16 %v6909
        %v7038 = vunpack.c.l.b16 %v6910
        %v7039 = vunpack.c.l.b16 %v6911
        %v7040 = vunpack.c.l.b16 %v6912
        %v7041 = vunpack.c.l.b16 %v6913
        %v7042 = vunpack.c.l.b16 %v6914
        %v7043 = vunpack.c.l.b16 %v6915
        %v7044 = vunpack.c.l.b16 %v6916
        %v7045 = vunpack.c.l.b16 %v6917
        %v7046 = vunpack.c.l.b16 %v6918
        %v7047 = vunpack.c.l.b16 %v6919
        %v7048 = vunpack.c.l.b16 %v6920
        %v7049 = vunpack.c.l.b16 %v6921
        %v7050 = vunpack.c.l.b16 %v6922
        %v7051 = vunpack.c.l.b16 %v6923
        %v7052 = vunpack.c.l.b16 %v6924
        %v7053 = vunpack.c.l.b16 %v6925
        %v7054 = vunpack.c.l.b16 %v6926
        %v7055 = vpack.c.b16 %v7024, %v7023
        %v7056 = vpack.c.b16 %v7026, %v7025
        %v7057 = vpack.c.b16 %v7028, %v7027
        %v7058 = vpack.c.b16 %v7030, %v7029
        %v7059 = vpack.c.b16 %v7032, %v7031
        %v7060 = vpack.c.b16 %v7034, %v7033
        %v7061 = vpack.c.b16 %v7036, %v7035
        %v7062 = vpack.c.b16 %v7038, %v7037
        %v7063 = vpack.c.b16 %v7040, %v7039
        %v7064 = vpack.c.b16 %v7042, %v7041
        %v7065 = vpack.c.b16 %v7044, %v7043
        %v7066 = vpack.c.b16 %v7046, %v7045
        %v7067 = vpack.c.b16 %v7048, %v7047
        %v7068 = vpack.c.b16 %v7050, %v7049
        %v7069 = vpack.c.b16 %v7052, %v7051
        %v7070 = vpack.c.b16 %v7054, %v7053
        %7087 = vmatprep.subr.bf16.mxu0 0
        %7088 = vmatpush1.bf16.msra.mxu0 %v7062
        %7089 = vmatprep.subr.bf16.mxu0 0
        %7090 = vmatpush1.bf16.msra.mxu0 %v7061
        %7091 = vmatprep.subr.bf16.mxu0 0
        %7092 = vmatpush1.bf16.msra.mxu0 %v7060
        %7093 = vmatprep.subr.bf16.mxu0 0
        %7094 = vmatpush1.bf16.msra.mxu0 %v7059
        %7095 = vmatprep.subr.bf16.mxu0 0
        %7096 = vmatpush1.bf16.msra.mxu0 %v7058
        %7097 = vmatprep.subr.bf16.mxu0 0
        %7098 = vmatpush1.bf16.msra.mxu0 %v7057
        %7099 = vmatprep.subr.bf16.mxu0 0
        %7100 = vmatpush1.bf16.msra.mxu0 %v7056
        %7101 = vmatprep.subr.bf16.mxu0 0
        %7102 = vmatpush1.bf16.msra.mxu0 %v7055
        %7103 = vmatprep.subr.bf16.mxu0 0
        %7104 = vmatpush2.bf16.msra.mxu0 %v7070
        %7105 = vmatprep.subr.bf16.mxu0 0
        %7106 = vmatpush2.bf16.msra.mxu0 %v7069
        %7107 = vmatprep.subr.bf16.mxu0 0
        %7108 = vmatpush2.bf16.msra.mxu0 %v7068
        %7109 = vmatprep.subr.bf16.mxu0 0
        %7110 = vmatpush2.bf16.msra.mxu0 %v7067
        %7111 = vmatprep.subr.bf16.mxu0 0
        %7112 = vmatpush2.bf16.msra.mxu0 %v7066
        %7113 = vmatprep.subr.bf16.mxu0 0
        %7114 = vmatpush2.bf16.msra.mxu0 %v7065
        %7115 = vmatprep.subr.bf16.mxu0 0
        %7116 = vmatpush2.bf16.msra.mxu0 %v7064
        %7117 = vmatprep.subr.bf16.mxu0 0
        %7118 = vmatpush2.bf16.msra.mxu0 %v7063
        %7119 = vmatprep.mubr.bf16.mxu0 %v6988
        %7120 = vmatmul.mubr.bf16.gmra.mxu0 %v6987
        %v7121 = vpop.f32.mrf.mxu0
        %v7122 = vadd.f32 0.0, %v7121
        %v7123 = vpop.f32.mrf.mxu0
        %v7124 = vpop.f32.mrf.mxu0
        %v7125 = vpop.f32.mrf.mxu0
        %7126 = vdwg.mxu0
        %v7127 = vadd.f32 %v6773, %v7122
        %s7128 = scalar_lea.vmem [#allocation2], 20
        %v7129 = vld [vmem:[%s7128] ss:$8 sm:$0x3]
        %s7130 = scalar_lea.vmem [#allocation2], 52
        %v7131 = vld [vmem:[%s7130] ss:$8 sm:$0x3]
        %s7132 = scalar_lea.vmem [#allocation2], 84
        %v7133 = vld [vmem:[%s7132] ss:$8 sm:$0x3]
        %s7134 = scalar_lea.vmem [#allocation2], 116
        %v7135 = vld [vmem:[%s7134] ss:$8 sm:$0x3]
        %s7136 = scalar_lea.vmem [#allocation2], 148
        %v7137 = vld [vmem:[%s7136] ss:$8 sm:$0x3]
        %s7138 = scalar_lea.vmem [#allocation2], 180
        %v7139 = vld [vmem:[%s7138] ss:$8 sm:$0x3]
        %s7140 = scalar_lea.vmem [#allocation2], 212
        %v7141 = vld [vmem:[%s7140] ss:$8 sm:$0x3]
        %s7142 = scalar_lea.vmem [#allocation2], 244
        %v7143 = vld [vmem:[%s7142] ss:$8 sm:$0x3]
        %v7152 = vlaneseq
        %v7153 = vshrl.u32 %v7152, 7
        %v7154 = vsub.s32 0, %v7153
        %v7155 = vrot.slane %v7129, %v7154
        %v7156 = vlaneseq
        %v7157 = vshrl.u32 %v7156, 7
        %v7158 = vsub.s32 1, %v7157
        %v7159 = vrot.slane %v7129, %v7158
        %v7160 = vlaneseq
        %v7161 = vshrl.u32 %v7160, 7
        %v7162 = vsub.s32 0, %v7161
        %v7163 = vrot.slane %v7131, %v7162
        %v7164 = vlaneseq
        %v7165 = vshrl.u32 %v7164, 7
        %v7166 = vsub.s32 1, %v7165
        %v7167 = vrot.slane %v7131, %v7166
        %v7168 = vlaneseq
        %v7169 = vshrl.u32 %v7168, 7
        %v7170 = vsub.s32 0, %v7169
        %v7171 = vrot.slane %v7133, %v7170
        %v7172 = vlaneseq
        %v7173 = vshrl.u32 %v7172, 7
        %v7174 = vsub.s32 1, %v7173
        %v7175 = vrot.slane %v7133, %v7174
        %v7176 = vlaneseq
        %v7177 = vshrl.u32 %v7176, 7
        %v7178 = vsub.s32 0, %v7177
        %v7179 = vrot.slane %v7135, %v7178
        %v7180 = vlaneseq
        %v7181 = vshrl.u32 %v7180, 7
        %v7182 = vsub.s32 1, %v7181
        %v7183 = vrot.slane %v7135, %v7182
        %v7184 = vlaneseq
        %v7185 = vshrl.u32 %v7184, 7
        %v7186 = vsub.s32 0, %v7185
        %v7187 = vrot.slane %v7137, %v7186
        %v7188 = vlaneseq
        %v7189 = vshrl.u32 %v7188, 7
        %v7190 = vsub.s32 1, %v7189
        %v7191 = vrot.slane %v7137, %v7190
        %v7192 = vlaneseq
        %v7193 = vshrl.u32 %v7192, 7
        %v7194 = vsub.s32 0, %v7193
        %v7195 = vrot.slane %v7139, %v7194
        %v7196 = vlaneseq
        %v7197 = vshrl.u32 %v7196, 7
        %v7198 = vsub.s32 1, %v7197
        %v7199 = vrot.slane %v7139, %v7198
        %v7200 = vlaneseq
        %v7201 = vshrl.u32 %v7200, 7
        %v7202 = vsub.s32 0, %v7201
        %v7203 = vrot.slane %v7141, %v7202
        %v7204 = vlaneseq
        %v7205 = vshrl.u32 %v7204, 7
        %v7206 = vsub.s32 1, %v7205
        %v7207 = vrot.slane %v7141, %v7206
        %v7208 = vlaneseq
        %v7209 = vshrl.u32 %v7208, 7
        %v7210 = vsub.s32 0, %v7209
        %v7211 = vrot.slane %v7143, %v7210
        %v7212 = vlaneseq
        %v7213 = vshrl.u32 %v7212, 7
        %v7214 = vsub.s32 1, %v7213
        %v7215 = vrot.slane %v7143, %v7214
        %v7232 = vpack.c.bf16 %v7155, %v7155
        %v7233 = vpack.c.bf16 %v7159, %v7159
        %v7234 = vpack.c.bf16 %v7163, %v7163
        %v7235 = vpack.c.bf16 %v7167, %v7167
        %v7236 = vpack.c.bf16 %v7171, %v7171
        %v7237 = vpack.c.bf16 %v7175, %v7175
        %v7238 = vpack.c.bf16 %v7179, %v7179
        %v7239 = vpack.c.bf16 %v7183, %v7183
        %v7240 = vpack.c.bf16 %v7187, %v7187
        %v7241 = vpack.c.bf16 %v7191, %v7191
        %v7242 = vpack.c.bf16 %v7195, %v7195
        %v7243 = vpack.c.bf16 %v7199, %v7199
        %v7244 = vpack.c.bf16 %v7203, %v7203
        %v7245 = vpack.c.bf16 %v7207, %v7207
        %v7246 = vpack.c.bf16 %v7211, %v7211
        %v7247 = vpack.c.bf16 %v7215, %v7215
        %s7248 = scalar_lea.vmem %s3, 1536
        %v7249 = vld [vmem:[%s7248] sm:$0xf]
        %v7250 = vld [vmem:[%s7248 + $0x4] sm:$0xf]
        %v7251 = vld [vmem:[%s7248 + $0x8] sm:$0xf]
        %v7252 = vld [vmem:[%s7248 + $0xc] sm:$0xf]
        %v7253 = vld [vmem:[%s7248 + $0x10] sm:$0xf]
        %v7254 = vld [vmem:[%s7248 + $0x14] sm:$0xf]
        %v7255 = vld [vmem:[%s7248 + $0x18] sm:$0xf]
        %v7256 = vld [vmem:[%s7248 + $0x1c] sm:$0xf]
        %v7257 = vld [vmem:[%s7248 + $0x20] sm:$0xf]
        %v7258 = vld [vmem:[%s7248 + $0x24] sm:$0xf]
        %v7259 = vld [vmem:[%s7248 + $0x28] sm:$0xf]
        %v7260 = vld [vmem:[%s7248 + $0x2c] sm:$0xf]
        %v7261 = vld [vmem:[%s7248 + $0x30] sm:$0xf]
        %v7262 = vld [vmem:[%s7248 + $0x34] sm:$0xf]
        %v7263 = vld [vmem:[%s7248 + $0x38] sm:$0xf]
        %v7264 = vld [vmem:[%s7248 + $0x3c] sm:$0xf]
        %v7265 = vld [vmem:[%s7248 + $0x40] sm:$0xf]
        %v7266 = vld [vmem:[%s7248 + $0x44] sm:$0xf]
        %v7267 = vld [vmem:[%s7248 + $0x48] sm:$0xf]
        %v7268 = vld [vmem:[%s7248 + $0x4c] sm:$0xf]
        %v7269 = vld [vmem:[%s7248 + $0x50] sm:$0xf]
        %v7270 = vld [vmem:[%s7248 + $0x54] sm:$0xf]
        %v7271 = vld [vmem:[%s7248 + $0x58] sm:$0xf]
        %v7272 = vld [vmem:[%s7248 + $0x5c] sm:$0xf]
        %v7273 = vld [vmem:[%s7248 + $0x60] sm:$0xf]
        %v7274 = vld [vmem:[%s7248 + $0x64] sm:$0xf]
        %v7275 = vld [vmem:[%s7248 + $0x68] sm:$0xf]
        %v7276 = vld [vmem:[%s7248 + $0x6c] sm:$0xf]
        %v7277 = vld [vmem:[%s7248 + $0x70] sm:$0xf]
        %v7278 = vld [vmem:[%s7248 + $0x74] sm:$0xf]
        %v7279 = vld [vmem:[%s7248 + $0x78] sm:$0xf]
        %v7280 = vld [vmem:[%s7248 + $0x7c] sm:$0xf]
        %v7297 = vunpack.c.l.b16 %v7232
        %v7298 = vunpack.c.l.b16 %v7233
        %v7299 = vunpack.c.l.b16 %v7234
        %v7300 = vunpack.c.l.b16 %v7235
        %v7301 = vunpack.c.l.b16 %v7236
        %v7302 = vunpack.c.l.b16 %v7237
        %v7303 = vunpack.c.l.b16 %v7238
        %v7304 = vunpack.c.l.b16 %v7239
        %v7305 = vunpack.c.l.b16 %v7240
        %v7306 = vunpack.c.l.b16 %v7241
        %v7307 = vunpack.c.l.b16 %v7242
        %v7308 = vunpack.c.l.b16 %v7243
        %v7309 = vunpack.c.l.b16 %v7244
        %v7310 = vunpack.c.l.b16 %v7245
        %v7311 = vunpack.c.l.b16 %v7246
        %v7312 = vunpack.c.l.b16 %v7247
        %v7313 = vrot.slane %v7299, 7
        %v7314 = vsel %vm3053, %v7313, %v7297
        %v7315 = vrot.slane %v7301, 6
        %v7316 = vsel %vm3056, %v7315, %v7314
        %v7317 = vrot.slane %v7303, 5
        %v7318 = vsel %vm3059, %v7317, %v7316
        %v7319 = vrot.slane %v7305, 4
        %v7320 = vsel %vm3062, %v7319, %v7318
        %v7321 = vrot.slane %v7307, 3
        %v7322 = vsel %vm3065, %v7321, %v7320
        %v7323 = vrot.slane %v7309, 2
        %v7324 = vsel %vm3068, %v7323, %v7322
        %v7325 = vrot.slane %v7311, 1
        %v7326 = vsel %vm3071, %v7325, %v7324
        %v7327 = vrot.slane %v7300, 7
        %v7328 = vsel %vm3053, %v7327, %v7298
        %v7329 = vrot.slane %v7302, 6
        %v7330 = vsel %vm3056, %v7329, %v7328
        %v7331 = vrot.slane %v7304, 5
        %v7332 = vsel %vm3059, %v7331, %v7330
        %v7333 = vrot.slane %v7306, 4
        %v7334 = vsel %vm3062, %v7333, %v7332
        %v7335 = vrot.slane %v7308, 3
        %v7336 = vsel %vm3065, %v7335, %v7334
        %v7337 = vrot.slane %v7310, 2
        %v7338 = vsel %vm3068, %v7337, %v7336
        %v7339 = vrot.slane %v7312, 1
        %v7340 = vsel %vm3071, %v7339, %v7338
        %v7341 = vpack.c.b16 %v7326, %v7326
        %v7342 = vpack.c.b16 %v7340, %v7340
        %v7377 = vunpack.c.l.b16 %v7249
        %v7378 = vunpack.c.l.b16 %v7250
        %v7379 = vunpack.c.l.b16 %v7251
        %v7380 = vunpack.c.l.b16 %v7252
        %v7381 = vunpack.c.l.b16 %v7253
        %v7382 = vunpack.c.l.b16 %v7254
        %v7383 = vunpack.c.l.b16 %v7255
        %v7384 = vunpack.c.l.b16 %v7256
        %v7385 = vunpack.c.l.b16 %v7257
        %v7386 = vunpack.c.l.b16 %v7258
        %v7387 = vunpack.c.l.b16 %v7259
        %v7388 = vunpack.c.l.b16 %v7260
        %v7389 = vunpack.c.l.b16 %v7261
        %v7390 = vunpack.c.l.b16 %v7262
        %v7391 = vunpack.c.l.b16 %v7263
        %v7392 = vunpack.c.l.b16 %v7264
        %v7393 = vunpack.c.l.b16 %v7265
        %v7394 = vunpack.c.l.b16 %v7266
        %v7395 = vunpack.c.l.b16 %v7267
        %v7396 = vunpack.c.l.b16 %v7268
        %v7397 = vunpack.c.l.b16 %v7269
        %v7398 = vunpack.c.l.b16 %v7270
        %v7399 = vunpack.c.l.b16 %v7271
        %v7400 = vunpack.c.l.b16 %v7272
        %v7401 = vunpack.c.l.b16 %v7273
        %v7402 = vunpack.c.l.b16 %v7274
        %v7403 = vunpack.c.l.b16 %v7275
        %v7404 = vunpack.c.l.b16 %v7276
        %v7405 = vunpack.c.l.b16 %v7277
        %v7406 = vunpack.c.l.b16 %v7278
        %v7407 = vunpack.c.l.b16 %v7279
        %v7408 = vunpack.c.l.b16 %v7280
        %v7409 = vpack.c.b16 %v7378, %v7377
        %v7410 = vpack.c.b16 %v7380, %v7379
        %v7411 = vpack.c.b16 %v7382, %v7381
        %v7412 = vpack.c.b16 %v7384, %v7383
        %v7413 = vpack.c.b16 %v7386, %v7385
        %v7414 = vpack.c.b16 %v7388, %v7387
        %v7415 = vpack.c.b16 %v7390, %v7389
        %v7416 = vpack.c.b16 %v7392, %v7391
        %v7417 = vpack.c.b16 %v7394, %v7393
        %v7418 = vpack.c.b16 %v7396, %v7395
        %v7419 = vpack.c.b16 %v7398, %v7397
        %v7420 = vpack.c.b16 %v7400, %v7399
        %v7421 = vpack.c.b16 %v7402, %v7401
        %v7422 = vpack.c.b16 %v7404, %v7403
        %v7423 = vpack.c.b16 %v7406, %v7405
        %v7424 = vpack.c.b16 %v7408, %v7407
        %7441 = vmatprep.subr.bf16.mxu0 0
        %7442 = vmatpush1.bf16.msra.mxu0 %v7416
        %7443 = vmatprep.subr.bf16.mxu0 0
        %7444 = vmatpush1.bf16.msra.mxu0 %v7415
        %7445 = vmatprep.subr.bf16.mxu0 0
        %7446 = vmatpush1.bf16.msra.mxu0 %v7414
        %7447 = vmatprep.subr.bf16.mxu0 0
        %7448 = vmatpush1.bf16.msra.mxu0 %v7413
        %7449 = vmatprep.subr.bf16.mxu0 0
        %7450 = vmatpush1.bf16.msra.mxu0 %v7412
        %7451 = vmatprep.subr.bf16.mxu0 0
        %7452 = vmatpush1.bf16.msra.mxu0 %v7411
        %7453 = vmatprep.subr.bf16.mxu0 0
        %7454 = vmatpush1.bf16.msra.mxu0 %v7410
        %7455 = vmatprep.subr.bf16.mxu0 0
        %7456 = vmatpush1.bf16.msra.mxu0 %v7409
        %7457 = vmatprep.subr.bf16.mxu0 0
        %7458 = vmatpush2.bf16.msra.mxu0 %v7424
        %7459 = vmatprep.subr.bf16.mxu0 0
        %7460 = vmatpush2.bf16.msra.mxu0 %v7423
        %7461 = vmatprep.subr.bf16.mxu0 0
        %7462 = vmatpush2.bf16.msra.mxu0 %v7422
        %7463 = vmatprep.subr.bf16.mxu0 0
        %7464 = vmatpush2.bf16.msra.mxu0 %v7421
        %7465 = vmatprep.subr.bf16.mxu0 0
        %7466 = vmatpush2.bf16.msra.mxu0 %v7420
        %7467 = vmatprep.subr.bf16.mxu0 0
        %7468 = vmatpush2.bf16.msra.mxu0 %v7419
        %7469 = vmatprep.subr.bf16.mxu0 0
        %7470 = vmatpush2.bf16.msra.mxu0 %v7418
        %7471 = vmatprep.subr.bf16.mxu0 0
        %7472 = vmatpush2.bf16.msra.mxu0 %v7417
        %7473 = vmatprep.mubr.bf16.mxu0 %v7342
        %7474 = vmatmul.mubr.bf16.gmra.mxu0 %v7341
        %v7475 = vpop.f32.mrf.mxu0
        %v7476 = vadd.f32 0.0, %v7475
        %v7477 = vpop.f32.mrf.mxu0
        %v7478 = vpop.f32.mrf.mxu0
        %v7479 = vpop.f32.mrf.mxu0
        %7480 = vdwg.mxu0
        %v7481 = vadd.f32 %v7127, %v7476
        %s7482 = scalar_lea.vmem [#allocation2], 21
        %v7483 = vld [vmem:[%s7482] ss:$8 sm:$0x3]
        %s7484 = scalar_lea.vmem [#allocation2], 53
        %v7485 = vld [vmem:[%s7484] ss:$8 sm:$0x3]
        %s7486 = scalar_lea.vmem [#allocation2], 85
        %v7487 = vld [vmem:[%s7486] ss:$8 sm:$0x3]
        %s7488 = scalar_lea.vmem [#allocation2], 117
        %v7489 = vld [vmem:[%s7488] ss:$8 sm:$0x3]
        %s7490 = scalar_lea.vmem [#allocation2], 149
        %v7491 = vld [vmem:[%s7490] ss:$8 sm:$0x3]
        %s7492 = scalar_lea.vmem [#allocation2], 181
        %v7493 = vld [vmem:[%s7492] ss:$8 sm:$0x3]
        %s7494 = scalar_lea.vmem [#allocation2], 213
        %v7495 = vld [vmem:[%s7494] ss:$8 sm:$0x3]
        %s7496 = scalar_lea.vmem [#allocation2], 245
        %v7497 = vld [vmem:[%s7496] ss:$8 sm:$0x3]
        %v7506 = vlaneseq
        %v7507 = vshrl.u32 %v7506, 7
        %v7508 = vsub.s32 0, %v7507
        %v7509 = vrot.slane %v7483, %v7508
        %v7510 = vlaneseq
        %v7511 = vshrl.u32 %v7510, 7
        %v7512 = vsub.s32 1, %v7511
        %v7513 = vrot.slane %v7483, %v7512
        %v7514 = vlaneseq
        %v7515 = vshrl.u32 %v7514, 7
        %v7516 = vsub.s32 0, %v7515
        %v7517 = vrot.slane %v7485, %v7516
        %v7518 = vlaneseq
        %v7519 = vshrl.u32 %v7518, 7
        %v7520 = vsub.s32 1, %v7519
        %v7521 = vrot.slane %v7485, %v7520
        %v7522 = vlaneseq
        %v7523 = vshrl.u32 %v7522, 7
        %v7524 = vsub.s32 0, %v7523
        %v7525 = vrot.slane %v7487, %v7524
        %v7526 = vlaneseq
        %v7527 = vshrl.u32 %v7526, 7
        %v7528 = vsub.s32 1, %v7527
        %v7529 = vrot.slane %v7487, %v7528
        %v7530 = vlaneseq
        %v7531 = vshrl.u32 %v7530, 7
        %v7532 = vsub.s32 0, %v7531
        %v7533 = vrot.slane %v7489, %v7532
        %v7534 = vlaneseq
        %v7535 = vshrl.u32 %v7534, 7
        %v7536 = vsub.s32 1, %v7535
        %v7537 = vrot.slane %v7489, %v7536
        %v7538 = vlaneseq
        %v7539 = vshrl.u32 %v7538, 7
        %v7540 = vsub.s32 0, %v7539
        %v7541 = vrot.slane %v7491, %v7540
        %v7542 = vlaneseq
        %v7543 = vshrl.u32 %v7542, 7
        %v7544 = vsub.s32 1, %v7543
        %v7545 = vrot.slane %v7491, %v7544
        %v7546 = vlaneseq
        %v7547 = vshrl.u32 %v7546, 7
        %v7548 = vsub.s32 0, %v7547
        %v7549 = vrot.slane %v7493, %v7548
        %v7550 = vlaneseq
        %v7551 = vshrl.u32 %v7550, 7
        %v7552 = vsub.s32 1, %v7551
        %v7553 = vrot.slane %v7493, %v7552
        %v7554 = vlaneseq
        %v7555 = vshrl.u32 %v7554, 7
        %v7556 = vsub.s32 0, %v7555
        %v7557 = vrot.slane %v7495, %v7556
        %v7558 = vlaneseq
        %v7559 = vshrl.u32 %v7558, 7
        %v7560 = vsub.s32 1, %v7559
        %v7561 = vrot.slane %v7495, %v7560
        %v7562 = vlaneseq
        %v7563 = vshrl.u32 %v7562, 7
        %v7564 = vsub.s32 0, %v7563
        %v7565 = vrot.slane %v7497, %v7564
        %v7566 = vlaneseq
        %v7567 = vshrl.u32 %v7566, 7
        %v7568 = vsub.s32 1, %v7567
        %v7569 = vrot.slane %v7497, %v7568
        %v7586 = vpack.c.bf16 %v7509, %v7509
        %v7587 = vpack.c.bf16 %v7513, %v7513
        %v7588 = vpack.c.bf16 %v7517, %v7517
        %v7589 = vpack.c.bf16 %v7521, %v7521
        %v7590 = vpack.c.bf16 %v7525, %v7525
        %v7591 = vpack.c.bf16 %v7529, %v7529
        %v7592 = vpack.c.bf16 %v7533, %v7533
        %v7593 = vpack.c.bf16 %v7537, %v7537
        %v7594 = vpack.c.bf16 %v7541, %v7541
        %v7595 = vpack.c.bf16 %v7545, %v7545
        %v7596 = vpack.c.bf16 %v7549, %v7549
        %v7597 = vpack.c.bf16 %v7553, %v7553
        %v7598 = vpack.c.bf16 %v7557, %v7557
        %v7599 = vpack.c.bf16 %v7561, %v7561
        %v7600 = vpack.c.bf16 %v7565, %v7565
        %v7601 = vpack.c.bf16 %v7569, %v7569
        %s7602 = scalar_lea.vmem %s3, 1664
        %v7603 = vld [vmem:[%s7602] sm:$0xf]
        %v7604 = vld [vmem:[%s7602 + $0x4] sm:$0xf]
        %v7605 = vld [vmem:[%s7602 + $0x8] sm:$0xf]
        %v7606 = vld [vmem:[%s7602 + $0xc] sm:$0xf]
        %v7607 = vld [vmem:[%s7602 + $0x10] sm:$0xf]
        %v7608 = vld [vmem:[%s7602 + $0x14] sm:$0xf]
        %v7609 = vld [vmem:[%s7602 + $0x18] sm:$0xf]
        %v7610 = vld [vmem:[%s7602 + $0x1c] sm:$0xf]
        %v7611 = vld [vmem:[%s7602 + $0x20] sm:$0xf]
        %v7612 = vld [vmem:[%s7602 + $0x24] sm:$0xf]
        %v7613 = vld [vmem:[%s7602 + $0x28] sm:$0xf]
        %v7614 = vld [vmem:[%s7602 + $0x2c] sm:$0xf]
        %v7615 = vld [vmem:[%s7602 + $0x30] sm:$0xf]
        %v7616 = vld [vmem:[%s7602 + $0x34] sm:$0xf]
        %v7617 = vld [vmem:[%s7602 + $0x38] sm:$0xf]
        %v7618 = vld [vmem:[%s7602 + $0x3c] sm:$0xf]
        %v7619 = vld [vmem:[%s7602 + $0x40] sm:$0xf]
        %v7620 = vld [vmem:[%s7602 + $0x44] sm:$0xf]
        %v7621 = vld [vmem:[%s7602 + $0x48] sm:$0xf]
        %v7622 = vld [vmem:[%s7602 + $0x4c] sm:$0xf]
        %v7623 = vld [vmem:[%s7602 + $0x50] sm:$0xf]
        %v7624 = vld [vmem:[%s7602 + $0x54] sm:$0xf]
        %v7625 = vld [vmem:[%s7602 + $0x58] sm:$0xf]
        %v7626 = vld [vmem:[%s7602 + $0x5c] sm:$0xf]
        %v7627 = vld [vmem:[%s7602 + $0x60] sm:$0xf]
        %v7628 = vld [vmem:[%s7602 + $0x64] sm:$0xf]
        %v7629 = vld [vmem:[%s7602 + $0x68] sm:$0xf]
        %v7630 = vld [vmem:[%s7602 + $0x6c] sm:$0xf]
        %v7631 = vld [vmem:[%s7602 + $0x70] sm:$0xf]
        %v7632 = vld [vmem:[%s7602 + $0x74] sm:$0xf]
        %v7633 = vld [vmem:[%s7602 + $0x78] sm:$0xf]
        %v7634 = vld [vmem:[%s7602 + $0x7c] sm:$0xf]
        %v7651 = vunpack.c.l.b16 %v7586
        %v7652 = vunpack.c.l.b16 %v7587
        %v7653 = vunpack.c.l.b16 %v7588
        %v7654 = vunpack.c.l.b16 %v7589
        %v7655 = vunpack.c.l.b16 %v7590
        %v7656 = vunpack.c.l.b16 %v7591
        %v7657 = vunpack.c.l.b16 %v7592
        %v7658 = vunpack.c.l.b16 %v7593
        %v7659 = vunpack.c.l.b16 %v7594
        %v7660 = vunpack.c.l.b16 %v7595
        %v7661 = vunpack.c.l.b16 %v7596
        %v7662 = vunpack.c.l.b16 %v7597
        %v7663 = vunpack.c.l.b16 %v7598
        %v7664 = vunpack.c.l.b16 %v7599
        %v7665 = vunpack.c.l.b16 %v7600
        %v7666 = vunpack.c.l.b16 %v7601
        %v7667 = vrot.slane %v7653, 7
        %v7668 = vsel %vm3053, %v7667, %v7651
        %v7669 = vrot.slane %v7655, 6
        %v7670 = vsel %vm3056, %v7669, %v7668
        %v7671 = vrot.slane %v7657, 5
        %v7672 = vsel %vm3059, %v7671, %v7670
        %v7673 = vrot.slane %v7659, 4
        %v7674 = vsel %vm3062, %v7673, %v7672
        %v7675 = vrot.slane %v7661, 3
        %v7676 = vsel %vm3065, %v7675, %v7674
        %v7677 = vrot.slane %v7663, 2
        %v7678 = vsel %vm3068, %v7677, %v7676
        %v7679 = vrot.slane %v7665, 1
        %v7680 = vsel %vm3071, %v7679, %v7678
        %v7681 = vrot.slane %v7654, 7
        %v7682 = vsel %vm3053, %v7681, %v7652
        %v7683 = vrot.slane %v7656, 6
        %v7684 = vsel %vm3056, %v7683, %v7682
        %v7685 = vrot.slane %v7658, 5
        %v7686 = vsel %vm3059, %v7685, %v7684
        %v7687 = vrot.slane %v7660, 4
        %v7688 = vsel %vm3062, %v7687, %v7686
        %v7689 = vrot.slane %v7662, 3
        %v7690 = vsel %vm3065, %v7689, %v7688
        %v7691 = vrot.slane %v7664, 2
        %v7692 = vsel %vm3068, %v7691, %v7690
        %v7693 = vrot.slane %v7666, 1
        %v7694 = vsel %vm3071, %v7693, %v7692
        %v7695 = vpack.c.b16 %v7680, %v7680
        %v7696 = vpack.c.b16 %v7694, %v7694
        %v7731 = vunpack.c.l.b16 %v7603
        %v7732 = vunpack.c.l.b16 %v7604
        %v7733 = vunpack.c.l.b16 %v7605
        %v7734 = vunpack.c.l.b16 %v7606
        %v7735 = vunpack.c.l.b16 %v7607
        %v7736 = vunpack.c.l.b16 %v7608
        %v7737 = vunpack.c.l.b16 %v7609
        %v7738 = vunpack.c.l.b16 %v7610
        %v7739 = vunpack.c.l.b16 %v7611
        %v7740 = vunpack.c.l.b16 %v7612
        %v7741 = vunpack.c.l.b16 %v7613
        %v7742 = vunpack.c.l.b16 %v7614
        %v7743 = vunpack.c.l.b16 %v7615
        %v7744 = vunpack.c.l.b16 %v7616
        %v7745 = vunpack.c.l.b16 %v7617
        %v7746 = vunpack.c.l.b16 %v7618
        %v7747 = vunpack.c.l.b16 %v7619
        %v7748 = vunpack.c.l.b16 %v7620
        %v7749 = vunpack.c.l.b16 %v7621
        %v7750 = vunpack.c.l.b16 %v7622
        %v7751 = vunpack.c.l.b16 %v7623
        %v7752 = vunpack.c.l.b16 %v7624
        %v7753 = vunpack.c.l.b16 %v7625
        %v7754 = vunpack.c.l.b16 %v7626
        %v7755 = vunpack.c.l.b16 %v7627
        %v7756 = vunpack.c.l.b16 %v7628
        %v7757 = vunpack.c.l.b16 %v7629
        %v7758 = vunpack.c.l.b16 %v7630
        %v7759 = vunpack.c.l.b16 %v7631
        %v7760 = vunpack.c.l.b16 %v7632
        %v7761 = vunpack.c.l.b16 %v7633
        %v7762 = vunpack.c.l.b16 %v7634
        %v7763 = vpack.c.b16 %v7732, %v7731
        %v7764 = vpack.c.b16 %v7734, %v7733
        %v7765 = vpack.c.b16 %v7736, %v7735
        %v7766 = vpack.c.b16 %v7738, %v7737
        %v7767 = vpack.c.b16 %v7740, %v7739
        %v7768 = vpack.c.b16 %v7742, %v7741
        %v7769 = vpack.c.b16 %v7744, %v7743
        %v7770 = vpack.c.b16 %v7746, %v7745
        %v7771 = vpack.c.b16 %v7748, %v7747
        %v7772 = vpack.c.b16 %v7750, %v7749
        %v7773 = vpack.c.b16 %v7752, %v7751
        %v7774 = vpack.c.b16 %v7754, %v7753
        %v7775 = vpack.c.b16 %v7756, %v7755
        %v7776 = vpack.c.b16 %v7758, %v7757
        %v7777 = vpack.c.b16 %v7760, %v7759
        %v7778 = vpack.c.b16 %v7762, %v7761
        %7795 = vmatprep.subr.bf16.mxu0 0
        %7796 = vmatpush1.bf16.msra.mxu0 %v7770
        %7797 = vmatprep.subr.bf16.mxu0 0
        %7798 = vmatpush1.bf16.msra.mxu0 %v7769
        %7799 = vmatprep.subr.bf16.mxu0 0
        %7800 = vmatpush1.bf16.msra.mxu0 %v7768
        %7801 = vmatprep.subr.bf16.mxu0 0
        %7802 = vmatpush1.bf16.msra.mxu0 %v7767
        %7803 = vmatprep.subr.bf16.mxu0 0
        %7804 = vmatpush1.bf16.msra.mxu0 %v7766
        %7805 = vmatprep.subr.bf16.mxu0 0
        %7806 = vmatpush1.bf16.msra.mxu0 %v7765
        %7807 = vmatprep.subr.bf16.mxu0 0
        %7808 = vmatpush1.bf16.msra.mxu0 %v7764
        %7809 = vmatprep.subr.bf16.mxu0 0
        %7810 = vmatpush1.bf16.msra.mxu0 %v7763
        %7811 = vmatprep.subr.bf16.mxu0 0
        %7812 = vmatpush2.bf16.msra.mxu0 %v7778
        %7813 = vmatprep.subr.bf16.mxu0 0
        %7814 = vmatpush2.bf16.msra.mxu0 %v7777
        %7815 = vmatprep.subr.bf16.mxu0 0
        %7816 = vmatpush2.bf16.msra.mxu0 %v7776
        %7817 = vmatprep.subr.bf16.mxu0 0
        %7818 = vmatpush2.bf16.msra.mxu0 %v7775
        %7819 = vmatprep.subr.bf16.mxu0 0
        %7820 = vmatpush2.bf16.msra.mxu0 %v7774
        %7821 = vmatprep.subr.bf16.mxu0 0
        %7822 = vmatpush2.bf16.msra.mxu0 %v7773
        %7823 = vmatprep.subr.bf16.mxu0 0
        %7824 = vmatpush2.bf16.msra.mxu0 %v7772
        %7825 = vmatprep.subr.bf16.mxu0 0
        %7826 = vmatpush2.bf16.msra.mxu0 %v7771
        %7827 = vmatprep.mubr.bf16.mxu0 %v7696
        %7828 = vmatmul.mubr.bf16.gmra.mxu0 %v7695
        %v7829 = vpop.f32.mrf.mxu0
        %v7830 = vadd.f32 0.0, %v7829
        %v7831 = vpop.f32.mrf.mxu0
        %v7832 = vpop.f32.mrf.mxu0
        %v7833 = vpop.f32.mrf.mxu0
        %7834 = vdwg.mxu0
        %v7835 = vadd.f32 %v7481, %v7830
        %s7836 = scalar_lea.vmem [#allocation2], 22
        %v7837 = vld [vmem:[%s7836] ss:$8 sm:$0x3]
        %s7838 = scalar_lea.vmem [#allocation2], 54
        %v7839 = vld [vmem:[%s7838] ss:$8 sm:$0x3]
        %s7840 = scalar_lea.vmem [#allocation2], 86
        %v7841 = vld [vmem:[%s7840] ss:$8 sm:$0x3]
        %s7842 = scalar_lea.vmem [#allocation2], 118
        %v7843 = vld [vmem:[%s7842] ss:$8 sm:$0x3]
        %s7844 = scalar_lea.vmem [#allocation2], 150
        %v7845 = vld [vmem:[%s7844] ss:$8 sm:$0x3]
        %s7846 = scalar_lea.vmem [#allocation2], 182
        %v7847 = vld [vmem:[%s7846] ss:$8 sm:$0x3]
        %s7848 = scalar_lea.vmem [#allocation2], 214
        %v7849 = vld [vmem:[%s7848] ss:$8 sm:$0x3]
        %s7850 = scalar_lea.vmem [#allocation2], 246
        %v7851 = vld [vmem:[%s7850] ss:$8 sm:$0x3]
        %v7860 = vlaneseq
        %v7861 = vshrl.u32 %v7860, 7
        %v7862 = vsub.s32 0, %v7861
        %v7863 = vrot.slane %v7837, %v7862
        %v7864 = vlaneseq
        %v7865 = vshrl.u32 %v7864, 7
        %v7866 = vsub.s32 1, %v7865
        %v7867 = vrot.slane %v7837, %v7866
        %v7868 = vlaneseq
        %v7869 = vshrl.u32 %v7868, 7
        %v7870 = vsub.s32 0, %v7869
        %v7871 = vrot.slane %v7839, %v7870
        %v7872 = vlaneseq
        %v7873 = vshrl.u32 %v7872, 7
        %v7874 = vsub.s32 1, %v7873
        %v7875 = vrot.slane %v7839, %v7874
        %v7876 = vlaneseq
        %v7877 = vshrl.u32 %v7876, 7
        %v7878 = vsub.s32 0, %v7877
        %v7879 = vrot.slane %v7841, %v7878
        %v7880 = vlaneseq
        %v7881 = vshrl.u32 %v7880, 7
        %v7882 = vsub.s32 1, %v7881
        %v7883 = vrot.slane %v7841, %v7882
        %v7884 = vlaneseq
        %v7885 = vshrl.u32 %v7884, 7
        %v7886 = vsub.s32 0, %v7885
        %v7887 = vrot.slane %v7843, %v7886
        %v7888 = vlaneseq
        %v7889 = vshrl.u32 %v7888, 7
        %v7890 = vsub.s32 1, %v7889
        %v7891 = vrot.slane %v7843, %v7890
        %v7892 = vlaneseq
        %v7893 = vshrl.u32 %v7892, 7
        %v7894 = vsub.s32 0, %v7893
        %v7895 = vrot.slane %v7845, %v7894
        %v7896 = vlaneseq
        %v7897 = vshrl.u32 %v7896, 7
        %v7898 = vsub.s32 1, %v7897
        %v7899 = vrot.slane %v7845, %v7898
        %v7900 = vlaneseq
        %v7901 = vshrl.u32 %v7900, 7
        %v7902 = vsub.s32 0, %v7901
        %v7903 = vrot.slane %v7847, %v7902
        %v7904 = vlaneseq
        %v7905 = vshrl.u32 %v7904, 7
        %v7906 = vsub.s32 1, %v7905
        %v7907 = vrot.slane %v7847, %v7906
        %v7908 = vlaneseq
        %v7909 = vshrl.u32 %v7908, 7
        %v7910 = vsub.s32 0, %v7909
        %v7911 = vrot.slane %v7849, %v7910
        %v7912 = vlaneseq
        %v7913 = vshrl.u32 %v7912, 7
        %v7914 = vsub.s32 1, %v7913
        %v7915 = vrot.slane %v7849, %v7914
        %v7916 = vlaneseq
        %v7917 = vshrl.u32 %v7916, 7
        %v7918 = vsub.s32 0, %v7917
        %v7919 = vrot.slane %v7851, %v7918
        %v7920 = vlaneseq
        %v7921 = vshrl.u32 %v7920, 7
        %v7922 = vsub.s32 1, %v7921
        %v7923 = vrot.slane %v7851, %v7922
        %v7940 = vpack.c.bf16 %v7863, %v7863
        %v7941 = vpack.c.bf16 %v7867, %v7867
        %v7942 = vpack.c.bf16 %v7871, %v7871
        %v7943 = vpack.c.bf16 %v7875, %v7875
        %v7944 = vpack.c.bf16 %v7879, %v7879
        %v7945 = vpack.c.bf16 %v7883, %v7883
        %v7946 = vpack.c.bf16 %v7887, %v7887
        %v7947 = vpack.c.bf16 %v7891, %v7891
        %v7948 = vpack.c.bf16 %v7895, %v7895
        %v7949 = vpack.c.bf16 %v7899, %v7899
        %v7950 = vpack.c.bf16 %v7903, %v7903
        %v7951 = vpack.c.bf16 %v7907, %v7907
        %v7952 = vpack.c.bf16 %v7911, %v7911
        %v7953 = vpack.c.bf16 %v7915, %v7915
        %v7954 = vpack.c.bf16 %v7919, %v7919
        %v7955 = vpack.c.bf16 %v7923, %v7923
        %s7956 = scalar_lea.vmem %s3, 1792
        %v7957 = vld [vmem:[%s7956] sm:$0xf]
        %v7958 = vld [vmem:[%s7956 + $0x4] sm:$0xf]
        %v7959 = vld [vmem:[%s7956 + $0x8] sm:$0xf]
        %v7960 = vld [vmem:[%s7956 + $0xc] sm:$0xf]
        %v7961 = vld [vmem:[%s7956 + $0x10] sm:$0xf]
        %v7962 = vld [vmem:[%s7956 + $0x14] sm:$0xf]
        %v7963 = vld [vmem:[%s7956 + $0x18] sm:$0xf]
        %v7964 = vld [vmem:[%s7956 + $0x1c] sm:$0xf]
        %v7965 = vld [vmem:[%s7956 + $0x20] sm:$0xf]
        %v7966 = vld [vmem:[%s7956 + $0x24] sm:$0xf]
        %v7967 = vld [vmem:[%s7956 + $0x28] sm:$0xf]
        %v7968 = vld [vmem:[%s7956 + $0x2c] sm:$0xf]
        %v7969 = vld [vmem:[%s7956 + $0x30] sm:$0xf]
        %v7970 = vld [vmem:[%s7956 + $0x34] sm:$0xf]
        %v7971 = vld [vmem:[%s7956 + $0x38] sm:$0xf]
        %v7972 = vld [vmem:[%s7956 + $0x3c] sm:$0xf]
        %v7973 = vld [vmem:[%s7956 + $0x40] sm:$0xf]
        %v7974 = vld [vmem:[%s7956 + $0x44] sm:$0xf]
        %v7975 = vld [vmem:[%s7956 + $0x48] sm:$0xf]
        %v7976 = vld [vmem:[%s7956 + $0x4c] sm:$0xf]
        %v7977 = vld [vmem:[%s7956 + $0x50] sm:$0xf]
        %v7978 = vld [vmem:[%s7956 + $0x54] sm:$0xf]
        %v7979 = vld [vmem:[%s7956 + $0x58] sm:$0xf]
        %v7980 = vld [vmem:[%s7956 + $0x5c] sm:$0xf]
        %v7981 = vld [vmem:[%s7956 + $0x60] sm:$0xf]
        %v7982 = vld [vmem:[%s7956 + $0x64] sm:$0xf]
        %v7983 = vld [vmem:[%s7956 + $0x68] sm:$0xf]
        %v7984 = vld [vmem:[%s7956 + $0x6c] sm:$0xf]
        %v7985 = vld [vmem:[%s7956 + $0x70] sm:$0xf]
        %v7986 = vld [vmem:[%s7956 + $0x74] sm:$0xf]
        %v7987 = vld [vmem:[%s7956 + $0x78] sm:$0xf]
        %v7988 = vld [vmem:[%s7956 + $0x7c] sm:$0xf]
        %v8005 = vunpack.c.l.b16 %v7940
        %v8006 = vunpack.c.l.b16 %v7941
        %v8007 = vunpack.c.l.b16 %v7942
        %v8008 = vunpack.c.l.b16 %v7943
        %v8009 = vunpack.c.l.b16 %v7944
        %v8010 = vunpack.c.l.b16 %v7945
        %v8011 = vunpack.c.l.b16 %v7946
        %v8012 = vunpack.c.l.b16 %v7947
        %v8013 = vunpack.c.l.b16 %v7948
        %v8014 = vunpack.c.l.b16 %v7949
        %v8015 = vunpack.c.l.b16 %v7950
        %v8016 = vunpack.c.l.b16 %v7951
        %v8017 = vunpack.c.l.b16 %v7952
        %v8018 = vunpack.c.l.b16 %v7953
        %v8019 = vunpack.c.l.b16 %v7954
        %v8020 = vunpack.c.l.b16 %v7955
        %v8021 = vrot.slane %v8007, 7
        %v8022 = vsel %vm3053, %v8021, %v8005
        %v8023 = vrot.slane %v8009, 6
        %v8024 = vsel %vm3056, %v8023, %v8022
        %v8025 = vrot.slane %v8011, 5
        %v8026 = vsel %vm3059, %v8025, %v8024
        %v8027 = vrot.slane %v8013, 4
        %v8028 = vsel %vm3062, %v8027, %v8026
        %v8029 = vrot.slane %v8015, 3
        %v8030 = vsel %vm3065, %v8029, %v8028
        %v8031 = vrot.slane %v8017, 2
        %v8032 = vsel %vm3068, %v8031, %v8030
        %v8033 = vrot.slane %v8019, 1
        %v8034 = vsel %vm3071, %v8033, %v8032
        %v8035 = vrot.slane %v8008, 7
        %v8036 = vsel %vm3053, %v8035, %v8006
        %v8037 = vrot.slane %v8010, 6
        %v8038 = vsel %vm3056, %v8037, %v8036
        %v8039 = vrot.slane %v8012, 5
        %v8040 = vsel %vm3059, %v8039, %v8038
        %v8041 = vrot.slane %v8014, 4
        %v8042 = vsel %vm3062, %v8041, %v8040
        %v8043 = vrot.slane %v8016, 3
        %v8044 = vsel %vm3065, %v8043, %v8042
        %v8045 = vrot.slane %v8018, 2
        %v8046 = vsel %vm3068, %v8045, %v8044
        %v8047 = vrot.slane %v8020, 1
        %v8048 = vsel %vm3071, %v8047, %v8046
        %v8049 = vpack.c.b16 %v8034, %v8034
        %v8050 = vpack.c.b16 %v8048, %v8048
        %v8085 = vunpack.c.l.b16 %v7957
        %v8086 = vunpack.c.l.b16 %v7958
        %v8087 = vunpack.c.l.b16 %v7959
        %v8088 = vunpack.c.l.b16 %v7960
        %v8089 = vunpack.c.l.b16 %v7961
        %v8090 = vunpack.c.l.b16 %v7962
        %v8091 = vunpack.c.l.b16 %v7963
        %v8092 = vunpack.c.l.b16 %v7964
        %v8093 = vunpack.c.l.b16 %v7965
        %v8094 = vunpack.c.l.b16 %v7966
        %v8095 = vunpack.c.l.b16 %v7967
        %v8096 = vunpack.c.l.b16 %v7968
        %v8097 = vunpack.c.l.b16 %v7969
        %v8098 = vunpack.c.l.b16 %v7970
        %v8099 = vunpack.c.l.b16 %v7971
        %v8100 = vunpack.c.l.b16 %v7972
        %v8101 = vunpack.c.l.b16 %v7973
        %v8102 = vunpack.c.l.b16 %v7974
        %v8103 = vunpack.c.l.b16 %v7975
        %v8104 = vunpack.c.l.b16 %v7976
        %v8105 = vunpack.c.l.b16 %v7977
        %v8106 = vunpack.c.l.b16 %v7978
        %v8107 = vunpack.c.l.b16 %v7979
        %v8108 = vunpack.c.l.b16 %v7980
        %v8109 = vunpack.c.l.b16 %v7981
        %v8110 = vunpack.c.l.b16 %v7982
        %v8111 = vunpack.c.l.b16 %v7983
        %v8112 = vunpack.c.l.b16 %v7984
        %v8113 = vunpack.c.l.b16 %v7985
        %v8114 = vunpack.c.l.b16 %v7986
        %v8115 = vunpack.c.l.b16 %v7987
        %v8116 = vunpack.c.l.b16 %v7988
        %v8117 = vpack.c.b16 %v8086, %v8085
        %v8118 = vpack.c.b16 %v8088, %v8087
        %v8119 = vpack.c.b16 %v8090, %v8089
        %v8120 = vpack.c.b16 %v8092, %v8091
        %v8121 = vpack.c.b16 %v8094, %v8093
        %v8122 = vpack.c.b16 %v8096, %v8095
        %v8123 = vpack.c.b16 %v8098, %v8097
        %v8124 = vpack.c.b16 %v8100, %v8099
        %v8125 = vpack.c.b16 %v8102, %v8101
        %v8126 = vpack.c.b16 %v8104, %v8103
        %v8127 = vpack.c.b16 %v8106, %v8105
        %v8128 = vpack.c.b16 %v8108, %v8107
        %v8129 = vpack.c.b16 %v8110, %v8109
        %v8130 = vpack.c.b16 %v8112, %v8111
        %v8131 = vpack.c.b16 %v8114, %v8113
        %v8132 = vpack.c.b16 %v8116, %v8115
        %8149 = vmatprep.subr.bf16.mxu0 0
        %8150 = vmatpush1.bf16.msra.mxu0 %v8124
        %8151 = vmatprep.subr.bf16.mxu0 0
        %8152 = vmatpush1.bf16.msra.mxu0 %v8123
        %8153 = vmatprep.subr.bf16.mxu0 0
        %8154 = vmatpush1.bf16.msra.mxu0 %v8122
        %8155 = vmatprep.subr.bf16.mxu0 0
        %8156 = vmatpush1.bf16.msra.mxu0 %v8121
        %8157 = vmatprep.subr.bf16.mxu0 0
        %8158 = vmatpush1.bf16.msra.mxu0 %v8120
        %8159 = vmatprep.subr.bf16.mxu0 0
        %8160 = vmatpush1.bf16.msra.mxu0 %v8119
        %8161 = vmatprep.subr.bf16.mxu0 0
        %8162 = vmatpush1.bf16.msra.mxu0 %v8118
        %8163 = vmatprep.subr.bf16.mxu0 0
        %8164 = vmatpush1.bf16.msra.mxu0 %v8117
        %8165 = vmatprep.subr.bf16.mxu0 0
        %8166 = vmatpush2.bf16.msra.mxu0 %v8132
        %8167 = vmatprep.subr.bf16.mxu0 0
        %8168 = vmatpush2.bf16.msra.mxu0 %v8131
        %8169 = vmatprep.subr.bf16.mxu0 0
        %8170 = vmatpush2.bf16.msra.mxu0 %v8130
        %8171 = vmatprep.subr.bf16.mxu0 0
        %8172 = vmatpush2.bf16.msra.mxu0 %v8129
        %8173 = vmatprep.subr.bf16.mxu0 0
        %8174 = vmatpush2.bf16.msra.mxu0 %v8128
        %8175 = vmatprep.subr.bf16.mxu0 0
        %8176 = vmatpush2.bf16.msra.mxu0 %v8127
        %8177 = vmatprep.subr.bf16.mxu0 0
        %8178 = vmatpush2.bf16.msra.mxu0 %v8126
        %8179 = vmatprep.subr.bf16.mxu0 0
        %8180 = vmatpush2.bf16.msra.mxu0 %v8125
        %8181 = vmatprep.mubr.bf16.mxu0 %v8050
        %8182 = vmatmul.mubr.bf16.gmra.mxu0 %v8049
        %v8183 = vpop.f32.mrf.mxu0
        %v8184 = vadd.f32 0.0, %v8183
        %v8185 = vpop.f32.mrf.mxu0
        %v8186 = vpop.f32.mrf.mxu0
        %v8187 = vpop.f32.mrf.mxu0
        %8188 = vdwg.mxu0
        %v8189 = vadd.f32 %v7835, %v8184
        %s8190 = scalar_lea.vmem [#allocation2], 23
        %v8191 = vld [vmem:[%s8190] ss:$8 sm:$0x3]
        %s8192 = scalar_lea.vmem [#allocation2], 55
        %v8193 = vld [vmem:[%s8192] ss:$8 sm:$0x3]
        %s8194 = scalar_lea.vmem [#allocation2], 87
        %v8195 = vld [vmem:[%s8194] ss:$8 sm:$0x3]
        %s8196 = scalar_lea.vmem [#allocation2], 119
        %v8197 = vld [vmem:[%s8196] ss:$8 sm:$0x3]
        %s8198 = scalar_lea.vmem [#allocation2], 151
        %v8199 = vld [vmem:[%s8198] ss:$8 sm:$0x3]
        %s8200 = scalar_lea.vmem [#allocation2], 183
        %v8201 = vld [vmem:[%s8200] ss:$8 sm:$0x3]
        %s8202 = scalar_lea.vmem [#allocation2], 215
        %v8203 = vld [vmem:[%s8202] ss:$8 sm:$0x3]
        %s8204 = scalar_lea.vmem [#allocation2], 247
        %v8205 = vld [vmem:[%s8204] ss:$8 sm:$0x3]
        %v8214 = vlaneseq
        %v8215 = vshrl.u32 %v8214, 7
        %v8216 = vsub.s32 0, %v8215
        %v8217 = vrot.slane %v8191, %v8216
        %v8218 = vlaneseq
        %v8219 = vshrl.u32 %v8218, 7
        %v8220 = vsub.s32 1, %v8219
        %v8221 = vrot.slane %v8191, %v8220
        %v8222 = vlaneseq
        %v8223 = vshrl.u32 %v8222, 7
        %v8224 = vsub.s32 0, %v8223
        %v8225 = vrot.slane %v8193, %v8224
        %v8226 = vlaneseq
        %v8227 = vshrl.u32 %v8226, 7
        %v8228 = vsub.s32 1, %v8227
        %v8229 = vrot.slane %v8193, %v8228
        %v8230 = vlaneseq
        %v8231 = vshrl.u32 %v8230, 7
        %v8232 = vsub.s32 0, %v8231
        %v8233 = vrot.slane %v8195, %v8232
        %v8234 = vlaneseq
        %v8235 = vshrl.u32 %v8234, 7
        %v8236 = vsub.s32 1, %v8235
        %v8237 = vrot.slane %v8195, %v8236
        %v8238 = vlaneseq
        %v8239 = vshrl.u32 %v8238, 7
        %v8240 = vsub.s32 0, %v8239
        %v8241 = vrot.slane %v8197, %v8240
        %v8242 = vlaneseq
        %v8243 = vshrl.u32 %v8242, 7
        %v8244 = vsub.s32 1, %v8243
        %v8245 = vrot.slane %v8197, %v8244
        %v8246 = vlaneseq
        %v8247 = vshrl.u32 %v8246, 7
        %v8248 = vsub.s32 0, %v8247
        %v8249 = vrot.slane %v8199, %v8248
        %v8250 = vlaneseq
        %v8251 = vshrl.u32 %v8250, 7
        %v8252 = vsub.s32 1, %v8251
        %v8253 = vrot.slane %v8199, %v8252
        %v8254 = vlaneseq
        %v8255 = vshrl.u32 %v8254, 7
        %v8256 = vsub.s32 0, %v8255
        %v8257 = vrot.slane %v8201, %v8256
        %v8258 = vlaneseq
        %v8259 = vshrl.u32 %v8258, 7
        %v8260 = vsub.s32 1, %v8259
        %v8261 = vrot.slane %v8201, %v8260
        %v8262 = vlaneseq
        %v8263 = vshrl.u32 %v8262, 7
        %v8264 = vsub.s32 0, %v8263
        %v8265 = vrot.slane %v8203, %v8264
        %v8266 = vlaneseq
        %v8267 = vshrl.u32 %v8266, 7
        %v8268 = vsub.s32 1, %v8267
        %v8269 = vrot.slane %v8203, %v8268
        %v8270 = vlaneseq
        %v8271 = vshrl.u32 %v8270, 7
        %v8272 = vsub.s32 0, %v8271
        %v8273 = vrot.slane %v8205, %v8272
        %v8274 = vlaneseq
        %v8275 = vshrl.u32 %v8274, 7
        %v8276 = vsub.s32 1, %v8275
        %v8277 = vrot.slane %v8205, %v8276
        %v8294 = vpack.c.bf16 %v8217, %v8217
        %v8295 = vpack.c.bf16 %v8221, %v8221
        %v8296 = vpack.c.bf16 %v8225, %v8225
        %v8297 = vpack.c.bf16 %v8229, %v8229
        %v8298 = vpack.c.bf16 %v8233, %v8233
        %v8299 = vpack.c.bf16 %v8237, %v8237
        %v8300 = vpack.c.bf16 %v8241, %v8241
        %v8301 = vpack.c.bf16 %v8245, %v8245
        %v8302 = vpack.c.bf16 %v8249, %v8249
        %v8303 = vpack.c.bf16 %v8253, %v8253
        %v8304 = vpack.c.bf16 %v8257, %v8257
        %v8305 = vpack.c.bf16 %v8261, %v8261
        %v8306 = vpack.c.bf16 %v8265, %v8265
        %v8307 = vpack.c.bf16 %v8269, %v8269
        %v8308 = vpack.c.bf16 %v8273, %v8273
        %v8309 = vpack.c.bf16 %v8277, %v8277
        %s8310 = scalar_lea.vmem %s3, 1920
        %v8311 = vld [vmem:[%s8310] sm:$0xf]
        %v8312 = vld [vmem:[%s8310 + $0x4] sm:$0xf]
        %v8313 = vld [vmem:[%s8310 + $0x8] sm:$0xf]
        %v8314 = vld [vmem:[%s8310 + $0xc] sm:$0xf]
        %v8315 = vld [vmem:[%s8310 + $0x10] sm:$0xf]
        %v8316 = vld [vmem:[%s8310 + $0x14] sm:$0xf]
        %v8317 = vld [vmem:[%s8310 + $0x18] sm:$0xf]
        %v8318 = vld [vmem:[%s8310 + $0x1c] sm:$0xf]
        %v8319 = vld [vmem:[%s8310 + $0x20] sm:$0xf]
        %v8320 = vld [vmem:[%s8310 + $0x24] sm:$0xf]
        %v8321 = vld [vmem:[%s8310 + $0x28] sm:$0xf]
        %v8322 = vld [vmem:[%s8310 + $0x2c] sm:$0xf]
        %v8323 = vld [vmem:[%s8310 + $0x30] sm:$0xf]
        %v8324 = vld [vmem:[%s8310 + $0x34] sm:$0xf]
        %v8325 = vld [vmem:[%s8310 + $0x38] sm:$0xf]
        %v8326 = vld [vmem:[%s8310 + $0x3c] sm:$0xf]
        %v8327 = vld [vmem:[%s8310 + $0x40] sm:$0xf]
        %v8328 = vld [vmem:[%s8310 + $0x44] sm:$0xf]
        %v8329 = vld [vmem:[%s8310 + $0x48] sm:$0xf]
        %v8330 = vld [vmem:[%s8310 + $0x4c] sm:$0xf]
        %v8331 = vld [vmem:[%s8310 + $0x50] sm:$0xf]
        %v8332 = vld [vmem:[%s8310 + $0x54] sm:$0xf]
        %v8333 = vld [vmem:[%s8310 + $0x58] sm:$0xf]
        %v8334 = vld [vmem:[%s8310 + $0x5c] sm:$0xf]
        %v8335 = vld [vmem:[%s8310 + $0x60] sm:$0xf]
        %v8336 = vld [vmem:[%s8310 + $0x64] sm:$0xf]
        %v8337 = vld [vmem:[%s8310 + $0x68] sm:$0xf]
        %v8338 = vld [vmem:[%s8310 + $0x6c] sm:$0xf]
        %v8339 = vld [vmem:[%s8310 + $0x70] sm:$0xf]
        %v8340 = vld [vmem:[%s8310 + $0x74] sm:$0xf]
        %v8341 = vld [vmem:[%s8310 + $0x78] sm:$0xf]
        %v8342 = vld [vmem:[%s8310 + $0x7c] sm:$0xf]
        %v8359 = vunpack.c.l.b16 %v8294
        %v8360 = vunpack.c.l.b16 %v8295
        %v8361 = vunpack.c.l.b16 %v8296
        %v8362 = vunpack.c.l.b16 %v8297
        %v8363 = vunpack.c.l.b16 %v8298
        %v8364 = vunpack.c.l.b16 %v8299
        %v8365 = vunpack.c.l.b16 %v8300
        %v8366 = vunpack.c.l.b16 %v8301
        %v8367 = vunpack.c.l.b16 %v8302
        %v8368 = vunpack.c.l.b16 %v8303
        %v8369 = vunpack.c.l.b16 %v8304
        %v8370 = vunpack.c.l.b16 %v8305
        %v8371 = vunpack.c.l.b16 %v8306
        %v8372 = vunpack.c.l.b16 %v8307
        %v8373 = vunpack.c.l.b16 %v8308
        %v8374 = vunpack.c.l.b16 %v8309
        %v8375 = vrot.slane %v8361, 7
        %v8376 = vsel %vm3053, %v8375, %v8359
        %v8377 = vrot.slane %v8363, 6
        %v8378 = vsel %vm3056, %v8377, %v8376
        %v8379 = vrot.slane %v8365, 5
        %v8380 = vsel %vm3059, %v8379, %v8378
        %v8381 = vrot.slane %v8367, 4
        %v8382 = vsel %vm3062, %v8381, %v8380
        %v8383 = vrot.slane %v8369, 3
        %v8384 = vsel %vm3065, %v8383, %v8382
        %v8385 = vrot.slane %v8371, 2
        %v8386 = vsel %vm3068, %v8385, %v8384
        %v8387 = vrot.slane %v8373, 1
        %v8388 = vsel %vm3071, %v8387, %v8386
        %v8389 = vrot.slane %v8362, 7
        %v8390 = vsel %vm3053, %v8389, %v8360
        %v8391 = vrot.slane %v8364, 6
        %v8392 = vsel %vm3056, %v8391, %v8390
        %v8393 = vrot.slane %v8366, 5
        %v8394 = vsel %vm3059, %v8393, %v8392
        %v8395 = vrot.slane %v8368, 4
        %v8396 = vsel %vm3062, %v8395, %v8394
        %v8397 = vrot.slane %v8370, 3
        %v8398 = vsel %vm3065, %v8397, %v8396
        %v8399 = vrot.slane %v8372, 2
        %v8400 = vsel %vm3068, %v8399, %v8398
        %v8401 = vrot.slane %v8374, 1
        %v8402 = vsel %vm3071, %v8401, %v8400
        %v8403 = vpack.c.b16 %v8388, %v8388
        %v8404 = vpack.c.b16 %v8402, %v8402
        %v8439 = vunpack.c.l.b16 %v8311
        %v8440 = vunpack.c.l.b16 %v8312
        %v8441 = vunpack.c.l.b16 %v8313
        %v8442 = vunpack.c.l.b16 %v8314
        %v8443 = vunpack.c.l.b16 %v8315
        %v8444 = vunpack.c.l.b16 %v8316
        %v8445 = vunpack.c.l.b16 %v8317
        %v8446 = vunpack.c.l.b16 %v8318
        %v8447 = vunpack.c.l.b16 %v8319
        %v8448 = vunpack.c.l.b16 %v8320
        %v8449 = vunpack.c.l.b16 %v8321
        %v8450 = vunpack.c.l.b16 %v8322
        %v8451 = vunpack.c.l.b16 %v8323
        %v8452 = vunpack.c.l.b16 %v8324
        %v8453 = vunpack.c.l.b16 %v8325
        %v8454 = vunpack.c.l.b16 %v8326
        %v8455 = vunpack.c.l.b16 %v8327
        %v8456 = vunpack.c.l.b16 %v8328
        %v8457 = vunpack.c.l.b16 %v8329
        %v8458 = vunpack.c.l.b16 %v8330
        %v8459 = vunpack.c.l.b16 %v8331
        %v8460 = vunpack.c.l.b16 %v8332
        %v8461 = vunpack.c.l.b16 %v8333
        %v8462 = vunpack.c.l.b16 %v8334
        %v8463 = vunpack.c.l.b16 %v8335
        %v8464 = vunpack.c.l.b16 %v8336
        %v8465 = vunpack.c.l.b16 %v8337
        %v8466 = vunpack.c.l.b16 %v8338
        %v8467 = vunpack.c.l.b16 %v8339
        %v8468 = vunpack.c.l.b16 %v8340
        %v8469 = vunpack.c.l.b16 %v8341
        %v8470 = vunpack.c.l.b16 %v8342
        %v8471 = vpack.c.b16 %v8440, %v8439
        %v8472 = vpack.c.b16 %v8442, %v8441
        %v8473 = vpack.c.b16 %v8444, %v8443
        %v8474 = vpack.c.b16 %v8446, %v8445
        %v8475 = vpack.c.b16 %v8448, %v8447
        %v8476 = vpack.c.b16 %v8450, %v8449
        %v8477 = vpack.c.b16 %v8452, %v8451
        %v8478 = vpack.c.b16 %v8454, %v8453
        %v8479 = vpack.c.b16 %v8456, %v8455
        %v8480 = vpack.c.b16 %v8458, %v8457
        %v8481 = vpack.c.b16 %v8460, %v8459
        %v8482 = vpack.c.b16 %v8462, %v8461
        %v8483 = vpack.c.b16 %v8464, %v8463
        %v8484 = vpack.c.b16 %v8466, %v8465
        %v8485 = vpack.c.b16 %v8468, %v8467
        %v8486 = vpack.c.b16 %v8470, %v8469
        %8503 = vmatprep.subr.bf16.mxu0 0
        %8504 = vmatpush1.bf16.msra.mxu0 %v8478
        %8505 = vmatprep.subr.bf16.mxu0 0
        %8506 = vmatpush1.bf16.msra.mxu0 %v8477
        %8507 = vmatprep.subr.bf16.mxu0 0
        %8508 = vmatpush1.bf16.msra.mxu0 %v8476
        %8509 = vmatprep.subr.bf16.mxu0 0
        %8510 = vmatpush1.bf16.msra.mxu0 %v8475
        %8511 = vmatprep.subr.bf16.mxu0 0
        %8512 = vmatpush1.bf16.msra.mxu0 %v8474
        %8513 = vmatprep.subr.bf16.mxu0 0
        %8514 = vmatpush1.bf16.msra.mxu0 %v8473
        %8515 = vmatprep.subr.bf16.mxu0 0
        %8516 = vmatpush1.bf16.msra.mxu0 %v8472
        %8517 = vmatprep.subr.bf16.mxu0 0
        %8518 = vmatpush1.bf16.msra.mxu0 %v8471
        %8519 = vmatprep.subr.bf16.mxu0 0
        %8520 = vmatpush2.bf16.msra.mxu0 %v8486
        %8521 = vmatprep.subr.bf16.mxu0 0
        %8522 = vmatpush2.bf16.msra.mxu0 %v8485
        %8523 = vmatprep.subr.bf16.mxu0 0
        %8524 = vmatpush2.bf16.msra.mxu0 %v8484
        %8525 = vmatprep.subr.bf16.mxu0 0
        %8526 = vmatpush2.bf16.msra.mxu0 %v8483
        %8527 = vmatprep.subr.bf16.mxu0 0
        %8528 = vmatpush2.bf16.msra.mxu0 %v8482
        %8529 = vmatprep.subr.bf16.mxu0 0
        %8530 = vmatpush2.bf16.msra.mxu0 %v8481
        %8531 = vmatprep.subr.bf16.mxu0 0
        %8532 = vmatpush2.bf16.msra.mxu0 %v8480
        %8533 = vmatprep.subr.bf16.mxu0 0
        %8534 = vmatpush2.bf16.msra.mxu0 %v8479
        %8535 = vmatprep.mubr.bf16.mxu0 %v8404
        %8536 = vmatmul.mubr.bf16.gmra.mxu0 %v8403
        %v8537 = vpop.f32.mrf.mxu0
        %v8538 = vadd.f32 0.0, %v8537
        %v8539 = vpop.f32.mrf.mxu0
        %v8540 = vpop.f32.mrf.mxu0
        %v8541 = vpop.f32.mrf.mxu0
        %8542 = vdwg.mxu0
        %v8543 = vadd.f32 %v8189, %v8538
        %8544 = vst [vmem:[%s496] sm:$0xff] %v8543
        %s8545 = sand.u32 %s137, 1
        %s8546 = scalar_lea.sflag [#allocation5], %s8545
        %s8547 = sand.u32 %s137, 1
        %s8548 = smul.addr %s8547, 8
        %s8549 = scalar_lea.vmem [#allocation4], %s8548
        // Predicated region
        $region64: #{convnet4_forward.1} parent=58 // pred_check
          %p8550 = pneg %p147
        $region65: #{convnet4_forward.1} parent=58 // pred_check_branch
          %8552 = sbr.rel (%p8550) target = $region67
        $region66: #{convnet4_forward.1} parent=58 // pred_region
          %s8554 = ssub.s32 128, 128
          %8555 = vsyncadd %s8546, %s8554
          %s8556 = smul.addr %s19, 128
          %s8557 = scalar_lea.hbm %s5, %s8556
          %s8559 = sshll.u32 %s8549, 4
          %s8560 = int_to_ptr.vmem [resolvable:$true] %s8559
          %8562 = dma.vmem_to_hbm [thread:$0]  %s8560, 128, %s8557, %s8546
        $region67: #{convnet4_forward.1} parent=58 // pred_fallthru
          _
      $region59: #{convnet4_forward.1} parent=5 // pred_fallthru
        _
      %p8563 = scmp.le.s32.totalorder 2, %s14
      // Predicated region
      $region68: #{convnet4_forward.1} parent=5 // pred_check
        %p8564 = pneg %p8563
      $region69: #{convnet4_forward.1} parent=5 // pred_check_branch
        %8566 = sbr.rel (%p8564) target = $region71
      $region70: #{convnet4_forward.1} parent=5 // pred_region
        %s8567 = ssub.s32 %s14, 2
        // Predicated region
        $region72: #{convnet4_forward.1} parent=70 // pred_check
          %p8568 = pneg %p153
        $region73: #{convnet4_forward.1} parent=70 // pred_check_branch
          %8570 = sbr.rel (%p8568) target = $region75
        $region74: #{convnet4_forward.1} parent=70 // pred_region
          %s8571 = sand.u32 %s138, 1
          %s8572 = scalar_lea.sflag [#allocation5], %s8571
          %s8573 = sand.u32 %s138, 1
          %s8574 = smul.addr %s8573, 8
          %s8575 = scalar_lea.vmem [#allocation4], %s8574
          %8576 = dma.done %s8572, 128
        $region75: #{convnet4_forward.1} parent=70 // pred_fallthru
          _
      $region71: #{convnet4_forward.1} parent=5 // pred_fallthru
        _
    $region6: #{convnet4_forward.1} parent=1 // loop_footer
      %s18 = sadd.s32 1, %s14
    $region7: #{convnet4_forward.1} parent=1 // loop_footer_branch
      %13 = sbr.rel target = $region3
    $region8: #{convnet4_forward.1} parent=1 // loop_exit
      _
    %8577 = vsyncpa [#allocation5], 1
    %s8578 = scalar_lea.sflag [#allocation5], 1
    %8579 = vsyncpa %s8578, 1

</llo_original>
